<compile_context>
chip_gen: v5e
topology: v5e:2x2
jax: 0.10.0
libtpu: 0.0.40
codegen_flags: <defaults>
</compile_context>

<pallas_src>
import jax
import jax.numpy as jnp
import numpy as np
from jax.experimental import pallas as pl
from jax.experimental.pallas import tpu as pltpu

BN_EPS = 1e-3
NEG_PAD = -1e30  # finite "-inf" for maxpool padding (every window has a real element)


# ----------------------------------------------------------------------------
# small helpers
# ----------------------------------------------------------------------------
def _round_up(x, m):
    return (x + m - 1) // m * m


def _choose_tile_m(m):
    # biggest tile that still leaves >=4 grid steps (2 per TC on v7x megacore)
    for t in (1024, 512, 256, 128, 64, 32, 16, 8):
        if m >= 4 * t:
            return t
    return _round_up(max(m, 8), 8)


def _bn_fold(bn):
    gamma, beta, mean, var = bn
    scale = gamma / jnp.sqrt(var + BN_EPS)
    bias = beta - mean * scale
    return scale, bias


def _w_pointwise(w):  # (Cout, Cin, 1, 1, 1) -> (Cin, Cout)
    return jnp.transpose(w[:, :, 0, 0, 0], (1, 0))


def _w_spatial9(w):  # (Cout, Cin, 1, 3, 3) -> (9, Cin, Cout), tap order (kh, kw)
    Cout, Cin = w.shape[0], w.shape[1]
    return jnp.transpose(w[:, :, 0, :, :], (2, 3, 1, 0)).reshape(9, Cin, Cout)


def _w_temporal3(w):  # (Cout, Cin, 3, 1, 1) -> (3, Cin, Cout)
    return jnp.transpose(w[:, :, :, 0, 0], (2, 1, 0))


# ----------------------------------------------------------------------------
# Kernel 1: fused bf16 matmul + bias + ReLU (BN scale pre-folded into weights)
# ----------------------------------------------------------------------------
def _matmul_bias_relu_kernel(x_ref, w_ref, b_ref, o_ref):
    acc = jnp.dot(x_ref[...], w_ref[...], preferred_element_type=jnp.float32)
    o_ref[...] = jnp.maximum(acc + b_ref[...], 0.0).astype(o_ref.dtype)


def matmul_bias_relu(x2d, w2d, bias, out_dtype=jnp.bfloat16):
    """relu(x2d @ w2d + bias); x2d: (M, K) bf16, w2d: (K, Cout) bf16."""
    M, K = x2d.shape
    Kw, Cout = w2d.shape
    assert K == Kw
    tile_m = _choose_tile_m(M)
    M_pad = _round_up(M, tile_m)
    if M_pad != M:
        x2d = jnp.pad(x2d, ((0, M_pad - M), (0, 0)))
    out = pl.pallas_call(
        _matmul_bias_relu_kernel,
        out_shape=jax.ShapeDtypeStruct((M_pad, Cout), out_dtype),
        grid_spec=pltpu.PrefetchScalarGridSpec(
            num_scalar_prefetch=0,
            grid=(M_pad // tile_m,),
            in_specs=[
                pl.BlockSpec((tile_m, K), lambda i: (i, 0)),
                pl.BlockSpec((K, Cout), lambda i: (0, 0)),
                pl.BlockSpec((1, Cout), lambda i: (0, 0)),
            ],
            out_specs=pl.BlockSpec((tile_m, Cout), lambda i: (i, 0)),
        ),
        compiler_params=pltpu.CompilerParams(dimension_semantics=("parallel",)),
    )(x2d, w2d, bias.reshape(1, Cout))
    return out[:M] if M_pad != M else out


# ----------------------------------------------------------------------------
# Kernel 2: (1,3,3) conv + bias + ReLU via 9 row-shifted taps of a padded slice
# Flat-row trick: H padded (2,2), W padded (1,1), rows flattened so each tap is
# a contiguous (R, Cin) slab.  Garbage border columns are stripped at the end.
# ----------------------------------------------------------------------------
def _make_spatial_kernel(Wp, R):
    taps = [((kh + 1) * Wp + (kw - 1), kh * 3 + kw) for kh in range(3) for kw in range(3)]

    def kernel(x_ref, w_ref, b_ref, o_ref):
        acc = None
        for t0, t in taps:
            part = jnp.dot(x_ref[0, t0:t0 + R, :], w_ref[t],
                           preferred_element_type=jnp.float32)
            acc = part if acc is None else acc + part
        o_ref[0] = jnp.maximum(acc + b_ref[...], 0.0).astype(o_ref.dtype)

    return kernel


def conv_spatial3x3_bias_relu(y, w9, bias, out_dtype=jnp.bfloat16):
    """y: (N, D, H, W, Cin) bf16; w9: (9, Cin, Cout) bf16 -> (N*D, H*(W+2), Cout)."""
    N, D, H, W, Cin = y.shape
    Cout = w9.shape[-1]
    Wp = W + 2
    Pp = (H + 4) * Wp
    R = H * Wp
    # TODO(synk): this jnp.pad is an XLA-materialized extra pass over the
    # intermediate; padding inside the kernel (scratch memset + interior copy)
    # would remove one HBM round trip.
    yp = jnp.pad(y, ((0, 0), (0, 0), (2, 2), (1, 1), (0, 0))).reshape(N * D, Pp, Cin)
    return pl.pallas_call(
        _make_spatial_kernel(Wp, R),
        out_shape=jax.ShapeDtypeStruct((N * D, R, Cout), out_dtype),
        grid_spec=pltpu.PrefetchScalarGridSpec(
            num_scalar_prefetch=0,
            grid=(N * D,),
            in_specs=[
                pl.BlockSpec((1, Pp, Cin), lambda i: (i, 0, 0)),
                pl.BlockSpec((9, Cin, Cout), lambda i: (0, 0, 0)),
                pl.BlockSpec((1, Cout), lambda i: (0, 0)),
            ],
            out_specs=pl.BlockSpec((1, R, Cout), lambda i: (i, 0, 0)),
        ),
        compiler_params=pltpu.CompilerParams(dimension_semantics=("parallel",)),
    )(yp, w9, bias.reshape(1, Cout))


# ----------------------------------------------------------------------------
# Kernel 3: (3,1,1) temporal conv + bias + ReLU; boundary taps are pl.when-
# guarded accumulations into an f32 scratch (no selects, no wasted matmuls).
# ----------------------------------------------------------------------------
def _temporal_kernel(xm_ref, xc_ref, xp_ref, w_ref, b_ref, o_ref, acc_ref):
    d = pl.program_id(1)
    nd = pl.num_programs(1)
    acc_ref[...] = jnp.dot(xc_ref[0, 0], w_ref[1], preferred_element_type=jnp.float32)

    @pl.when(d > 0)
    def _():
        acc_ref[...] += jnp.dot(xm_ref[0, 0], w_ref[0], preferred_element_type=jnp.float32)

    @pl.when(d < nd - 1)
    def _():
        acc_ref[...] += jnp.dot(xp_ref[0, 0], w_ref[2], preferred_element_type=jnp.float32)

    o_ref[0, 0] = jnp.maximum(acc_ref[...] + b_ref[...], 0.0).astype(o_ref.dtype)


def conv_temporal3_bias_relu(z, w3, bias, N, D, out_dtype=jnp.float32):
    """z: (N*D, R, Cmid) bf16 (padded-column layout); w3: (3, Cmid, Cout) bf16."""
    ND, R, Cmid = z.shape
    Cout = w3.shape[-1]
    z4 = z.reshape(N, D, R, Cmid)
    # TODO(synk): each depth slice is DMA'd 3x (xm/xc/xp); a carried VMEM ring
    # over an arbitrary innermost D axis would read each slice once.
    return pl.pallas_call(
        _temporal_kernel,
        out_shape=jax.ShapeDtypeStruct((N, D, R, Cout), out_dtype),
        grid_spec=pltpu.PrefetchScalarGridSpec(
            num_scalar_prefetch=0,
            grid=(N, D),
            in_specs=[
                pl.BlockSpec((1, 1, R, Cmid),
                             lambda n, d: (n, jnp.maximum(d - 1, 0), 0, 0)),
                pl.BlockSpec((1, 1, R, Cmid), lambda n, d: (n, d, 0, 0)),
                pl.BlockSpec((1, 1, R, Cmid),
                             lambda n, d: (n, jnp.minimum(d + 1, D - 1), 0, 0)),
                pl.BlockSpec((3, Cmid, Cout), lambda n, d: (0, 0, 0)),
                pl.BlockSpec((1, Cout), lambda n, d: (0, 0)),
            ],
            out_specs=pl.BlockSpec((1, 1, R, Cout), lambda n, d: (n, d, 0, 0)),
            scratch_shapes=[pltpu.VMEM((R, Cout), jnp.float32)],
        ),
        compiler_params=pltpu.CompilerParams(
            dimension_semantics=("parallel", "parallel")),
    )(z4, z4, z4, w3, bias.reshape(1, Cout))


# ----------------------------------------------------------------------------
# Kernel 4: fused MaxPool3d(3,1,1) + 1x1x1 conv (scale folded) + bias + ReLU.
# Running HxW/depth max kept in a bf16 VMEM scratch; neighbour-depth maxima are
# pl.when-guarded (no NEG_PAD selects, no boundary work).
# ----------------------------------------------------------------------------
def _make_pool_unit_kernel(Wp, R):
    taps = [(kh + 1) * Wp + (kw - 1) for kh in range(3) for kw in range(3)]

    def hwmax(ref):
        m = ref[0, 0, taps[0]:taps[0] + R, :]
        for t0 in taps[1:]:
            m = jnp.maximum(m, ref[0, 0, t0:t0 + R, :])
        return m

    def kernel(xm_ref, xc_ref, xp_ref, w_ref, b_ref, o_ref, m_ref):
        d = pl.program_id(1)
        nd = pl.num_programs(1)
        # TODO(synk): each slice's 9-tap HxW max is recomputed for up to 3
        # neighbouring d; a carried ring over an arbitrary D axis would
        # de-duplicate it and read each 192-ch slice once.
        m_ref[...] = hwmax(xc_ref)

        @pl.when(d > 0)
        def _():
            m_ref[...] = jnp.maximum(m_ref[...], hwmax(xm_ref))

        @pl.when(d < nd - 1)
        def _():
            m_ref[...] = jnp.maximum(m_ref[...], hwmax(xp_ref))

        acc = jnp.dot(m_ref[...], w_ref[...], preferred_element_type=jnp.float32)
        o_ref[0, 0] = jnp.maximum(acc + b_ref[...], 0.0).astype(o_ref.dtype)

    return kernel


def maxpool3_unit_bias_relu(x, w, bias):
    """x: (N, D, H, W, C) bf16; w: (C, Cout) bf16 -> (N, D, H*(W+2), Cout) f32."""
    N, D, H, W, C = x.shape
    Cout = w.shape[-1]
    Wp = W + 2
    Pp = (H + 4) * Wp
    R = H * Wp
    xpad = jnp.pad(x, ((0, 0), (0, 0), (2, 2), (1, 1), (0, 0)),
                   constant_values=NEG_PAD).reshape(N, D, Pp, C)
    return pl.pallas_call(
        _make_pool_unit_kernel(Wp, R),
        out_shape=jax.ShapeDtypeStruct((N, D, R, Cout), jnp.float32),
        grid_spec=pltpu.PrefetchScalarGridSpec(
            num_scalar_prefetch=0,
            grid=(N, D),
            in_specs=[
                pl.BlockSpec((1, 1, Pp, C),
                             lambda n, d: (n, jnp.maximum(d - 1, 0), 0, 0)),
                pl.BlockSpec((1, 1, Pp, C), lambda n, d: (n, d, 0, 0)),
                pl.BlockSpec((1, 1, Pp, C),
                             lambda n, d: (n, jnp.minimum(d + 1, D - 1), 0, 0)),
                pl.BlockSpec((C, Cout), lambda n, d: (0, 0)),
                pl.BlockSpec((1, Cout), lambda n, d: (0, 0)),
            ],
            out_specs=pl.BlockSpec((1, 1, R, Cout), lambda n, d: (n, d, 0, 0)),
            scratch_shapes=[pltpu.VMEM((R, C), jnp.bfloat16)],
        ),
        compiler_params=pltpu.CompilerParams(
            dimension_semantics=("parallel", "parallel")),
    )(xpad, xpad, xpad, w, bias.reshape(1, Cout))


# ----------------------------------------------------------------------------
# Mixed_3b forward (NCDHW in/out, BatchNorm in eval mode)
# ----------------------------------------------------------------------------
def mixed_3b_forward(x_ncdhw, params):
    N, C, D, H, W = x_ncdhw.shape
    x = jnp.transpose(x_ncdhw, (0, 2, 3, 4, 1))          # -> NDHWC
    x_bf = x.astype(jnp.bfloat16)
    M = N * D * H * W
    Wp = W + 2

    # ---- fused pointwise stems (b0:64, b1:96, b2:16) -> one 256-wide bf16 matmul
    w0 = _w_pointwise(params["b0_unit"]["w"]); s0, b0 = _bn_fold(params["b0_unit"]["bn"])
    w1 = _w_pointwise(params["b1_unit"]["w"]); s1, b1 = _bn_fold(params["b1_unit"]["bn"])
    w2 = _w_pointwise(params["b2_unit"]["w"]); s2, b2 = _bn_fold(params["b2_unit"]["bn"])
    c0, c1, c2 = w0.shape[1], w1.shape[1], w2.shape[1]
    c_tot = c0 + c1 + c2
    c_pad = _round_up(c_tot, 128) - c_tot
    w_f = jnp.concatenate([w0 * s0, w1 * s1, w2 * s2,
                           jnp.zeros((C, c_pad), jnp.float32)],
                          axis=1).astype(jnp.bfloat16)
    b_f = jnp.concatenate([b0, b1, b2, jnp.zeros((c_pad,), jnp.float32)])
    fused = matmul_bias_relu(x_bf.reshape(M, C), w_f, b_f)        # (M, 256) bf16

    x0 = fused[:, :c0]                                            # (M, 64) bf16
    y12 = fused[:, c0:c_tot].reshape(N, D, H, W, c1 + c2)         # (.., 112) bf16

    # ---- branch1 + branch2 fused separable conv (block-diagonal weights)
    s1s, b1s = _bn_fold(params["b1_sep"]["bn_s"])
    s2s, b2s = _bn_fold(params["b2_sep"]["bn_s"])
    w1s = _w_spatial9(params["b1_sep"]["w_s"]) * s1s              # (9, 96, 128)
    w2s = _w_spatial9(params["b2_sep"]["w_s"]) * s2s              # (9, 16, 32)
    cs1, cs2 = w1s.shape[-1], w2s.shape[-1]
    w_sf = (jnp.zeros((9, c1 + c2, cs1 + cs2), jnp.float32)
            .at[:, :c1, :cs1].set(w1s)
            .at[:, c1:, cs1:].set(w2s)).astype(jnp.bfloat16)
    b_sf = jnp.concatenate([b1s, b2s])
    zs = conv_spatial3x3_bias_relu(y12, w_sf, b_sf)               # (N*D, R, 160) bf16

    s1t, b1t = _bn_fold(params["b1_sep"]["bn_t"])
    s2t, b2t = _bn_fold(params["b2_sep"]["bn_t"])
    w1t = _w_temporal3(params["b1_sep"]["w_t"]) * s1t             # (3, 128, 128)
    w2t = _w_temporal3(params["b2_sep"]["w_t"]) * s2t             # (3, 32, 32)
    w_tf = (jnp.zeros((3, cs1 + cs2, cs1 + cs2), jnp.float32)
            .at[:, :cs1, :cs1].set(w1t)
            .at[:, cs1:, cs1:].set(w2t)).astype(jnp.bfloat16)
    b_tf = jnp.concatenate([b1t, b2t])
    z12 = conv_temporal3_bias_relu(zs, w_tf, b_tf, N, D)          # (N, D, R, 160) f32

    # ---- branch3: fused maxpool + pointwise unit (scale folded into weights)
    s3, b3 = _bn_fold(params["b3_unit"]["bn"])
    w3 = (_w_pointwise(params["b3_unit"]["w"]) * s3).astype(jnp.bfloat16)
    z3 = maxpool3_unit_bias_relu(x_bf, w3, b3)                    # (N, D, R, 32) f32

    def strip(z):  # drop the garbage border columns of the flat-row layout
        return z.reshape(N, D, H, Wp, z.shape[-1])[:, :, :, 1:W + 1, :]

    # TODO(synk): strip/concat/transpose is still an extra HBM pass; writing
    # channel-offset blocks of a single pre-concat buffer from each kernel
    # (and stripping inside the final transpose) would remove it.
    out = jnp.concatenate([
        x0.reshape(N, D, H, W, c0).astype(jnp.float32),
        strip(z12),
        strip(z3),
    ], axis=-1)
    return jnp.transpose(out, (0, 4, 1, 2, 3))                    # -> NCDHW


# ----------------------------------------------------------------------------
# Deterministic parameter init (PyTorch shapes: (Cout, Cin, kD, kH, kW))
# ----------------------------------------------------------------------------
def init_params(key):
    def conv(k, cout, cin, kd, kh, kw):
        return 0.05 * jax.random.normal(k, (cout, cin, kd, kh, kw), jnp.float32)

    def bn(k, c):
        k1, k2, k3, k4 = jax.random.split(k, 4)
        gamma = 1.0 + 0.1 * jax.random.normal(k1, (c,), jnp.float32)
        beta = 0.1 * jax.random.normal(k2, (c,), jnp.float32)
        mean = 0.1 * jax.random.normal(k3, (c,), jnp.float32)
        var = 1.0 + 0.1 * jax.random.uniform(k4, (c,), jnp.float32)
        return (gamma, beta, mean, var)

    ks = jax.random.split(key, 20)
    return {
        "b0_unit": {"w": conv(ks[0], 64, 192, 1, 1, 1), "bn": bn(ks[1], 64)},
        "b1_unit": {"w": conv(ks[2], 96, 192, 1, 1, 1), "bn": bn(ks[3], 96)},
        "b1_sep": {
            "w_s": conv(ks[4], 128, 96, 1, 3, 3), "bn_s": bn(ks[5], 128),
            "w_t": conv(ks[6], 128, 128, 3, 1, 1), "bn_t": bn(ks[7], 128),
        },
        "b2_unit": {"w": conv(ks[8], 16, 192, 1, 1, 1), "bn": bn(ks[9], 16)},
        "b2_sep": {
            "w_s": conv(ks[10], 32, 16, 1, 3, 3), "bn_s": bn(ks[11], 32),
            "w_t": conv(ks[12], 32, 32, 3, 1, 1), "bn_t": bn(ks[13], 32),
        },
        "b3_unit": {"w": conv(ks[14], 32, 192, 1, 1, 1), "bn": bn(ks[15], 32)},
    }


# ----------------------------------------------------------------------------
# Pure-JAX reference (conv_general_dilated / reduce_window), NCDHW, f32
# ----------------------------------------------------------------------------
def ref_forward(x, params):
    def conv(x, w, pad):
        return jax.lax.conv_general_dilated(
            x, w, window_strides=(1, 1, 1), padding=pad,
            dimension_numbers=("NCDHW", "OIDHW", "NCDHW"))

    def bn_relu(x, bnp):
        gamma, beta, mean, var = bnp
        s = gamma / jnp.sqrt(var + BN_EPS)
        b = beta - mean * s
        return jnp.maximum(x * s[None, :, None, None, None]
                           + b[None, :, None, None, None], 0.0)

    def unit(x, p, pad=((0, 0), (0, 0), (0, 0))):
        return bn_relu(conv(x, p["w"], pad), p["bn"])

    x0 = unit(x, params["b0_unit"])

    y = unit(x, params["b1_unit"])
    y = bn_relu(conv(y, params["b1_sep"]["w_s"], ((0, 0), (1, 1), (1, 1))),
                params["b1_sep"]["bn_s"])
    x1 = bn_relu(conv(y, params["b1_sep"]["w_t"], ((1, 1), (0, 0), (0, 0))),
                 params["b1_sep"]["bn_t"])

    z = unit(x, params["b2_unit"])
    z = bn_relu(conv(z, params["b2_sep"]["w_s"], ((0, 0), (1, 1), (1, 1))),
                params["b2_sep"]["bn_s"])
    x2 = bn_relu(conv(z, params["b2_sep"]["w_t"], ((1, 1), (0, 0), (0, 0))),
                 params["b2_sep"]["bn_t"])

    neg = jnp.finfo(x.dtype).min
    xpad = jnp.pad(x, ((0, 0), (0, 0), (1, 1), (1, 1), (1, 1)),
                   constant_values=neg)
    xpool = jax.lax.reduce_window(xpad, neg, jax.lax.max,
                                  (1, 1, 3, 3, 3), (1, 1, 1, 1, 1), "VALID")
    x3 = unit(xpool, params["b3_unit"])
    return jnp.concatenate([x0, x1, x2, x3], axis=1)


if __name__ == "__main__":
    key = jax.random.PRNGKey(0)
    kx, kp = jax.random.split(key)
    # Small shapes consistent with the module (Cin fixed to 192 by Mixed_3b).
    N, C, D, H, W = 2, 192, 4, 8, 8
    x = jax.random.normal(kx, (N, C, D, H, W), jnp.float32)
    params = init_params(kp)

    fwd = jax.jit(mixed_3b_forward)
    out = jax.block_until_ready(fwd(x, params))
    assert out.shape == (N, 256, D, H, W), out.shape

    ref = jax.block_until_ready(ref_forward(x, params))
    # Tolerance sized for the bf16 operand path (three chained bf16 matmul
    # stages) compared against the f32 reference.
    np.testing.assert_allclose(np.asarray(out), np.asarray(ref),
                               rtol=2e-2, atol=3e-2)

    print("KERNEL_OK")
</pallas_src>

<mosaic_0001>
module attributes {stable_mosaic.version = 11 : i64} {
  func.func @_matmul_bias_relu_kernel(%arg0: i32, %arg1: memref<128x192xbf16, #tpu.memory_space<vmem>>, %arg2: memref<192x256xbf16, #tpu.memory_space<vmem>>, %arg3: memref<1x256xf32, #tpu.memory_space<vmem>>, %arg4: memref<128x256xbf16, #tpu.memory_space<vmem>>) attributes {dimension_semantics = [#tpu.dimension_semantics<parallel>], iteration_bounds = array<i64: 4>, scalar_prefetch = 0 : i64, scratch_operands = 0 : i64, tpu.core_type = #tpu.core_type<tc>, window_params = [{transform_indices = @transform_0, window_bounds = array<i64: 128, 192>}, {pipeline_mode = #tpu.pipeline_mode<synchronous>, transform_indices = @transform_1, window_bounds = array<i64: 192, 256>}, {pipeline_mode = #tpu.pipeline_mode<synchronous>, transform_indices = @transform_2, window_bounds = array<i64: 1, 256>}, {transform_indices = @transform_3, window_bounds = array<i64: 128, 256>}]} {
    %c0 = arith.constant 0 : index
    %c0_0 = arith.constant 0 : index
    %0 = vector.load %arg1[%c0, %c0_0] : memref<128x192xbf16, #tpu.memory_space<vmem>>, vector<128x192xbf16>
    %c0_1 = arith.constant 0 : index
    %c0_2 = arith.constant 0 : index
    %1 = vector.load %arg2[%c0_1, %c0_2] : memref<192x256xbf16, #tpu.memory_space<vmem>>, vector<192x256xbf16>
    %cst = arith.constant dense<0.000000e+00> : vector<128x256xf32>
    %2 = tpu.matmul %0, %1, %cst {dimension_numbers = #tpu.dot_dimension_numbers<[1], [0], [0], [1], [0, 0, 1, 1], [], []>} : vector<128x192xbf16>, vector<192x256xbf16>, vector<128x256xf32> -> vector<128x256xf32>
    %c0_3 = arith.constant 0 : index
    %c0_4 = arith.constant 0 : index
    %3 = vector.load %arg3[%c0_3, %c0_4] : memref<1x256xf32, #tpu.memory_space<vmem>>, vector<1x256xf32>
    %4 = vector.broadcast %3 : vector<1x256xf32> to vector<128x256xf32>
    %5 = arith.addf %2, %4 : vector<128x256xf32>
    %cst_5 = arith.constant 0.000000e+00 : f32
    %6 = vector.broadcast %cst_5 : f32 to vector<128x256xf32>
    %7 = arith.maximumf %5, %6 : vector<128x256xf32>
    %8 = arith.truncf %7 : vector<128x256xf32> to vector<128x256xbf16>
    %c0_6 = arith.constant 0 : index
    %c0_7 = arith.constant 0 : index
    %9 = vector.load %arg4[%c0_6, %c0_7] : memref<128x256xbf16, #tpu.memory_space<vmem>>, vector<128x256xbf16>
    tpu.vector_store %arg4[%c0_6, %c0_7], %8 {strides = array<i32>} : memref<128x256xbf16, #tpu.memory_space<vmem>>, vector<128x256xbf16>,
    return
  }
  func.func @transform_0(%arg0: i32) -> (i32, i32) {
    %c0_i32 = arith.constant 0 : i32
    %c0_i32_0 = arith.constant 0 : i32
    return %arg0, %c0_i32 : i32, i32
  }
  func.func @transform_1(%arg0: i32) -> (i32, i32) {
    %c0_i32 = arith.constant 0 : i32
    %c0_i32_0 = arith.constant 0 : i32
    %c0_i32_1 = arith.constant 0 : i32
    return %c0_i32, %c0_i32_0 : i32, i32
  }
  func.func @transform_2(%arg0: i32) -> (i32, i32) {
    %c0_i32 = arith.constant 0 : i32
    %c0_i32_0 = arith.constant 0 : i32
    %c0_i32_1 = arith.constant 0 : i32
    return %c0_i32, %c0_i32_0 : i32, i32
  }
  func.func @transform_3(%arg0: i32) -> (i32, i32) {
    %c0_i32 = arith.constant 0 : i32
    %c0_i32_0 = arith.constant 0 : i32
    return %arg0, %c0_i32 : i32, i32
  }
}

module attributes {stable_mosaic.version = 11 : i64} {
  func.func @kernel(%arg0: i32, %arg1: memref<1x120x112xbf16, #tpu.memory_space<vmem>>, %arg2: memref<9x112x160xbf16, #tpu.memory_space<vmem>>, %arg3: memref<1x160xf32, #tpu.memory_space<vmem>>, %arg4: memref<1x80x160xbf16, #tpu.memory_space<vmem>>) attributes {dimension_semantics = [#tpu.dimension_semantics<parallel>], iteration_bounds = array<i64: 8>, scalar_prefetch = 0 : i64, scratch_operands = 0 : i64, tpu.core_type = #tpu.core_type<tc>, window_params = [{transform_indices = @transform_0, window_bounds = array<i64: 1, 120, 112>}, {pipeline_mode = #tpu.pipeline_mode<synchronous>, transform_indices = @transform_1, window_bounds = array<i64: 9, 112, 160>}, {pipeline_mode = #tpu.pipeline_mode<synchronous>, transform_indices = @transform_2, window_bounds = array<i64: 1, 160>}, {transform_indices = @transform_3, window_bounds = array<i64: 1, 80, 160>}]} {
    %c0 = arith.constant 0 : index
    %c9 = arith.constant 9 : index
    %c0_0 = arith.constant 0 : index
    %0 = vector.load %arg1[%c0, %c9, %c0_0] : memref<1x120x112xbf16, #tpu.memory_space<vmem>>, vector<1x80x112xbf16>
    %1 = vector.shape_cast %0 : vector<1x80x112xbf16> to vector<80x112xbf16>
    %c0_1 = arith.constant 0 : index
    %c0_2 = arith.constant 0 : index
    %c0_3 = arith.constant 0 : index
    %2 = vector.load %arg2[%c0_1, %c0_2, %c0_3] : memref<9x112x160xbf16, #tpu.memory_space<vmem>>, vector<1x112x160xbf16>
    %3 = vector.shape_cast %2 : vector<1x112x160xbf16> to vector<112x160xbf16>
    %cst = arith.constant dense<0.000000e+00> : vector<80x160xf32>
    %4 = tpu.matmul %1, %3, %cst {dimension_numbers = #tpu.dot_dimension_numbers<[1], [0], [0], [1], [0, 0, 1, 1], [], []>} : vector<80x112xbf16>, vector<112x160xbf16>, vector<80x160xf32> -> vector<80x160xf32>
    %c0_4 = arith.constant 0 : index
    %c10 = arith.constant 10 : index
    %c0_5 = arith.constant 0 : index
    %5 = vector.load %arg1[%c0_4, %c10, %c0_5] : memref<1x120x112xbf16, #tpu.memory_space<vmem>>, vector<1x80x112xbf16>
    %6 = vector.shape_cast %5 : vector<1x80x112xbf16> to vector<80x112xbf16>
    %c1 = arith.constant 1 : index
    %c0_6 = arith.constant 0 : index
    %c0_7 = arith.constant 0 : index
    %7 = vector.load %arg2[%c1, %c0_6, %c0_7] : memref<9x112x160xbf16, #tpu.memory_space<vmem>>, vector<1x112x160xbf16>
    %8 = vector.shape_cast %7 : vector<1x112x160xbf16> to vector<112x160xbf16>
    %cst_8 = arith.constant dense<0.000000e+00> : vector<80x160xf32>
    %9 = tpu.matmul %6, %8, %cst_8 {dimension_numbers = #tpu.dot_dimension_numbers<[1], [0], [0], [1], [0, 0, 1, 1], [], []>} : vector<80x112xbf16>, vector<112x160xbf16>, vector<80x160xf32> -> vector<80x160xf32>
    %10 = arith.addf %4, %9 : vector<80x160xf32>
    %c0_9 = arith.constant 0 : index
    %c11 = arith.constant 11 : index
    %c0_10 = arith.constant 0 : index
    %11 = vector.load %arg1[%c0_9, %c11, %c0_10] : memref<1x120x112xbf16, #tpu.memory_space<vmem>>, vector<1x80x112xbf16>
    %12 = vector.shape_cast %11 : vector<1x80x112xbf16> to vector<80x112xbf16>
    %c2 = arith.constant 2 : index
    %c0_11 = arith.constant 0 : index
    %c0_12 = arith.constant 0 : index
    %13 = vector.load %arg2[%c2, %c0_11, %c0_12] : memref<9x112x160xbf16, #tpu.memory_space<vmem>>, vector<1x112x160xbf16>
    %14 = vector.shape_cast %13 : vector<1x112x160xbf16> to vector<112x160xbf16>
    %cst_13 = arith.constant dense<0.000000e+00> : vector<80x160xf32>
    %15 = tpu.matmul %12, %14, %cst_13 {dimension_numbers = #tpu.dot_dimension_numbers<[1], [0], [0], [1], [0, 0, 1, 1], [], []>} : vector<80x112xbf16>, vector<112x160xbf16>, vector<80x160xf32> -> vector<80x160xf32>
    %16 = arith.addf %10, %15 : vector<80x160xf32>
    %c0_14 = arith.constant 0 : index
    %c19 = arith.constant 19 : index
    %c0_15 = arith.constant 0 : index
    %17 = vector.load %arg1[%c0_14, %c19, %c0_15] : memref<1x120x112xbf16, #tpu.memory_space<vmem>>, vector<1x80x112xbf16>
    %18 = vector.shape_cast %17 : vector<1x80x112xbf16> to vector<80x112xbf16>
    %c3 = arith.constant 3 : index
    %c0_16 = arith.constant 0 : index
    %c0_17 = arith.constant 0 : index
    %19 = vector.load %arg2[%c3, %c0_16, %c0_17] : memref<9x112x160xbf16, #tpu.memory_space<vmem>>, vector<1x112x160xbf16>
    %20 = vector.shape_cast %19 : vector<1x112x160xbf16> to vector<112x160xbf16>
    %cst_18 = arith.constant dense<0.000000e+00> : vector<80x160xf32>
    %21 = tpu.matmul %18, %20, %cst_18 {dimension_numbers = #tpu.dot_dimension_numbers<[1], [0], [0], [1], [0, 0, 1, 1], [], []>} : vector<80x112xbf16>, vector<112x160xbf16>, vector<80x160xf32> -> vector<80x160xf32>
    %22 = arith.addf %16, %21 : vector<80x160xf32>
    %c0_19 = arith.constant 0 : index
    %c20 = arith.constant 20 : index
    %c0_20 = arith.constant 0 : index
    %23 = vector.load %arg1[%c0_19, %c20, %c0_20] : memref<1x120x112xbf16, #tpu.memory_space<vmem>>, vector<1x80x112xbf16>
    %24 = vector.shape_cast %23 : vector<1x80x112xbf16> to vector<80x112xbf16>
    %c4 = arith.constant 4 : index
    %c0_21 = arith.constant 0 : index
    %c0_22 = arith.constant 0 : index
    %25 = vector.load %arg2[%c4, %c0_21, %c0_22] : memref<9x112x160xbf16, #tpu.memory_space<vmem>>, vector<1x112x160xbf16>
    %26 = vector.shape_cast %25 : vector<1x112x160xbf16> to vector<112x160xbf16>
    %cst_23 = arith.constant dense<0.000000e+00> : vector<80x160xf32>
    %27 = tpu.matmul %24, %26, %cst_23 {dimension_numbers = #tpu.dot_dimension_numbers<[1], [0], [0], [1], [0, 0, 1, 1], [], []>} : vector<80x112xbf16>, vector<112x160xbf16>, vector<80x160xf32> -> vector<80x160xf32>
    %28 = arith.addf %22, %27 : vector<80x160xf32>
    %c0_24 = arith.constant 0 : index
    %c21 = arith.constant 21 : index
    %c0_25 = arith.constant 0 : index
    %29 = vector.load %arg1[%c0_24, %c21, %c0_25] : memref<1x120x112xbf16, #tpu.memory_space<vmem>>, vector<1x80x112xbf16>
    %30 = vector.shape_cast %29 : vector<1x80x112xbf16> to vector<80x112xbf16>
    %c5 = arith.constant 5 : index
    %c0_26 = arith.constant 0 : index
    %c0_27 = arith.constant 0 : index
    %31 = vector.load %arg2[%c5, %c0_26, %c0_27] : memref<9x112x160xbf16, #tpu.memory_space<vmem>>, vector<1x112x160xbf16>
    %32 = vector.shape_cast %31 : vector<1x112x160xbf16> to vector<112x160xbf16>
    %cst_28 = arith.constant dense<0.000000e+00> : vector<80x160xf32>
    %33 = tpu.matmul %30, %32, %cst_28 {dimension_numbers = #tpu.dot_dimension_numbers<[1], [0], [0], [1], [0, 0, 1, 1], [], []>} : vector<80x112xbf16>, vector<112x160xbf16>, vector<80x160xf32> -> vector<80x160xf32>
    %34 = arith.addf %28, %33 : vector<80x160xf32>
    %c0_29 = arith.constant 0 : index
    %c29 = arith.constant 29 : index
    %c0_30 = arith.constant 0 : index
    %35 = vector.load %arg1[%c0_29, %c29, %c0_30] : memref<1x120x112xbf16, #tpu.memory_space<vmem>>, vector<1x80x112xbf16>
    %36 = vector.shape_cast %35 : vector<1x80x112xbf16> to vector<80x112xbf16>
    %c6 = arith.constant 6 : index
    %c0_31 = arith.constant 0 : index
    %c0_32 = arith.constant 0 : index
    %37 = vector.load %arg2[%c6, %c0_31, %c0_32] : memref<9x112x160xbf16, #tpu.memory_space<vmem>>, vector<1x112x160xbf16>
    %38 = vector.shape_cast %37 : vector<1x112x160xbf16> to vector<112x160xbf16>
    %cst_33 = arith.constant dense<0.000000e+00> : vector<80x160xf32>
    %39 = tpu.matmul %36, %38, %cst_33 {dimension_numbers = #tpu.dot_dimension_numbers<[1], [0], [0], [1], [0, 0, 1, 1], [], []>} : vector<80x112xbf16>, vector<112x160xbf16>, vector<80x160xf32> -> vector<80x160xf32>
    %40 = arith.addf %34, %39 : vector<80x160xf32>
    %c0_34 = arith.constant 0 : index
    %c30 = arith.constant 30 : index
    %c0_35 = arith.constant 0 : index
    %41 = vector.load %arg1[%c0_34, %c30, %c0_35] : memref<1x120x112xbf16, #tpu.memory_space<vmem>>, vector<1x80x112xbf16>
    %42 = vector.shape_cast %41 : vector<1x80x112xbf16> to vector<80x112xbf16>
    %c7 = arith.constant 7 : index
    %c0_36 = arith.constant 0 : index
    %c0_37 = arith.constant 0 : index
    %43 = vector.load %arg2[%c7, %c0_36, %c0_37] : memref<9x112x160xbf16, #tpu.memory_space<vmem>>, vector<1x112x160xbf16>
    %44 = vector.shape_cast %43 : vector<1x112x160xbf16> to vector<112x160xbf16>
    %cst_38 = arith.constant dense<0.000000e+00> : vector<80x160xf32>
    %45 = tpu.matmul %42, %44, %cst_38 {dimension_numbers = #tpu.dot_dimension_numbers<[1], [0], [0], [1], [0, 0, 1, 1], [], []>} : vector<80x112xbf16>, vector<112x160xbf16>, vector<80x160xf32> -> vector<80x160xf32>
    %46 = arith.addf %40, %45 : vector<80x160xf32>
    %c0_39 = arith.constant 0 : index
    %c31 = arith.constant 31 : index
    %c0_40 = arith.constant 0 : index
    %47 = vector.load %arg1[%c0_39, %c31, %c0_40] : memref<1x120x112xbf16, #tpu.memory_space<vmem>>, vector<1x80x112xbf16>
    %48 = vector.shape_cast %47 : vector<1x80x112xbf16> to vector<80x112xbf16>
    %c8 = arith.constant 8 : index
    %c0_41 = arith.constant 0 : index
    %c0_42 = arith.constant 0 : index
    %49 = vector.load %arg2[%c8, %c0_41, %c0_42] : memref<9x112x160xbf16, #tpu.memory_space<vmem>>, vector<1x112x160xbf16>
    %50 = vector.shape_cast %49 : vector<1x112x160xbf16> to vector<112x160xbf16>
    %cst_43 = arith.constant dense<0.000000e+00> : vector<80x160xf32>
    %51 = tpu.matmul %48, %50, %cst_43 {dimension_numbers = #tpu.dot_dimension_numbers<[1], [0], [0], [1], [0, 0, 1, 1], [], []>} : vector<80x112xbf16>, vector<112x160xbf16>, vector<80x160xf32> -> vector<80x160xf32>
    %52 = arith.addf %46, %51 : vector<80x160xf32>
    %c0_44 = arith.constant 0 : index
    %c0_45 = arith.constant 0 : index
    %53 = vector.load %arg3[%c0_44, %c0_45] : memref<1x160xf32, #tpu.memory_space<vmem>>, vector<1x160xf32>
    %54 = vector.broadcast %53 : vector<1x160xf32> to vector<80x160xf32>
    %55 = arith.addf %52, %54 : vector<80x160xf32>
    %cst_46 = arith.constant 0.000000e+00 : f32
    %56 = vector.broadcast %cst_46 : f32 to vector<80x160xf32>
    %57 = arith.maximumf %55, %56 : vector<80x160xf32>
    %58 = arith.truncf %57 : vector<80x160xf32> to vector<80x160xbf16>
    %c0_47 = arith.constant 0 : index
    %c0_48 = arith.constant 0 : index
    %c0_49 = arith.constant 0 : index
    %59 = vector.load %arg4[%c0_47, %c0_48, %c0_49] : memref<1x80x160xbf16, #tpu.memory_space<vmem>>, vector<1x80x160xbf16>
    %60 = vector.shape_cast %59 : vector<1x80x160xbf16> to vector<80x160xbf16>
    %61 = vector.shape_cast %58 : vector<80x160xbf16> to vector<1x80x160xbf16>
    tpu.vector_store %arg4[%c0_47, %c0_48, %c0_49], %61 {strides = array<i32>} : memref<1x80x160xbf16, #tpu.memory_space<vmem>>, vector<1x80x160xbf16>,
    return
  }
  func.func @transform_0(%arg0: i32) -> (i32, i32, i32) {
    %c0_i32 = arith.constant 0 : i32
    %c0_i32_0 = arith.constant 0 : i32
    %c0_i32_1 = arith.constant 0 : i32
    return %arg0, %c0_i32, %c0_i32_0 : i32, i32, i32
  }
  func.func @transform_1(%arg0: i32) -> (i32, i32, i32) {
    %c0_i32 = arith.constant 0 : i32
    %c0_i32_0 = arith.constant 0 : i32
    %c0_i32_1 = arith.constant 0 : i32
    %c0_i32_2 = arith.constant 0 : i32
    return %c0_i32, %c0_i32_0, %c0_i32_1 : i32, i32, i32
  }
  func.func @transform_2(%arg0: i32) -> (i32, i32) {
    %c0_i32 = arith.constant 0 : i32
    %c0_i32_0 = arith.constant 0 : i32
    %c0_i32_1 = arith.constant 0 : i32
    return %c0_i32, %c0_i32_0 : i32, i32
  }
  func.func @transform_3(%arg0: i32) -> (i32, i32, i32) {
    %c0_i32 = arith.constant 0 : i32
    %c0_i32_0 = arith.constant 0 : i32
    %c0_i32_1 = arith.constant 0 : i32
    return %arg0, %c0_i32, %c0_i32_0 : i32, i32, i32
  }
}

module attributes {stable_mosaic.version = 11 : i64} {
  func.func @_temporal_kernel(%arg0: i32, %arg1: i32, %arg2: memref<1x1x80x160xbf16, #tpu.memory_space<vmem>>, %arg3: memref<1x1x80x160xbf16, #tpu.memory_space<vmem>>, %arg4: memref<1x1x80x160xbf16, #tpu.memory_space<vmem>>, %arg5: memref<3x160x160xbf16, #tpu.memory_space<vmem>>, %arg6: memref<1x160xf32, #tpu.memory_space<vmem>>, %arg7: memref<1x1x80x160xf32, #tpu.memory_space<vmem>>, %arg8: memref<80x160xf32, #tpu.memory_space<vmem>>) attributes {dimension_semantics = [#tpu.dimension_semantics<parallel>, #tpu.dimension_semantics<parallel>], iteration_bounds = array<i64: 2, 4>, scalar_prefetch = 0 : i64, scratch_operands = 1 : i64, tpu.core_type = #tpu.core_type<tc>, window_params = [{transform_indices = @transform_0, window_bounds = array<i64: 1, 1, 80, 160>}, {transform_indices = @transform_1, window_bounds = array<i64: 1, 1, 80, 160>}, {transform_indices = @transform_2, window_bounds = array<i64: 1, 1, 80, 160>}, {pipeline_mode = #tpu.pipeline_mode<synchronous>, transform_indices = @transform_3, window_bounds = array<i64: 3, 160, 160>}, {pipeline_mode = #tpu.pipeline_mode<synchronous>, transform_indices = @transform_4, window_bounds = array<i64: 1, 160>}, {transform_indices = @transform_5, window_bounds = array<i64: 1, 1, 80, 160>}]} {
    %c0 = arith.constant 0 : index
    %c0_0 = arith.constant 0 : index
    %c0_1 = arith.constant 0 : index
    %c0_2 = arith.constant 0 : index
    %0 = vector.load %arg3[%c0, %c0_0, %c0_1, %c0_2] : memref<1x1x80x160xbf16, #tpu.memory_space<vmem>>, vector<1x1x80x160xbf16>
    %1 = vector.shape_cast %0 : vector<1x1x80x160xbf16> to vector<80x160xbf16>
    %c1 = arith.constant 1 : index
    %c0_3 = arith.constant 0 : index
    %c0_4 = arith.constant 0 : index
    %2 = vector.load %arg5[%c1, %c0_3, %c0_4] : memref<3x160x160xbf16, #tpu.memory_space<vmem>>, vector<1x160x160xbf16>
    %3 = vector.shape_cast %2 : vector<1x160x160xbf16> to vector<160x160xbf16>
    %cst = arith.constant dense<0.000000e+00> : vector<80x160xf32>
    %4 = tpu.matmul %1, %3, %cst {dimension_numbers = #tpu.dot_dimension_numbers<[1], [0], [0], [1], [0, 0, 1, 1], [], []>} : vector<80x160xbf16>, vector<160x160xbf16>, vector<80x160xf32> -> vector<80x160xf32>
    %c0_5 = arith.constant 0 : index
    %c0_6 = arith.constant 0 : index
    %5 = vector.load %arg8[%c0_5, %c0_6] : memref<80x160xf32, #tpu.memory_space<vmem>>, vector<80x160xf32>
    tpu.vector_store %arg8[%c0_5, %c0_6], %4 {strides = array<i32>} : memref<80x160xf32, #tpu.memory_space<vmem>>, vector<80x160xf32>,
    %c0_i32 = arith.constant 0 : i32
    %6 = arith.cmpi sgt, %arg1, %c0_i32 : i32
    %7 = arith.extui %6 : i1 to i32
    %c0_i32_7 = arith.constant 0 : i32
    %8 = arith.cmpi ne, %7, %c0_i32_7 : i32
    scf.if %8 {
      %c0_18 = arith.constant 0 : index
      %c0_19 = arith.constant 0 : index
      %21 = vector.load %arg8[%c0_18, %c0_19] : memref<80x160xf32, #tpu.memory_space<vmem>>, vector<80x160xf32>
      %c0_20 = arith.constant 0 : index
      %c0_21 = arith.constant 0 : index
      %c0_22 = arith.constant 0 : index
      %c0_23 = arith.constant 0 : index
      %22 = vector.load %arg2[%c0_20, %c0_21, %c0_22, %c0_23] : memref<1x1x80x160xbf16, #tpu.memory_space<vmem>>, vector<1x1x80x160xbf16>
      %23 = vector.shape_cast %22 : vector<1x1x80x160xbf16> to vector<80x160xbf16>
      %c0_24 = arith.constant 0 : index
      %c0_25 = arith.constant 0 : index
      %c0_26 = arith.constant 0 : index
      %24 = vector.load %arg5[%c0_24, %c0_25, %c0_26] : memref<3x160x160xbf16, #tpu.memory_space<vmem>>, vector<1x160x160xbf16>
      %25 = vector.shape_cast %24 : vector<1x160x160xbf16> to vector<160x160xbf16>
      %cst_27 = arith.constant dense<0.000000e+00> : vector<80x160xf32>
      %26 = tpu.matmul %23, %25, %cst_27 {dimension_numbers = #tpu.dot_dimension_numbers<[1], [0], [0], [1], [0, 0, 1, 1], [], []>} : vector<80x160xbf16>, vector<160x160xbf16>, vector<80x160xf32> -> vector<80x160xf32>
      %27 = arith.addf %21, %26 : vector<80x160xf32>
      %c0_28 = arith.constant 0 : index
      %c0_29 = arith.constant 0 : index
      %28 = vector.load %arg8[%c0_28, %c0_29] : memref<80x160xf32, #tpu.memory_space<vmem>>, vector<80x160xf32>
      tpu.vector_store %arg8[%c0_28, %c0_29], %27 {strides = array<i32>} : memref<80x160xf32, #tpu.memory_space<vmem>>, vector<80x160xf32>,
    } else {
    }
    %c3_i32 = arith.constant 3 : i32
    %9 = arith.cmpi slt, %arg1, %c3_i32 : i32
    %10 = arith.extui %9 : i1 to i32
    %c0_i32_8 = arith.constant 0 : i32
    %11 = arith.cmpi ne, %10, %c0_i32_8 : i32
    scf.if %11 {
      %c0_18 = arith.constant 0 : index
      %c0_19 = arith.constant 0 : index
      %21 = vector.load %arg8[%c0_18, %c0_19] : memref<80x160xf32, #tpu.memory_space<vmem>>, vector<80x160xf32>
      %c0_20 = arith.constant 0 : index
      %c0_21 = arith.constant 0 : index
      %c0_22 = arith.constant 0 : index
      %c0_23 = arith.constant 0 : index
      %22 = vector.load %arg4[%c0_20, %c0_21, %c0_22, %c0_23] : memref<1x1x80x160xbf16, #tpu.memory_space<vmem>>, vector<1x1x80x160xbf16>
      %23 = vector.shape_cast %22 : vector<1x1x80x160xbf16> to vector<80x160xbf16>
      %c2 = arith.constant 2 : index
      %c0_24 = arith.constant 0 : index
      %c0_25 = arith.constant 0 : index
      %24 = vector.load %arg5[%c2, %c0_24, %c0_25] : memref<3x160x160xbf16, #tpu.memory_space<vmem>>, vector<1x160x160xbf16>
      %25 = vector.shape_cast %24 : vector<1x160x160xbf16> to vector<160x160xbf16>
      %cst_26 = arith.constant dense<0.000000e+00> : vector<80x160xf32>
      %26 = tpu.matmul %23, %25, %cst_26 {dimension_numbers = #tpu.dot_dimension_numbers<[1], [0], [0], [1], [0, 0, 1, 1], [], []>} : vector<80x160xbf16>, vector<160x160xbf16>, vector<80x160xf32> -> vector<80x160xf32>
      %27 = arith.addf %21, %26 : vector<80x160xf32>
      %c0_27 = arith.constant 0 : index
      %c0_28 = arith.constant 0 : index
      %28 = vector.load %arg8[%c0_27, %c0_28] : memref<80x160xf32, #tpu.memory_space<vmem>>, vector<80x160xf32>
      tpu.vector_store %arg8[%c0_27, %c0_28], %27 {strides = array<i32>} : memref<80x160xf32, #tpu.memory_space<vmem>>, vector<80x160xf32>,
    } else {
    }
    %c0_9 = arith.constant 0 : index
    %c0_10 = arith.constant 0 : index
    %12 = vector.load %arg8[%c0_9, %c0_10] : memref<80x160xf32, #tpu.memory_space<vmem>>, vector<80x160xf32>
    %c0_11 = arith.constant 0 : index
    %c0_12 = arith.constant 0 : index
    %13 = vector.load %arg6[%c0_11, %c0_12] : memref<1x160xf32, #tpu.memory_space<vmem>>, vector<1x160xf32>
    %14 = vector.broadcast %13 : vector<1x160xf32> to vector<80x160xf32>
    %15 = arith.addf %12, %14 : vector<80x160xf32>
    %cst_13 = arith.constant 0.000000e+00 : f32
    %16 = vector.broadcast %cst_13 : f32 to vector<80x160xf32>
    %17 = arith.maximumf %15, %16 : vector<80x160xf32>
    %c0_14 = arith.constant 0 : index
    %c0_15 = arith.constant 0 : index
    %c0_16 = arith.constant 0 : index
    %c0_17 = arith.constant 0 : index
    %18 = vector.load %arg7[%c0_14, %c0_15, %c0_16, %c0_17] : memref<1x1x80x160xf32, #tpu.memory_space<vmem>>, vector<1x1x80x160xf32>
    %19 = vector.shape_cast %18 : vector<1x1x80x160xf32> to vector<80x160xf32>
    %20 = vector.shape_cast %17 : vector<80x160xf32> to vector<1x1x80x160xf32>
    tpu.vector_store %arg7[%c0_14, %c0_15, %c0_16, %c0_17], %20 {strides = array<i32>} : memref<1x1x80x160xf32, #tpu.memory_space<vmem>>, vector<1x1x80x160xf32>,
    return
  }
  func.func @transform_0(%arg0: i32, %arg1: i32) -> (i32, i32, i32, i32) {
    %c1_i32 = arith.constant 1 : i32
    %0 = arith.subi %arg1, %c1_i32 : i32
    %c0_i32 = arith.constant 0 : i32
    %1 = arith.maxsi %0, %c0_i32 : i32
    %c0_i32_0 = arith.constant 0 : i32
    %c0_i32_1 = arith.constant 0 : i32
    %c0_i32_2 = arith.constant 0 : i32
    return %arg0, %1, %c0_i32_0, %c0_i32_1 : i32, i32, i32, i32
  }
  func.func @transform_1(%arg0: i32, %arg1: i32) -> (i32, i32, i32, i32) {
    %c0_i32 = arith.constant 0 : i32
    %c0_i32_0 = arith.constant 0 : i32
    %c0_i32_1 = arith.constant 0 : i32
    return %arg0, %arg1, %c0_i32, %c0_i32_0 : i32, i32, i32, i32
  }
  func.func @transform_2(%arg0: i32, %arg1: i32) -> (i32, i32, i32, i32) {
    %c1_i32 = arith.constant 1 : i32
    %0 = arith.addi %arg1, %c1_i32 : i32
    %c3_i32 = arith.constant 3 : i32
    %1 = arith.minsi %0, %c3_i32 : i32
    %c0_i32 = arith.constant 0 : i32
    %c0_i32_0 = arith.constant 0 : i32
    %c0_i32_1 = arith.constant 0 : i32
    return %arg0, %1, %c0_i32, %c0_i32_0 : i32, i32, i32, i32
  }
  func.func @transform_3(%arg0: i32, %arg1: i32) -> (i32, i32, i32) {
    %c0_i32 = arith.constant 0 : i32
    %c0_i32_0 = arith.constant 0 : i32
    %c0_i32_1 = arith.constant 0 : i32
    %c0_i32_2 = arith.constant 0 : i32
    return %c0_i32, %c0_i32_0, %c0_i32_1 : i32, i32, i32
  }
  func.func @transform_4(%arg0: i32, %arg1: i32) -> (i32, i32) {
    %c0_i32 = arith.constant 0 : i32
    %c0_i32_0 = arith.constant 0 : i32
    %c0_i32_1 = arith.constant 0 : i32
    return %c0_i32, %c0_i32_0 : i32, i32
  }
  func.func @transform_5(%arg0: i32, %arg1: i32) -> (i32, i32, i32, i32) {
    %c0_i32 = arith.constant 0 : i32
    %c0_i32_0 = arith.constant 0 : i32
    %c0_i32_1 = arith.constant 0 : i32
    return %arg0, %arg1, %c0_i32, %c0_i32_0 : i32, i32, i32, i32
  }
}

module attributes {stable_mosaic.version = 11 : i64} {
  func.func @kernel(%arg0: i32, %arg1: i32, %arg2: memref<1x1x120x192xbf16, #tpu.memory_space<vmem>>, %arg3: memref<1x1x120x192xbf16, #tpu.memory_space<vmem>>, %arg4: memref<1x1x120x192xbf16, #tpu.memory_space<vmem>>, %arg5: memref<192x32xbf16, #tpu.memory_space<vmem>>, %arg6: memref<1x32xf32, #tpu.memory_space<vmem>>, %arg7: memref<1x1x80x32xf32, #tpu.memory_space<vmem>>, %arg8: memref<80x192xbf16, #tpu.memory_space<vmem>>) attributes {dimension_semantics = [#tpu.dimension_semantics<parallel>, #tpu.dimension_semantics<parallel>], iteration_bounds = array<i64: 2, 4>, scalar_prefetch = 0 : i64, scratch_operands = 1 : i64, tpu.core_type = #tpu.core_type<tc>, window_params = [{transform_indices = @transform_0, window_bounds = array<i64: 1, 1, 120, 192>}, {transform_indices = @transform_1, window_bounds = array<i64: 1, 1, 120, 192>}, {transform_indices = @transform_2, window_bounds = array<i64: 1, 1, 120, 192>}, {pipeline_mode = #tpu.pipeline_mode<synchronous>, transform_indices = @transform_3, window_bounds = array<i64: 192, 32>}, {pipeline_mode = #tpu.pipeline_mode<synchronous>, transform_indices = @transform_4, window_bounds = array<i64: 1, 32>}, {transform_indices = @transform_5, window_bounds = array<i64: 1, 1, 80, 32>}]} {
    %c0 = arith.constant 0 : index
    %c0_0 = arith.constant 0 : index
    %c9 = arith.constant 9 : index
    %c0_1 = arith.constant 0 : index
    %0 = vector.load %arg3[%c0, %c0_0, %c9, %c0_1] : memref<1x1x120x192xbf16, #tpu.memory_space<vmem>>, vector<1x1x80x192xbf16>
    %1 = vector.shape_cast %0 : vector<1x1x80x192xbf16> to vector<80x192xbf16>
    %c0_2 = arith.constant 0 : index
    %c0_3 = arith.constant 0 : index
    %c10 = arith.constant 10 : index
    %c0_4 = arith.constant 0 : index
    %2 = vector.load %arg3[%c0_2, %c0_3, %c10, %c0_4] : memref<1x1x120x192xbf16, #tpu.memory_space<vmem>>, vector<1x1x80x192xbf16>
    %3 = vector.shape_cast %2 : vector<1x1x80x192xbf16> to vector<80x192xbf16>
    %4 = arith.maximumf %1, %3 : vector<80x192xbf16>
    %c0_5 = arith.constant 0 : index
    %c0_6 = arith.constant 0 : index
    %c11 = arith.constant 11 : index
    %c0_7 = arith.constant 0 : index
    %5 = vector.load %arg3[%c0_5, %c0_6, %c11, %c0_7] : memref<1x1x120x192xbf16, #tpu.memory_space<vmem>>, vector<1x1x80x192xbf16>
    %6 = vector.shape_cast %5 : vector<1x1x80x192xbf16> to vector<80x192xbf16>
    %7 = arith.maximumf %4, %6 : vector<80x192xbf16>
    %c0_8 = arith.constant 0 : index
    %c0_9 = arith.constant 0 : index
    %c19 = arith.constant 19 : index
    %c0_10 = arith.constant 0 : index
    %8 = vector.load %arg3[%c0_8, %c0_9, %c19, %c0_10] : memref<1x1x120x192xbf16, #tpu.memory_space<vmem>>, vector<1x1x80x192xbf16>
    %9 = vector.shape_cast %8 : vector<1x1x80x192xbf16> to vector<80x192xbf16>
    %10 = arith.maximumf %7, %9 : vector<80x192xbf16>
    %c0_11 = arith.constant 0 : index
    %c0_12 = arith.constant 0 : index
    %c20 = arith.constant 20 : index
    %c0_13 = arith.constant 0 : index
    %11 = vector.load %arg3[%c0_11, %c0_12, %c20, %c0_13] : memref<1x1x120x192xbf16, #tpu.memory_space<vmem>>, vector<1x1x80x192xbf16>
    %12 = vector.shape_cast %11 : vector<1x1x80x192xbf16> to vector<80x192xbf16>
    %13 = arith.maximumf %10, %12 : vector<80x192xbf16>
    %c0_14 = arith.constant 0 : index
    %c0_15 = arith.constant 0 : index
    %c21 = arith.constant 21 : index
    %c0_16 = arith.constant 0 : index
    %14 = vector.load %arg3[%c0_14, %c0_15, %c21, %c0_16] : memref<1x1x120x192xbf16, #tpu.memory_space<vmem>>, vector<1x1x80x192xbf16>
    %15 = vector.shape_cast %14 : vector<1x1x80x192xbf16> to vector<80x192xbf16>
    %16 = arith.maximumf %13, %15 : vector<80x192xbf16>
    %c0_17 = arith.constant 0 : index
    %c0_18 = arith.constant 0 : index
    %c29 = arith.constant 29 : index
    %c0_19 = arith.constant 0 : index
    %17 = vector.load %arg3[%c0_17, %c0_18, %c29, %c0_19] : memref<1x1x120x192xbf16, #tpu.memory_space<vmem>>, vector<1x1x80x192xbf16>
    %18 = vector.shape_cast %17 : vector<1x1x80x192xbf16> to vector<80x192xbf16>
    %19 = arith.maximumf %16, %18 : vector<80x192xbf16>
    %c0_20 = arith.constant 0 : index
    %c0_21 = arith.constant 0 : index
    %c30 = arith.constant 30 : index
    %c0_22 = arith.constant 0 : index
    %20 = vector.load %arg3[%c0_20, %c0_21, %c30, %c0_22] : memref<1x1x120x192xbf16, #tpu.memory_space<vmem>>, vector<1x1x80x192xbf16>
    %21 = vector.shape_cast %20 : vector<1x1x80x192xbf16> to vector<80x192xbf16>
    %22 = arith.maximumf %19, %21 : vector<80x192xbf16>
    %c0_23 = arith.constant 0 : index
    %c0_24 = arith.constant 0 : index
    %c31 = arith.constant 31 : index
    %c0_25 = arith.constant 0 : index
    %23 = vector.load %arg3[%c0_23, %c0_24, %c31, %c0_25] : memref<1x1x120x192xbf16, #tpu.memory_space<vmem>>, vector<1x1x80x192xbf16>
    %24 = vector.shape_cast %23 : vector<1x1x80x192xbf16> to vector<80x192xbf16>
    %25 = arith.maximumf %22, %24 : vector<80x192xbf16>
    %c0_26 = arith.constant 0 : index
    %c0_27 = arith.constant 0 : index
    %26 = vector.load %arg8[%c0_26, %c0_27] : memref<80x192xbf16, #tpu.memory_space<vmem>>, vector<80x192xbf16>
    tpu.vector_store %arg8[%c0_26, %c0_27], %25 {strides = array<i32>} : memref<80x192xbf16, #tpu.memory_space<vmem>>, vector<80x192xbf16>,
    %c0_i32 = arith.constant 0 : i32
    %27 = arith.cmpi sgt, %arg1, %c0_i32 : i32
    %28 = arith.extui %27 : i1 to i32
    %c0_i32_28 = arith.constant 0 : i32
    %29 = arith.cmpi ne, %28, %c0_i32_28 : i32
    scf.if %29 {
      %c0_41 = arith.constant 0 : index
      %c0_42 = arith.constant 0 : index
      %44 = vector.load %arg8[%c0_41, %c0_42] : memref<80x192xbf16, #tpu.memory_space<vmem>>, vector<80x192xbf16>
      %c0_43 = arith.constant 0 : index
      %c0_44 = arith.constant 0 : index
      %c9_45 = arith.constant 9 : index
      %c0_46 = arith.constant 0 : index
      %45 = vector.load %arg2[%c0_43, %c0_44, %c9_45, %c0_46] : memref<1x1x120x192xbf16, #tpu.memory_space<vmem>>, vector<1x1x80x192xbf16>
      %46 = vector.shape_cast %45 : vector<1x1x80x192xbf16> to vector<80x192xbf16>
      %c0_47 = arith.constant 0 : index
      %c0_48 = arith.constant 0 : index
      %c10_49 = arith.constant 10 : index
      %c0_50 = arith.constant 0 : index
      %47 = vector.load %arg2[%c0_47, %c0_48, %c10_49, %c0_50] : memref<1x1x120x192xbf16, #tpu.memory_space<vmem>>, vector<1x1x80x192xbf16>
      %48 = vector.shape_cast %47 : vector<1x1x80x192xbf16> to vector<80x192xbf16>
      %49 = arith.maximumf %46, %48 : vector<80x192xbf16>
      %c0_51 = arith.constant 0 : index
      %c0_52 = arith.constant 0 : index
      %c11_53 = arith.constant 11 : index
      %c0_54 = arith.constant 0 : index
      %50 = vector.load %arg2[%c0_51, %c0_52, %c11_53, %c0_54] : memref<1x1x120x192xbf16, #tpu.memory_space<vmem>>, vector<1x1x80x192xbf16>
      %51 = vector.shape_cast %50 : vector<1x1x80x192xbf16> to vector<80x192xbf16>
      %52 = arith.maximumf %49, %51 : vector<80x192xbf16>
      %c0_55 = arith.constant 0 : index
      %c0_56 = arith.constant 0 : index
      %c19_57 = arith.constant 19 : index
      %c0_58 = arith.constant 0 : index
      %53 = vector.load %arg2[%c0_55, %c0_56, %c19_57, %c0_58] : memref<1x1x120x192xbf16, #tpu.memory_space<vmem>>, vector<1x1x80x192xbf16>
      %54 = vector.shape_cast %53 : vector<1x1x80x192xbf16> to vector<80x192xbf16>
      %55 = arith.maximumf %52, %54 : vector<80x192xbf16>
      %c0_59 = arith.constant 0 : index
      %c0_60 = arith.constant 0 : index
      %c20_61 = arith.constant 20 : index
      %c0_62 = arith.constant 0 : index
      %56 = vector.load %arg2[%c0_59, %c0_60, %c20_61, %c0_62] : memref<1x1x120x192xbf16, #tpu.memory_space<vmem>>, vector<1x1x80x192xbf16>
      %57 = vector.shape_cast %56 : vector<1x1x80x192xbf16> to vector<80x192xbf16>
      %58 = arith.maximumf %55, %57 : vector<80x192xbf16>
      %c0_63 = arith.constant 0 : index
      %c0_64 = arith.constant 0 : index
      %c21_65 = arith.constant 21 : index
      %c0_66 = arith.constant 0 : index
      %59 = vector.load %arg2[%c0_63, %c0_64, %c21_65, %c0_66] : memref<1x1x120x192xbf16, #tpu.memory_space<vmem>>, vector<1x1x80x192xbf16>
      %60 = vector.shape_cast %59 : vector<1x1x80x192xbf16> to vector<80x192xbf16>
      %61 = arith.maximumf %58, %60 : vector<80x192xbf16>
      %c0_67 = arith.constant 0 : index
      %c0_68 = arith.constant 0 : index
      %c29_69 = arith.constant 29 : index
      %c0_70 = arith.constant 0 : index
      %62 = vector.load %arg2[%c0_67, %c0_68, %c29_69, %c0_70] : memref<1x1x120x192xbf16, #tpu.memory_space<vmem>>, vector<1x1x80x192xbf16>
      %63 = vector.shape_cast %62 : vector<1x1x80x192xbf16> to vector<80x192xbf16>
      %64 = arith.maximumf %61, %63 : vector<80x192xbf16>
      %c0_71 = arith.constant 0 : index
      %c0_72 = arith.constant 0 : index
      %c30_73 = arith.constant 30 : index
      %c0_74 = arith.constant 0 : index
      %65 = vector.load %arg2[%c0_71, %c0_72, %c30_73, %c0_74] : memref<1x1x120x192xbf16, #tpu.memory_space<vmem>>, vector<1x1x80x192xbf16>
      %66 = vector.shape_cast %65 : vector<1x1x80x192xbf16> to vector<80x192xbf16>
      %67 = arith.maximumf %64, %66 : vector<80x192xbf16>
      %c0_75 = arith.constant 0 : index
      %c0_76 = arith.constant 0 : index
      %c31_77 = arith.constant 31 : index
      %c0_78 = arith.constant 0 : index
      %68 = vector.load %arg2[%c0_75, %c0_76, %c31_77, %c0_78] : memref<1x1x120x192xbf16, #tpu.memory_space<vmem>>, vector<1x1x80x192xbf16>
      %69 = vector.shape_cast %68 : vector<1x1x80x192xbf16> to vector<80x192xbf16>
      %70 = arith.maximumf %67, %69 : vector<80x192xbf16>
      %71 = arith.maximumf %44, %70 : vector<80x192xbf16>
      %c0_79 = arith.constant 0 : index
      %c0_80 = arith.constant 0 : index
      %72 = vector.load %arg8[%c0_79, %c0_80] : memref<80x192xbf16, #tpu.memory_space<vmem>>, vector<80x192xbf16>
      tpu.vector_store %arg8[%c0_79, %c0_80], %71 {strides = array<i32>} : memref<80x192xbf16, #tpu.memory_space<vmem>>, vector<80x192xbf16>,
    } else {
    }
    %c3_i32 = arith.constant 3 : i32
    %30 = arith.cmpi slt, %arg1, %c3_i32 : i32
    %31 = arith.extui %30 : i1 to i32
    %c0_i32_29 = arith.constant 0 : i32
    %32 = arith.cmpi ne, %31, %c0_i32_29 : i32
    scf.if %32 {
      %c0_41 = arith.constant 0 : index
      %c0_42 = arith.constant 0 : index
      %44 = vector.load %arg8[%c0_41, %c0_42] : memref<80x192xbf16, #tpu.memory_space<vmem>>, vector<80x192xbf16>
      %c0_43 = arith.constant 0 : index
      %c0_44 = arith.constant 0 : index
      %c9_45 = arith.constant 9 : index
      %c0_46 = arith.constant 0 : index
      %45 = vector.load %arg4[%c0_43, %c0_44, %c9_45, %c0_46] : memref<1x1x120x192xbf16, #tpu.memory_space<vmem>>, vector<1x1x80x192xbf16>
      %46 = vector.shape_cast %45 : vector<1x1x80x192xbf16> to vector<80x192xbf16>
      %c0_47 = arith.constant 0 : index
      %c0_48 = arith.constant 0 : index
      %c10_49 = arith.constant 10 : index
      %c0_50 = arith.constant 0 : index
      %47 = vector.load %arg4[%c0_47, %c0_48, %c10_49, %c0_50] : memref<1x1x120x192xbf16, #tpu.memory_space<vmem>>, vector<1x1x80x192xbf16>
      %48 = vector.shape_cast %47 : vector<1x1x80x192xbf16> to vector<80x192xbf16>
      %49 = arith.maximumf %46, %48 : vector<80x192xbf16>
      %c0_51 = arith.constant 0 : index
      %c0_52 = arith.constant 0 : index
      %c11_53 = arith.constant 11 : index
      %c0_54 = arith.constant 0 : index
      %50 = vector.load %arg4[%c0_51, %c0_52, %c11_53, %c0_54] : memref<1x1x120x192xbf16, #tpu.memory_space<vmem>>, vector<1x1x80x192xbf16>
      %51 = vector.shape_cast %50 : vector<1x1x80x192xbf16> to vector<80x192xbf16>
      %52 = arith.maximumf %49, %51 : vector<80x192xbf16>
      %c0_55 = arith.constant 0 : index
      %c0_56 = arith.constant 0 : index
      %c19_57 = arith.constant 19 : index
      %c0_58 = arith.constant 0 : index
      %53 = vector.load %arg4[%c0_55, %c0_56, %c19_57, %c0_58] : memref<1x1x120x192xbf16, #tpu.memory_space<vmem>>, vector<1x1x80x192xbf16>
      %54 = vector.shape_cast %53 : vector<1x1x80x192xbf16> to vector<80x192xbf16>
      %55 = arith.maximumf %52, %54 : vector<80x192xbf16>
      %c0_59 = arith.constant 0 : index
      %c0_60 = arith.constant 0 : index
      %c20_61 = arith.constant 20 : index
      %c0_62 = arith.constant 0 : index
      %56 = vector.load %arg4[%c0_59, %c0_60, %c20_61, %c0_62] : memref<1x1x120x192xbf16, #tpu.memory_space<vmem>>, vector<1x1x80x192xbf16>
      %57 = vector.shape_cast %56 : vector<1x1x80x192xbf16> to vector<80x192xbf16>
      %58 = arith.maximumf %55, %57 : vector<80x192xbf16>
      %c0_63 = arith.constant 0 : index
      %c0_64 = arith.constant 0 : index
      %c21_65 = arith.constant 21 : index
      %c0_66 = arith.constant 0 : index
      %59 = vector.load %arg4[%c0_63, %c0_64, %c21_65, %c0_66] : memref<1x1x120x192xbf16, #tpu.memory_space<vmem>>, vector<1x1x80x192xbf16>
      %60 = vector.shape_cast %59 : vector<1x1x80x192xbf16> to vector<80x192xbf16>
      %61 = arith.maximumf %58, %60 : vector<80x192xbf16>
      %c0_67 = arith.constant 0 : index
      %c0_68 = arith.constant 0 : index
      %c29_69 = arith.constant 29 : index
      %c0_70 = arith.constant 0 : index
      %62 = vector.load %arg4[%c0_67, %c0_68, %c29_69, %c0_70] : memref<1x1x120x192xbf16, #tpu.memory_space<vmem>>, vector<1x1x80x192xbf16>
      %63 = vector.shape_cast %62 : vector<1x1x80x192xbf16> to vector<80x192xbf16>
      %64 = arith.maximumf %61, %63 : vector<80x192xbf16>
      %c0_71 = arith.constant 0 : index
      %c0_72 = arith.constant 0 : index
      %c30_73 = arith.constant 30 : index
      %c0_74 = arith.constant 0 : index
      %65 = vector.load %arg4[%c0_71, %c0_72, %c30_73, %c0_74] : memref<1x1x120x192xbf16, #tpu.memory_space<vmem>>, vector<1x1x80x192xbf16>
      %66 = vector.shape_cast %65 : vector<1x1x80x192xbf16> to vector<80x192xbf16>
      %67 = arith.maximumf %64, %66 : vector<80x192xbf16>
      %c0_75 = arith.constant 0 : index
      %c0_76 = arith.constant 0 : index
      %c31_77 = arith.constant 31 : index
      %c0_78 = arith.constant 0 : index
      %68 = vector.load %arg4[%c0_75, %c0_76, %c31_77, %c0_78] : memref<1x1x120x192xbf16, #tpu.memory_space<vmem>>, vector<1x1x80x192xbf16>
      %69 = vector.shape_cast %68 : vector<1x1x80x192xbf16> to vector<80x192xbf16>
      %70 = arith.maximumf %67, %69 : vector<80x192xbf16>
      %71 = arith.maximumf %44, %70 : vector<80x192xbf16>
      %c0_79 = arith.constant 0 : index
      %c0_80 = arith.constant 0 : index
      %72 = vector.load %arg8[%c0_79, %c0_80] : memref<80x192xbf16, #tpu.memory_space<vmem>>, vector<80x192xbf16>
      tpu.vector_store %arg8[%c0_79, %c0_80], %71 {strides = array<i32>} : memref<80x192xbf16, #tpu.memory_space<vmem>>, vector<80x192xbf16>,
    } else {
    }
    %c0_30 = arith.constant 0 : index
    %c0_31 = arith.constant 0 : index
    %33 = vector.load %arg8[%c0_30, %c0_31] : memref<80x192xbf16, #tpu.memory_space<vmem>>, vector<80x192xbf16>
    %c0_32 = arith.constant 0 : index
    %c0_33 = arith.constant 0 : index
    %34 = vector.load %arg5[%c0_32, %c0_33] : memref<192x32xbf16, #tpu.memory_space<vmem>>, vector<192x32xbf16>
    %cst = arith.constant dense<0.000000e+00> : vector<80x32xf32>
    %35 = tpu.matmul %33, %34, %cst {dimension_numbers = #tpu.dot_dimension_numbers<[1], [0], [0], [1], [0, 0, 1, 1], [], []>} : vector<80x192xbf16>, vector<192x32xbf16>, vector<80x32xf32> -> vector<80x32xf32>
    %c0_34 = arith.constant 0 : index
    %c0_35 = arith.constant 0 : index
    %36 = vector.load %arg6[%c0_34, %c0_35] : memref<1x32xf32, #tpu.memory_space<vmem>>, vector<1x32xf32>
    %37 = vector.broadcast %36 : vector<1x32xf32> to vector<80x32xf32>
    %38 = arith.addf %35, %37 : vector<80x32xf32>
    %cst_36 = arith.constant 0.000000e+00 : f32
    %39 = vector.broadcast %cst_36 : f32 to vector<80x32xf32>
    %40 = arith.maximumf %38, %39 : vector<80x32xf32>
    %c0_37 = arith.constant 0 : index
    %c0_38 = arith.constant 0 : index
    %c0_39 = arith.constant 0 : index
    %c0_40 = arith.constant 0 : index
    %41 = vector.load %arg7[%c0_37, %c0_38, %c0_39, %c0_40] : memref<1x1x80x32xf32, #tpu.memory_space<vmem>>, vector<1x1x80x32xf32>
    %42 = vector.shape_cast %41 : vector<1x1x80x32xf32> to vector<80x32xf32>
    %43 = vector.shape_cast %40 : vector<80x32xf32> to vector<1x1x80x32xf32>
    tpu.vector_store %arg7[%c0_37, %c0_38, %c0_39, %c0_40], %43 {strides = array<i32>} : memref<1x1x80x32xf32, #tpu.memory_space<vmem>>, vector<1x1x80x32xf32>,
    return
  }
  func.func @transform_0(%arg0: i32, %arg1: i32) -> (i32, i32, i32, i32) {
    %c1_i32 = arith.constant 1 : i32
    %0 = arith.subi %arg1, %c1_i32 : i32
    %c0_i32 = arith.constant 0 : i32
    %1 = arith.maxsi %0, %c0_i32 : i32
    %c0_i32_0 = arith.constant 0 : i32
    %c0_i32_1 = arith.constant 0 : i32
    %c0_i32_2 = arith.constant 0 : i32
    return %arg0, %1, %c0_i32_0, %c0_i32_1 : i32, i32, i32, i32
  }
  func.func @transform_1(%arg0: i32, %arg1: i32) -> (i32, i32, i32, i32) {
    %c0_i32 = arith.constant 0 : i32
    %c0_i32_0 = arith.constant 0 : i32
    %c0_i32_1 = arith.constant 0 : i32
    return %arg0, %arg1, %c0_i32, %c0_i32_0 : i32, i32, i32, i32
  }
  func.func @transform_2(%arg0: i32, %arg1: i32) -> (i32, i32, i32, i32) {
    %c1_i32 = arith.constant 1 : i32
    %0 = arith.addi %arg1, %c1_i32 : i32
    %c3_i32 = arith.constant 3 : i32
    %1 = arith.minsi %0, %c3_i32 : i32
    %c0_i32 = arith.constant 0 : i32
    %c0_i32_0 = arith.constant 0 : i32
    %c0_i32_1 = arith.constant 0 : i32
    return %arg0, %1, %c0_i32, %c0_i32_0 : i32, i32, i32, i32
  }
  func.func @transform_3(%arg0: i32, %arg1: i32) -> (i32, i32) {
    %c0_i32 = arith.constant 0 : i32
    %c0_i32_0 = arith.constant 0 : i32
    %c0_i32_1 = arith.constant 0 : i32
    return %c0_i32, %c0_i32_0 : i32, i32
  }
  func.func @transform_4(%arg0: i32, %arg1: i32) -> (i32, i32) {
    %c0_i32 = arith.constant 0 : i32
    %c0_i32_0 = arith.constant 0 : i32
    %c0_i32_1 = arith.constant 0 : i32
    return %c0_i32, %c0_i32_0 : i32, i32
  }
  func.func @transform_5(%arg0: i32, %arg1: i32) -> (i32, i32, i32, i32) {
    %c0_i32 = arith.constant 0 : i32
    %c0_i32_0 = arith.constant 0 : i32
    %c0_i32_1 = arith.constant 0 : i32
    return %arg0, %arg1, %c0_i32, %c0_i32_0 : i32, i32, i32, i32
  }
}

</mosaic_0001>

<llo_original>
// kernel: mixed_3b_forward.4
$region0: #{mixed_3b_forward.4}
  #allocation0 [shape = 'u32[]', space=smem, size = 0x4, offset = 0x4, fixed_abs, tag = 'smem constant byte address 0x4 - core index']
  #allocation1 [shape = 'u32[72,128]{1,0:T(1,128)}', space=vmem, size = 0x9000, scoped, tag = 'internal scratch']
  %s0 = inlined_call_operand.vmem [shape: bf16[512,192], index: 0, kind: input, shape index: {}]
  %s1 = inlined_call_operand.vmem [shape: bf16[192,256], index: 1, kind: input, shape index: {}]
  %s2 = inlined_call_operand.vmem [shape: f32[1,256], index: 2, kind: input, shape index: {}]
  %s3 = inlined_call_operand.vmem [shape: bf16[512,256], index: 3, kind: output, shape index: {}]
  %s4 = sld [smem:[#allocation0]]
  $region45: #{mixed_3b_forward.4} parent=0
    _
  %s6 = ssub.s32 1, %s4
  %s7 = scalar_select 0, %s6, %s4
  loop: start=0, step=1, limit=6
  $region2: #{mixed_3b_forward.4} parent=0 // loop_pre_header
    _
  $region3: #{mixed_3b_forward.4} parent=0 // loop_header
    %s9 = sphi 0, %s13
    %p10 = scmp.ge.s32.totalorder %s9, 6
    %s19 = sphi 0, %s21
    %s22 = sphi 0, %s19
    %s23 = sphi 0, %s22
    %s39 = sphi 0, %s23
    %s43 = sphi 0, %s43
    %s45 = sphi 0, %s43
    %s46 = sphi 0, %s45
    %s60 = sphi 0, %s46
    %s64 = sphi 0, %s64
    %s66 = sphi 0, %s64
    %s67 = sphi 0, %s66
    %s81 = sphi 0, %s67
    %s87 = sphi 0, %s89
    %s90 = sphi 0, %s87
    %s91 = sphi 0, %s90
    %s107 = sphi 0, %s91
  $region4: #{mixed_3b_forward.4} parent=0 // loop_header_branch
    %12 = sbr.rel (%p10) target = $region8
  $region5: #{mixed_3b_forward.4} parent=0 // loop_body
    %s14 = ssub.s32 %s9, 1
    %s15 = ssub.s32 %s9, 2
    %s16 = sadd.s32 %s9, 1
    %s17 = ssub.s32 %s9, %s16
    %p18 = scmp.eq.s32.totalorder %s17, 0
    %s20 = sadd.s32 %s19, 1
    %s21 = scalar_select %p18, %s19, %s20
    %p24 = pneg %p18
    %p25 = scmp.eq.s32.totalorder %s9, 3
    %p26 = por %p24, %p25
    %p27 = scmp.ne.s32.totalorder %s19, %s22
    %p28 = scmp.eq.s32.totalorder %s9, 0
    %p29 = por %p27, %p28
    %p30 = scmp.ne.s32.totalorder %s19, %s22
    %p31 = scmp.eq.s32.totalorder %s14, 3
    %p32 = por %p30, %p31
    %p33 = scmp.ne.s32.totalorder %s22, %s23
    %p34 = scmp.eq.s32.totalorder %s14, 0
    %p35 = por %p33, %p34
    %p36 = scmp.ne.s32.totalorder %s22, %s23
    %p37 = scmp.eq.s32.totalorder %s15, 3
    %p38 = por %p36, %p37
    %p40 = scmp.ne.s32.totalorder %s23, %s39
    %p41 = scmp.eq.s32.totalorder %s15, 0
    %p42 = por %p40, %p41
    %s44 = sadd.s32 %s43, 1
    %p47 = scmp.eq.s32.totalorder %s9, 3
    %p48 = scmp.ne.s32.totalorder %s43, %s45
    %p49 = scmp.eq.s32.totalorder %s9, 0
    %p50 = por %p48, %p49
    %p51 = scmp.ne.s32.totalorder %s43, %s45
    %p52 = scmp.eq.s32.totalorder %s14, 3
    %p53 = por %p51, %p52
    %p54 = scmp.ne.s32.totalorder %s45, %s46
    %p55 = scmp.eq.s32.totalorder %s14, 0
    %p56 = por %p54, %p55
    %p57 = scmp.ne.s32.totalorder %s45, %s46
    %p58 = scmp.eq.s32.totalorder %s15, 3
    %p59 = por %p57, %p58
    %p61 = scmp.ne.s32.totalorder %s46, %s60
    %p62 = scmp.eq.s32.totalorder %s15, 0
    %p63 = por %p61, %p62
    %s65 = sadd.s32 %s64, 1
    %p68 = scmp.eq.s32.totalorder %s9, 3
    %p69 = scmp.ne.s32.totalorder %s64, %s66
    %p70 = scmp.eq.s32.totalorder %s9, 0
    %p71 = por %p69, %p70
    %p72 = scmp.ne.s32.totalorder %s64, %s66
    %p73 = scmp.eq.s32.totalorder %s14, 3
    %p74 = por %p72, %p73
    %p75 = scmp.ne.s32.totalorder %s66, %s67
    %p76 = scmp.eq.s32.totalorder %s14, 0
    %p77 = por %p75, %p76
    %p78 = scmp.ne.s32.totalorder %s66, %s67
    %p79 = scmp.eq.s32.totalorder %s15, 3
    %p80 = por %p78, %p79
    %p82 = scmp.ne.s32.totalorder %s67, %s81
    %p83 = scmp.eq.s32.totalorder %s15, 0
    %p84 = por %p82, %p83
    %s85 = ssub.s32 %s9, %s16
    %p86 = scmp.eq.s32.totalorder %s85, 0
    %s88 = sadd.s32 %s87, 1
    %s89 = scalar_select %p86, %s87, %s88
    %p92 = pneg %p86
    %p93 = scmp.eq.s32.totalorder %s9, 3
    %p94 = por %p92, %p93
    %p95 = scmp.ne.s32.totalorder %s87, %s90
    %p96 = scmp.eq.s32.totalorder %s9, 0
    %p97 = por %p95, %p96
    %p98 = scmp.ne.s32.totalorder %s87, %s90
    %p99 = scmp.eq.s32.totalorder %s14, 3
    %p100 = por %p98, %p99
    %p101 = scmp.ne.s32.totalorder %s90, %s91
    %p102 = scmp.eq.s32.totalorder %s14, 0
    %p103 = por %p101, %p102
    %p104 = scmp.ne.s32.totalorder %s90, %s91
    %p105 = scmp.eq.s32.totalorder %s15, 3
    %p106 = por %p104, %p105
    %p108 = scmp.ne.s32.totalorder %s91, %s107
    %p109 = scmp.eq.s32.totalorder %s15, 0
    %p110 = por %p108, %p109
    %p111 = scmp.le.s32.totalorder 1, %s9
    %p112 = scmp.lt.s32.totalorder %s9, 5
    %p113 = pnand %p111, %p112
    %p114 = pneg %p113
    // Predicated region
    $region9: #{mixed_3b_forward.4} parent=5 // pred_check
      _
    $region10: #{mixed_3b_forward.4} parent=5 // pred_check_branch
      %116 = sbr.rel (%p113) target = $region12
    $region11: #{mixed_3b_forward.4} parent=5 // pred_region
      %s117 = ssub.s32 %s9, 1
      // Predicated region
      $region13: #{mixed_3b_forward.4} parent=11 // pred_check
        %p118 = pneg %p56
      $region14: #{mixed_3b_forward.4} parent=11 // pred_check_branch
        %120 = sbr.rel (%p118) target = $region16
      $region15: #{mixed_3b_forward.4} parent=11 // pred_region
        _
      $region16: #{mixed_3b_forward.4} parent=11 // pred_fallthru
        _
      // Predicated region
      $region17: #{mixed_3b_forward.4} parent=11 // pred_check
        %p121 = pneg %p77
      $region18: #{mixed_3b_forward.4} parent=11 // pred_check_branch
        %123 = sbr.rel (%p121) target = $region20
      $region19: #{mixed_3b_forward.4} parent=11 // pred_region
        _
      $region20: #{mixed_3b_forward.4} parent=11 // pred_fallthru
        _
    $region12: #{mixed_3b_forward.4} parent=5 // pred_fallthru
      _
    %p124 = scmp.lt.s32.totalorder %s9, 4
    // Predicated region
    $region21: #{mixed_3b_forward.4} parent=5 // pred_check
      %p125 = pneg %p124
    $region22: #{mixed_3b_forward.4} parent=5 // pred_check_branch
      %127 = sbr.rel (%p125) target = $region24
    $region23: #{mixed_3b_forward.4} parent=5 // pred_region
      // Predicated region
      $region25: #{mixed_3b_forward.4} parent=23 // pred_check
        %p128 = pneg %p29
      $region26: #{mixed_3b_forward.4} parent=23 // pred_check_branch
        %130 = sbr.rel (%p128) target = $region28
      $region27: #{mixed_3b_forward.4} parent=23 // pred_region
        %s131 = smul.u32 16, %s9
        %p132 = scmp.lt.s32.totalorder %s131, 63
        %s133 = scalar_select %p132, %s131, 63
        %s134 = smul.addr %s133, 2
        %s135 = smul.addr %s134, 4
        %s136 = scalar_lea.vmem %s0, %s135
        %s137 = smul.u32 16, %s9
      $region28: #{mixed_3b_forward.4} parent=23 // pred_fallthru
        _
    $region24: #{mixed_3b_forward.4} parent=5 // pred_fallthru
      _
    %p138 = scmp.le.s32.totalorder 1, %s9
    %p139 = scmp.lt.s32.totalorder %s9, 5
    %p140 = pnand %p138, %p139
    %p141 = pneg %p140
    // Predicated region
    $region29: #{mixed_3b_forward.4} parent=5 // pred_check
      _
    $region30: #{mixed_3b_forward.4} parent=5 // pred_check_branch
      %143 = sbr.rel (%p140) target = $region32
    $region31: #{mixed_3b_forward.4} parent=5 // pred_region
      %s144 = ssub.s32 %s9, 1
      %s145 = smul.u32 16, %s14
      %p146 = scmp.lt.s32.totalorder %s145, 63
      %s147 = scalar_select %p146, %s145, 63
      %s148 = smul.addr %s147, 2
      %s149 = smul.addr %s148, 4
      %s150 = scalar_lea.vmem %s0, %s149
      %p151 = pneg %p35
      %p152 = pneg %p32
      %p153 = pneg %p56
      %p154 = pneg %p53
      %p155 = pneg %p77
      %p156 = pneg %p74
      %p157 = pneg %p103
      %p158 = pneg %p100
      %s159 = smul.u32 16, %s14
      %p160 = scmp.lt.s32.totalorder %s159, 63
      %s161 = scalar_select %p160, %s159, 63
      %s162 = smul.addr %s161, 2
      %s163 = smul.addr %s162, 4
      %s164 = scalar_lea.vmem %s3, %s163
      %s165 = smul.u32 16, %s14
      %p166 = scmp.lt.s32.totalorder %s165, 63
      %s167 = scalar_select %p166, %s165, 63
      %s168 = smul.addr %s167, 2
      %s169 = smul.addr %s168, 4
      %s170 = scalar_lea.vmem %s0, %s169
      %s171 = smul.u32 16, %s14
      %s172 = smul.u32 16, %s14
      %p173 = scmp.lt.s32.totalorder %s172, 63
      %s174 = scalar_select %p173, %s172, 63
      %s175 = smul.addr %s174, 2
      %s176 = smul.addr %s175, 4
      %s177 = scalar_lea.vmem %s3, %s176
      %s178 = smul.u32 16, %s14
      %v180 = vld [vmem:[%s170] sm:$0xff]
      %v181 = vld [vmem:[%s170 + $0x8] sm:$0xff]
      %v182 = vld [vmem:[%s170 + $0x10] sm:$0xff]
      %v183 = vld [vmem:[%s170 + $0x18] sm:$0xff]
      %v184 = vld [vmem:[%s170 + $0x20] sm:$0xff]
      %v185 = vld [vmem:[%s170 + $0x28] sm:$0xff]
      %v186 = vld [vmem:[%s170 + $0x30] sm:$0xff]
      %v187 = vld [vmem:[%s170 + $0x38] sm:$0xff]
      %v188 = vld [vmem:[%s170 + $0x40] sm:$0xff]
      %v189 = vld [vmem:[%s170 + $0x48] sm:$0xff]
      %v190 = vld [vmem:[%s170 + $0x50] sm:$0xff]
      %v191 = vld [vmem:[%s170 + $0x58] sm:$0xff]
      %v192 = vld [vmem:[%s170 + $0x60] sm:$0xff]
      %v193 = vld [vmem:[%s170 + $0x68] sm:$0xff]
      %v194 = vld [vmem:[%s170 + $0x70] sm:$0xff]
      %v195 = vld [vmem:[%s170 + $0x78] sm:$0xff]
      %v196 = vld [vmem:[%s1] sm:$0xff]
      %v197 = vld [vmem:[%s1 + $0x8] sm:$0xff]
      %v198 = vld [vmem:[%s1 + $0x10] sm:$0xff]
      %v199 = vld [vmem:[%s1 + $0x18] sm:$0xff]
      %v200 = vld [vmem:[%s1 + $0x20] sm:$0xff]
      %v201 = vld [vmem:[%s1 + $0x28] sm:$0xff]
      %v202 = vld [vmem:[%s1 + $0x30] sm:$0xff]
      %v203 = vld [vmem:[%s1 + $0x38] sm:$0xff]
      %v204 = vld [vmem:[%s1 + $0x40] sm:$0xff]
      %v205 = vld [vmem:[%s1 + $0x48] sm:$0xff]
      %v206 = vld [vmem:[%s1 + $0x50] sm:$0xff]
      %v207 = vld [vmem:[%s1 + $0x58] sm:$0xff]
      %v208 = vld [vmem:[%s1 + $0x60] sm:$0xff]
      %v209 = vld [vmem:[%s1 + $0x68] sm:$0xff]
      %v210 = vld [vmem:[%s1 + $0x70] sm:$0xff]
      %v211 = vld [vmem:[%s1 + $0x78] sm:$0xff]
      %v212 = vld [vmem:[%s1 + $0x80] sm:$0xff]
      %v213 = vld [vmem:[%s1 + $0x88] sm:$0xff]
      %v214 = vld [vmem:[%s1 + $0x90] sm:$0xff]
      %v215 = vld [vmem:[%s1 + $0x98] sm:$0xff]
      %v216 = vld [vmem:[%s1 + $0xa0] sm:$0xff]
      %v217 = vld [vmem:[%s1 + $0xa8] sm:$0xff]
      %v218 = vld [vmem:[%s1 + $0xb0] sm:$0xff]
      %v219 = vld [vmem:[%s1 + $0xb8] sm:$0xff]
      %v220 = vld [vmem:[%s2] sm:$0x3]
      %v222 = vperm.slane %v220, 0
      %v223 = vperm.slane %v220, 1
      %v242 = vunpack.c.l.b16 %v180
      %v243 = vunpack.c.h.b16 %v180
      %v244 = vunpack.c.l.b16 %v181
      %v245 = vunpack.c.h.b16 %v181
      %v246 = vunpack.c.l.b16 %v182
      %v247 = vunpack.c.h.b16 %v182
      %v248 = vunpack.c.l.b16 %v183
      %v249 = vunpack.c.h.b16 %v183
      %v250 = vunpack.c.l.b16 %v184
      %v251 = vunpack.c.h.b16 %v184
      %v252 = vunpack.c.l.b16 %v185
      %v253 = vunpack.c.h.b16 %v185
      %v254 = vunpack.c.l.b16 %v186
      %v255 = vunpack.c.h.b16 %v186
      %v256 = vunpack.c.l.b16 %v187
      %v257 = vunpack.c.h.b16 %v187
      %v258 = vunpack.c.l.b16 %v188
      %v259 = vunpack.c.h.b16 %v188
      %v260 = vunpack.c.l.b16 %v189
      %v261 = vunpack.c.h.b16 %v189
      %v262 = vunpack.c.l.b16 %v190
      %v263 = vunpack.c.h.b16 %v190
      %v264 = vunpack.c.l.b16 %v191
      %v265 = vunpack.c.h.b16 %v191
      %v266 = vunpack.c.l.b16 %v192
      %v267 = vunpack.c.h.b16 %v192
      %v268 = vunpack.c.l.b16 %v193
      %v269 = vunpack.c.h.b16 %v193
      %v270 = vunpack.c.l.b16 %v194
      %v271 = vunpack.c.h.b16 %v194
      %v272 = vunpack.c.l.b16 %v195
      %v273 = vunpack.c.h.b16 %v195
      %v274 = vpack.c.b16 %v244, %v242
      %v275 = vpack.c.b16 %v245, %v243
      %v276 = vpack.c.b16 %v248, %v246
      %v277 = vpack.c.b16 %v249, %v247
      %v278 = vpack.c.b16 %v252, %v250
      %v279 = vpack.c.b16 %v253, %v251
      %v280 = vpack.c.b16 %v256, %v254
      %v281 = vpack.c.b16 %v257, %v255
      %v282 = vpack.c.b16 %v260, %v258
      %v283 = vpack.c.b16 %v261, %v259
      %v284 = vpack.c.b16 %v264, %v262
      %v285 = vpack.c.b16 %v265, %v263
      %v286 = vpack.c.b16 %v268, %v266
      %v287 = vpack.c.b16 %v269, %v267
      %v288 = vpack.c.b16 %v272, %v270
      %v289 = vpack.c.b16 %v273, %v271
      %v322 = vunpack.c.l.b16 %v196
      %v323 = vunpack.c.h.b16 %v196
      %v324 = vunpack.c.l.b16 %v197
      %v325 = vunpack.c.h.b16 %v197
      %v326 = vunpack.c.l.b16 %v198
      %v327 = vunpack.c.h.b16 %v198
      %v328 = vunpack.c.l.b16 %v199
      %v329 = vunpack.c.h.b16 %v199
      %v330 = vunpack.c.l.b16 %v200
      %v331 = vunpack.c.h.b16 %v200
      %v332 = vunpack.c.l.b16 %v201
      %v333 = vunpack.c.h.b16 %v201
      %v334 = vunpack.c.l.b16 %v202
      %v335 = vunpack.c.h.b16 %v202
      %v336 = vunpack.c.l.b16 %v203
      %v337 = vunpack.c.h.b16 %v203
      %v338 = vunpack.c.l.b16 %v204
      %v339 = vunpack.c.h.b16 %v204
      %v340 = vunpack.c.l.b16 %v205
      %v341 = vunpack.c.h.b16 %v205
      %v342 = vunpack.c.l.b16 %v206
      %v343 = vunpack.c.h.b16 %v206
      %v344 = vunpack.c.l.b16 %v207
      %v345 = vunpack.c.h.b16 %v207
      %v346 = vunpack.c.l.b16 %v208
      %v347 = vunpack.c.h.b16 %v208
      %v348 = vunpack.c.l.b16 %v209
      %v349 = vunpack.c.h.b16 %v209
      %v350 = vunpack.c.l.b16 %v210
      %v351 = vunpack.c.h.b16 %v210
      %v352 = vunpack.c.l.b16 %v211
      %v353 = vunpack.c.h.b16 %v211
      %v354 = vunpack.c.l.b16 %v212
      %v355 = vunpack.c.h.b16 %v212
      %v356 = vunpack.c.l.b16 %v213
      %v357 = vunpack.c.h.b16 %v213
      %v358 = vunpack.c.l.b16 %v214
      %v359 = vunpack.c.h.b16 %v214
      %v360 = vunpack.c.l.b16 %v215
      %v361 = vunpack.c.h.b16 %v215
      %v362 = vunpack.c.l.b16 %v216
      %v363 = vunpack.c.h.b16 %v216
      %v364 = vunpack.c.l.b16 %v217
      %v365 = vunpack.c.h.b16 %v217
      %v366 = vunpack.c.l.b16 %v218
      %v367 = vunpack.c.h.b16 %v218
      %v368 = vunpack.c.l.b16 %v219
      %v369 = vunpack.c.h.b16 %v219
      %v370 = vpack.c.b16 %v324, %v322
      %v371 = vpack.c.b16 %v325, %v323
      %v372 = vpack.c.b16 %v328, %v326
      %v373 = vpack.c.b16 %v329, %v327
      %v374 = vpack.c.b16 %v332, %v330
      %v375 = vpack.c.b16 %v333, %v331
      %v376 = vpack.c.b16 %v336, %v334
      %v377 = vpack.c.b16 %v337, %v335
      %v378 = vpack.c.b16 %v340, %v338
      %v379 = vpack.c.b16 %v341, %v339
      %v380 = vpack.c.b16 %v344, %v342
      %v381 = vpack.c.b16 %v345, %v343
      %v382 = vpack.c.b16 %v348, %v346
      %v383 = vpack.c.b16 %v349, %v347
      %v384 = vpack.c.b16 %v352, %v350
      %v385 = vpack.c.b16 %v353, %v351
      %v386 = vpack.c.b16 %v356, %v354
      %v387 = vpack.c.b16 %v357, %v355
      %v388 = vpack.c.b16 %v360, %v358
      %v389 = vpack.c.b16 %v361, %v359
      %v390 = vpack.c.b16 %v364, %v362
      %v391 = vpack.c.b16 %v365, %v363
      %v392 = vpack.c.b16 %v368, %v366
      %v393 = vpack.c.b16 %v369, %v367
      %vm418 = vcmask 523264
      %v420 = vsel %vm418, %v275, 0
      %v423 = vsel %vm418, %v277, 0
      %v426 = vsel %vm418, %v279, 0
      %v429 = vsel %vm418, %v281, 0
      %v432 = vsel %vm418, %v283, 0
      %v435 = vsel %vm418, %v285, 0
      %v438 = vsel %vm418, %v287, 0
      %v441 = vsel %vm418, %v289, 0
      %443 = vmatpush.bf16.msra.mxu0 %v384
      %444 = vmatpush.bf16.msra.mxu0 %v382
      %445 = vmatpush.bf16.msra.mxu0 %v380
      %446 = vmatpush.bf16.msra.mxu0 %v378
      %447 = vmatpush.bf16.msra.mxu0 %v376
      %448 = vmatpush.bf16.msra.mxu0 %v374
      %449 = vmatpush.bf16.msra.mxu0 %v372
      %450 = vmatpush.bf16.msra.mxu0 %v370
      %451 = vmatmul.bf16.gmra.mxu0 %v274
      %v452 = vpop.f32.mrf.mxu0
      %v453 = vadd.f32 %v222, %v452
      %v454 = vpop.f32.mrf.mxu0
      %v455 = vadd.f32 %v222, %v454
      %456 = vmatmul.bf16.gmra.mxu0 %v276
      %v457 = vpop.f32.mrf.mxu0
      %v458 = vadd.f32 %v222, %v457
      %v459 = vpop.f32.mrf.mxu0
      %v460 = vadd.f32 %v222, %v459
      %461 = vmatmul.bf16.gmra.mxu0 %v278
      %v462 = vpop.f32.mrf.mxu0
      %v463 = vadd.f32 %v222, %v462
      %v464 = vpop.f32.mrf.mxu0
      %v465 = vadd.f32 %v222, %v464
      %466 = vmatmul.bf16.gmra.mxu0 %v280
      %v467 = vpop.f32.mrf.mxu0
      %v468 = vadd.f32 %v222, %v467
      %v469 = vpop.f32.mrf.mxu0
      %v470 = vadd.f32 %v222, %v469
      %471 = vmatmul.bf16.gmra.mxu0 %v282
      %v472 = vpop.f32.mrf.mxu0
      %v473 = vadd.f32 %v222, %v472
      %v474 = vpop.f32.mrf.mxu0
      %v475 = vadd.f32 %v222, %v474
      %476 = vmatmul.bf16.gmra.mxu0 %v284
      %v477 = vpop.f32.mrf.mxu0
      %v478 = vadd.f32 %v222, %v477
      %v479 = vpop.f32.mrf.mxu0
      %v480 = vadd.f32 %v222, %v479
      %481 = vmatmul.bf16.gmra.mxu0 %v286
      %v482 = vpop.f32.mrf.mxu0
      %v483 = vadd.f32 %v222, %v482
      %v484 = vpop.f32.mrf.mxu0
      %v485 = vadd.f32 %v222, %v484
      %486 = vmatmul.bf16.gmra.mxu0 %v288
      %v487 = vpop.f32.mrf.mxu0
      %v488 = vadd.f32 %v222, %v487
      %v489 = vpop.f32.mrf.mxu0
      %v490 = vadd.f32 %v222, %v489
      %491 = vdwg.mxu0
      %492 = vmatpush.bf16.msra.mxu0 0
      %493 = vmatpush.bf16.msra.mxu0 0
      %494 = vmatpush.bf16.msra.mxu0 0
      %495 = vmatpush.bf16.msra.mxu0 0
      %496 = vmatpush.bf16.msra.mxu0 %v392
      %497 = vmatpush.bf16.msra.mxu0 %v390
      %498 = vmatpush.bf16.msra.mxu0 %v388
      %499 = vmatpush.bf16.msra.mxu0 %v386
      %500 = vmatmul.bf16.gmra.mxu0 %v420
      %v501 = vpop.f32.mrf.mxu0
      %v502 = vadd.f32 %v453, %v501
      %v503 = vpop.f32.mrf.mxu0
      %v504 = vadd.f32 %v455, %v503
      %505 = vmatmul.bf16.gmra.mxu0 %v423
      %v506 = vpop.f32.mrf.mxu0
      %v507 = vadd.f32 %v458, %v506
      %v508 = vpop.f32.mrf.mxu0
      %v509 = vadd.f32 %v460, %v508
      %510 = vmatmul.bf16.gmra.mxu0 %v426
      %v511 = vpop.f32.mrf.mxu0
      %v512 = vadd.f32 %v463, %v511
      %v513 = vpop.f32.mrf.mxu0
      %v514 = vadd.f32 %v465, %v513
      %515 = vmatmul.bf16.gmra.mxu0 %v429
      %v516 = vpop.f32.mrf.mxu0
      %v517 = vadd.f32 %v468, %v516
      %v518 = vpop.f32.mrf.mxu0
      %v519 = vadd.f32 %v470, %v518
      %520 = vmatmul.bf16.gmra.mxu0 %v432
      %v521 = vpop.f32.mrf.mxu0
      %v522 = vadd.f32 %v473, %v521
      %v523 = vpop.f32.mrf.mxu0
      %v524 = vadd.f32 %v475, %v523
      %525 = vmatmul.bf16.gmra.mxu0 %v435
      %v526 = vpop.f32.mrf.mxu0
      %v527 = vadd.f32 %v478, %v526
      %v528 = vpop.f32.mrf.mxu0
      %v529 = vadd.f32 %v480, %v528
      %530 = vmatmul.bf16.gmra.mxu0 %v438
      %v531 = vpop.f32.mrf.mxu0
      %v532 = vadd.f32 %v483, %v531
      %v533 = vpop.f32.mrf.mxu0
      %v534 = vadd.f32 %v485, %v533
      %535 = vmatmul.bf16.gmra.mxu0 %v441
      %v536 = vpop.f32.mrf.mxu0
      %v537 = vadd.f32 %v488, %v536
      %v538 = vpop.f32.mrf.mxu0
      %v539 = vadd.f32 %v490, %v538
      %540 = vdwg.mxu0
      %541 = vmatpush.bf16.msra.mxu0 %v385
      %542 = vmatpush.bf16.msra.mxu0 %v383
      %543 = vmatpush.bf16.msra.mxu0 %v381
      %544 = vmatpush.bf16.msra.mxu0 %v379
      %545 = vmatpush.bf16.msra.mxu0 %v377
      %546 = vmatpush.bf16.msra.mxu0 %v375
      %547 = vmatpush.bf16.msra.mxu0 %v373
      %548 = vmatpush.bf16.msra.mxu0 %v371
      %549 = vmatmul.bf16.gmra.mxu0 %v274
      %v550 = vpop.f32.mrf.mxu0
      %v551 = vadd.f32 %v223, %v550
      %v552 = vpop.f32.mrf.mxu0
      %v553 = vadd.f32 %v223, %v552
      %554 = vmatmul.bf16.gmra.mxu0 %v276
      %v555 = vpop.f32.mrf.mxu0
      %v556 = vadd.f32 %v223, %v555
      %v557 = vpop.f32.mrf.mxu0
      %v558 = vadd.f32 %v223, %v557
      %559 = vmatmul.bf16.gmra.mxu0 %v278
      %v560 = vpop.f32.mrf.mxu0
      %v561 = vadd.f32 %v223, %v560
      %v562 = vpop.f32.mrf.mxu0
      %v563 = vadd.f32 %v223, %v562
      %564 = vmatmul.bf16.gmra.mxu0 %v280
      %v565 = vpop.f32.mrf.mxu0
      %v566 = vadd.f32 %v223, %v565
      %v567 = vpop.f32.mrf.mxu0
      %v568 = vadd.f32 %v223, %v567
      %569 = vmatmul.bf16.gmra.mxu0 %v282
      %v570 = vpop.f32.mrf.mxu0
      %v571 = vadd.f32 %v223, %v570
      %v572 = vpop.f32.mrf.mxu0
      %v573 = vadd.f32 %v223, %v572
      %574 = vmatmul.bf16.gmra.mxu0 %v284
      %v575 = vpop.f32.mrf.mxu0
      %v576 = vadd.f32 %v223, %v575
      %v577 = vpop.f32.mrf.mxu0
      %v578 = vadd.f32 %v223, %v577
      %579 = vmatmul.bf16.gmra.mxu0 %v286
      %v580 = vpop.f32.mrf.mxu0
      %v581 = vadd.f32 %v223, %v580
      %v582 = vpop.f32.mrf.mxu0
      %v583 = vadd.f32 %v223, %v582
      %584 = vmatmul.bf16.gmra.mxu0 %v288
      %v585 = vpop.f32.mrf.mxu0
      %v586 = vadd.f32 %v223, %v585
      %v587 = vpop.f32.mrf.mxu0
      %v588 = vadd.f32 %v223, %v587
      %589 = vdwg.mxu0
      %590 = vmatpush.bf16.msra.mxu0 0
      %591 = vmatpush.bf16.msra.mxu0 0
      %592 = vmatpush.bf16.msra.mxu0 0
      %593 = vmatpush.bf16.msra.mxu0 0
      %594 = vmatpush.bf16.msra.mxu0 %v393
      %595 = vmatpush.bf16.msra.mxu0 %v391
      %596 = vmatpush.bf16.msra.mxu0 %v389
      %597 = vmatpush.bf16.msra.mxu0 %v387
      %598 = vmatmul.bf16.gmra.mxu0 %v420
      %v599 = vpop.f32.mrf.mxu0
      %v600 = vadd.f32 %v551, %v599
      %v601 = vpop.f32.mrf.mxu0
      %v602 = vadd.f32 %v553, %v601
      %603 = vmatmul.bf16.gmra.mxu0 %v423
      %v604 = vpop.f32.mrf.mxu0
      %v605 = vadd.f32 %v556, %v604
      %v606 = vpop.f32.mrf.mxu0
      %v607 = vadd.f32 %v558, %v606
      %608 = vmatmul.bf16.gmra.mxu0 %v426
      %v609 = vpop.f32.mrf.mxu0
      %v610 = vadd.f32 %v561, %v609
      %v611 = vpop.f32.mrf.mxu0
      %v612 = vadd.f32 %v563, %v611
      %613 = vmatmul.bf16.gmra.mxu0 %v429
      %v614 = vpop.f32.mrf.mxu0
      %v615 = vadd.f32 %v566, %v614
      %v616 = vpop.f32.mrf.mxu0
      %v617 = vadd.f32 %v568, %v616
      %618 = vmatmul.bf16.gmra.mxu0 %v432
      %v619 = vpop.f32.mrf.mxu0
      %v620 = vadd.f32 %v571, %v619
      %v621 = vpop.f32.mrf.mxu0
      %v622 = vadd.f32 %v573, %v621
      %623 = vmatmul.bf16.gmra.mxu0 %v435
      %v624 = vpop.f32.mrf.mxu0
      %v625 = vadd.f32 %v576, %v624
      %v626 = vpop.f32.mrf.mxu0
      %v627 = vadd.f32 %v578, %v626
      %628 = vmatmul.bf16.gmra.mxu0 %v438
      %v629 = vpop.f32.mrf.mxu0
      %v630 = vadd.f32 %v581, %v629
      %v631 = vpop.f32.mrf.mxu0
      %v632 = vadd.f32 %v583, %v631
      %633 = vmatmul.bf16.gmra.mxu0 %v441
      %v634 = vpop.f32.mrf.mxu0
      %v635 = vadd.f32 %v586, %v634
      %v636 = vpop.f32.mrf.mxu0
      %v637 = vadd.f32 %v588, %v636
      %638 = vdwg.mxu0
      %v639 = vmax.f32 %v502, 0.0
      %v640 = vmax.f32 %v600, 0.0
      %v641 = vmax.f32 %v504, 0.0
      %v642 = vmax.f32 %v602, 0.0
      %v643 = vmax.f32 %v507, 0.0
      %v644 = vmax.f32 %v605, 0.0
      %v645 = vmax.f32 %v509, 0.0
      %v646 = vmax.f32 %v607, 0.0
      %v647 = vmax.f32 %v512, 0.0
      %v648 = vmax.f32 %v610, 0.0
      %v649 = vmax.f32 %v514, 0.0
      %v650 = vmax.f32 %v612, 0.0
      %v651 = vmax.f32 %v517, 0.0
      %v652 = vmax.f32 %v615, 0.0
      %v653 = vmax.f32 %v519, 0.0
      %v654 = vmax.f32 %v617, 0.0
      %v655 = vmax.f32 %v522, 0.0
      %v656 = vmax.f32 %v620, 0.0
      %v657 = vmax.f32 %v524, 0.0
      %v658 = vmax.f32 %v622, 0.0
      %v659 = vmax.f32 %v527, 0.0
      %v660 = vmax.f32 %v625, 0.0
      %v661 = vmax.f32 %v529, 0.0
      %v662 = vmax.f32 %v627, 0.0
      %v663 = vmax.f32 %v532, 0.0
      %v664 = vmax.f32 %v630, 0.0
      %v665 = vmax.f32 %v534, 0.0
      %v666 = vmax.f32 %v632, 0.0
      %v667 = vmax.f32 %v537, 0.0
      %v668 = vmax.f32 %v635, 0.0
      %v669 = vmax.f32 %v539, 0.0
      %v670 = vmax.f32 %v637, 0.0
      %v671 = vpack.c.bf16 %v640, %v639
      %v672 = vpack.c.bf16 %v642, %v641
      %v673 = vpack.c.bf16 %v644, %v643
      %v674 = vpack.c.bf16 %v646, %v645
      %v675 = vpack.c.bf16 %v648, %v647
      %v676 = vpack.c.bf16 %v650, %v649
      %v677 = vpack.c.bf16 %v652, %v651
      %v678 = vpack.c.bf16 %v654, %v653
      %v679 = vpack.c.bf16 %v656, %v655
      %v680 = vpack.c.bf16 %v658, %v657
      %v681 = vpack.c.bf16 %v660, %v659
      %v682 = vpack.c.bf16 %v662, %v661
      %v683 = vpack.c.bf16 %v664, %v663
      %v684 = vpack.c.bf16 %v666, %v665
      %v685 = vpack.c.bf16 %v668, %v667
      %v686 = vpack.c.bf16 %v670, %v669
      %687 = vst [vmem:[%s177] sm:$0xff] %v671
      %688 = vst [vmem:[%s177 + $0x8] sm:$0xff] %v672
      %689 = vst [vmem:[%s177 + $0x10] sm:$0xff] %v673
      %690 = vst [vmem:[%s177 + $0x18] sm:$0xff] %v674
      %691 = vst [vmem:[%s177 + $0x20] sm:$0xff] %v675
      %692 = vst [vmem:[%s177 + $0x28] sm:$0xff] %v676
      %693 = vst [vmem:[%s177 + $0x30] sm:$0xff] %v677
      %694 = vst [vmem:[%s177 + $0x38] sm:$0xff] %v678
      %695 = vst [vmem:[%s177 + $0x40] sm:$0xff] %v679
      %696 = vst [vmem:[%s177 + $0x48] sm:$0xff] %v680
      %697 = vst [vmem:[%s177 + $0x50] sm:$0xff] %v681
      %698 = vst [vmem:[%s177 + $0x58] sm:$0xff] %v682
      %699 = vst [vmem:[%s177 + $0x60] sm:$0xff] %v683
      %700 = vst [vmem:[%s177 + $0x68] sm:$0xff] %v684
      %701 = vst [vmem:[%s177 + $0x70] sm:$0xff] %v685
      %702 = vst [vmem:[%s177 + $0x78] sm:$0xff] %v686
      %s703 = smul.u32 16, %s14
      %p704 = scmp.lt.s32.totalorder %s703, 63
      %s705 = scalar_select %p704, %s703, 63
      %s706 = smul.addr %s705, 2
      %s707 = smul.addr %s706, 4
      %s708 = scalar_lea.vmem %s3, %s707
      // Predicated region
      $region33: #{mixed_3b_forward.4} parent=31 // pred_check
        %p709 = pneg %p100
      $region34: #{mixed_3b_forward.4} parent=31 // pred_check_branch
        %711 = sbr.rel (%p709) target = $region36
      $region35: #{mixed_3b_forward.4} parent=31 // pred_region
        %s712 = smul.u32 16, %s14
      $region36: #{mixed_3b_forward.4} parent=31 // pred_fallthru
        _
    $region32: #{mixed_3b_forward.4} parent=5 // pred_fallthru
      _
    %p713 = scmp.le.s32.totalorder 2, %s9
    // Predicated region
    $region37: #{mixed_3b_forward.4} parent=5 // pred_check
      %p714 = pneg %p713
    $region38: #{mixed_3b_forward.4} parent=5 // pred_check_branch
      %716 = sbr.rel (%p714) target = $region40
    $region39: #{mixed_3b_forward.4} parent=5 // pred_region
      %s717 = ssub.s32 %s9, 2
      // Predicated region
      $region41: #{mixed_3b_forward.4} parent=39 // pred_check
        %p718 = pneg %p106
      $region42: #{mixed_3b_forward.4} parent=39 // pred_check_branch
        %720 = sbr.rel (%p718) target = $region44
      $region43: #{mixed_3b_forward.4} parent=39 // pred_region
        %s721 = smul.u32 16, %s15
        %p722 = scmp.lt.s32.totalorder %s721, 63
        %s723 = scalar_select %p722, %s721, 63
        %s724 = smul.addr %s723, 2
        %s725 = smul.addr %s724, 4
        %s726 = scalar_lea.vmem %s3, %s725
      $region44: #{mixed_3b_forward.4} parent=39 // pred_fallthru
        _
    $region40: #{mixed_3b_forward.4} parent=5 // pred_fallthru
      _
  $region6: #{mixed_3b_forward.4} parent=0 // loop_footer
    %s13 = sadd.s32 1, %s9
  $region7: #{mixed_3b_forward.4} parent=0 // loop_footer_branch
    %8 = sbr.rel target = $region3
  $region8: #{mixed_3b_forward.4} parent=0 // loop_exit
    _

// kernel: mixed_3b_forward.6
$region0: #{mixed_3b_forward.6}
  #allocation0 [shape = 'u32[]', space=smem, size = 0x4, offset = 0x4, fixed_abs, tag = 'smem constant byte address 0x4 - core index']
  #allocation1 [shape = 'u32[72,128]{1,0:T(1,128)}', space=vmem, size = 0x9000, scoped, tag = 'internal scratch']
  #allocation2 [shape = 'f32[80,160]{1,0:T(8,128)}', space=vmem, size = 0x14000, scoped, tag = 'scratch operand']
  %s0 = inlined_call_operand.vmem [shape: bf16[2,4,80,160], index: 0, kind: input, shape index: {}, may-alias: {0,1,2}]
  %s1 = inlined_call_operand.vmem [shape: bf16[2,4,80,160], index: 1, kind: input, shape index: {}, may-alias: {0,1,2}]
  %s2 = inlined_call_operand.vmem [shape: bf16[2,4,80,160], index: 2, kind: input, shape index: {}, may-alias: {0,1,2}]
  %s3 = inlined_call_operand.vmem [shape: bf16[3,160,160], index: 3, kind: input, shape index: {}]
  %s4 = inlined_call_operand.vmem [shape: f32[1,160], index: 4, kind: input, shape index: {}]
  %s5 = inlined_call_operand.vmem [shape: f32[2,4,80,160], index: 5, kind: output, shape index: {}]
  %s6 = sld [smem:[#allocation0]]
  $region61: #{mixed_3b_forward.6} parent=0
    _
  %s8 = ssub.s32 1, %s6
  %s9 = scalar_select 0, %s8, %s6
  loop: start=0, step=1, limit=10
  $region2: #{mixed_3b_forward.6} parent=0 // loop_pre_header
    _
  $region3: #{mixed_3b_forward.6} parent=0 // loop_header
    %s11 = sphi 0, %s15
    %p12 = scmp.ge.s32.totalorder %s11, 10
    %s18 = sphi 0, %s30
    %s19 = sphi 0, %s26
    %s20 = sphi 0, %s18
    %s21 = sphi 0, %s19
    %s22 = sphi 0, %s20
    %s23 = sphi 0, %s21
    %s41 = sphi 0, %s43
    %s44 = sphi 0, %s41
    %s45 = sphi 0, %s44
    %s61 = sphi 0, %s45
    %s69 = sphi 0, %s71
    %s72 = sphi 0, %s69
    %s73 = sphi 0, %s72
    %s89 = sphi 0, %s73
    %s103 = sphi 0, %s105
    %s106 = sphi 0, %s103
    %s107 = sphi 0, %s106
    %s123 = sphi 0, %s107
    %s127 = sphi 0, %s127
    %s129 = sphi 0, %s127
    %s130 = sphi 0, %s129
    %s144 = sphi 0, %s130
    %s148 = sphi 0, %s148
    %s150 = sphi 0, %s148
    %s151 = sphi 0, %s150
    %s165 = sphi 0, %s151
    %s173 = sphi 0, %s175
    %s176 = sphi 0, %s173
    %s177 = sphi 0, %s176
    %s193 = sphi 0, %s177
  $region4: #{mixed_3b_forward.6} parent=0 // loop_header_branch
    %14 = sbr.rel (%p12) target = $region8
  $region5: #{mixed_3b_forward.6} parent=0 // loop_body
    %s16 = ssub.s32 %s11, 1
    %s17 = ssub.s32 %s11, 2
    %s24 = sadd.s32 1, %s19
    %p25 = scmp.ge.s32.totalorder %s24, 4
    %s26 = scalar_select %p25, 0, %s24
    %s27 = sadd.s32 1, %s18
    %s28 = scalar_select %p25, %s27, %s18
    %p29 = scmp.ge.s32.totalorder %s28, 2
    %s30 = scalar_select %p29, 0, %s28
    %s31 = ssub.s32 %s19, 1
    %p32 = scmp.gt.s32.totalorder %s31, 0
    %s33 = scalar_select %p32, %s31, 0
    %s34 = ssub.s32 %s26, 1
    %p35 = scmp.gt.s32.totalorder %s34, 0
    %s36 = scalar_select %p35, %s34, 0
    %s37 = ssub.s32 %s18, %s30
    %s38 = ssub.s32 %s33, %s36
    %s39 = sor.u32 %s37, %s38
    %p40 = scmp.eq.s32.totalorder %s39, 0
    %s42 = sadd.s32 %s41, 1
    %s43 = scalar_select %p40, %s41, %s42
    %p46 = pneg %p40
    %p47 = scmp.eq.s32.totalorder %s11, 7
    %p48 = por %p46, %p47
    %p49 = scmp.ne.s32.totalorder %s41, %s44
    %p50 = scmp.eq.s32.totalorder %s11, 0
    %p51 = por %p49, %p50
    %p52 = scmp.ne.s32.totalorder %s41, %s44
    %p53 = scmp.eq.s32.totalorder %s16, 7
    %p54 = por %p52, %p53
    %p55 = scmp.ne.s32.totalorder %s44, %s45
    %p56 = scmp.eq.s32.totalorder %s16, 0
    %p57 = por %p55, %p56
    %p58 = scmp.ne.s32.totalorder %s44, %s45
    %p59 = scmp.eq.s32.totalorder %s17, 7
    %p60 = por %p58, %p59
    %p62 = scmp.ne.s32.totalorder %s45, %s61
    %p63 = scmp.eq.s32.totalorder %s17, 0
    %p64 = por %p62, %p63
    %s65 = ssub.s32 %s18, %s30
    %s66 = ssub.s32 %s19, %s26
    %s67 = sor.u32 %s65, %s66
    %p68 = scmp.eq.s32.totalorder %s67, 0
    %s70 = sadd.s32 %s69, 1
    %s71 = scalar_select %p68, %s69, %s70
    %p74 = pneg %p68
    %p75 = scmp.eq.s32.totalorder %s11, 7
    %p76 = por %p74, %p75
    %p77 = scmp.ne.s32.totalorder %s69, %s72
    %p78 = scmp.eq.s32.totalorder %s11, 0
    %p79 = por %p77, %p78
    %p80 = scmp.ne.s32.totalorder %s69, %s72
    %p81 = scmp.eq.s32.totalorder %s16, 7
    %p82 = por %p80, %p81
    %p83 = scmp.ne.s32.totalorder %s72, %s73
    %p84 = scmp.eq.s32.totalorder %s16, 0
    %p85 = por %p83, %p84
    %p86 = scmp.ne.s32.totalorder %s72, %s73
    %p87 = scmp.eq.s32.totalorder %s17, 7
    %p88 = por %p86, %p87
    %p90 = scmp.ne.s32.totalorder %s73, %s89
    %p91 = scmp.eq.s32.totalorder %s17, 0
    %p92 = por %p90, %p91
    %s93 = sadd.s32 %s19, 1
    %p94 = scmp.lt.s32.totalorder %s93, 3
    %s95 = scalar_select %p94, %s93, 3
    %s96 = sadd.s32 %s26, 1
    %p97 = scmp.lt.s32.totalorder %s96, 3
    %s98 = scalar_select %p97, %s96, 3
    %s99 = ssub.s32 %s18, %s30
    %s100 = ssub.s32 %s95, %s98
    %s101 = sor.u32 %s99, %s100
    %p102 = scmp.eq.s32.totalorder %s101, 0
    %s104 = sadd.s32 %s103, 1
    %s105 = scalar_select %p102, %s103, %s104
    %p108 = pneg %p102
    %p109 = scmp.eq.s32.totalorder %s11, 7
    %p110 = por %p108, %p109
    %p111 = scmp.ne.s32.totalorder %s103, %s106
    %p112 = scmp.eq.s32.totalorder %s11, 0
    %p113 = por %p111, %p112
    %p114 = scmp.ne.s32.totalorder %s103, %s106
    %p115 = scmp.eq.s32.totalorder %s16, 7
    %p116 = por %p114, %p115
    %p117 = scmp.ne.s32.totalorder %s106, %s107
    %p118 = scmp.eq.s32.totalorder %s16, 0
    %p119 = por %p117, %p118
    %p120 = scmp.ne.s32.totalorder %s106, %s107
    %p121 = scmp.eq.s32.totalorder %s17, 7
    %p122 = por %p120, %p121
    %p124 = scmp.ne.s32.totalorder %s107, %s123
    %p125 = scmp.eq.s32.totalorder %s17, 0
    %p126 = por %p124, %p125
    %s128 = sadd.s32 %s127, 1
    %p131 = scmp.eq.s32.totalorder %s11, 7
    %p132 = scmp.ne.s32.totalorder %s127, %s129
    %p133 = scmp.eq.s32.totalorder %s11, 0
    %p134 = por %p132, %p133
    %p135 = scmp.ne.s32.totalorder %s127, %s129
    %p136 = scmp.eq.s32.totalorder %s16, 7
    %p137 = por %p135, %p136
    %p138 = scmp.ne.s32.totalorder %s129, %s130
    %p139 = scmp.eq.s32.totalorder %s16, 0
    %p140 = por %p138, %p139
    %p141 = scmp.ne.s32.totalorder %s129, %s130
    %p142 = scmp.eq.s32.totalorder %s17, 7
    %p143 = por %p141, %p142
    %p145 = scmp.ne.s32.totalorder %s130, %s144
    %p146 = scmp.eq.s32.totalorder %s17, 0
    %p147 = por %p145, %p146
    %s149 = sadd.s32 %s148, 1
    %p152 = scmp.eq.s32.totalorder %s11, 7
    %p153 = scmp.ne.s32.totalorder %s148, %s150
    %p154 = scmp.eq.s32.totalorder %s11, 0
    %p155 = por %p153, %p154
    %p156 = scmp.ne.s32.totalorder %s148, %s150
    %p157 = scmp.eq.s32.totalorder %s16, 7
    %p158 = por %p156, %p157
    %p159 = scmp.ne.s32.totalorder %s150, %s151
    %p160 = scmp.eq.s32.totalorder %s16, 0
    %p161 = por %p159, %p160
    %p162 = scmp.ne.s32.totalorder %s150, %s151
    %p163 = scmp.eq.s32.totalorder %s17, 7
    %p164 = por %p162, %p163
    %p166 = scmp.ne.s32.totalorder %s151, %s165
    %p167 = scmp.eq.s32.totalorder %s17, 0
    %p168 = por %p166, %p167
    %s169 = ssub.s32 %s18, %s30
    %s170 = ssub.s32 %s19, %s26
    %s171 = sor.u32 %s169, %s170
    %p172 = scmp.eq.s32.totalorder %s171, 0
    %s174 = sadd.s32 %s173, 1
    %s175 = scalar_select %p172, %s173, %s174
    %p178 = pneg %p172
    %p179 = scmp.eq.s32.totalorder %s11, 7
    %p180 = por %p178, %p179
    %p181 = scmp.ne.s32.totalorder %s173, %s176
    %p182 = scmp.eq.s32.totalorder %s11, 0
    %p183 = por %p181, %p182
    %p184 = scmp.ne.s32.totalorder %s173, %s176
    %p185 = scmp.eq.s32.totalorder %s16, 7
    %p186 = por %p184, %p185
    %p187 = scmp.ne.s32.totalorder %s176, %s177
    %p188 = scmp.eq.s32.totalorder %s16, 0
    %p189 = por %p187, %p188
    %p190 = scmp.ne.s32.totalorder %s176, %s177
    %p191 = scmp.eq.s32.totalorder %s17, 7
    %p192 = por %p190, %p191
    %p194 = scmp.ne.s32.totalorder %s177, %s193
    %p195 = scmp.eq.s32.totalorder %s17, 0
    %p196 = por %p194, %p195
    %p197 = scmp.le.s32.totalorder 1, %s11
    %p198 = scmp.lt.s32.totalorder %s11, 9
    %p199 = pnand %p197, %p198
    %p200 = pneg %p199
    // Predicated region
    $region9: #{mixed_3b_forward.6} parent=5 // pred_check
      _
    $region10: #{mixed_3b_forward.6} parent=5 // pred_check_branch
      %202 = sbr.rel (%p199) target = $region12
    $region11: #{mixed_3b_forward.6} parent=5 // pred_region
      %s203 = ssub.s32 %s11, 1
      // Predicated region
      $region13: #{mixed_3b_forward.6} parent=11 // pred_check
        %p204 = pneg %p140
      $region14: #{mixed_3b_forward.6} parent=11 // pred_check_branch
        %206 = sbr.rel (%p204) target = $region16
      $region15: #{mixed_3b_forward.6} parent=11 // pred_region
        _
      $region16: #{mixed_3b_forward.6} parent=11 // pred_fallthru
        _
      // Predicated region
      $region17: #{mixed_3b_forward.6} parent=11 // pred_check
        %p207 = pneg %p161
      $region18: #{mixed_3b_forward.6} parent=11 // pred_check_branch
        %209 = sbr.rel (%p207) target = $region20
      $region19: #{mixed_3b_forward.6} parent=11 // pred_region
        _
      $region20: #{mixed_3b_forward.6} parent=11 // pred_fallthru
        _
    $region12: #{mixed_3b_forward.6} parent=5 // pred_fallthru
      _
    %p210 = scmp.lt.s32.totalorder %s11, 8
    // Predicated region
    $region21: #{mixed_3b_forward.6} parent=5 // pred_check
      %p211 = pneg %p210
    $region22: #{mixed_3b_forward.6} parent=5 // pred_check_branch
      %213 = sbr.rel (%p211) target = $region24
    $region23: #{mixed_3b_forward.6} parent=5 // pred_region
      // Predicated region
      $region25: #{mixed_3b_forward.6} parent=23 // pred_check
        %p214 = pneg %p51
      $region26: #{mixed_3b_forward.6} parent=23 // pred_check_branch
        %216 = sbr.rel (%p214) target = $region28
      $region27: #{mixed_3b_forward.6} parent=23 // pred_region
        %s217 = ssub.s32 %s19, 1
        %p218 = scmp.gt.s32.totalorder %s217, 0
        %s219 = scalar_select %p218, %s217, 0
        %p220 = scmp.lt.s32.totalorder %s18, 1
        %s221 = scalar_select %p220, %s18, 1
        %p222 = scmp.lt.s32.totalorder %s219, 3
        %s223 = scalar_select %p222, %s219, 3
        %s224 = smul.addr %s223, 20
        %s225 = smul.addr %s221, 80
        %s226 = sadd.s32 %s224, %s225
        %s227 = smul.addr %s226, 4
        %s228 = scalar_lea.vmem %s0, %s227
        %s229 = ssub.s32 %s19, 1
        %p230 = scmp.gt.s32.totalorder %s229, 0
        %s231 = scalar_select %p230, %s229, 0
      $region28: #{mixed_3b_forward.6} parent=23 // pred_fallthru
        _
      // Predicated region
      $region29: #{mixed_3b_forward.6} parent=23 // pred_check
        %p232 = pneg %p79
      $region30: #{mixed_3b_forward.6} parent=23 // pred_check_branch
        %234 = sbr.rel (%p232) target = $region32
      $region31: #{mixed_3b_forward.6} parent=23 // pred_region
        %p235 = scmp.lt.s32.totalorder %s18, 1
        %s236 = scalar_select %p235, %s18, 1
        %p237 = scmp.lt.s32.totalorder %s19, 3
        %s238 = scalar_select %p237, %s19, 3
        %s239 = smul.addr %s238, 20
        %s240 = smul.addr %s236, 80
        %s241 = sadd.s32 %s239, %s240
        %s242 = smul.addr %s241, 4
        %s243 = scalar_lea.vmem %s1, %s242
      $region32: #{mixed_3b_forward.6} parent=23 // pred_fallthru
        _
      // Predicated region
      $region33: #{mixed_3b_forward.6} parent=23 // pred_check
        %p244 = pneg %p113
      $region34: #{mixed_3b_forward.6} parent=23 // pred_check_branch
        %246 = sbr.rel (%p244) target = $region36
      $region35: #{mixed_3b_forward.6} parent=23 // pred_region
        %s247 = sadd.s32 %s19, 1
        %p248 = scmp.lt.s32.totalorder %s247, 3
        %s249 = scalar_select %p248, %s247, 3
        %p250 = scmp.lt.s32.totalorder %s18, 1
        %s251 = scalar_select %p250, %s18, 1
        %p252 = scmp.lt.s32.totalorder %s249, 3
        %s253 = scalar_select %p252, %s249, 3
        %s254 = smul.addr %s253, 20
        %s255 = smul.addr %s251, 80
        %s256 = sadd.s32 %s254, %s255
        %s257 = smul.addr %s256, 4
        %s258 = scalar_lea.vmem %s2, %s257
        %s259 = sadd.s32 %s19, 1
        %p260 = scmp.lt.s32.totalorder %s259, 3
        %s261 = scalar_select %p260, %s259, 3
      $region36: #{mixed_3b_forward.6} parent=23 // pred_fallthru
        _
    $region24: #{mixed_3b_forward.6} parent=5 // pred_fallthru
      _
    %p262 = scmp.le.s32.totalorder 1, %s11
    %p263 = scmp.lt.s32.totalorder %s11, 9
    %p264 = pnand %p262, %p263
    %p265 = pneg %p264
    // Predicated region
    $region37: #{mixed_3b_forward.6} parent=5 // pred_check
      _
    $region38: #{mixed_3b_forward.6} parent=5 // pred_check_branch
      %267 = sbr.rel (%p264) target = $region40
    $region39: #{mixed_3b_forward.6} parent=5 // pred_region
      %s268 = ssub.s32 %s11, 1
      %s269 = ssub.s32 %s21, 1
      %p270 = scmp.gt.s32.totalorder %s269, 0
      %s271 = scalar_select %p270, %s269, 0
      %p272 = scmp.lt.s32.totalorder %s20, 1
      %s273 = scalar_select %p272, %s20, 1
      %p274 = scmp.lt.s32.totalorder %s271, 3
      %s275 = scalar_select %p274, %s271, 3
      %s276 = smul.addr %s275, 20
      %s277 = smul.addr %s273, 80
      %s278 = sadd.s32 %s276, %s277
      %s279 = smul.addr %s278, 4
      %s280 = scalar_lea.vmem %s0, %s279
      %p281 = pneg %p57
      %p282 = pneg %p54
      %p283 = scmp.lt.s32.totalorder %s20, 1
      %s284 = scalar_select %p283, %s20, 1
      %p285 = scmp.lt.s32.totalorder %s21, 3
      %s286 = scalar_select %p285, %s21, 3
      %s287 = smul.addr %s286, 20
      %s288 = smul.addr %s284, 80
      %s289 = sadd.s32 %s287, %s288
      %s290 = smul.addr %s289, 4
      %s291 = scalar_lea.vmem %s1, %s290
      %p292 = pneg %p85
      %p293 = pneg %p82
      %s294 = sadd.s32 %s21, 1
      %p295 = scmp.lt.s32.totalorder %s294, 3
      %s296 = scalar_select %p295, %s294, 3
      %p297 = scmp.lt.s32.totalorder %s20, 1
      %s298 = scalar_select %p297, %s20, 1
      %p299 = scmp.lt.s32.totalorder %s296, 3
      %s300 = scalar_select %p299, %s296, 3
      %s301 = smul.addr %s300, 20
      %s302 = smul.addr %s298, 80
      %s303 = sadd.s32 %s301, %s302
      %s304 = smul.addr %s303, 4
      %s305 = scalar_lea.vmem %s2, %s304
      %p306 = pneg %p119
      %p307 = pneg %p116
      %p308 = pneg %p140
      %p309 = pneg %p137
      %p310 = pneg %p161
      %p311 = pneg %p158
      %p312 = pneg %p189
      %p313 = pneg %p186
      %p314 = scmp.lt.s32.totalorder %s20, 1
      %s315 = scalar_select %p314, %s20, 1
      %p316 = scmp.lt.s32.totalorder %s21, 3
      %s317 = scalar_select %p316, %s21, 3
      %s318 = smul.addr %s317, 20
      %s319 = smul.addr %s315, 80
      %s320 = sadd.s32 %s318, %s319
      %s321 = smul.addr %s320, 8
      %s322 = scalar_lea.vmem %s5, %s321
      %s323 = ssub.s32 %s21, 1
      %p324 = scmp.gt.s32.totalorder %s323, 0
      %s325 = scalar_select %p324, %s323, 0
      %p326 = scmp.lt.s32.totalorder %s20, 1
      %s327 = scalar_select %p326, %s20, 1
      %p328 = scmp.lt.s32.totalorder %s325, 3
      %s329 = scalar_select %p328, %s325, 3
      %s330 = smul.addr %s329, 20
      %s331 = smul.addr %s327, 80
      %s332 = sadd.s32 %s330, %s331
      %s333 = smul.addr %s332, 4
      %s334 = scalar_lea.vmem %s0, %s333
      %s335 = ssub.s32 %s21, 1
      %p336 = scmp.gt.s32.totalorder %s335, 0
      %s337 = scalar_select %p336, %s335, 0
      %p338 = scmp.lt.s32.totalorder %s20, 1
      %s339 = scalar_select %p338, %s20, 1
      %p340 = scmp.lt.s32.totalorder %s21, 3
      %s341 = scalar_select %p340, %s21, 3
      %s342 = smul.addr %s341, 20
      %s343 = smul.addr %s339, 80
      %s344 = sadd.s32 %s342, %s343
      %s345 = smul.addr %s344, 4
      %s346 = scalar_lea.vmem %s1, %s345
      %s347 = sadd.s32 %s21, 1
      %p348 = scmp.lt.s32.totalorder %s347, 3
      %s349 = scalar_select %p348, %s347, 3
      %p350 = scmp.lt.s32.totalorder %s20, 1
      %s351 = scalar_select %p350, %s20, 1
      %p352 = scmp.lt.s32.totalorder %s349, 3
      %s353 = scalar_select %p352, %s349, 3
      %s354 = smul.addr %s353, 20
      %s355 = smul.addr %s351, 80
      %s356 = sadd.s32 %s354, %s355
      %s357 = smul.addr %s356, 4
      %s358 = scalar_lea.vmem %s2, %s357
      %s359 = sadd.s32 %s21, 1
      %p360 = scmp.lt.s32.totalorder %s359, 3
      %s361 = scalar_select %p360, %s359, 3
      %p362 = scmp.lt.s32.totalorder %s20, 1
      %s363 = scalar_select %p362, %s20, 1
      %p364 = scmp.lt.s32.totalorder %s21, 3
      %s365 = scalar_select %p364, %s21, 3
      %s366 = smul.addr %s365, 20
      %s367 = smul.addr %s363, 80
      %s368 = sadd.s32 %s366, %s367
      %s369 = smul.addr %s368, 8
      %s370 = scalar_lea.vmem %s5, %s369
      %v372 = vld [vmem:[%s346] sm:$0xff]
      %v373 = vld [vmem:[%s346 + $0x8] sm:$0xff]
      %v374 = vld [vmem:[%s346 + $0x10] sm:$0xff]
      %v375 = vld [vmem:[%s346 + $0x18] sm:$0xff]
      %v376 = vld [vmem:[%s346 + $0x20] sm:$0xff]
      %v377 = vld [vmem:[%s346 + $0x28] sm:$0xff]
      %v378 = vld [vmem:[%s346 + $0x30] sm:$0xff]
      %v379 = vld [vmem:[%s346 + $0x38] sm:$0xff]
      %v380 = vld [vmem:[%s346 + $0x40] sm:$0xff]
      %v381 = vld [vmem:[%s346 + $0x48] sm:$0xff]
      %s382 = scalar_lea.vmem %s3, 160
      %v383 = vld [vmem:[%s382] sm:$0xff]
      %v384 = vld [vmem:[%s382 + $0x8] sm:$0xff]
      %v385 = vld [vmem:[%s382 + $0x10] sm:$0xff]
      %v386 = vld [vmem:[%s382 + $0x18] sm:$0xff]
      %v387 = vld [vmem:[%s382 + $0x20] sm:$0xff]
      %v388 = vld [vmem:[%s382 + $0x28] sm:$0xff]
      %v389 = vld [vmem:[%s382 + $0x30] sm:$0xff]
      %v390 = vld [vmem:[%s382 + $0x38] sm:$0xff]
      %v391 = vld [vmem:[%s382 + $0x40] sm:$0xff]
      %v392 = vld [vmem:[%s382 + $0x48] sm:$0xff]
      %v393 = vld [vmem:[%s382 + $0x50] sm:$0xff]
      %v394 = vld [vmem:[%s382 + $0x58] sm:$0xff]
      %v395 = vld [vmem:[%s382 + $0x60] sm:$0xff]
      %v396 = vld [vmem:[%s382 + $0x68] sm:$0xff]
      %v397 = vld [vmem:[%s382 + $0x70] sm:$0xff]
      %v398 = vld [vmem:[%s382 + $0x78] sm:$0xff]
      %v399 = vld [vmem:[%s382 + $0x80] sm:$0xff]
      %v400 = vld [vmem:[%s382 + $0x88] sm:$0xff]
      %v401 = vld [vmem:[%s382 + $0x90] sm:$0xff]
      %v402 = vld [vmem:[%s382 + $0x98] sm:$0xff]
      %v413 = vunpack.c.l.b16 %v372
      %v414 = vunpack.c.h.b16 %v372
      %v415 = vunpack.c.l.b16 %v373
      %v416 = vunpack.c.h.b16 %v373
      %v417 = vunpack.c.l.b16 %v374
      %v418 = vunpack.c.h.b16 %v374
      %v419 = vunpack.c.l.b16 %v375
      %v420 = vunpack.c.h.b16 %v375
      %v421 = vunpack.c.l.b16 %v376
      %v422 = vunpack.c.h.b16 %v376
      %v423 = vunpack.c.l.b16 %v377
      %v424 = vunpack.c.h.b16 %v377
      %v425 = vunpack.c.l.b16 %v378
      %v426 = vunpack.c.h.b16 %v378
      %v427 = vunpack.c.l.b16 %v379
      %v428 = vunpack.c.h.b16 %v379
      %v429 = vunpack.c.l.b16 %v380
      %v430 = vunpack.c.h.b16 %v380
      %v431 = vunpack.c.l.b16 %v381
      %v432 = vunpack.c.h.b16 %v381
      %v433 = vpack.c.b16 %v415, %v413
      %v434 = vpack.c.b16 %v416, %v414
      %v435 = vpack.c.b16 %v419, %v417
      %v436 = vpack.c.b16 %v420, %v418
      %v437 = vpack.c.b16 %v423, %v421
      %v438 = vpack.c.b16 %v424, %v422
      %v439 = vpack.c.b16 %v427, %v425
      %v440 = vpack.c.b16 %v428, %v426
      %v441 = vpack.c.b16 %v431, %v429
      %v442 = vpack.c.b16 %v432, %v430
      %v468 = vunpack.c.l.b16 %v383
      %v469 = vunpack.c.h.b16 %v383
      %v470 = vunpack.c.l.b16 %v384
      %v471 = vunpack.c.h.b16 %v384
      %v472 = vunpack.c.l.b16 %v385
      %v473 = vunpack.c.h.b16 %v385
      %v474 = vunpack.c.l.b16 %v386
      %v475 = vunpack.c.h.b16 %v386
      %v476 = vunpack.c.l.b16 %v387
      %v477 = vunpack.c.h.b16 %v387
      %v478 = vunpack.c.l.b16 %v388
      %v479 = vunpack.c.h.b16 %v388
      %v480 = vunpack.c.l.b16 %v389
      %v481 = vunpack.c.h.b16 %v389
      %v482 = vunpack.c.l.b16 %v390
      %v483 = vunpack.c.h.b16 %v390
      %v484 = vunpack.c.l.b16 %v391
      %v485 = vunpack.c.h.b16 %v391
      %v486 = vunpack.c.l.b16 %v392
      %v487 = vunpack.c.h.b16 %v392
      %v488 = vunpack.c.l.b16 %v393
      %v489 = vunpack.c.h.b16 %v393
      %v490 = vunpack.c.l.b16 %v394
      %v491 = vunpack.c.h.b16 %v394
      %v492 = vunpack.c.l.b16 %v395
      %v493 = vunpack.c.h.b16 %v395
      %v494 = vunpack.c.l.b16 %v396
      %v495 = vunpack.c.h.b16 %v396
      %v496 = vunpack.c.l.b16 %v397
      %v497 = vunpack.c.h.b16 %v397
      %v498 = vunpack.c.l.b16 %v398
      %v499 = vunpack.c.h.b16 %v398
      %v500 = vunpack.c.l.b16 %v399
      %v501 = vunpack.c.h.b16 %v399
      %v502 = vunpack.c.l.b16 %v400
      %v503 = vunpack.c.h.b16 %v400
      %v504 = vunpack.c.l.b16 %v401
      %v505 = vunpack.c.h.b16 %v401
      %v506 = vunpack.c.l.b16 %v402
      %v507 = vunpack.c.h.b16 %v402
      %v508 = vpack.c.b16 %v470, %v468
      %v509 = vpack.c.b16 %v471, %v469
      %v510 = vpack.c.b16 %v474, %v472
      %v511 = vpack.c.b16 %v475, %v473
      %v512 = vpack.c.b16 %v478, %v476
      %v513 = vpack.c.b16 %v479, %v477
      %v514 = vpack.c.b16 %v482, %v480
      %v515 = vpack.c.b16 %v483, %v481
      %v516 = vpack.c.b16 %v486, %v484
      %v517 = vpack.c.b16 %v487, %v485
      %v518 = vpack.c.b16 %v490, %v488
      %v519 = vpack.c.b16 %v491, %v489
      %v520 = vpack.c.b16 %v494, %v492
      %v521 = vpack.c.b16 %v495, %v493
      %v522 = vpack.c.b16 %v498, %v496
      %v523 = vpack.c.b16 %v499, %v497
      %v524 = vpack.c.b16 %v502, %v500
      %v525 = vpack.c.b16 %v503, %v501
      %v526 = vpack.c.b16 %v506, %v504
      %v527 = vpack.c.b16 %v507, %v505
      %vm548 = vcmask 261120
      %v550 = vsel %vm548, %v434, 0
      %v553 = vsel %vm548, %v436, 0
      %v556 = vsel %vm548, %v438, 0
      %v559 = vsel %vm548, %v440, 0
      %v562 = vsel %vm548, %v442, 0
      %564 = vmatpush.bf16.msra.mxu0 %v522
      %565 = vmatpush.bf16.msra.mxu0 %v520
      %566 = vmatpush.bf16.msra.mxu0 %v518
      %567 = vmatpush.bf16.msra.mxu0 %v516
      %568 = vmatpush.bf16.msra.mxu0 %v514
      %569 = vmatpush.bf16.msra.mxu0 %v512
      %570 = vmatpush.bf16.msra.mxu0 %v510
      %571 = vmatpush.bf16.msra.mxu0 %v508
      %572 = vmatmul.bf16.gmra.mxu0 %v433
      %v573 = vpop.f32.mrf.mxu0
      %v574 = vadd.f32 0.0, %v573
      %v575 = vpop.f32.mrf.mxu0
      %v576 = vadd.f32 0.0, %v575
      %577 = vmatmul.bf16.gmra.mxu0 %v435
      %v578 = vpop.f32.mrf.mxu0
      %v579 = vadd.f32 0.0, %v578
      %v580 = vpop.f32.mrf.mxu0
      %v581 = vadd.f32 0.0, %v580
      %582 = vmatmul.bf16.gmra.mxu0 %v437
      %v583 = vpop.f32.mrf.mxu0
      %v584 = vadd.f32 0.0, %v583
      %v585 = vpop.f32.mrf.mxu0
      %v586 = vadd.f32 0.0, %v585
      %587 = vmatmul.bf16.gmra.mxu0 %v439
      %v588 = vpop.f32.mrf.mxu0
      %v589 = vadd.f32 0.0, %v588
      %v590 = vpop.f32.mrf.mxu0
      %v591 = vadd.f32 0.0, %v590
      %592 = vmatmul.bf16.gmra.mxu0 %v441
      %v593 = vpop.f32.mrf.mxu0
      %v594 = vadd.f32 0.0, %v593
      %v595 = vpop.f32.mrf.mxu0
      %v596 = vadd.f32 0.0, %v595
      %597 = vdwg.mxu0
      %598 = vmatpush.bf16.msra.mxu0 0
      %599 = vmatpush.bf16.msra.mxu0 0
      %600 = vmatpush.bf16.msra.mxu0 0
      %601 = vmatpush.bf16.msra.mxu0 0
      %602 = vmatpush.bf16.msra.mxu0 0
      %603 = vmatpush.bf16.msra.mxu0 0
      %604 = vmatpush.bf16.msra.mxu0 %v526
      %605 = vmatpush.bf16.msra.mxu0 %v524
      %606 = vmatmul.bf16.gmra.mxu0 %v550
      %v607 = vpop.f32.mrf.mxu0
      %v608 = vadd.f32 %v574, %v607
      %v609 = vpop.f32.mrf.mxu0
      %v610 = vadd.f32 %v576, %v609
      %611 = vmatmul.bf16.gmra.mxu0 %v553
      %v612 = vpop.f32.mrf.mxu0
      %v613 = vadd.f32 %v579, %v612
      %v614 = vpop.f32.mrf.mxu0
      %v615 = vadd.f32 %v581, %v614
      %616 = vmatmul.bf16.gmra.mxu0 %v556
      %v617 = vpop.f32.mrf.mxu0
      %v618 = vadd.f32 %v584, %v617
      %v619 = vpop.f32.mrf.mxu0
      %v620 = vadd.f32 %v586, %v619
      %621 = vmatmul.bf16.gmra.mxu0 %v559
      %v622 = vpop.f32.mrf.mxu0
      %v623 = vadd.f32 %v589, %v622
      %v624 = vpop.f32.mrf.mxu0
      %v625 = vadd.f32 %v591, %v624
      %626 = vmatmul.bf16.gmra.mxu0 %v562
      %v627 = vpop.f32.mrf.mxu0
      %v628 = vadd.f32 %v594, %v627
      %v629 = vpop.f32.mrf.mxu0
      %v630 = vadd.f32 %v596, %v629
      %631 = vdwg.mxu0
      %632 = vmatpush.bf16.msra.mxu0 %v523
      %633 = vmatpush.bf16.msra.mxu0 %v521
      %634 = vmatpush.bf16.msra.mxu0 %v519
      %635 = vmatpush.bf16.msra.mxu0 %v517
      %636 = vmatpush.bf16.msra.mxu0 %v515
      %637 = vmatpush.bf16.msra.mxu0 %v513
      %638 = vmatpush.bf16.msra.mxu0 %v511
      %639 = vmatpush.bf16.msra.mxu0 %v509
      %640 = vmatmul.bf16.gmra.mxu0 %v433
      %v641 = vpop.f32.mrf.mxu0
      %v642 = vadd.f32 0.0, %v641
      %v643 = vpop.f32.mrf.mxu0
      %v644 = vadd.f32 0.0, %v643
      %645 = vmatmul.bf16.gmra.mxu0 %v435
      %v646 = vpop.f32.mrf.mxu0
      %v647 = vadd.f32 0.0, %v646
      %v648 = vpop.f32.mrf.mxu0
      %v649 = vadd.f32 0.0, %v648
      %650 = vmatmul.bf16.gmra.mxu0 %v437
      %v651 = vpop.f32.mrf.mxu0
      %v652 = vadd.f32 0.0, %v651
      %v653 = vpop.f32.mrf.mxu0
      %v654 = vadd.f32 0.0, %v653
      %655 = vmatmul.bf16.gmra.mxu0 %v439
      %v656 = vpop.f32.mrf.mxu0
      %v657 = vadd.f32 0.0, %v656
      %v658 = vpop.f32.mrf.mxu0
      %v659 = vadd.f32 0.0, %v658
      %660 = vmatmul.bf16.gmra.mxu0 %v441
      %v661 = vpop.f32.mrf.mxu0
      %v662 = vadd.f32 0.0, %v661
      %v663 = vpop.f32.mrf.mxu0
      %v664 = vadd.f32 0.0, %v663
      %665 = vdwg.mxu0
      %666 = vmatpush.bf16.msra.mxu0 0
      %667 = vmatpush.bf16.msra.mxu0 0
      %668 = vmatpush.bf16.msra.mxu0 0
      %669 = vmatpush.bf16.msra.mxu0 0
      %670 = vmatpush.bf16.msra.mxu0 0
      %671 = vmatpush.bf16.msra.mxu0 0
      %672 = vmatpush.bf16.msra.mxu0 %v527
      %673 = vmatpush.bf16.msra.mxu0 %v525
      %674 = vmatmul.bf16.gmra.mxu0 %v550
      %v675 = vpop.f32.mrf.mxu0
      %v676 = vadd.f32 %v642, %v675
      %v677 = vpop.f32.mrf.mxu0
      %v678 = vadd.f32 %v644, %v677
      %679 = vmatmul.bf16.gmra.mxu0 %v553
      %v680 = vpop.f32.mrf.mxu0
      %v681 = vadd.f32 %v647, %v680
      %v682 = vpop.f32.mrf.mxu0
      %v683 = vadd.f32 %v649, %v682
      %684 = vmatmul.bf16.gmra.mxu0 %v556
      %v685 = vpop.f32.mrf.mxu0
      %v686 = vadd.f32 %v652, %v685
      %v687 = vpop.f32.mrf.mxu0
      %v688 = vadd.f32 %v654, %v687
      %689 = vmatmul.bf16.gmra.mxu0 %v559
      %v690 = vpop.f32.mrf.mxu0
      %v691 = vadd.f32 %v657, %v690
      %v692 = vpop.f32.mrf.mxu0
      %v693 = vadd.f32 %v659, %v692
      %694 = vmatmul.bf16.gmra.mxu0 %v562
      %v695 = vpop.f32.mrf.mxu0
      %v696 = vadd.f32 %v662, %v695
      %v697 = vpop.f32.mrf.mxu0
      %v698 = vadd.f32 %v664, %v697
      %699 = vdwg.mxu0
      %700 = vst [vmem:[#allocation2] sm:$0xff] %v608
      %701 = vst.msk [vmem:[#allocation2 + $0x8] sm:$0xff] %vm548, %v676
      %702 = vst [vmem:[#allocation2 + $0x10] sm:$0xff] %v610
      %703 = vst.msk [vmem:[#allocation2 + $0x18] sm:$0xff] %vm548, %v678
      %704 = vst [vmem:[#allocation2 + $0x20] sm:$0xff] %v613
      %705 = vst.msk [vmem:[#allocation2 + $0x28] sm:$0xff] %vm548, %v681
      %706 = vst [vmem:[#allocation2 + $0x30] sm:$0xff] %v615
      %707 = vst.msk [vmem:[#allocation2 + $0x38] sm:$0xff] %vm548, %v683
      %708 = vst [vmem:[#allocation2 + $0x40] sm:$0xff] %v618
      %709 = vst.msk [vmem:[#allocation2 + $0x48] sm:$0xff] %vm548, %v686
      %710 = vst [vmem:[#allocation2 + $0x50] sm:$0xff] %v620
      %711 = vst.msk [vmem:[#allocation2 + $0x58] sm:$0xff] %vm548, %v688
      %712 = vst [vmem:[#allocation2 + $0x60] sm:$0xff] %v623
      %713 = vst.msk [vmem:[#allocation2 + $0x68] sm:$0xff] %vm548, %v691
      %714 = vst [vmem:[#allocation2 + $0x70] sm:$0xff] %v625
      %715 = vst.msk [vmem:[#allocation2 + $0x78] sm:$0xff] %vm548, %v693
      %716 = vst [vmem:[#allocation2 + $0x80] sm:$0xff] %v628
      %717 = vst.msk [vmem:[#allocation2 + $0x88] sm:$0xff] %vm548, %v696
      %718 = vst [vmem:[#allocation2 + $0x90] sm:$0xff] %v630
      %719 = vst.msk [vmem:[#allocation2 + $0x98] sm:$0xff] %vm548, %v698
      %p720 = scmp.gt.s32.totalorder %s21, 0
      // Predicated region
      $region41: #{mixed_3b_forward.6} parent=39 // pred_check
        %p721 = pneg %p720
      $region42: #{mixed_3b_forward.6} parent=39 // pred_check_branch
        %723 = sbr.rel (%p721) target = $region44
      $region43: #{mixed_3b_forward.6} parent=39 // pred_region
        %v724 = vld [vmem:[#allocation2] sm:$0xff]
        %v725 = vld [vmem:[#allocation2 + $0x8] sm:$0xff]
        %v726 = vld [vmem:[#allocation2 + $0x10] sm:$0xff]
        %v727 = vld [vmem:[#allocation2 + $0x18] sm:$0xff]
        %v728 = vld [vmem:[#allocation2 + $0x20] sm:$0xff]
        %v729 = vld [vmem:[#allocation2 + $0x28] sm:$0xff]
        %v730 = vld [vmem:[#allocation2 + $0x30] sm:$0xff]
        %v731 = vld [vmem:[#allocation2 + $0x38] sm:$0xff]
        %v732 = vld [vmem:[#allocation2 + $0x40] sm:$0xff]
        %v733 = vld [vmem:[#allocation2 + $0x48] sm:$0xff]
        %v734 = vld [vmem:[#allocation2 + $0x50] sm:$0xff]
        %v735 = vld [vmem:[#allocation2 + $0x58] sm:$0xff]
        %v736 = vld [vmem:[#allocation2 + $0x60] sm:$0xff]
        %v737 = vld [vmem:[#allocation2 + $0x68] sm:$0xff]
        %v738 = vld [vmem:[#allocation2 + $0x70] sm:$0xff]
        %v739 = vld [vmem:[#allocation2 + $0x78] sm:$0xff]
        %v740 = vld [vmem:[#allocation2 + $0x80] sm:$0xff]
        %v741 = vld [vmem:[#allocation2 + $0x88] sm:$0xff]
        %v742 = vld [vmem:[#allocation2 + $0x90] sm:$0xff]
        %v743 = vld [vmem:[#allocation2 + $0x98] sm:$0xff]
        %v744 = vld [vmem:[%s334] sm:$0xff]
        %v745 = vld [vmem:[%s334 + $0x8] sm:$0xff]
        %v746 = vld [vmem:[%s334 + $0x10] sm:$0xff]
        %v747 = vld [vmem:[%s334 + $0x18] sm:$0xff]
        %v748 = vld [vmem:[%s334 + $0x20] sm:$0xff]
        %v749 = vld [vmem:[%s334 + $0x28] sm:$0xff]
        %v750 = vld [vmem:[%s334 + $0x30] sm:$0xff]
        %v751 = vld [vmem:[%s334 + $0x38] sm:$0xff]
        %v752 = vld [vmem:[%s334 + $0x40] sm:$0xff]
        %v753 = vld [vmem:[%s334 + $0x48] sm:$0xff]
        %v754 = vld [vmem:[%s3] sm:$0xff]
        %v755 = vld [vmem:[%s3 + $0x8] sm:$0xff]
        %v756 = vld [vmem:[%s3 + $0x10] sm:$0xff]
        %v757 = vld [vmem:[%s3 + $0x18] sm:$0xff]
        %v758 = vld [vmem:[%s3 + $0x20] sm:$0xff]
        %v759 = vld [vmem:[%s3 + $0x28] sm:$0xff]
        %v760 = vld [vmem:[%s3 + $0x30] sm:$0xff]
        %v761 = vld [vmem:[%s3 + $0x38] sm:$0xff]
        %v762 = vld [vmem:[%s3 + $0x40] sm:$0xff]
        %v763 = vld [vmem:[%s3 + $0x48] sm:$0xff]
        %v764 = vld [vmem:[%s3 + $0x50] sm:$0xff]
        %v765 = vld [vmem:[%s3 + $0x58] sm:$0xff]
        %v766 = vld [vmem:[%s3 + $0x60] sm:$0xff]
        %v767 = vld [vmem:[%s3 + $0x68] sm:$0xff]
        %v768 = vld [vmem:[%s3 + $0x70] sm:$0xff]
        %v769 = vld [vmem:[%s3 + $0x78] sm:$0xff]
        %v770 = vld [vmem:[%s3 + $0x80] sm:$0xff]
        %v771 = vld [vmem:[%s3 + $0x88] sm:$0xff]
        %v772 = vld [vmem:[%s3 + $0x90] sm:$0xff]
        %v773 = vld [vmem:[%s3 + $0x98] sm:$0xff]
        %v784 = vunpack.c.l.b16 %v744
        %v785 = vunpack.c.h.b16 %v744
        %v786 = vunpack.c.l.b16 %v745
        %v787 = vunpack.c.h.b16 %v745
        %v788 = vunpack.c.l.b16 %v746
        %v789 = vunpack.c.h.b16 %v746
        %v790 = vunpack.c.l.b16 %v747
        %v791 = vunpack.c.h.b16 %v747
        %v792 = vunpack.c.l.b16 %v748
        %v793 = vunpack.c.h.b16 %v748
        %v794 = vunpack.c.l.b16 %v749
        %v795 = vunpack.c.h.b16 %v749
        %v796 = vunpack.c.l.b16 %v750
        %v797 = vunpack.c.h.b16 %v750
        %v798 = vunpack.c.l.b16 %v751
        %v799 = vunpack.c.h.b16 %v751
        %v800 = vunpack.c.l.b16 %v752
        %v801 = vunpack.c.h.b16 %v752
        %v802 = vunpack.c.l.b16 %v753
        %v803 = vunpack.c.h.b16 %v753
        %v804 = vpack.c.b16 %v786, %v784
        %v805 = vpack.c.b16 %v787, %v785
        %v806 = vpack.c.b16 %v790, %v788
        %v807 = vpack.c.b16 %v791, %v789
        %v808 = vpack.c.b16 %v794, %v792
        %v809 = vpack.c.b16 %v795, %v793
        %v810 = vpack.c.b16 %v798, %v796
        %v811 = vpack.c.b16 %v799, %v797
        %v812 = vpack.c.b16 %v802, %v800
        %v813 = vpack.c.b16 %v803, %v801
        %v839 = vunpack.c.l.b16 %v754
        %v840 = vunpack.c.h.b16 %v754
        %v841 = vunpack.c.l.b16 %v755
        %v842 = vunpack.c.h.b16 %v755
        %v843 = vunpack.c.l.b16 %v756
        %v844 = vunpack.c.h.b16 %v756
        %v845 = vunpack.c.l.b16 %v757
        %v846 = vunpack.c.h.b16 %v757
        %v847 = vunpack.c.l.b16 %v758
        %v848 = vunpack.c.h.b16 %v758
        %v849 = vunpack.c.l.b16 %v759
        %v850 = vunpack.c.h.b16 %v759
        %v851 = vunpack.c.l.b16 %v760
        %v852 = vunpack.c.h.b16 %v760
        %v853 = vunpack.c.l.b16 %v761
        %v854 = vunpack.c.h.b16 %v761
        %v855 = vunpack.c.l.b16 %v762
        %v856 = vunpack.c.h.b16 %v762
        %v857 = vunpack.c.l.b16 %v763
        %v858 = vunpack.c.h.b16 %v763
        %v859 = vunpack.c.l.b16 %v764
        %v860 = vunpack.c.h.b16 %v764
        %v861 = vunpack.c.l.b16 %v765
        %v862 = vunpack.c.h.b16 %v765
        %v863 = vunpack.c.l.b16 %v766
        %v864 = vunpack.c.h.b16 %v766
        %v865 = vunpack.c.l.b16 %v767
        %v866 = vunpack.c.h.b16 %v767
        %v867 = vunpack.c.l.b16 %v768
        %v868 = vunpack.c.h.b16 %v768
        %v869 = vunpack.c.l.b16 %v769
        %v870 = vunpack.c.h.b16 %v769
        %v871 = vunpack.c.l.b16 %v770
        %v872 = vunpack.c.h.b16 %v770
        %v873 = vunpack.c.l.b16 %v771
        %v874 = vunpack.c.h.b16 %v771
        %v875 = vunpack.c.l.b16 %v772
        %v876 = vunpack.c.h.b16 %v772
        %v877 = vunpack.c.l.b16 %v773
        %v878 = vunpack.c.h.b16 %v773
        %v879 = vpack.c.b16 %v841, %v839
        %v880 = vpack.c.b16 %v842, %v840
        %v881 = vpack.c.b16 %v845, %v843
        %v882 = vpack.c.b16 %v846, %v844
        %v883 = vpack.c.b16 %v849, %v847
        %v884 = vpack.c.b16 %v850, %v848
        %v885 = vpack.c.b16 %v853, %v851
        %v886 = vpack.c.b16 %v854, %v852
        %v887 = vpack.c.b16 %v857, %v855
        %v888 = vpack.c.b16 %v858, %v856
        %v889 = vpack.c.b16 %v861, %v859
        %v890 = vpack.c.b16 %v862, %v860
        %v891 = vpack.c.b16 %v865, %v863
        %v892 = vpack.c.b16 %v866, %v864
        %v893 = vpack.c.b16 %v869, %v867
        %v894 = vpack.c.b16 %v870, %v868
        %v895 = vpack.c.b16 %v873, %v871
        %v896 = vpack.c.b16 %v874, %v872
        %v897 = vpack.c.b16 %v877, %v875
        %v898 = vpack.c.b16 %v878, %v876
        %v920 = vsel %vm548, %v805, 0
        %v923 = vsel %vm548, %v807, 0
        %v926 = vsel %vm548, %v809, 0
        %v929 = vsel %vm548, %v811, 0
        %v932 = vsel %vm548, %v813, 0
        %934 = vmatpush.bf16.msra.mxu0 %v893
        %935 = vmatpush.bf16.msra.mxu0 %v891
        %936 = vmatpush.bf16.msra.mxu0 %v889
        %937 = vmatpush.bf16.msra.mxu0 %v887
        %938 = vmatpush.bf16.msra.mxu0 %v885
        %939 = vmatpush.bf16.msra.mxu0 %v883
        %940 = vmatpush.bf16.msra.mxu0 %v881
        %941 = vmatpush.bf16.msra.mxu0 %v879
        %942 = vmatmul.bf16.gmra.mxu0 %v804
        %v943 = vpop.f32.mrf.mxu0
        %v944 = vadd.f32 0.0, %v943
        %v945 = vpop.f32.mrf.mxu0
        %v946 = vadd.f32 0.0, %v945
        %947 = vmatmul.bf16.gmra.mxu0 %v806
        %v948 = vpop.f32.mrf.mxu0
        %v949 = vadd.f32 0.0, %v948
        %v950 = vpop.f32.mrf.mxu0
        %v951 = vadd.f32 0.0, %v950
        %952 = vmatmul.bf16.gmra.mxu0 %v808
        %v953 = vpop.f32.mrf.mxu0
        %v954 = vadd.f32 0.0, %v953
        %v955 = vpop.f32.mrf.mxu0
        %v956 = vadd.f32 0.0, %v955
        %957 = vmatmul.bf16.gmra.mxu0 %v810
        %v958 = vpop.f32.mrf.mxu0
        %v959 = vadd.f32 0.0, %v958
        %v960 = vpop.f32.mrf.mxu0
        %v961 = vadd.f32 0.0, %v960
        %962 = vmatmul.bf16.gmra.mxu0 %v812
        %v963 = vpop.f32.mrf.mxu0
        %v964 = vadd.f32 0.0, %v963
        %v965 = vpop.f32.mrf.mxu0
        %v966 = vadd.f32 0.0, %v965
        %967 = vdwg.mxu0
        %968 = vmatpush.bf16.msra.mxu0 0
        %969 = vmatpush.bf16.msra.mxu0 0
        %970 = vmatpush.bf16.msra.mxu0 0
        %971 = vmatpush.bf16.msra.mxu0 0
        %972 = vmatpush.bf16.msra.mxu0 0
        %973 = vmatpush.bf16.msra.mxu0 0
        %974 = vmatpush.bf16.msra.mxu0 %v897
        %975 = vmatpush.bf16.msra.mxu0 %v895
        %976 = vmatmul.bf16.gmra.mxu0 %v920
        %v977 = vpop.f32.mrf.mxu0
        %v978 = vadd.f32 %v944, %v977
        %v979 = vpop.f32.mrf.mxu0
        %v980 = vadd.f32 %v946, %v979
        %981 = vmatmul.bf16.gmra.mxu0 %v923
        %v982 = vpop.f32.mrf.mxu0
        %v983 = vadd.f32 %v949, %v982
        %v984 = vpop.f32.mrf.mxu0
        %v985 = vadd.f32 %v951, %v984
        %986 = vmatmul.bf16.gmra.mxu0 %v926
        %v987 = vpop.f32.mrf.mxu0
        %v988 = vadd.f32 %v954, %v987
        %v989 = vpop.f32.mrf.mxu0
        %v990 = vadd.f32 %v956, %v989
        %991 = vmatmul.bf16.gmra.mxu0 %v929
        %v992 = vpop.f32.mrf.mxu0
        %v993 = vadd.f32 %v959, %v992
        %v994 = vpop.f32.mrf.mxu0
        %v995 = vadd.f32 %v961, %v994
        %996 = vmatmul.bf16.gmra.mxu0 %v932
        %v997 = vpop.f32.mrf.mxu0
        %v998 = vadd.f32 %v964, %v997
        %v999 = vpop.f32.mrf.mxu0
        %v1000 = vadd.f32 %v966, %v999
        %1001 = vdwg.mxu0
        %1002 = vmatpush.bf16.msra.mxu0 %v894
        %1003 = vmatpush.bf16.msra.mxu0 %v892
        %1004 = vmatpush.bf16.msra.mxu0 %v890
        %1005 = vmatpush.bf16.msra.mxu0 %v888
        %1006 = vmatpush.bf16.msra.mxu0 %v886
        %1007 = vmatpush.bf16.msra.mxu0 %v884
        %1008 = vmatpush.bf16.msra.mxu0 %v882
        %1009 = vmatpush.bf16.msra.mxu0 %v880
        %1010 = vmatmul.bf16.gmra.mxu0 %v804
        %v1011 = vpop.f32.mrf.mxu0
        %v1012 = vadd.f32 0.0, %v1011
        %v1013 = vpop.f32.mrf.mxu0
        %v1014 = vadd.f32 0.0, %v1013
        %1015 = vmatmul.bf16.gmra.mxu0 %v806
        %v1016 = vpop.f32.mrf.mxu0
        %v1017 = vadd.f32 0.0, %v1016
        %v1018 = vpop.f32.mrf.mxu0
        %v1019 = vadd.f32 0.0, %v1018
        %1020 = vmatmul.bf16.gmra.mxu0 %v808
        %v1021 = vpop.f32.mrf.mxu0
        %v1022 = vadd.f32 0.0, %v1021
        %v1023 = vpop.f32.mrf.mxu0
        %v1024 = vadd.f32 0.0, %v1023
        %1025 = vmatmul.bf16.gmra.mxu0 %v810
        %v1026 = vpop.f32.mrf.mxu0
        %v1027 = vadd.f32 0.0, %v1026
        %v1028 = vpop.f32.mrf.mxu0
        %v1029 = vadd.f32 0.0, %v1028
        %1030 = vmatmul.bf16.gmra.mxu0 %v812
        %v1031 = vpop.f32.mrf.mxu0
        %v1032 = vadd.f32 0.0, %v1031
        %v1033 = vpop.f32.mrf.mxu0
        %v1034 = vadd.f32 0.0, %v1033
        %1035 = vdwg.mxu0
        %1036 = vmatpush.bf16.msra.mxu0 0
        %1037 = vmatpush.bf16.msra.mxu0 0
        %1038 = vmatpush.bf16.msra.mxu0 0
        %1039 = vmatpush.bf16.msra.mxu0 0
        %1040 = vmatpush.bf16.msra.mxu0 0
        %1041 = vmatpush.bf16.msra.mxu0 0
        %1042 = vmatpush.bf16.msra.mxu0 %v898
        %1043 = vmatpush.bf16.msra.mxu0 %v896
        %1044 = vmatmul.bf16.gmra.mxu0 %v920
        %v1045 = vpop.f32.mrf.mxu0
        %v1046 = vadd.f32 %v1012, %v1045
        %v1047 = vpop.f32.mrf.mxu0
        %v1048 = vadd.f32 %v1014, %v1047
        %1049 = vmatmul.bf16.gmra.mxu0 %v923
        %v1050 = vpop.f32.mrf.mxu0
        %v1051 = vadd.f32 %v1017, %v1050
        %v1052 = vpop.f32.mrf.mxu0
        %v1053 = vadd.f32 %v1019, %v1052
        %1054 = vmatmul.bf16.gmra.mxu0 %v926
        %v1055 = vpop.f32.mrf.mxu0
        %v1056 = vadd.f32 %v1022, %v1055
        %v1057 = vpop.f32.mrf.mxu0
        %v1058 = vadd.f32 %v1024, %v1057
        %1059 = vmatmul.bf16.gmra.mxu0 %v929
        %v1060 = vpop.f32.mrf.mxu0
        %v1061 = vadd.f32 %v1027, %v1060
        %v1062 = vpop.f32.mrf.mxu0
        %v1063 = vadd.f32 %v1029, %v1062
        %1064 = vmatmul.bf16.gmra.mxu0 %v932
        %v1065 = vpop.f32.mrf.mxu0
        %v1066 = vadd.f32 %v1032, %v1065
        %v1067 = vpop.f32.mrf.mxu0
        %v1068 = vadd.f32 %v1034, %v1067
        %1069 = vdwg.mxu0
        %v1070 = vadd.f32 %v724, %v978
        %v1071 = vadd.f32 %v725, %v1046
        %v1072 = vadd.f32 %v726, %v980
        %v1073 = vadd.f32 %v727, %v1048
        %v1074 = vadd.f32 %v728, %v983
        %v1075 = vadd.f32 %v729, %v1051
        %v1076 = vadd.f32 %v730, %v985
        %v1077 = vadd.f32 %v731, %v1053
        %v1078 = vadd.f32 %v732, %v988
        %v1079 = vadd.f32 %v733, %v1056
        %v1080 = vadd.f32 %v734, %v990
        %v1081 = vadd.f32 %v735, %v1058
        %v1082 = vadd.f32 %v736, %v993
        %v1083 = vadd.f32 %v737, %v1061
        %v1084 = vadd.f32 %v738, %v995
        %v1085 = vadd.f32 %v739, %v1063
        %v1086 = vadd.f32 %v740, %v998
        %v1087 = vadd.f32 %v741, %v1066
        %v1088 = vadd.f32 %v742, %v1000
        %v1089 = vadd.f32 %v743, %v1068
        %1090 = vst [vmem:[#allocation2] sm:$0xff] %v1070
        %1091 = vst.msk [vmem:[#allocation2 + $0x8] sm:$0xff] %vm548, %v1071
        %1092 = vst [vmem:[#allocation2 + $0x10] sm:$0xff] %v1072
        %1093 = vst.msk [vmem:[#allocation2 + $0x18] sm:$0xff] %vm548, %v1073
        %1094 = vst [vmem:[#allocation2 + $0x20] sm:$0xff] %v1074
        %1095 = vst.msk [vmem:[#allocation2 + $0x28] sm:$0xff] %vm548, %v1075
        %1096 = vst [vmem:[#allocation2 + $0x30] sm:$0xff] %v1076
        %1097 = vst.msk [vmem:[#allocation2 + $0x38] sm:$0xff] %vm548, %v1077
        %1098 = vst [vmem:[#allocation2 + $0x40] sm:$0xff] %v1078
        %1099 = vst.msk [vmem:[#allocation2 + $0x48] sm:$0xff] %vm548, %v1079
        %1100 = vst [vmem:[#allocation2 + $0x50] sm:$0xff] %v1080
        %1101 = vst.msk [vmem:[#allocation2 + $0x58] sm:$0xff] %vm548, %v1081
        %1102 = vst [vmem:[#allocation2 + $0x60] sm:$0xff] %v1082
        %1103 = vst.msk [vmem:[#allocation2 + $0x68] sm:$0xff] %vm548, %v1083
        %1104 = vst [vmem:[#allocation2 + $0x70] sm:$0xff] %v1084
        %1105 = vst.msk [vmem:[#allocation2 + $0x78] sm:$0xff] %vm548, %v1085
        %1106 = vst [vmem:[#allocation2 + $0x80] sm:$0xff] %v1086
        %1107 = vst.msk [vmem:[#allocation2 + $0x88] sm:$0xff] %vm548, %v1087
        %1108 = vst [vmem:[#allocation2 + $0x90] sm:$0xff] %v1088
        %1109 = vst.msk [vmem:[#allocation2 + $0x98] sm:$0xff] %vm548, %v1089
      $region44: #{mixed_3b_forward.6} parent=39 // pred_fallthru
        _
      %p1110 = scmp.lt.s32.totalorder %s21, 3
      // Predicated region
      $region45: #{mixed_3b_forward.6} parent=39 // pred_check
        %p1111 = pneg %p1110
      $region46: #{mixed_3b_forward.6} parent=39 // pred_check_branch
        %1113 = sbr.rel (%p1111) target = $region48
      $region47: #{mixed_3b_forward.6} parent=39 // pred_region
        %v1114 = vld [vmem:[#allocation2] sm:$0xff]
        %v1115 = vld [vmem:[#allocation2 + $0x8] sm:$0xff]
        %v1116 = vld [vmem:[#allocation2 + $0x10] sm:$0xff]
        %v1117 = vld [vmem:[#allocation2 + $0x18] sm:$0xff]
        %v1118 = vld [vmem:[#allocation2 + $0x20] sm:$0xff]
        %v1119 = vld [vmem:[#allocation2 + $0x28] sm:$0xff]
        %v1120 = vld [vmem:[#allocation2 + $0x30] sm:$0xff]
        %v1121 = vld [vmem:[#allocation2 + $0x38] sm:$0xff]
        %v1122 = vld [vmem:[#allocation2 + $0x40] sm:$0xff]
        %v1123 = vld [vmem:[#allocation2 + $0x48] sm:$0xff]
        %v1124 = vld [vmem:[#allocation2 + $0x50] sm:$0xff]
        %v1125 = vld [vmem:[#allocation2 + $0x58] sm:$0xff]
        %v1126 = vld [vmem:[#allocation2 + $0x60] sm:$0xff]
        %v1127 = vld [vmem:[#allocation2 + $0x68] sm:$0xff]
        %v1128 = vld [vmem:[#allocation2 + $0x70] sm:$0xff]
        %v1129 = vld [vmem:[#allocation2 + $0x78] sm:$0xff]
        %v1130 = vld [vmem:[#allocation2 + $0x80] sm:$0xff]
        %v1131 = vld [vmem:[#allocation2 + $0x88] sm:$0xff]
        %v1132 = vld [vmem:[#allocation2 + $0x90] sm:$0xff]
        %v1133 = vld [vmem:[#allocation2 + $0x98] sm:$0xff]
        %v1134 = vld [vmem:[%s358] sm:$0xff]
        %v1135 = vld [vmem:[%s358 + $0x8] sm:$0xff]
        %v1136 = vld [vmem:[%s358 + $0x10] sm:$0xff]
        %v1137 = vld [vmem:[%s358 + $0x18] sm:$0xff]
        %v1138 = vld [vmem:[%s358 + $0x20] sm:$0xff]
        %v1139 = vld [vmem:[%s358 + $0x28] sm:$0xff]
        %v1140 = vld [vmem:[%s358 + $0x30] sm:$0xff]
        %v1141 = vld [vmem:[%s358 + $0x38] sm:$0xff]
        %v1142 = vld [vmem:[%s358 + $0x40] sm:$0xff]
        %v1143 = vld [vmem:[%s358 + $0x48] sm:$0xff]
        %s1144 = scalar_lea.vmem %s3, 320
        %v1145 = vld [vmem:[%s1144] sm:$0xff]
        %v1146 = vld [vmem:[%s1144 + $0x8] sm:$0xff]
        %v1147 = vld [vmem:[%s1144 + $0x10] sm:$0xff]
        %v1148 = vld [vmem:[%s1144 + $0x18] sm:$0xff]
        %v1149 = vld [vmem:[%s1144 + $0x20] sm:$0xff]
        %v1150 = vld [vmem:[%s1144 + $0x28] sm:$0xff]
        %v1151 = vld [vmem:[%s1144 + $0x30] sm:$0xff]
        %v1152 = vld [vmem:[%s1144 + $0x38] sm:$0xff]
        %v1153 = vld [vmem:[%s1144 + $0x40] sm:$0xff]
        %v1154 = vld [vmem:[%s1144 + $0x48] sm:$0xff]
        %v1155 = vld [vmem:[%s1144 + $0x50] sm:$0xff]
        %v1156 = vld [vmem:[%s1144 + $0x58] sm:$0xff]
        %v1157 = vld [vmem:[%s1144 + $0x60] sm:$0xff]
        %v1158 = vld [vmem:[%s1144 + $0x68] sm:$0xff]
        %v1159 = vld [vmem:[%s1144 + $0x70] sm:$0xff]
        %v1160 = vld [vmem:[%s1144 + $0x78] sm:$0xff]
        %v1161 = vld [vmem:[%s1144 + $0x80] sm:$0xff]
        %v1162 = vld [vmem:[%s1144 + $0x88] sm:$0xff]
        %v1163 = vld [vmem:[%s1144 + $0x90] sm:$0xff]
        %v1164 = vld [vmem:[%s1144 + $0x98] sm:$0xff]
        %v1175 = vunpack.c.l.b16 %v1134
        %v1176 = vunpack.c.h.b16 %v1134
        %v1177 = vunpack.c.l.b16 %v1135
        %v1178 = vunpack.c.h.b16 %v1135
        %v1179 = vunpack.c.l.b16 %v1136
        %v1180 = vunpack.c.h.b16 %v1136
        %v1181 = vunpack.c.l.b16 %v1137
        %v1182 = vunpack.c.h.b16 %v1137
        %v1183 = vunpack.c.l.b16 %v1138
        %v1184 = vunpack.c.h.b16 %v1138
        %v1185 = vunpack.c.l.b16 %v1139
        %v1186 = vunpack.c.h.b16 %v1139
        %v1187 = vunpack.c.l.b16 %v1140
        %v1188 = vunpack.c.h.b16 %v1140
        %v1189 = vunpack.c.l.b16 %v1141
        %v1190 = vunpack.c.h.b16 %v1141
        %v1191 = vunpack.c.l.b16 %v1142
        %v1192 = vunpack.c.h.b16 %v1142
        %v1193 = vunpack.c.l.b16 %v1143
        %v1194 = vunpack.c.h.b16 %v1143
        %v1195 = vpack.c.b16 %v1177, %v1175
        %v1196 = vpack.c.b16 %v1178, %v1176
        %v1197 = vpack.c.b16 %v1181, %v1179
        %v1198 = vpack.c.b16 %v1182, %v1180
        %v1199 = vpack.c.b16 %v1185, %v1183
        %v1200 = vpack.c.b16 %v1186, %v1184
        %v1201 = vpack.c.b16 %v1189, %v1187
        %v1202 = vpack.c.b16 %v1190, %v1188
        %v1203 = vpack.c.b16 %v1193, %v1191
        %v1204 = vpack.c.b16 %v1194, %v1192
        %v1230 = vunpack.c.l.b16 %v1145
        %v1231 = vunpack.c.h.b16 %v1145
        %v1232 = vunpack.c.l.b16 %v1146
        %v1233 = vunpack.c.h.b16 %v1146
        %v1234 = vunpack.c.l.b16 %v1147
        %v1235 = vunpack.c.h.b16 %v1147
        %v1236 = vunpack.c.l.b16 %v1148
        %v1237 = vunpack.c.h.b16 %v1148
        %v1238 = vunpack.c.l.b16 %v1149
        %v1239 = vunpack.c.h.b16 %v1149
        %v1240 = vunpack.c.l.b16 %v1150
        %v1241 = vunpack.c.h.b16 %v1150
        %v1242 = vunpack.c.l.b16 %v1151
        %v1243 = vunpack.c.h.b16 %v1151
        %v1244 = vunpack.c.l.b16 %v1152
        %v1245 = vunpack.c.h.b16 %v1152
        %v1246 = vunpack.c.l.b16 %v1153
        %v1247 = vunpack.c.h.b16 %v1153
        %v1248 = vunpack.c.l.b16 %v1154
        %v1249 = vunpack.c.h.b16 %v1154
        %v1250 = vunpack.c.l.b16 %v1155
        %v1251 = vunpack.c.h.b16 %v1155
        %v1252 = vunpack.c.l.b16 %v1156
        %v1253 = vunpack.c.h.b16 %v1156
        %v1254 = vunpack.c.l.b16 %v1157
        %v1255 = vunpack.c.h.b16 %v1157
        %v1256 = vunpack.c.l.b16 %v1158
        %v1257 = vunpack.c.h.b16 %v1158
        %v1258 = vunpack.c.l.b16 %v1159
        %v1259 = vunpack.c.h.b16 %v1159
        %v1260 = vunpack.c.l.b16 %v1160
        %v1261 = vunpack.c.h.b16 %v1160
        %v1262 = vunpack.c.l.b16 %v1161
        %v1263 = vunpack.c.h.b16 %v1161
        %v1264 = vunpack.c.l.b16 %v1162
        %v1265 = vunpack.c.h.b16 %v1162
        %v1266 = vunpack.c.l.b16 %v1163
        %v1267 = vunpack.c.h.b16 %v1163
        %v1268 = vunpack.c.l.b16 %v1164
        %v1269 = vunpack.c.h.b16 %v1164
        %v1270 = vpack.c.b16 %v1232, %v1230
        %v1271 = vpack.c.b16 %v1233, %v1231
        %v1272 = vpack.c.b16 %v1236, %v1234
        %v1273 = vpack.c.b16 %v1237, %v1235
        %v1274 = vpack.c.b16 %v1240, %v1238
        %v1275 = vpack.c.b16 %v1241, %v1239
        %v1276 = vpack.c.b16 %v1244, %v1242
        %v1277 = vpack.c.b16 %v1245, %v1243
        %v1278 = vpack.c.b16 %v1248, %v1246
        %v1279 = vpack.c.b16 %v1249, %v1247
        %v1280 = vpack.c.b16 %v1252, %v1250
        %v1281 = vpack.c.b16 %v1253, %v1251
        %v1282 = vpack.c.b16 %v1256, %v1254
        %v1283 = vpack.c.b16 %v1257, %v1255
        %v1284 = vpack.c.b16 %v1260, %v1258
        %v1285 = vpack.c.b16 %v1261, %v1259
        %v1286 = vpack.c.b16 %v1264, %v1262
        %v1287 = vpack.c.b16 %v1265, %v1263
        %v1288 = vpack.c.b16 %v1268, %v1266
        %v1289 = vpack.c.b16 %v1269, %v1267
        %v1311 = vsel %vm548, %v1196, 0
        %v1314 = vsel %vm548, %v1198, 0
        %v1317 = vsel %vm548, %v1200, 0
        %v1320 = vsel %vm548, %v1202, 0
        %v1323 = vsel %vm548, %v1204, 0
        %1325 = vmatpush.bf16.msra.mxu0 %v1284
        %1326 = vmatpush.bf16.msra.mxu0 %v1282
        %1327 = vmatpush.bf16.msra.mxu0 %v1280
        %1328 = vmatpush.bf16.msra.mxu0 %v1278
        %1329 = vmatpush.bf16.msra.mxu0 %v1276
        %1330 = vmatpush.bf16.msra.mxu0 %v1274
        %1331 = vmatpush.bf16.msra.mxu0 %v1272
        %1332 = vmatpush.bf16.msra.mxu0 %v1270
        %1333 = vmatmul.bf16.gmra.mxu0 %v1195
        %v1334 = vpop.f32.mrf.mxu0
        %v1335 = vadd.f32 0.0, %v1334
        %v1336 = vpop.f32.mrf.mxu0
        %v1337 = vadd.f32 0.0, %v1336
        %1338 = vmatmul.bf16.gmra.mxu0 %v1197
        %v1339 = vpop.f32.mrf.mxu0
        %v1340 = vadd.f32 0.0, %v1339
        %v1341 = vpop.f32.mrf.mxu0
        %v1342 = vadd.f32 0.0, %v1341
        %1343 = vmatmul.bf16.gmra.mxu0 %v1199
        %v1344 = vpop.f32.mrf.mxu0
        %v1345 = vadd.f32 0.0, %v1344
        %v1346 = vpop.f32.mrf.mxu0
        %v1347 = vadd.f32 0.0, %v1346
        %1348 = vmatmul.bf16.gmra.mxu0 %v1201
        %v1349 = vpop.f32.mrf.mxu0
        %v1350 = vadd.f32 0.0, %v1349
        %v1351 = vpop.f32.mrf.mxu0
        %v1352 = vadd.f32 0.0, %v1351
        %1353 = vmatmul.bf16.gmra.mxu0 %v1203
        %v1354 = vpop.f32.mrf.mxu0
        %v1355 = vadd.f32 0.0, %v1354
        %v1356 = vpop.f32.mrf.mxu0
        %v1357 = vadd.f32 0.0, %v1356
        %1358 = vdwg.mxu0
        %1359 = vmatpush.bf16.msra.mxu0 0
        %1360 = vmatpush.bf16.msra.mxu0 0
        %1361 = vmatpush.bf16.msra.mxu0 0
        %1362 = vmatpush.bf16.msra.mxu0 0
        %1363 = vmatpush.bf16.msra.mxu0 0
        %1364 = vmatpush.bf16.msra.mxu0 0
        %1365 = vmatpush.bf16.msra.mxu0 %v1288
        %1366 = vmatpush.bf16.msra.mxu0 %v1286
        %1367 = vmatmul.bf16.gmra.mxu0 %v1311
        %v1368 = vpop.f32.mrf.mxu0
        %v1369 = vadd.f32 %v1335, %v1368
        %v1370 = vpop.f32.mrf.mxu0
        %v1371 = vadd.f32 %v1337, %v1370
        %1372 = vmatmul.bf16.gmra.mxu0 %v1314
        %v1373 = vpop.f32.mrf.mxu0
        %v1374 = vadd.f32 %v1340, %v1373
        %v1375 = vpop.f32.mrf.mxu0
        %v1376 = vadd.f32 %v1342, %v1375
        %1377 = vmatmul.bf16.gmra.mxu0 %v1317
        %v1378 = vpop.f32.mrf.mxu0
        %v1379 = vadd.f32 %v1345, %v1378
        %v1380 = vpop.f32.mrf.mxu0
        %v1381 = vadd.f32 %v1347, %v1380
        %1382 = vmatmul.bf16.gmra.mxu0 %v1320
        %v1383 = vpop.f32.mrf.mxu0
        %v1384 = vadd.f32 %v1350, %v1383
        %v1385 = vpop.f32.mrf.mxu0
        %v1386 = vadd.f32 %v1352, %v1385
        %1387 = vmatmul.bf16.gmra.mxu0 %v1323
        %v1388 = vpop.f32.mrf.mxu0
        %v1389 = vadd.f32 %v1355, %v1388
        %v1390 = vpop.f32.mrf.mxu0
        %v1391 = vadd.f32 %v1357, %v1390
        %1392 = vdwg.mxu0
        %1393 = vmatpush.bf16.msra.mxu0 %v1285
        %1394 = vmatpush.bf16.msra.mxu0 %v1283
        %1395 = vmatpush.bf16.msra.mxu0 %v1281
        %1396 = vmatpush.bf16.msra.mxu0 %v1279
        %1397 = vmatpush.bf16.msra.mxu0 %v1277
        %1398 = vmatpush.bf16.msra.mxu0 %v1275
        %1399 = vmatpush.bf16.msra.mxu0 %v1273
        %1400 = vmatpush.bf16.msra.mxu0 %v1271
        %1401 = vmatmul.bf16.gmra.mxu0 %v1195
        %v1402 = vpop.f32.mrf.mxu0
        %v1403 = vadd.f32 0.0, %v1402
        %v1404 = vpop.f32.mrf.mxu0
        %v1405 = vadd.f32 0.0, %v1404
        %1406 = vmatmul.bf16.gmra.mxu0 %v1197
        %v1407 = vpop.f32.mrf.mxu0
        %v1408 = vadd.f32 0.0, %v1407
        %v1409 = vpop.f32.mrf.mxu0
        %v1410 = vadd.f32 0.0, %v1409
        %1411 = vmatmul.bf16.gmra.mxu0 %v1199
        %v1412 = vpop.f32.mrf.mxu0
        %v1413 = vadd.f32 0.0, %v1412
        %v1414 = vpop.f32.mrf.mxu0
        %v1415 = vadd.f32 0.0, %v1414
        %1416 = vmatmul.bf16.gmra.mxu0 %v1201
        %v1417 = vpop.f32.mrf.mxu0
        %v1418 = vadd.f32 0.0, %v1417
        %v1419 = vpop.f32.mrf.mxu0
        %v1420 = vadd.f32 0.0, %v1419
        %1421 = vmatmul.bf16.gmra.mxu0 %v1203
        %v1422 = vpop.f32.mrf.mxu0
        %v1423 = vadd.f32 0.0, %v1422
        %v1424 = vpop.f32.mrf.mxu0
        %v1425 = vadd.f32 0.0, %v1424
        %1426 = vdwg.mxu0
        %1427 = vmatpush.bf16.msra.mxu0 0
        %1428 = vmatpush.bf16.msra.mxu0 0
        %1429 = vmatpush.bf16.msra.mxu0 0
        %1430 = vmatpush.bf16.msra.mxu0 0
        %1431 = vmatpush.bf16.msra.mxu0 0
        %1432 = vmatpush.bf16.msra.mxu0 0
        %1433 = vmatpush.bf16.msra.mxu0 %v1289
        %1434 = vmatpush.bf16.msra.mxu0 %v1287
        %1435 = vmatmul.bf16.gmra.mxu0 %v1311
        %v1436 = vpop.f32.mrf.mxu0
        %v1437 = vadd.f32 %v1403, %v1436
        %v1438 = vpop.f32.mrf.mxu0
        %v1439 = vadd.f32 %v1405, %v1438
        %1440 = vmatmul.bf16.gmra.mxu0 %v1314
        %v1441 = vpop.f32.mrf.mxu0
        %v1442 = vadd.f32 %v1408, %v1441
        %v1443 = vpop.f32.mrf.mxu0
        %v1444 = vadd.f32 %v1410, %v1443
        %1445 = vmatmul.bf16.gmra.mxu0 %v1317
        %v1446 = vpop.f32.mrf.mxu0
        %v1447 = vadd.f32 %v1413, %v1446
        %v1448 = vpop.f32.mrf.mxu0
        %v1449 = vadd.f32 %v1415, %v1448
        %1450 = vmatmul.bf16.gmra.mxu0 %v1320
        %v1451 = vpop.f32.mrf.mxu0
        %v1452 = vadd.f32 %v1418, %v1451
        %v1453 = vpop.f32.mrf.mxu0
        %v1454 = vadd.f32 %v1420, %v1453
        %1455 = vmatmul.bf16.gmra.mxu0 %v1323
        %v1456 = vpop.f32.mrf.mxu0
        %v1457 = vadd.f32 %v1423, %v1456
        %v1458 = vpop.f32.mrf.mxu0
        %v1459 = vadd.f32 %v1425, %v1458
        %1460 = vdwg.mxu0
        %v1461 = vadd.f32 %v1114, %v1369
        %v1462 = vadd.f32 %v1115, %v1437
        %v1463 = vadd.f32 %v1116, %v1371
        %v1464 = vadd.f32 %v1117, %v1439
        %v1465 = vadd.f32 %v1118, %v1374
        %v1466 = vadd.f32 %v1119, %v1442
        %v1467 = vadd.f32 %v1120, %v1376
        %v1468 = vadd.f32 %v1121, %v1444
        %v1469 = vadd.f32 %v1122, %v1379
        %v1470 = vadd.f32 %v1123, %v1447
        %v1471 = vadd.f32 %v1124, %v1381
        %v1472 = vadd.f32 %v1125, %v1449
        %v1473 = vadd.f32 %v1126, %v1384
        %v1474 = vadd.f32 %v1127, %v1452
        %v1475 = vadd.f32 %v1128, %v1386
        %v1476 = vadd.f32 %v1129, %v1454
        %v1477 = vadd.f32 %v1130, %v1389
        %v1478 = vadd.f32 %v1131, %v1457
        %v1479 = vadd.f32 %v1132, %v1391
        %v1480 = vadd.f32 %v1133, %v1459
        %1481 = vst [vmem:[#allocation2] sm:$0xff] %v1461
        %1482 = vst.msk [vmem:[#allocation2 + $0x8] sm:$0xff] %vm548, %v1462
        %1483 = vst [vmem:[#allocation2 + $0x10] sm:$0xff] %v1463
        %1484 = vst.msk [vmem:[#allocation2 + $0x18] sm:$0xff] %vm548, %v1464
        %1485 = vst [vmem:[#allocation2 + $0x20] sm:$0xff] %v1465
        %1486 = vst.msk [vmem:[#allocation2 + $0x28] sm:$0xff] %vm548, %v1466
        %1487 = vst [vmem:[#allocation2 + $0x30] sm:$0xff] %v1467
        %1488 = vst.msk [vmem:[#allocation2 + $0x38] sm:$0xff] %vm548, %v1468
        %1489 = vst [vmem:[#allocation2 + $0x40] sm:$0xff] %v1469
        %1490 = vst.msk [vmem:[#allocation2 + $0x48] sm:$0xff] %vm548, %v1470
        %1491 = vst [vmem:[#allocation2 + $0x50] sm:$0xff] %v1471
        %1492 = vst.msk [vmem:[#allocation2 + $0x58] sm:$0xff] %vm548, %v1472
        %1493 = vst [vmem:[#allocation2 + $0x60] sm:$0xff] %v1473
        %1494 = vst.msk [vmem:[#allocation2 + $0x68] sm:$0xff] %vm548, %v1474
        %1495 = vst [vmem:[#allocation2 + $0x70] sm:$0xff] %v1475
        %1496 = vst.msk [vmem:[#allocation2 + $0x78] sm:$0xff] %vm548, %v1476
        %1497 = vst [vmem:[#allocation2 + $0x80] sm:$0xff] %v1477
        %1498 = vst.msk [vmem:[#allocation2 + $0x88] sm:$0xff] %vm548, %v1478
        %1499 = vst [vmem:[#allocation2 + $0x90] sm:$0xff] %v1479
        %1500 = vst.msk [vmem:[#allocation2 + $0x98] sm:$0xff] %vm548, %v1480
      $region48: #{mixed_3b_forward.6} parent=39 // pred_fallthru
        _
      %v1501 = vld [vmem:[#allocation2] sm:$0xff]
      %v1502 = vld [vmem:[#allocation2 + $0x8] sm:$0xff]
      %v1503 = vld [vmem:[#allocation2 + $0x10] sm:$0xff]
      %v1504 = vld [vmem:[#allocation2 + $0x18] sm:$0xff]
      %v1505 = vld [vmem:[#allocation2 + $0x20] sm:$0xff]
      %v1506 = vld [vmem:[#allocation2 + $0x28] sm:$0xff]
      %v1507 = vld [vmem:[#allocation2 + $0x30] sm:$0xff]
      %v1508 = vld [vmem:[#allocation2 + $0x38] sm:$0xff]
      %v1509 = vld [vmem:[#allocation2 + $0x40] sm:$0xff]
      %v1510 = vld [vmem:[#allocation2 + $0x48] sm:$0xff]
      %v1511 = vld [vmem:[#allocation2 + $0x50] sm:$0xff]
      %v1512 = vld [vmem:[#allocation2 + $0x58] sm:$0xff]
      %v1513 = vld [vmem:[#allocation2 + $0x60] sm:$0xff]
      %v1514 = vld [vmem:[#allocation2 + $0x68] sm:$0xff]
      %v1515 = vld [vmem:[#allocation2 + $0x70] sm:$0xff]
      %v1516 = vld [vmem:[#allocation2 + $0x78] sm:$0xff]
      %v1517 = vld [vmem:[#allocation2 + $0x80] sm:$0xff]
      %v1518 = vld [vmem:[#allocation2 + $0x88] sm:$0xff]
      %v1519 = vld [vmem:[#allocation2 + $0x90] sm:$0xff]
      %v1520 = vld [vmem:[#allocation2 + $0x98] sm:$0xff]
      %v1521 = vld [vmem:[%s4] sm:$0x3]
      %v1523 = vperm.slane %v1521, 0
      %v1524 = vperm.slane %v1521, 1
      %v1527 = vadd.f32 %v1501, %v1523
      %v1528 = vadd.f32 %v1502, %v1524
      %v1529 = vadd.f32 %v1503, %v1523
      %v1530 = vadd.f32 %v1504, %v1524
      %v1531 = vadd.f32 %v1505, %v1523
      %v1532 = vadd.f32 %v1506, %v1524
      %v1533 = vadd.f32 %v1507, %v1523
      %v1534 = vadd.f32 %v1508, %v1524
      %v1535 = vadd.f32 %v1509, %v1523
      %v1536 = vadd.f32 %v1510, %v1524
      %v1537 = vadd.f32 %v1511, %v1523
      %v1538 = vadd.f32 %v1512, %v1524
      %v1539 = vadd.f32 %v1513, %v1523
      %v1540 = vadd.f32 %v1514, %v1524
      %v1541 = vadd.f32 %v1515, %v1523
      %v1542 = vadd.f32 %v1516, %v1524
      %v1543 = vadd.f32 %v1517, %v1523
      %v1544 = vadd.f32 %v1518, %v1524
      %v1545 = vadd.f32 %v1519, %v1523
      %v1546 = vadd.f32 %v1520, %v1524
      %v1547 = vmax.f32 %v1527, 0.0
      %v1548 = vmax.f32 %v1528, 0.0
      %v1549 = vmax.f32 %v1529, 0.0
      %v1550 = vmax.f32 %v1530, 0.0
      %v1551 = vmax.f32 %v1531, 0.0
      %v1552 = vmax.f32 %v1532, 0.0
      %v1553 = vmax.f32 %v1533, 0.0
      %v1554 = vmax.f32 %v1534, 0.0
      %v1555 = vmax.f32 %v1535, 0.0
      %v1556 = vmax.f32 %v1536, 0.0
      %v1557 = vmax.f32 %v1537, 0.0
      %v1558 = vmax.f32 %v1538, 0.0
      %v1559 = vmax.f32 %v1539, 0.0
      %v1560 = vmax.f32 %v1540, 0.0
      %v1561 = vmax.f32 %v1541, 0.0
      %v1562 = vmax.f32 %v1542, 0.0
      %v1563 = vmax.f32 %v1543, 0.0
      %v1564 = vmax.f32 %v1544, 0.0
      %v1565 = vmax.f32 %v1545, 0.0
      %v1566 = vmax.f32 %v1546, 0.0
      %1567 = vst [vmem:[%s370] sm:$0xff] %v1547
      %1568 = vst.msk [vmem:[%s370 + $0x8] sm:$0xff] %vm548, %v1548
      %1569 = vst [vmem:[%s370 + $0x10] sm:$0xff] %v1549
      %1570 = vst.msk [vmem:[%s370 + $0x18] sm:$0xff] %vm548, %v1550
      %1571 = vst [vmem:[%s370 + $0x20] sm:$0xff] %v1551
      %1572 = vst.msk [vmem:[%s370 + $0x28] sm:$0xff] %vm548, %v1552
      %1573 = vst [vmem:[%s370 + $0x30] sm:$0xff] %v1553
      %1574 = vst.msk [vmem:[%s370 + $0x38] sm:$0xff] %vm548, %v1554
      %1575 = vst [vmem:[%s370 + $0x40] sm:$0xff] %v1555
      %1576 = vst.msk [vmem:[%s370 + $0x48] sm:$0xff] %vm548, %v1556
      %1577 = vst [vmem:[%s370 + $0x50] sm:$0xff] %v1557
      %1578 = vst.msk [vmem:[%s370 + $0x58] sm:$0xff] %vm548, %v1558
      %1579 = vst [vmem:[%s370 + $0x60] sm:$0xff] %v1559
      %1580 = vst.msk [vmem:[%s370 + $0x68] sm:$0xff] %vm548, %v1560
      %1581 = vst [vmem:[%s370 + $0x70] sm:$0xff] %v1561
      %1582 = vst.msk [vmem:[%s370 + $0x78] sm:$0xff] %vm548, %v1562
      %1583 = vst [vmem:[%s370 + $0x80] sm:$0xff] %v1563
      %1584 = vst.msk [vmem:[%s370 + $0x88] sm:$0xff] %vm548, %v1564
      %1585 = vst [vmem:[%s370 + $0x90] sm:$0xff] %v1565
      %1586 = vst.msk [vmem:[%s370 + $0x98] sm:$0xff] %vm548, %v1566
      %p1587 = scmp.lt.s32.totalorder %s20, 1
      %s1588 = scalar_select %p1587, %s20, 1
      %p1589 = scmp.lt.s32.totalorder %s21, 3
      %s1590 = scalar_select %p1589, %s21, 3
      %s1591 = smul.addr %s1590, 20
      %s1592 = smul.addr %s1588, 80
      %s1593 = sadd.s32 %s1591, %s1592
      %s1594 = smul.addr %s1593, 8
      %s1595 = scalar_lea.vmem %s5, %s1594
      // Predicated region
      $region49: #{mixed_3b_forward.6} parent=39 // pred_check
        %p1596 = pneg %p186
      $region50: #{mixed_3b_forward.6} parent=39 // pred_check_branch
        %1598 = sbr.rel (%p1596) target = $region52
      $region51: #{mixed_3b_forward.6} parent=39 // pred_region
        _
      $region52: #{mixed_3b_forward.6} parent=39 // pred_fallthru
        _
    $region40: #{mixed_3b_forward.6} parent=5 // pred_fallthru
      _
    %p1599 = scmp.le.s32.totalorder 2, %s11
    // Predicated region
    $region53: #{mixed_3b_forward.6} parent=5 // pred_check
      %p1600 = pneg %p1599
    $region54: #{mixed_3b_forward.6} parent=5 // pred_check_branch
      %1602 = sbr.rel (%p1600) target = $region56
    $region55: #{mixed_3b_forward.6} parent=5 // pred_region
      %s1603 = ssub.s32 %s11, 2
      // Predicated region
      $region57: #{mixed_3b_forward.6} parent=55 // pred_check
        %p1604 = pneg %p192
      $region58: #{mixed_3b_forward.6} parent=55 // pred_check_branch
        %1606 = sbr.rel (%p1604) target = $region60
      $region59: #{mixed_3b_forward.6} parent=55 // pred_region
        %p1607 = scmp.lt.s32.totalorder %s22, 1
        %s1608 = scalar_select %p1607, %s22, 1
        %p1609 = scmp.lt.s32.totalorder %s23, 3
        %s1610 = scalar_select %p1609, %s23, 3
        %s1611 = smul.addr %s1610, 20
        %s1612 = smul.addr %s1608, 80
        %s1613 = sadd.s32 %s1611, %s1612
        %s1614 = smul.addr %s1613, 8
        %s1615 = scalar_lea.vmem %s5, %s1614
      $region60: #{mixed_3b_forward.6} parent=55 // pred_fallthru
        _
    $region56: #{mixed_3b_forward.6} parent=5 // pred_fallthru
      _
  $region6: #{mixed_3b_forward.6} parent=0 // loop_footer
    %s15 = sadd.s32 1, %s11
  $region7: #{mixed_3b_forward.6} parent=0 // loop_footer_branch
    %10 = sbr.rel target = $region3
  $region8: #{mixed_3b_forward.6} parent=0 // loop_exit
    _

// kernel: mixed_3b_forward.5
$region0: #{mixed_3b_forward.5}
  #allocation0 [shape = 'u32[]', space=smem, size = 0x4, offset = 0x4, fixed_abs, tag = 'smem constant byte address 0x4 - core index']
  #allocation1 [shape = 'u32[72,128]{1,0:T(1,128)}', space=vmem, size = 0x9000, scoped, tag = 'internal scratch']
  %s0 = inlined_call_operand.vmem [shape: bf16[8,120,112], index: 0, kind: input, shape index: {}]
  %s1 = inlined_call_operand.vmem [shape: bf16[9,112,160], index: 1, kind: input, shape index: {}]
  %s2 = inlined_call_operand.vmem [shape: f32[1,160], index: 2, kind: input, shape index: {}]
  %s3 = inlined_call_operand.vmem [shape: bf16[8,80,160], index: 3, kind: output, shape index: {}]
  %s4 = sld [smem:[#allocation0]]
  $region45: #{mixed_3b_forward.5} parent=0
    _
  %s6 = ssub.s32 1, %s4
  %s7 = scalar_select 0, %s6, %s4
  loop: start=0, step=1, limit=10
  $region2: #{mixed_3b_forward.5} parent=0 // loop_pre_header
    _
  $region3: #{mixed_3b_forward.5} parent=0 // loop_header
    %s9 = sphi 0, %s13
    %p10 = scmp.ge.s32.totalorder %s9, 10
    %s19 = sphi 0, %s21
    %s22 = sphi 0, %s19
    %s23 = sphi 0, %s22
    %s39 = sphi 0, %s23
    %s43 = sphi 0, %s43
    %s45 = sphi 0, %s43
    %s46 = sphi 0, %s45
    %s60 = sphi 0, %s46
    %s64 = sphi 0, %s64
    %s66 = sphi 0, %s64
    %s67 = sphi 0, %s66
    %s81 = sphi 0, %s67
    %s87 = sphi 0, %s89
    %s90 = sphi 0, %s87
    %s91 = sphi 0, %s90
    %s107 = sphi 0, %s91
  $region4: #{mixed_3b_forward.5} parent=0 // loop_header_branch
    %12 = sbr.rel (%p10) target = $region8
  $region5: #{mixed_3b_forward.5} parent=0 // loop_body
    %s14 = ssub.s32 %s9, 1
    %s15 = ssub.s32 %s9, 2
    %s16 = sadd.s32 %s9, 1
    %s17 = ssub.s32 %s9, %s16
    %p18 = scmp.eq.s32.totalorder %s17, 0
    %s20 = sadd.s32 %s19, 1
    %s21 = scalar_select %p18, %s19, %s20
    %p24 = pneg %p18
    %p25 = scmp.eq.s32.totalorder %s9, 7
    %p26 = por %p24, %p25
    %p27 = scmp.ne.s32.totalorder %s19, %s22
    %p28 = scmp.eq.s32.totalorder %s9, 0
    %p29 = por %p27, %p28
    %p30 = scmp.ne.s32.totalorder %s19, %s22
    %p31 = scmp.eq.s32.totalorder %s14, 7
    %p32 = por %p30, %p31
    %p33 = scmp.ne.s32.totalorder %s22, %s23
    %p34 = scmp.eq.s32.totalorder %s14, 0
    %p35 = por %p33, %p34
    %p36 = scmp.ne.s32.totalorder %s22, %s23
    %p37 = scmp.eq.s32.totalorder %s15, 7
    %p38 = por %p36, %p37
    %p40 = scmp.ne.s32.totalorder %s23, %s39
    %p41 = scmp.eq.s32.totalorder %s15, 0
    %p42 = por %p40, %p41
    %s44 = sadd.s32 %s43, 1
    %p47 = scmp.eq.s32.totalorder %s9, 7
    %p48 = scmp.ne.s32.totalorder %s43, %s45
    %p49 = scmp.eq.s32.totalorder %s9, 0
    %p50 = por %p48, %p49
    %p51 = scmp.ne.s32.totalorder %s43, %s45
    %p52 = scmp.eq.s32.totalorder %s14, 7
    %p53 = por %p51, %p52
    %p54 = scmp.ne.s32.totalorder %s45, %s46
    %p55 = scmp.eq.s32.totalorder %s14, 0
    %p56 = por %p54, %p55
    %p57 = scmp.ne.s32.totalorder %s45, %s46
    %p58 = scmp.eq.s32.totalorder %s15, 7
    %p59 = por %p57, %p58
    %p61 = scmp.ne.s32.totalorder %s46, %s60
    %p62 = scmp.eq.s32.totalorder %s15, 0
    %p63 = por %p61, %p62
    %s65 = sadd.s32 %s64, 1
    %p68 = scmp.eq.s32.totalorder %s9, 7
    %p69 = scmp.ne.s32.totalorder %s64, %s66
    %p70 = scmp.eq.s32.totalorder %s9, 0
    %p71 = por %p69, %p70
    %p72 = scmp.ne.s32.totalorder %s64, %s66
    %p73 = scmp.eq.s32.totalorder %s14, 7
    %p74 = por %p72, %p73
    %p75 = scmp.ne.s32.totalorder %s66, %s67
    %p76 = scmp.eq.s32.totalorder %s14, 0
    %p77 = por %p75, %p76
    %p78 = scmp.ne.s32.totalorder %s66, %s67
    %p79 = scmp.eq.s32.totalorder %s15, 7
    %p80 = por %p78, %p79
    %p82 = scmp.ne.s32.totalorder %s67, %s81
    %p83 = scmp.eq.s32.totalorder %s15, 0
    %p84 = por %p82, %p83
    %s85 = ssub.s32 %s9, %s16
    %p86 = scmp.eq.s32.totalorder %s85, 0
    %s88 = sadd.s32 %s87, 1
    %s89 = scalar_select %p86, %s87, %s88
    %p92 = pneg %p86
    %p93 = scmp.eq.s32.totalorder %s9, 7
    %p94 = por %p92, %p93
    %p95 = scmp.ne.s32.totalorder %s87, %s90
    %p96 = scmp.eq.s32.totalorder %s9, 0
    %p97 = por %p95, %p96
    %p98 = scmp.ne.s32.totalorder %s87, %s90
    %p99 = scmp.eq.s32.totalorder %s14, 7
    %p100 = por %p98, %p99
    %p101 = scmp.ne.s32.totalorder %s90, %s91
    %p102 = scmp.eq.s32.totalorder %s14, 0
    %p103 = por %p101, %p102
    %p104 = scmp.ne.s32.totalorder %s90, %s91
    %p105 = scmp.eq.s32.totalorder %s15, 7
    %p106 = por %p104, %p105
    %p108 = scmp.ne.s32.totalorder %s91, %s107
    %p109 = scmp.eq.s32.totalorder %s15, 0
    %p110 = por %p108, %p109
    %p111 = scmp.le.s32.totalorder 1, %s9
    %p112 = scmp.lt.s32.totalorder %s9, 9
    %p113 = pnand %p111, %p112
    %p114 = pneg %p113
    // Predicated region
    $region9: #{mixed_3b_forward.5} parent=5 // pred_check
      _
    $region10: #{mixed_3b_forward.5} parent=5 // pred_check_branch
      %116 = sbr.rel (%p113) target = $region12
    $region11: #{mixed_3b_forward.5} parent=5 // pred_region
      %s117 = ssub.s32 %s9, 1
      // Predicated region
      $region13: #{mixed_3b_forward.5} parent=11 // pred_check
        %p118 = pneg %p56
      $region14: #{mixed_3b_forward.5} parent=11 // pred_check_branch
        %120 = sbr.rel (%p118) target = $region16
      $region15: #{mixed_3b_forward.5} parent=11 // pred_region
        _
      $region16: #{mixed_3b_forward.5} parent=11 // pred_fallthru
        _
      // Predicated region
      $region17: #{mixed_3b_forward.5} parent=11 // pred_check
        %p121 = pneg %p77
      $region18: #{mixed_3b_forward.5} parent=11 // pred_check_branch
        %123 = sbr.rel (%p121) target = $region20
      $region19: #{mixed_3b_forward.5} parent=11 // pred_region
        _
      $region20: #{mixed_3b_forward.5} parent=11 // pred_fallthru
        _
    $region12: #{mixed_3b_forward.5} parent=5 // pred_fallthru
      _
    %p124 = scmp.lt.s32.totalorder %s9, 8
    // Predicated region
    $region21: #{mixed_3b_forward.5} parent=5 // pred_check
      %p125 = pneg %p124
    $region22: #{mixed_3b_forward.5} parent=5 // pred_check_branch
      %127 = sbr.rel (%p125) target = $region24
    $region23: #{mixed_3b_forward.5} parent=5 // pred_region
      // Predicated region
      $region25: #{mixed_3b_forward.5} parent=23 // pred_check
        %p128 = pneg %p29
      $region26: #{mixed_3b_forward.5} parent=23 // pred_check_branch
        %130 = sbr.rel (%p128) target = $region28
      $region27: #{mixed_3b_forward.5} parent=23 // pred_region
        %p131 = scmp.lt.s32.totalorder %s9, 7
        %s132 = scalar_select %p131, %s9, 7
        %s133 = smul.addr %s132, 15
        %s134 = smul.addr %s133, 4
        %s135 = scalar_lea.vmem %s0, %s134
      $region28: #{mixed_3b_forward.5} parent=23 // pred_fallthru
        _
    $region24: #{mixed_3b_forward.5} parent=5 // pred_fallthru
      _
    %p136 = scmp.le.s32.totalorder 1, %s9
    %p137 = scmp.lt.s32.totalorder %s9, 9
    %p138 = pnand %p136, %p137
    %p139 = pneg %p138
    // Predicated region
    $region29: #{mixed_3b_forward.5} parent=5 // pred_check
      _
    $region30: #{mixed_3b_forward.5} parent=5 // pred_check_branch
      %141 = sbr.rel (%p138) target = $region32
    $region31: #{mixed_3b_forward.5} parent=5 // pred_region
      %s142 = ssub.s32 %s9, 1
      %p143 = scmp.lt.s32.totalorder %s14, 7
      %s144 = scalar_select %p143, %s14, 7
      %s145 = smul.addr %s144, 15
      %s146 = smul.addr %s145, 4
      %s147 = scalar_lea.vmem %s0, %s146
      %p148 = pneg %p35
      %p149 = pneg %p32
      %p150 = pneg %p56
      %p151 = pneg %p53
      %p152 = pneg %p77
      %p153 = pneg %p74
      %p154 = pneg %p103
      %p155 = pneg %p100
      %p156 = scmp.lt.s32.totalorder %s14, 7
      %s157 = scalar_select %p156, %s14, 7
      %s158 = smul.addr %s157, 20
      %s159 = smul.addr %s158, 4
      %s160 = scalar_lea.vmem %s3, %s159
      %p161 = scmp.lt.s32.totalorder %s14, 7
      %s162 = scalar_select %p161, %s14, 7
      %s163 = smul.addr %s162, 15
      %s164 = smul.addr %s163, 4
      %s165 = scalar_lea.vmem %s0, %s164
      %p166 = scmp.lt.s32.totalorder %s14, 7
      %s167 = scalar_select %p166, %s14, 7
      %s168 = smul.addr %s167, 20
      %s169 = smul.addr %s168, 4
      %s170 = scalar_lea.vmem %s3, %s169
      %v172 = vld [vmem:[%s165 + $0x4] sm:$0xf]
      %v173 = vld [vmem:[%s165 + $0x8] sm:$0xf]
      %v174 = vld [vmem:[%s165 + $0xc] sm:$0xf]
      %v175 = vld [vmem:[%s165 + $0x10] sm:$0xf]
      %v176 = vld [vmem:[%s165 + $0x14] sm:$0xf]
      %v177 = vld [vmem:[%s165 + $0x18] sm:$0xf]
      %v178 = vld [vmem:[%s165 + $0x1c] sm:$0xf]
      %v179 = vld [vmem:[%s165 + $0x20] sm:$0xf]
      %v180 = vld [vmem:[%s165 + $0x24] sm:$0xf]
      %v181 = vld [vmem:[%s165 + $0x28] sm:$0xf]
      %v182 = vld [vmem:[%s165 + $0x2c] sm:$0x1]
      %v183 = vld [vmem:[%s1] sm:$0xff]
      %v184 = vld [vmem:[%s1 + $0x8] sm:$0xff]
      %v185 = vld [vmem:[%s1 + $0x10] sm:$0xff]
      %v186 = vld [vmem:[%s1 + $0x18] sm:$0xff]
      %v187 = vld [vmem:[%s1 + $0x20] sm:$0xff]
      %v188 = vld [vmem:[%s1 + $0x28] sm:$0xff]
      %v189 = vld [vmem:[%s1 + $0x30] sm:$0xff]
      %v190 = vld [vmem:[%s1 + $0x38] sm:$0xff]
      %v191 = vld [vmem:[%s1 + $0x40] sm:$0xff]
      %v192 = vld [vmem:[%s1 + $0x48] sm:$0xff]
      %v193 = vld [vmem:[%s1 + $0x50] sm:$0xff]
      %v194 = vld [vmem:[%s1 + $0x58] sm:$0xff]
      %v195 = vld [vmem:[%s1 + $0x60] sm:$0xff]
      %v196 = vld [vmem:[%s1 + $0x68] sm:$0xff]
      %v197 = vld [vmem:[%s165 + $0x4] sm:$0xe]
      %s198 = scalar_lea.vmem %s1, 112
      %v199 = vld [vmem:[%s198] sm:$0xff]
      %v200 = vld [vmem:[%s198 + $0x8] sm:$0xff]
      %v201 = vld [vmem:[%s198 + $0x10] sm:$0xff]
      %v202 = vld [vmem:[%s198 + $0x18] sm:$0xff]
      %v203 = vld [vmem:[%s198 + $0x20] sm:$0xff]
      %v204 = vld [vmem:[%s198 + $0x28] sm:$0xff]
      %v205 = vld [vmem:[%s198 + $0x30] sm:$0xff]
      %v206 = vld [vmem:[%s198 + $0x38] sm:$0xff]
      %v207 = vld [vmem:[%s198 + $0x40] sm:$0xff]
      %v208 = vld [vmem:[%s198 + $0x48] sm:$0xff]
      %v209 = vld [vmem:[%s198 + $0x50] sm:$0xff]
      %v210 = vld [vmem:[%s198 + $0x58] sm:$0xff]
      %v211 = vld [vmem:[%s198 + $0x60] sm:$0xff]
      %v212 = vld [vmem:[%s198 + $0x68] sm:$0xff]
      %v224 = vunpack.c.l.b16 %v197
      %v225 = vunpack.c.l.b16 %v173
      %v226 = vunpack.c.l.b16 %v174
      %v227 = vunpack.c.l.b16 %v175
      %v228 = vunpack.c.l.b16 %v176
      %v229 = vunpack.c.l.b16 %v177
      %v230 = vunpack.c.l.b16 %v178
      %v231 = vunpack.c.l.b16 %v179
      %v232 = vunpack.c.l.b16 %v180
      %v233 = vunpack.c.l.b16 %v181
      %v234 = vunpack.c.l.b16 %v182
      %v235 = vpack.c.b16 %v225, %v224
      %v236 = vpack.c.b16 %v227, %v226
      %v237 = vpack.c.b16 %v229, %v228
      %v238 = vpack.c.b16 %v231, %v230
      %v239 = vpack.c.b16 %v233, %v232
      %v240 = vpack.c.b16 %v234, %v234
      %vm241 = vcmask 1046528
      %v242 = vrot.slane %v235, 1
      %v243 = vrot.slane %v236, 1
      %v244 = vsel %vm241, %v242, %v243
      %v245 = vrot.slane %v237, 1
      %v246 = vsel %vm241, %v243, %v245
      %v247 = vrot.slane %v238, 1
      %v248 = vsel %vm241, %v245, %v247
      %v249 = vrot.slane %v239, 1
      %v250 = vsel %vm241, %v247, %v249
      %v251 = vrot.slane %v240, 1
      %v252 = vsel %vm241, %v249, %v251
      %v267 = vunpack.c.l.b16 %v199
      %v268 = vunpack.c.h.b16 %v199
      %v269 = vunpack.c.l.b16 %v200
      %v270 = vunpack.c.h.b16 %v200
      %v271 = vunpack.c.l.b16 %v201
      %v272 = vunpack.c.h.b16 %v201
      %v273 = vunpack.c.l.b16 %v202
      %v274 = vunpack.c.h.b16 %v202
      %v275 = vunpack.c.l.b16 %v203
      %v276 = vunpack.c.h.b16 %v203
      %v277 = vunpack.c.l.b16 %v204
      %v278 = vunpack.c.h.b16 %v204
      %v279 = vunpack.c.l.b16 %v205
      %v280 = vunpack.c.h.b16 %v205
      %v281 = vunpack.c.l.b16 %v206
      %v282 = vunpack.c.h.b16 %v206
      %v283 = vunpack.c.l.b16 %v207
      %v284 = vunpack.c.h.b16 %v207
      %v285 = vunpack.c.l.b16 %v208
      %v286 = vunpack.c.h.b16 %v208
      %v287 = vunpack.c.l.b16 %v209
      %v288 = vunpack.c.h.b16 %v209
      %v289 = vunpack.c.l.b16 %v210
      %v290 = vunpack.c.h.b16 %v210
      %v291 = vunpack.c.l.b16 %v211
      %v292 = vunpack.c.h.b16 %v211
      %v293 = vunpack.c.l.b16 %v212
      %v294 = vunpack.c.h.b16 %v212
      %v295 = vpack.c.b16 %v269, %v267
      %v296 = vpack.c.b16 %v270, %v268
      %v297 = vpack.c.b16 %v273, %v271
      %v298 = vpack.c.b16 %v274, %v272
      %v299 = vpack.c.b16 %v277, %v275
      %v300 = vpack.c.b16 %v278, %v276
      %v301 = vpack.c.b16 %v281, %v279
      %v302 = vpack.c.b16 %v282, %v280
      %v303 = vpack.c.b16 %v285, %v283
      %v304 = vpack.c.b16 %v286, %v284
      %v305 = vpack.c.b16 %v289, %v287
      %v306 = vpack.c.b16 %v290, %v288
      %v307 = vpack.c.b16 %v293, %v291
      %v308 = vpack.c.b16 %v294, %v292
      %vm323 = vcmask 916480
      %v325 = vsel %vm323, %v244, 0
      %v328 = vsel %vm323, %v246, 0
      %v331 = vsel %vm323, %v248, 0
      %v334 = vsel %vm323, %v250, 0
      %v337 = vsel %vm323, %v252, 0
      %339 = vmatpush.bf16.msra.mxu0 0
      %340 = vmatpush.bf16.msra.mxu0 %v307
      %341 = vmatpush.bf16.msra.mxu0 %v305
      %342 = vmatpush.bf16.msra.mxu0 %v303
      %343 = vmatpush.bf16.msra.mxu0 %v301
      %344 = vmatpush.bf16.msra.mxu0 %v299
      %345 = vmatpush.bf16.msra.mxu0 %v297
      %346 = vmatpush.bf16.msra.mxu0 %v295
      %347 = vmatmul.bf16.gmra.mxu0 %v325
      %v348 = vpop.f32.mrf.mxu0
      %v349 = vadd.f32 0.0, %v348
      %v350 = vpop.f32.mrf.mxu0
      %v351 = vadd.f32 0.0, %v350
      %352 = vmatmul.bf16.gmra.mxu0 %v328
      %v353 = vpop.f32.mrf.mxu0
      %v354 = vadd.f32 0.0, %v353
      %v355 = vpop.f32.mrf.mxu0
      %v356 = vadd.f32 0.0, %v355
      %357 = vmatmul.bf16.gmra.mxu0 %v331
      %v358 = vpop.f32.mrf.mxu0
      %v359 = vadd.f32 0.0, %v358
      %v360 = vpop.f32.mrf.mxu0
      %v361 = vadd.f32 0.0, %v360
      %362 = vmatmul.bf16.gmra.mxu0 %v334
      %v363 = vpop.f32.mrf.mxu0
      %v364 = vadd.f32 0.0, %v363
      %v365 = vpop.f32.mrf.mxu0
      %v366 = vadd.f32 0.0, %v365
      %367 = vmatmul.bf16.gmra.mxu0 %v337
      %v368 = vpop.f32.mrf.mxu0
      %v369 = vadd.f32 0.0, %v368
      %v370 = vpop.f32.mrf.mxu0
      %v371 = vadd.f32 0.0, %v370
      %372 = vdwg.mxu0
      %373 = vmatpush.bf16.msra.mxu0 0
      %374 = vmatpush.bf16.msra.mxu0 %v308
      %375 = vmatpush.bf16.msra.mxu0 %v306
      %376 = vmatpush.bf16.msra.mxu0 %v304
      %377 = vmatpush.bf16.msra.mxu0 %v302
      %378 = vmatpush.bf16.msra.mxu0 %v300
      %379 = vmatpush.bf16.msra.mxu0 %v298
      %380 = vmatpush.bf16.msra.mxu0 %v296
      %381 = vmatmul.bf16.gmra.mxu0 %v325
      %v382 = vpop.f32.mrf.mxu0
      %v383 = vadd.f32 0.0, %v382
      %v384 = vpop.f32.mrf.mxu0
      %v385 = vadd.f32 0.0, %v384
      %386 = vmatmul.bf16.gmra.mxu0 %v328
      %v387 = vpop.f32.mrf.mxu0
      %v388 = vadd.f32 0.0, %v387
      %v389 = vpop.f32.mrf.mxu0
      %v390 = vadd.f32 0.0, %v389
      %391 = vmatmul.bf16.gmra.mxu0 %v331
      %v392 = vpop.f32.mrf.mxu0
      %v393 = vadd.f32 0.0, %v392
      %v394 = vpop.f32.mrf.mxu0
      %v395 = vadd.f32 0.0, %v394
      %396 = vmatmul.bf16.gmra.mxu0 %v334
      %v397 = vpop.f32.mrf.mxu0
      %v398 = vadd.f32 0.0, %v397
      %v399 = vpop.f32.mrf.mxu0
      %v400 = vadd.f32 0.0, %v399
      %401 = vmatmul.bf16.gmra.mxu0 %v337
      %v402 = vpop.f32.mrf.mxu0
      %v403 = vadd.f32 0.0, %v402
      %v404 = vpop.f32.mrf.mxu0
      %v405 = vadd.f32 0.0, %v404
      %406 = vdwg.mxu0
      %v408 = vunpack.c.l.b16 %v172
      %v409 = vpack.c.b16 %v225, %v408
      %vm410 = vsmask.f32 7424
      %v412 = vshrl.u32 %v409, 16
      %v414 = vshll.u32 %v409, 16
      %v416 = vrot.slane %v414, 1
      %v417 = vor.u32 %v412, %v416
      %v419 = vshll.u32 %v236, 16
      %v421 = vrot.slane %v419, 1
      %v422 = vsel %vm410, %v417, %v421
      %v423 = vshrl.u32 %v236, 16
      %v425 = vor.u32 %v423, %v421
      %v427 = vshll.u32 %v237, 16
      %v429 = vrot.slane %v427, 1
      %v430 = vsel %vm410, %v425, %v429
      %v431 = vshrl.u32 %v237, 16
      %v433 = vor.u32 %v431, %v429
      %v435 = vshll.u32 %v238, 16
      %v437 = vrot.slane %v435, 1
      %v438 = vsel %vm410, %v433, %v437
      %v439 = vshrl.u32 %v238, 16
      %v441 = vor.u32 %v439, %v437
      %v443 = vshll.u32 %v239, 16
      %v445 = vrot.slane %v443, 1
      %v446 = vsel %vm410, %v441, %v445
      %v447 = vshrl.u32 %v239, 16
      %v449 = vor.u32 %v447, %v445
      %v451 = vshll.u32 %v240, 16
      %v453 = vrot.slane %v451, 1
      %v454 = vsel %vm410, %v449, %v453
      %v469 = vunpack.c.l.b16 %v183
      %v470 = vunpack.c.h.b16 %v183
      %v471 = vunpack.c.l.b16 %v184
      %v472 = vunpack.c.h.b16 %v184
      %v473 = vunpack.c.l.b16 %v185
      %v474 = vunpack.c.h.b16 %v185
      %v475 = vunpack.c.l.b16 %v186
      %v476 = vunpack.c.h.b16 %v186
      %v477 = vunpack.c.l.b16 %v187
      %v478 = vunpack.c.h.b16 %v187
      %v479 = vunpack.c.l.b16 %v188
      %v480 = vunpack.c.h.b16 %v188
      %v481 = vunpack.c.l.b16 %v189
      %v482 = vunpack.c.h.b16 %v189
      %v483 = vunpack.c.l.b16 %v190
      %v484 = vunpack.c.h.b16 %v190
      %v485 = vunpack.c.l.b16 %v191
      %v486 = vunpack.c.h.b16 %v191
      %v487 = vunpack.c.l.b16 %v192
      %v488 = vunpack.c.h.b16 %v192
      %v489 = vunpack.c.l.b16 %v193
      %v490 = vunpack.c.h.b16 %v193
      %v491 = vunpack.c.l.b16 %v194
      %v492 = vunpack.c.h.b16 %v194
      %v493 = vunpack.c.l.b16 %v195
      %v494 = vunpack.c.h.b16 %v195
      %v495 = vunpack.c.l.b16 %v196
      %v496 = vunpack.c.h.b16 %v196
      %v497 = vpack.c.b16 %v471, %v469
      %v498 = vpack.c.b16 %v472, %v470
      %v499 = vpack.c.b16 %v475, %v473
      %v500 = vpack.c.b16 %v476, %v474
      %v501 = vpack.c.b16 %v479, %v477
      %v502 = vpack.c.b16 %v480, %v478
      %v503 = vpack.c.b16 %v483, %v481
      %v504 = vpack.c.b16 %v484, %v482
      %v505 = vpack.c.b16 %v487, %v485
      %v506 = vpack.c.b16 %v488, %v486
      %v507 = vpack.c.b16 %v491, %v489
      %v508 = vpack.c.b16 %v492, %v490
      %v509 = vpack.c.b16 %v495, %v493
      %v510 = vpack.c.b16 %v496, %v494
      %v526 = vsel %vm323, %v422, 0
      %v529 = vsel %vm323, %v430, 0
      %v532 = vsel %vm323, %v438, 0
      %v535 = vsel %vm323, %v446, 0
      %v538 = vsel %vm323, %v454, 0
      %540 = vmatpush.bf16.msra.mxu0 0
      %541 = vmatpush.bf16.msra.mxu0 %v509
      %542 = vmatpush.bf16.msra.mxu0 %v507
      %543 = vmatpush.bf16.msra.mxu0 %v505
      %544 = vmatpush.bf16.msra.mxu0 %v503
      %545 = vmatpush.bf16.msra.mxu0 %v501
      %546 = vmatpush.bf16.msra.mxu0 %v499
      %547 = vmatpush.bf16.msra.mxu0 %v497
      %548 = vmatmul.bf16.gmra.mxu0 %v526
      %v549 = vpop.f32.mrf.mxu0
      %v550 = vadd.f32 %v349, %v549
      %v551 = vpop.f32.mrf.mxu0
      %v552 = vadd.f32 %v351, %v551
      %553 = vmatmul.bf16.gmra.mxu0 %v529
      %v554 = vpop.f32.mrf.mxu0
      %v555 = vadd.f32 %v354, %v554
      %v556 = vpop.f32.mrf.mxu0
      %v557 = vadd.f32 %v356, %v556
      %558 = vmatmul.bf16.gmra.mxu0 %v532
      %v559 = vpop.f32.mrf.mxu0
      %v560 = vadd.f32 %v359, %v559
      %v561 = vpop.f32.mrf.mxu0
      %v562 = vadd.f32 %v361, %v561
      %563 = vmatmul.bf16.gmra.mxu0 %v535
      %v564 = vpop.f32.mrf.mxu0
      %v565 = vadd.f32 %v364, %v564
      %v566 = vpop.f32.mrf.mxu0
      %v567 = vadd.f32 %v366, %v566
      %568 = vmatmul.bf16.gmra.mxu0 %v538
      %v569 = vpop.f32.mrf.mxu0
      %v570 = vadd.f32 %v369, %v569
      %v571 = vpop.f32.mrf.mxu0
      %v572 = vadd.f32 %v371, %v571
      %573 = vdwg.mxu0
      %574 = vmatpush.bf16.msra.mxu0 0
      %575 = vmatpush.bf16.msra.mxu0 %v510
      %576 = vmatpush.bf16.msra.mxu0 %v508
      %577 = vmatpush.bf16.msra.mxu0 %v506
      %578 = vmatpush.bf16.msra.mxu0 %v504
      %579 = vmatpush.bf16.msra.mxu0 %v502
      %580 = vmatpush.bf16.msra.mxu0 %v500
      %581 = vmatpush.bf16.msra.mxu0 %v498
      %582 = vmatmul.bf16.gmra.mxu0 %v526
      %v583 = vpop.f32.mrf.mxu0
      %v584 = vadd.f32 %v383, %v583
      %v585 = vpop.f32.mrf.mxu0
      %v586 = vadd.f32 %v385, %v585
      %587 = vmatmul.bf16.gmra.mxu0 %v529
      %v588 = vpop.f32.mrf.mxu0
      %v589 = vadd.f32 %v388, %v588
      %v590 = vpop.f32.mrf.mxu0
      %v591 = vadd.f32 %v390, %v590
      %592 = vmatmul.bf16.gmra.mxu0 %v532
      %v593 = vpop.f32.mrf.mxu0
      %v594 = vadd.f32 %v393, %v593
      %v595 = vpop.f32.mrf.mxu0
      %v596 = vadd.f32 %v395, %v595
      %597 = vmatmul.bf16.gmra.mxu0 %v535
      %v598 = vpop.f32.mrf.mxu0
      %v599 = vadd.f32 %v398, %v598
      %v600 = vpop.f32.mrf.mxu0
      %v601 = vadd.f32 %v400, %v600
      %602 = vmatmul.bf16.gmra.mxu0 %v538
      %v603 = vpop.f32.mrf.mxu0
      %v604 = vadd.f32 %v403, %v603
      %v605 = vpop.f32.mrf.mxu0
      %v606 = vadd.f32 %v405, %v605
      %607 = vdwg.mxu0
      %v608 = vld [vmem:[%s165 + $0x2c] sm:$0x3]
      %s609 = scalar_lea.vmem %s1, 224
      %v610 = vld [vmem:[%s609] sm:$0xff]
      %v611 = vld [vmem:[%s609 + $0x8] sm:$0xff]
      %v612 = vld [vmem:[%s609 + $0x10] sm:$0xff]
      %v613 = vld [vmem:[%s609 + $0x18] sm:$0xff]
      %v614 = vld [vmem:[%s609 + $0x20] sm:$0xff]
      %v615 = vld [vmem:[%s609 + $0x28] sm:$0xff]
      %v616 = vld [vmem:[%s609 + $0x30] sm:$0xff]
      %v617 = vld [vmem:[%s609 + $0x38] sm:$0xff]
      %v618 = vld [vmem:[%s609 + $0x40] sm:$0xff]
      %v619 = vld [vmem:[%s609 + $0x48] sm:$0xff]
      %v620 = vld [vmem:[%s609 + $0x50] sm:$0xff]
      %v621 = vld [vmem:[%s609 + $0x58] sm:$0xff]
      %v622 = vld [vmem:[%s609 + $0x60] sm:$0xff]
      %v623 = vld [vmem:[%s609 + $0x68] sm:$0xff]
      %v625 = vunpack.c.l.b16 %v608
      %v626 = vpack.c.b16 %v625, %v625
      %vm627 = vsmask.f32 6400
      %v629 = vshrl.u32 %v235, 16
      %v631 = vrot.slane %v629, 1
      %v632 = vshll.u32 %v235, 16
      %v634 = vrot.slane %v632, 2
      %v635 = vor.u32 %v631, %v634
      %v636 = vrot.slane %v423, 1
      %v637 = vrot.slane %v419, 2
      %v638 = vor.u32 %v636, %v637
      %v639 = vsel %vm627, %v635, %v638
      %v640 = vrot.slane %v431, 1
      %v641 = vrot.slane %v427, 2
      %v642 = vor.u32 %v640, %v641
      %v643 = vsel %vm627, %v638, %v642
      %v644 = vrot.slane %v439, 1
      %v645 = vrot.slane %v435, 2
      %v646 = vor.u32 %v644, %v645
      %v647 = vsel %vm627, %v642, %v646
      %v648 = vrot.slane %v447, 1
      %v649 = vrot.slane %v443, 2
      %v650 = vor.u32 %v648, %v649
      %v651 = vsel %vm627, %v646, %v650
      %v653 = vshrl.u32 %v626, 16
      %v655 = vrot.slane %v653, 1
      %v656 = vshll.u32 %v626, 16
      %v658 = vrot.slane %v656, 2
      %v659 = vor.u32 %v655, %v658
      %v660 = vsel %vm627, %v650, %v659
      %v675 = vunpack.c.l.b16 %v610
      %v676 = vunpack.c.h.b16 %v610
      %v677 = vunpack.c.l.b16 %v611
      %v678 = vunpack.c.h.b16 %v611
      %v679 = vunpack.c.l.b16 %v612
      %v680 = vunpack.c.h.b16 %v612
      %v681 = vunpack.c.l.b16 %v613
      %v682 = vunpack.c.h.b16 %v613
      %v683 = vunpack.c.l.b16 %v614
      %v684 = vunpack.c.h.b16 %v614
      %v685 = vunpack.c.l.b16 %v615
      %v686 = vunpack.c.h.b16 %v615
      %v687 = vunpack.c.l.b16 %v616
      %v688 = vunpack.c.h.b16 %v616
      %v689 = vunpack.c.l.b16 %v617
      %v690 = vunpack.c.h.b16 %v617
      %v691 = vunpack.c.l.b16 %v618
      %v692 = vunpack.c.h.b16 %v618
      %v693 = vunpack.c.l.b16 %v619
      %v694 = vunpack.c.h.b16 %v619
      %v695 = vunpack.c.l.b16 %v620
      %v696 = vunpack.c.h.b16 %v620
      %v697 = vunpack.c.l.b16 %v621
      %v698 = vunpack.c.h.b16 %v621
      %v699 = vunpack.c.l.b16 %v622
      %v700 = vunpack.c.h.b16 %v622
      %v701 = vunpack.c.l.b16 %v623
      %v702 = vunpack.c.h.b16 %v623
      %v703 = vpack.c.b16 %v677, %v675
      %v704 = vpack.c.b16 %v678, %v676
      %v705 = vpack.c.b16 %v681, %v679
      %v706 = vpack.c.b16 %v682, %v680
      %v707 = vpack.c.b16 %v685, %v683
      %v708 = vpack.c.b16 %v686, %v684
      %v709 = vpack.c.b16 %v689, %v687
      %v710 = vpack.c.b16 %v690, %v688
      %v711 = vpack.c.b16 %v693, %v691
      %v712 = vpack.c.b16 %v694, %v692
      %v713 = vpack.c.b16 %v697, %v695
      %v714 = vpack.c.b16 %v698, %v696
      %v715 = vpack.c.b16 %v701, %v699
      %v716 = vpack.c.b16 %v702, %v700
      %v732 = vsel %vm323, %v639, 0
      %v735 = vsel %vm323, %v643, 0
      %v738 = vsel %vm323, %v647, 0
      %v741 = vsel %vm323, %v651, 0
      %v744 = vsel %vm323, %v660, 0
      %746 = vmatpush.bf16.msra.mxu0 0
      %747 = vmatpush.bf16.msra.mxu0 %v715
      %748 = vmatpush.bf16.msra.mxu0 %v713
      %749 = vmatpush.bf16.msra.mxu0 %v711
      %750 = vmatpush.bf16.msra.mxu0 %v709
      %751 = vmatpush.bf16.msra.mxu0 %v707
      %752 = vmatpush.bf16.msra.mxu0 %v705
      %753 = vmatpush.bf16.msra.mxu0 %v703
      %754 = vmatmul.bf16.gmra.mxu0 %v732
      %v755 = vpop.f32.mrf.mxu0
      %v756 = vadd.f32 0.0, %v755
      %v757 = vpop.f32.mrf.mxu0
      %v758 = vadd.f32 0.0, %v757
      %759 = vmatmul.bf16.gmra.mxu0 %v735
      %v760 = vpop.f32.mrf.mxu0
      %v761 = vadd.f32 0.0, %v760
      %v762 = vpop.f32.mrf.mxu0
      %v763 = vadd.f32 0.0, %v762
      %764 = vmatmul.bf16.gmra.mxu0 %v738
      %v765 = vpop.f32.mrf.mxu0
      %v766 = vadd.f32 0.0, %v765
      %v767 = vpop.f32.mrf.mxu0
      %v768 = vadd.f32 0.0, %v767
      %769 = vmatmul.bf16.gmra.mxu0 %v741
      %v770 = vpop.f32.mrf.mxu0
      %v771 = vadd.f32 0.0, %v770
      %v772 = vpop.f32.mrf.mxu0
      %v773 = vadd.f32 0.0, %v772
      %774 = vmatmul.bf16.gmra.mxu0 %v744
      %v775 = vpop.f32.mrf.mxu0
      %v776 = vadd.f32 0.0, %v775
      %v777 = vpop.f32.mrf.mxu0
      %v778 = vadd.f32 0.0, %v777
      %779 = vdwg.mxu0
      %780 = vmatpush.bf16.msra.mxu0 0
      %781 = vmatpush.bf16.msra.mxu0 %v716
      %782 = vmatpush.bf16.msra.mxu0 %v714
      %783 = vmatpush.bf16.msra.mxu0 %v712
      %784 = vmatpush.bf16.msra.mxu0 %v710
      %785 = vmatpush.bf16.msra.mxu0 %v708
      %786 = vmatpush.bf16.msra.mxu0 %v706
      %787 = vmatpush.bf16.msra.mxu0 %v704
      %788 = vmatmul.bf16.gmra.mxu0 %v732
      %v789 = vpop.f32.mrf.mxu0
      %v790 = vadd.f32 0.0, %v789
      %v791 = vpop.f32.mrf.mxu0
      %v792 = vadd.f32 0.0, %v791
      %793 = vmatmul.bf16.gmra.mxu0 %v735
      %v794 = vpop.f32.mrf.mxu0
      %v795 = vadd.f32 0.0, %v794
      %v796 = vpop.f32.mrf.mxu0
      %v797 = vadd.f32 0.0, %v796
      %798 = vmatmul.bf16.gmra.mxu0 %v738
      %v799 = vpop.f32.mrf.mxu0
      %v800 = vadd.f32 0.0, %v799
      %v801 = vpop.f32.mrf.mxu0
      %v802 = vadd.f32 0.0, %v801
      %803 = vmatmul.bf16.gmra.mxu0 %v741
      %v804 = vpop.f32.mrf.mxu0
      %v805 = vadd.f32 0.0, %v804
      %v806 = vpop.f32.mrf.mxu0
      %v807 = vadd.f32 0.0, %v806
      %808 = vmatmul.bf16.gmra.mxu0 %v744
      %v809 = vpop.f32.mrf.mxu0
      %v810 = vadd.f32 0.0, %v809
      %v811 = vpop.f32.mrf.mxu0
      %v812 = vadd.f32 0.0, %v811
      %813 = vdwg.mxu0
      %v814 = vadd.f32 %v550, %v756
      %v815 = vadd.f32 %v584, %v790
      %v816 = vadd.f32 %v552, %v758
      %v817 = vadd.f32 %v586, %v792
      %v818 = vadd.f32 %v555, %v761
      %v819 = vadd.f32 %v589, %v795
      %v820 = vadd.f32 %v557, %v763
      %v821 = vadd.f32 %v591, %v797
      %v822 = vadd.f32 %v560, %v766
      %v823 = vadd.f32 %v594, %v800
      %v824 = vadd.f32 %v562, %v768
      %v825 = vadd.f32 %v596, %v802
      %v826 = vadd.f32 %v565, %v771
      %v827 = vadd.f32 %v599, %v805
      %v828 = vadd.f32 %v567, %v773
      %v829 = vadd.f32 %v601, %v807
      %v830 = vadd.f32 %v570, %v776
      %v831 = vadd.f32 %v604, %v810
      %v832 = vadd.f32 %v572, %v778
      %v833 = vadd.f32 %v606, %v812
      %v834 = vld [vmem:[%s165 + $0x8] sm:$0xe]
      %v835 = vld [vmem:[%s165 + $0xc] sm:$0xf]
      %v836 = vld [vmem:[%s165 + $0x10] sm:$0xf]
      %v837 = vld [vmem:[%s165 + $0x14] sm:$0xf]
      %v838 = vld [vmem:[%s165 + $0x18] sm:$0xf]
      %v839 = vld [vmem:[%s165 + $0x1c] sm:$0xf]
      %v840 = vld [vmem:[%s165 + $0x20] sm:$0xf]
      %v841 = vld [vmem:[%s165 + $0x24] sm:$0xf]
      %v842 = vld [vmem:[%s165 + $0x28] sm:$0xf]
      %v843 = vld [vmem:[%s165 + $0x2c] sm:$0xf]
      %v844 = vld [vmem:[%s165 + $0x30] sm:$0x3]
      %s845 = scalar_lea.vmem %s1, 336
      %v846 = vld [vmem:[%s845] sm:$0xff]
      %v847 = vld [vmem:[%s845 + $0x8] sm:$0xff]
      %v848 = vld [vmem:[%s845 + $0x10] sm:$0xff]
      %v849 = vld [vmem:[%s845 + $0x18] sm:$0xff]
      %v850 = vld [vmem:[%s845 + $0x20] sm:$0xff]
      %v851 = vld [vmem:[%s845 + $0x28] sm:$0xff]
      %v852 = vld [vmem:[%s845 + $0x30] sm:$0xff]
      %v853 = vld [vmem:[%s845 + $0x38] sm:$0xff]
      %v854 = vld [vmem:[%s845 + $0x40] sm:$0xff]
      %v855 = vld [vmem:[%s845 + $0x48] sm:$0xff]
      %v856 = vld [vmem:[%s845 + $0x50] sm:$0xff]
      %v857 = vld [vmem:[%s845 + $0x58] sm:$0xff]
      %v858 = vld [vmem:[%s845 + $0x60] sm:$0xff]
      %v859 = vld [vmem:[%s845 + $0x68] sm:$0xff]
      %v871 = vunpack.c.l.b16 %v834
      %v872 = vunpack.c.l.b16 %v835
      %v873 = vunpack.c.l.b16 %v836
      %v874 = vunpack.c.l.b16 %v837
      %v875 = vunpack.c.l.b16 %v838
      %v876 = vunpack.c.l.b16 %v839
      %v877 = vunpack.c.l.b16 %v840
      %v878 = vunpack.c.l.b16 %v841
      %v879 = vunpack.c.l.b16 %v842
      %v880 = vunpack.c.l.b16 %v843
      %v881 = vunpack.c.l.b16 %v844
      %v882 = vpack.c.b16 %v872, %v871
      %v883 = vpack.c.b16 %v874, %v873
      %v884 = vpack.c.b16 %v876, %v875
      %v885 = vpack.c.b16 %v878, %v877
      %v886 = vpack.c.b16 %v880, %v879
      %v887 = vpack.c.b16 %v881, %v881
      %v889 = vshrl.u32 %v882, 16
      %v891 = vrot.slane %v889, 1
      %v892 = vshll.u32 %v882, 16
      %v894 = vrot.slane %v892, 2
      %v895 = vor.u32 %v891, %v894
      %v897 = vshrl.u32 %v883, 16
      %v899 = vrot.slane %v897, 1
      %v900 = vshll.u32 %v883, 16
      %v902 = vrot.slane %v900, 2
      %v903 = vor.u32 %v899, %v902
      %v904 = vsel %vm627, %v895, %v903
      %v906 = vshrl.u32 %v884, 16
      %v908 = vrot.slane %v906, 1
      %v909 = vshll.u32 %v884, 16
      %v911 = vrot.slane %v909, 2
      %v912 = vor.u32 %v908, %v911
      %v913 = vsel %vm627, %v903, %v912
      %v915 = vshrl.u32 %v885, 16
      %v917 = vrot.slane %v915, 1
      %v918 = vshll.u32 %v885, 16
      %v920 = vrot.slane %v918, 2
      %v921 = vor.u32 %v917, %v920
      %v922 = vsel %vm627, %v912, %v921
      %v924 = vshrl.u32 %v886, 16
      %v926 = vrot.slane %v924, 1
      %v927 = vshll.u32 %v886, 16
      %v929 = vrot.slane %v927, 2
      %v930 = vor.u32 %v926, %v929
      %v931 = vsel %vm627, %v921, %v930
      %v933 = vshrl.u32 %v887, 16
      %v935 = vrot.slane %v933, 1
      %v936 = vshll.u32 %v887, 16
      %v938 = vrot.slane %v936, 2
      %v939 = vor.u32 %v935, %v938
      %v940 = vsel %vm627, %v930, %v939
      %v955 = vunpack.c.l.b16 %v846
      %v956 = vunpack.c.h.b16 %v846
      %v957 = vunpack.c.l.b16 %v847
      %v958 = vunpack.c.h.b16 %v847
      %v959 = vunpack.c.l.b16 %v848
      %v960 = vunpack.c.h.b16 %v848
      %v961 = vunpack.c.l.b16 %v849
      %v962 = vunpack.c.h.b16 %v849
      %v963 = vunpack.c.l.b16 %v850
      %v964 = vunpack.c.h.b16 %v850
      %v965 = vunpack.c.l.b16 %v851
      %v966 = vunpack.c.h.b16 %v851
      %v967 = vunpack.c.l.b16 %v852
      %v968 = vunpack.c.h.b16 %v852
      %v969 = vunpack.c.l.b16 %v853
      %v970 = vunpack.c.h.b16 %v853
      %v971 = vunpack.c.l.b16 %v854
      %v972 = vunpack.c.h.b16 %v854
      %v973 = vunpack.c.l.b16 %v855
      %v974 = vunpack.c.h.b16 %v855
      %v975 = vunpack.c.l.b16 %v856
      %v976 = vunpack.c.h.b16 %v856
      %v977 = vunpack.c.l.b16 %v857
      %v978 = vunpack.c.h.b16 %v857
      %v979 = vunpack.c.l.b16 %v858
      %v980 = vunpack.c.h.b16 %v858
      %v981 = vunpack.c.l.b16 %v859
      %v982 = vunpack.c.h.b16 %v859
      %v983 = vpack.c.b16 %v957, %v955
      %v984 = vpack.c.b16 %v958, %v956
      %v985 = vpack.c.b16 %v961, %v959
      %v986 = vpack.c.b16 %v962, %v960
      %v987 = vpack.c.b16 %v965, %v963
      %v988 = vpack.c.b16 %v966, %v964
      %v989 = vpack.c.b16 %v969, %v967
      %v990 = vpack.c.b16 %v970, %v968
      %v991 = vpack.c.b16 %v973, %v971
      %v992 = vpack.c.b16 %v974, %v972
      %v993 = vpack.c.b16 %v977, %v975
      %v994 = vpack.c.b16 %v978, %v976
      %v995 = vpack.c.b16 %v981, %v979
      %v996 = vpack.c.b16 %v982, %v980
      %v1012 = vsel %vm323, %v904, 0
      %v1015 = vsel %vm323, %v913, 0
      %v1018 = vsel %vm323, %v922, 0
      %v1021 = vsel %vm323, %v931, 0
      %v1024 = vsel %vm323, %v940, 0
      %1026 = vmatpush.bf16.msra.mxu0 0
      %1027 = vmatpush.bf16.msra.mxu0 %v995
      %1028 = vmatpush.bf16.msra.mxu0 %v993
      %1029 = vmatpush.bf16.msra.mxu0 %v991
      %1030 = vmatpush.bf16.msra.mxu0 %v989
      %1031 = vmatpush.bf16.msra.mxu0 %v987
      %1032 = vmatpush.bf16.msra.mxu0 %v985
      %1033 = vmatpush.bf16.msra.mxu0 %v983
      %1034 = vmatmul.bf16.gmra.mxu0 %v1012
      %v1035 = vpop.f32.mrf.mxu0
      %v1036 = vadd.f32 0.0, %v1035
      %v1037 = vpop.f32.mrf.mxu0
      %v1038 = vadd.f32 0.0, %v1037
      %1039 = vmatmul.bf16.gmra.mxu0 %v1015
      %v1040 = vpop.f32.mrf.mxu0
      %v1041 = vadd.f32 0.0, %v1040
      %v1042 = vpop.f32.mrf.mxu0
      %v1043 = vadd.f32 0.0, %v1042
      %1044 = vmatmul.bf16.gmra.mxu0 %v1018
      %v1045 = vpop.f32.mrf.mxu0
      %v1046 = vadd.f32 0.0, %v1045
      %v1047 = vpop.f32.mrf.mxu0
      %v1048 = vadd.f32 0.0, %v1047
      %1049 = vmatmul.bf16.gmra.mxu0 %v1021
      %v1050 = vpop.f32.mrf.mxu0
      %v1051 = vadd.f32 0.0, %v1050
      %v1052 = vpop.f32.mrf.mxu0
      %v1053 = vadd.f32 0.0, %v1052
      %1054 = vmatmul.bf16.gmra.mxu0 %v1024
      %v1055 = vpop.f32.mrf.mxu0
      %v1056 = vadd.f32 0.0, %v1055
      %v1057 = vpop.f32.mrf.mxu0
      %v1058 = vadd.f32 0.0, %v1057
      %1059 = vdwg.mxu0
      %1060 = vmatpush.bf16.msra.mxu0 0
      %1061 = vmatpush.bf16.msra.mxu0 %v996
      %1062 = vmatpush.bf16.msra.mxu0 %v994
      %1063 = vmatpush.bf16.msra.mxu0 %v992
      %1064 = vmatpush.bf16.msra.mxu0 %v990
      %1065 = vmatpush.bf16.msra.mxu0 %v988
      %1066 = vmatpush.bf16.msra.mxu0 %v986
      %1067 = vmatpush.bf16.msra.mxu0 %v984
      %1068 = vmatmul.bf16.gmra.mxu0 %v1012
      %v1069 = vpop.f32.mrf.mxu0
      %v1070 = vadd.f32 0.0, %v1069
      %v1071 = vpop.f32.mrf.mxu0
      %v1072 = vadd.f32 0.0, %v1071
      %1073 = vmatmul.bf16.gmra.mxu0 %v1015
      %v1074 = vpop.f32.mrf.mxu0
      %v1075 = vadd.f32 0.0, %v1074
      %v1076 = vpop.f32.mrf.mxu0
      %v1077 = vadd.f32 0.0, %v1076
      %1078 = vmatmul.bf16.gmra.mxu0 %v1018
      %v1079 = vpop.f32.mrf.mxu0
      %v1080 = vadd.f32 0.0, %v1079
      %v1081 = vpop.f32.mrf.mxu0
      %v1082 = vadd.f32 0.0, %v1081
      %1083 = vmatmul.bf16.gmra.mxu0 %v1021
      %v1084 = vpop.f32.mrf.mxu0
      %v1085 = vadd.f32 0.0, %v1084
      %v1086 = vpop.f32.mrf.mxu0
      %v1087 = vadd.f32 0.0, %v1086
      %1088 = vmatmul.bf16.gmra.mxu0 %v1024
      %v1089 = vpop.f32.mrf.mxu0
      %v1090 = vadd.f32 0.0, %v1089
      %v1091 = vpop.f32.mrf.mxu0
      %v1092 = vadd.f32 0.0, %v1091
      %1093 = vdwg.mxu0
      %v1094 = vadd.f32 %v814, %v1036
      %v1095 = vadd.f32 %v815, %v1070
      %v1096 = vadd.f32 %v816, %v1038
      %v1097 = vadd.f32 %v817, %v1072
      %v1098 = vadd.f32 %v818, %v1041
      %v1099 = vadd.f32 %v819, %v1075
      %v1100 = vadd.f32 %v820, %v1043
      %v1101 = vadd.f32 %v821, %v1077
      %v1102 = vadd.f32 %v822, %v1046
      %v1103 = vadd.f32 %v823, %v1080
      %v1104 = vadd.f32 %v824, %v1048
      %v1105 = vadd.f32 %v825, %v1082
      %v1106 = vadd.f32 %v826, %v1051
      %v1107 = vadd.f32 %v827, %v1085
      %v1108 = vadd.f32 %v828, %v1053
      %v1109 = vadd.f32 %v829, %v1087
      %v1110 = vadd.f32 %v830, %v1056
      %v1111 = vadd.f32 %v831, %v1090
      %v1112 = vadd.f32 %v832, %v1058
      %v1113 = vadd.f32 %v833, %v1092
      %v1114 = vld [vmem:[%s165 + $0x8] sm:$0xc]
      %s1115 = scalar_lea.vmem %s1, 448
      %v1116 = vld [vmem:[%s1115] sm:$0xff]
      %v1117 = vld [vmem:[%s1115 + $0x8] sm:$0xff]
      %v1118 = vld [vmem:[%s1115 + $0x10] sm:$0xff]
      %v1119 = vld [vmem:[%s1115 + $0x18] sm:$0xff]
      %v1120 = vld [vmem:[%s1115 + $0x20] sm:$0xff]
      %v1121 = vld [vmem:[%s1115 + $0x28] sm:$0xff]
      %v1122 = vld [vmem:[%s1115 + $0x30] sm:$0xff]
      %v1123 = vld [vmem:[%s1115 + $0x38] sm:$0xff]
      %v1124 = vld [vmem:[%s1115 + $0x40] sm:$0xff]
      %v1125 = vld [vmem:[%s1115 + $0x48] sm:$0xff]
      %v1126 = vld [vmem:[%s1115 + $0x50] sm:$0xff]
      %v1127 = vld [vmem:[%s1115 + $0x58] sm:$0xff]
      %v1128 = vld [vmem:[%s1115 + $0x60] sm:$0xff]
      %v1129 = vld [vmem:[%s1115 + $0x68] sm:$0xff]
      %v1131 = vunpack.c.l.b16 %v1114
      %v1132 = vpack.c.b16 %v872, %v1131
      %vm1133 = vcmask 1045504
      %v1134 = vrot.slane %v1132, 2
      %v1135 = vrot.slane %v883, 2
      %v1136 = vsel %vm1133, %v1134, %v1135
      %v1137 = vrot.slane %v884, 2
      %v1138 = vsel %vm1133, %v1135, %v1137
      %v1139 = vrot.slane %v885, 2
      %v1140 = vsel %vm1133, %v1137, %v1139
      %v1141 = vrot.slane %v886, 2
      %v1142 = vsel %vm1133, %v1139, %v1141
      %v1143 = vrot.slane %v887, 2
      %v1144 = vsel %vm1133, %v1141, %v1143
      %v1159 = vunpack.c.l.b16 %v1116
      %v1160 = vunpack.c.h.b16 %v1116
      %v1161 = vunpack.c.l.b16 %v1117
      %v1162 = vunpack.c.h.b16 %v1117
      %v1163 = vunpack.c.l.b16 %v1118
      %v1164 = vunpack.c.h.b16 %v1118
      %v1165 = vunpack.c.l.b16 %v1119
      %v1166 = vunpack.c.h.b16 %v1119
      %v1167 = vunpack.c.l.b16 %v1120
      %v1168 = vunpack.c.h.b16 %v1120
      %v1169 = vunpack.c.l.b16 %v1121
      %v1170 = vunpack.c.h.b16 %v1121
      %v1171 = vunpack.c.l.b16 %v1122
      %v1172 = vunpack.c.h.b16 %v1122
      %v1173 = vunpack.c.l.b16 %v1123
      %v1174 = vunpack.c.h.b16 %v1123
      %v1175 = vunpack.c.l.b16 %v1124
      %v1176 = vunpack.c.h.b16 %v1124
      %v1177 = vunpack.c.l.b16 %v1125
      %v1178 = vunpack.c.h.b16 %v1125
      %v1179 = vunpack.c.l.b16 %v1126
      %v1180 = vunpack.c.h.b16 %v1126
      %v1181 = vunpack.c.l.b16 %v1127
      %v1182 = vunpack.c.h.b16 %v1127
      %v1183 = vunpack.c.l.b16 %v1128
      %v1184 = vunpack.c.h.b16 %v1128
      %v1185 = vunpack.c.l.b16 %v1129
      %v1186 = vunpack.c.h.b16 %v1129
      %v1187 = vpack.c.b16 %v1161, %v1159
      %v1188 = vpack.c.b16 %v1162, %v1160
      %v1189 = vpack.c.b16 %v1165, %v1163
      %v1190 = vpack.c.b16 %v1166, %v1164
      %v1191 = vpack.c.b16 %v1169, %v1167
      %v1192 = vpack.c.b16 %v1170, %v1168
      %v1193 = vpack.c.b16 %v1173, %v1171
      %v1194 = vpack.c.b16 %v1174, %v1172
      %v1195 = vpack.c.b16 %v1177, %v1175
      %v1196 = vpack.c.b16 %v1178, %v1176
      %v1197 = vpack.c.b16 %v1181, %v1179
      %v1198 = vpack.c.b16 %v1182, %v1180
      %v1199 = vpack.c.b16 %v1185, %v1183
      %v1200 = vpack.c.b16 %v1186, %v1184
      %v1216 = vsel %vm323, %v1136, 0
      %v1219 = vsel %vm323, %v1138, 0
      %v1222 = vsel %vm323, %v1140, 0
      %v1225 = vsel %vm323, %v1142, 0
      %v1228 = vsel %vm323, %v1144, 0
      %1230 = vmatpush.bf16.msra.mxu0 0
      %1231 = vmatpush.bf16.msra.mxu0 %v1199
      %1232 = vmatpush.bf16.msra.mxu0 %v1197
      %1233 = vmatpush.bf16.msra.mxu0 %v1195
      %1234 = vmatpush.bf16.msra.mxu0 %v1193
      %1235 = vmatpush.bf16.msra.mxu0 %v1191
      %1236 = vmatpush.bf16.msra.mxu0 %v1189
      %1237 = vmatpush.bf16.msra.mxu0 %v1187
      %1238 = vmatmul.bf16.gmra.mxu0 %v1216
      %v1239 = vpop.f32.mrf.mxu0
      %v1240 = vadd.f32 0.0, %v1239
      %v1241 = vpop.f32.mrf.mxu0
      %v1242 = vadd.f32 0.0, %v1241
      %1243 = vmatmul.bf16.gmra.mxu0 %v1219
      %v1244 = vpop.f32.mrf.mxu0
      %v1245 = vadd.f32 0.0, %v1244
      %v1246 = vpop.f32.mrf.mxu0
      %v1247 = vadd.f32 0.0, %v1246
      %1248 = vmatmul.bf16.gmra.mxu0 %v1222
      %v1249 = vpop.f32.mrf.mxu0
      %v1250 = vadd.f32 0.0, %v1249
      %v1251 = vpop.f32.mrf.mxu0
      %v1252 = vadd.f32 0.0, %v1251
      %1253 = vmatmul.bf16.gmra.mxu0 %v1225
      %v1254 = vpop.f32.mrf.mxu0
      %v1255 = vadd.f32 0.0, %v1254
      %v1256 = vpop.f32.mrf.mxu0
      %v1257 = vadd.f32 0.0, %v1256
      %1258 = vmatmul.bf16.gmra.mxu0 %v1228
      %v1259 = vpop.f32.mrf.mxu0
      %v1260 = vadd.f32 0.0, %v1259
      %v1261 = vpop.f32.mrf.mxu0
      %v1262 = vadd.f32 0.0, %v1261
      %1263 = vdwg.mxu0
      %1264 = vmatpush.bf16.msra.mxu0 0
      %1265 = vmatpush.bf16.msra.mxu0 %v1200
      %1266 = vmatpush.bf16.msra.mxu0 %v1198
      %1267 = vmatpush.bf16.msra.mxu0 %v1196
      %1268 = vmatpush.bf16.msra.mxu0 %v1194
      %1269 = vmatpush.bf16.msra.mxu0 %v1192
      %1270 = vmatpush.bf16.msra.mxu0 %v1190
      %1271 = vmatpush.bf16.msra.mxu0 %v1188
      %1272 = vmatmul.bf16.gmra.mxu0 %v1216
      %v1273 = vpop.f32.mrf.mxu0
      %v1274 = vadd.f32 0.0, %v1273
      %v1275 = vpop.f32.mrf.mxu0
      %v1276 = vadd.f32 0.0, %v1275
      %1277 = vmatmul.bf16.gmra.mxu0 %v1219
      %v1278 = vpop.f32.mrf.mxu0
      %v1279 = vadd.f32 0.0, %v1278
      %v1280 = vpop.f32.mrf.mxu0
      %v1281 = vadd.f32 0.0, %v1280
      %1282 = vmatmul.bf16.gmra.mxu0 %v1222
      %v1283 = vpop.f32.mrf.mxu0
      %v1284 = vadd.f32 0.0, %v1283
      %v1285 = vpop.f32.mrf.mxu0
      %v1286 = vadd.f32 0.0, %v1285
      %1287 = vmatmul.bf16.gmra.mxu0 %v1225
      %v1288 = vpop.f32.mrf.mxu0
      %v1289 = vadd.f32 0.0, %v1288
      %v1290 = vpop.f32.mrf.mxu0
      %v1291 = vadd.f32 0.0, %v1290
      %1292 = vmatmul.bf16.gmra.mxu0 %v1228
      %v1293 = vpop.f32.mrf.mxu0
      %v1294 = vadd.f32 0.0, %v1293
      %v1295 = vpop.f32.mrf.mxu0
      %v1296 = vadd.f32 0.0, %v1295
      %1297 = vdwg.mxu0
      %v1298 = vadd.f32 %v1094, %v1240
      %v1299 = vadd.f32 %v1095, %v1274
      %v1300 = vadd.f32 %v1096, %v1242
      %v1301 = vadd.f32 %v1097, %v1276
      %v1302 = vadd.f32 %v1098, %v1245
      %v1303 = vadd.f32 %v1099, %v1279
      %v1304 = vadd.f32 %v1100, %v1247
      %v1305 = vadd.f32 %v1101, %v1281
      %v1306 = vadd.f32 %v1102, %v1250
      %v1307 = vadd.f32 %v1103, %v1284
      %v1308 = vadd.f32 %v1104, %v1252
      %v1309 = vadd.f32 %v1105, %v1286
      %v1310 = vadd.f32 %v1106, %v1255
      %v1311 = vadd.f32 %v1107, %v1289
      %v1312 = vadd.f32 %v1108, %v1257
      %v1313 = vadd.f32 %v1109, %v1291
      %v1314 = vadd.f32 %v1110, %v1260
      %v1315 = vadd.f32 %v1111, %v1294
      %v1316 = vadd.f32 %v1112, %v1262
      %v1317 = vadd.f32 %v1113, %v1296
      %v1318 = vld [vmem:[%s165 + $0x30] sm:$0x7]
      %s1319 = scalar_lea.vmem %s1, 560
      %v1320 = vld [vmem:[%s1319] sm:$0xff]
      %v1321 = vld [vmem:[%s1319 + $0x8] sm:$0xff]
      %v1322 = vld [vmem:[%s1319 + $0x10] sm:$0xff]
      %v1323 = vld [vmem:[%s1319 + $0x18] sm:$0xff]
      %v1324 = vld [vmem:[%s1319 + $0x20] sm:$0xff]
      %v1325 = vld [vmem:[%s1319 + $0x28] sm:$0xff]
      %v1326 = vld [vmem:[%s1319 + $0x30] sm:$0xff]
      %v1327 = vld [vmem:[%s1319 + $0x38] sm:$0xff]
      %v1328 = vld [vmem:[%s1319 + $0x40] sm:$0xff]
      %v1329 = vld [vmem:[%s1319 + $0x48] sm:$0xff]
      %v1330 = vld [vmem:[%s1319 + $0x50] sm:$0xff]
      %v1331 = vld [vmem:[%s1319 + $0x58] sm:$0xff]
      %v1332 = vld [vmem:[%s1319 + $0x60] sm:$0xff]
      %v1333 = vld [vmem:[%s1319 + $0x68] sm:$0xff]
      %v1335 = vunpack.c.l.b16 %v1318
      %v1336 = vpack.c.b16 %v1335, %v1335
      %vm1337 = vsmask.f32 5376
      %v1339 = vshrl.u32 %v1132, 16
      %v1341 = vrot.slane %v1339, 2
      %v1342 = vshll.u32 %v1132, 16
      %v1344 = vrot.slane %v1342, 3
      %v1345 = vor.u32 %v1341, %v1344
      %v1346 = vrot.slane %v897, 2
      %v1347 = vrot.slane %v900, 3
      %v1348 = vor.u32 %v1346, %v1347
      %v1349 = vsel %vm1337, %v1345, %v1348
      %v1350 = vrot.slane %v906, 2
      %v1351 = vrot.slane %v909, 3
      %v1352 = vor.u32 %v1350, %v1351
      %v1353 = vsel %vm1337, %v1348, %v1352
      %v1354 = vrot.slane %v915, 2
      %v1355 = vrot.slane %v918, 3
      %v1356 = vor.u32 %v1354, %v1355
      %v1357 = vsel %vm1337, %v1352, %v1356
      %v1358 = vrot.slane %v924, 2
      %v1359 = vrot.slane %v927, 3
      %v1360 = vor.u32 %v1358, %v1359
      %v1361 = vsel %vm1337, %v1356, %v1360
      %v1363 = vshrl.u32 %v1336, 16
      %v1365 = vrot.slane %v1363, 2
      %v1366 = vshll.u32 %v1336, 16
      %v1368 = vrot.slane %v1366, 3
      %v1369 = vor.u32 %v1365, %v1368
      %v1370 = vsel %vm1337, %v1360, %v1369
      %v1385 = vunpack.c.l.b16 %v1320
      %v1386 = vunpack.c.h.b16 %v1320
      %v1387 = vunpack.c.l.b16 %v1321
      %v1388 = vunpack.c.h.b16 %v1321
      %v1389 = vunpack.c.l.b16 %v1322
      %v1390 = vunpack.c.h.b16 %v1322
      %v1391 = vunpack.c.l.b16 %v1323
      %v1392 = vunpack.c.h.b16 %v1323
      %v1393 = vunpack.c.l.b16 %v1324
      %v1394 = vunpack.c.h.b16 %v1324
      %v1395 = vunpack.c.l.b16 %v1325
      %v1396 = vunpack.c.h.b16 %v1325
      %v1397 = vunpack.c.l.b16 %v1326
      %v1398 = vunpack.c.h.b16 %v1326
      %v1399 = vunpack.c.l.b16 %v1327
      %v1400 = vunpack.c.h.b16 %v1327
      %v1401 = vunpack.c.l.b16 %v1328
      %v1402 = vunpack.c.h.b16 %v1328
      %v1403 = vunpack.c.l.b16 %v1329
      %v1404 = vunpack.c.h.b16 %v1329
      %v1405 = vunpack.c.l.b16 %v1330
      %v1406 = vunpack.c.h.b16 %v1330
      %v1407 = vunpack.c.l.b16 %v1331
      %v1408 = vunpack.c.h.b16 %v1331
      %v1409 = vunpack.c.l.b16 %v1332
      %v1410 = vunpack.c.h.b16 %v1332
      %v1411 = vunpack.c.l.b16 %v1333
      %v1412 = vunpack.c.h.b16 %v1333
      %v1413 = vpack.c.b16 %v1387, %v1385
      %v1414 = vpack.c.b16 %v1388, %v1386
      %v1415 = vpack.c.b16 %v1391, %v1389
      %v1416 = vpack.c.b16 %v1392, %v1390
      %v1417 = vpack.c.b16 %v1395, %v1393
      %v1418 = vpack.c.b16 %v1396, %v1394
      %v1419 = vpack.c.b16 %v1399, %v1397
      %v1420 = vpack.c.b16 %v1400, %v1398
      %v1421 = vpack.c.b16 %v1403, %v1401
      %v1422 = vpack.c.b16 %v1404, %v1402
      %v1423 = vpack.c.b16 %v1407, %v1405
      %v1424 = vpack.c.b16 %v1408, %v1406
      %v1425 = vpack.c.b16 %v1411, %v1409
      %v1426 = vpack.c.b16 %v1412, %v1410
      %v1442 = vsel %vm323, %v1349, 0
      %v1445 = vsel %vm323, %v1353, 0
      %v1448 = vsel %vm323, %v1357, 0
      %v1451 = vsel %vm323, %v1361, 0
      %v1454 = vsel %vm323, %v1370, 0
      %1456 = vmatpush.bf16.msra.mxu0 0
      %1457 = vmatpush.bf16.msra.mxu0 %v1425
      %1458 = vmatpush.bf16.msra.mxu0 %v1423
      %1459 = vmatpush.bf16.msra.mxu0 %v1421
      %1460 = vmatpush.bf16.msra.mxu0 %v1419
      %1461 = vmatpush.bf16.msra.mxu0 %v1417
      %1462 = vmatpush.bf16.msra.mxu0 %v1415
      %1463 = vmatpush.bf16.msra.mxu0 %v1413
      %1464 = vmatmul.bf16.gmra.mxu0 %v1442
      %v1465 = vpop.f32.mrf.mxu0
      %v1466 = vadd.f32 0.0, %v1465
      %v1467 = vpop.f32.mrf.mxu0
      %v1468 = vadd.f32 0.0, %v1467
      %1469 = vmatmul.bf16.gmra.mxu0 %v1445
      %v1470 = vpop.f32.mrf.mxu0
      %v1471 = vadd.f32 0.0, %v1470
      %v1472 = vpop.f32.mrf.mxu0
      %v1473 = vadd.f32 0.0, %v1472
      %1474 = vmatmul.bf16.gmra.mxu0 %v1448
      %v1475 = vpop.f32.mrf.mxu0
      %v1476 = vadd.f32 0.0, %v1475
      %v1477 = vpop.f32.mrf.mxu0
      %v1478 = vadd.f32 0.0, %v1477
      %1479 = vmatmul.bf16.gmra.mxu0 %v1451
      %v1480 = vpop.f32.mrf.mxu0
      %v1481 = vadd.f32 0.0, %v1480
      %v1482 = vpop.f32.mrf.mxu0
      %v1483 = vadd.f32 0.0, %v1482
      %1484 = vmatmul.bf16.gmra.mxu0 %v1454
      %v1485 = vpop.f32.mrf.mxu0
      %v1486 = vadd.f32 0.0, %v1485
      %v1487 = vpop.f32.mrf.mxu0
      %v1488 = vadd.f32 0.0, %v1487
      %1489 = vdwg.mxu0
      %1490 = vmatpush.bf16.msra.mxu0 0
      %1491 = vmatpush.bf16.msra.mxu0 %v1426
      %1492 = vmatpush.bf16.msra.mxu0 %v1424
      %1493 = vmatpush.bf16.msra.mxu0 %v1422
      %1494 = vmatpush.bf16.msra.mxu0 %v1420
      %1495 = vmatpush.bf16.msra.mxu0 %v1418
      %1496 = vmatpush.bf16.msra.mxu0 %v1416
      %1497 = vmatpush.bf16.msra.mxu0 %v1414
      %1498 = vmatmul.bf16.gmra.mxu0 %v1442
      %v1499 = vpop.f32.mrf.mxu0
      %v1500 = vadd.f32 0.0, %v1499
      %v1501 = vpop.f32.mrf.mxu0
      %v1502 = vadd.f32 0.0, %v1501
      %1503 = vmatmul.bf16.gmra.mxu0 %v1445
      %v1504 = vpop.f32.mrf.mxu0
      %v1505 = vadd.f32 0.0, %v1504
      %v1506 = vpop.f32.mrf.mxu0
      %v1507 = vadd.f32 0.0, %v1506
      %1508 = vmatmul.bf16.gmra.mxu0 %v1448
      %v1509 = vpop.f32.mrf.mxu0
      %v1510 = vadd.f32 0.0, %v1509
      %v1511 = vpop.f32.mrf.mxu0
      %v1512 = vadd.f32 0.0, %v1511
      %1513 = vmatmul.bf16.gmra.mxu0 %v1451
      %v1514 = vpop.f32.mrf.mxu0
      %v1515 = vadd.f32 0.0, %v1514
      %v1516 = vpop.f32.mrf.mxu0
      %v1517 = vadd.f32 0.0, %v1516
      %1518 = vmatmul.bf16.gmra.mxu0 %v1454
      %v1519 = vpop.f32.mrf.mxu0
      %v1520 = vadd.f32 0.0, %v1519
      %v1521 = vpop.f32.mrf.mxu0
      %v1522 = vadd.f32 0.0, %v1521
      %1523 = vdwg.mxu0
      %v1524 = vadd.f32 %v1298, %v1466
      %v1525 = vadd.f32 %v1299, %v1500
      %v1526 = vadd.f32 %v1300, %v1468
      %v1527 = vadd.f32 %v1301, %v1502
      %v1528 = vadd.f32 %v1302, %v1471
      %v1529 = vadd.f32 %v1303, %v1505
      %v1530 = vadd.f32 %v1304, %v1473
      %v1531 = vadd.f32 %v1305, %v1507
      %v1532 = vadd.f32 %v1306, %v1476
      %v1533 = vadd.f32 %v1307, %v1510
      %v1534 = vadd.f32 %v1308, %v1478
      %v1535 = vadd.f32 %v1309, %v1512
      %v1536 = vadd.f32 %v1310, %v1481
      %v1537 = vadd.f32 %v1311, %v1515
      %v1538 = vadd.f32 %v1312, %v1483
      %v1539 = vadd.f32 %v1313, %v1517
      %v1540 = vadd.f32 %v1314, %v1486
      %v1541 = vadd.f32 %v1315, %v1520
      %v1542 = vadd.f32 %v1316, %v1488
      %v1543 = vadd.f32 %v1317, %v1522
      %v1544 = vld [vmem:[%s165 + $0xc] sm:$0xc]
      %v1545 = vld [vmem:[%s165 + $0x10] sm:$0xf]
      %v1546 = vld [vmem:[%s165 + $0x14] sm:$0xf]
      %v1547 = vld [vmem:[%s165 + $0x18] sm:$0xf]
      %v1548 = vld [vmem:[%s165 + $0x1c] sm:$0xf]
      %v1549 = vld [vmem:[%s165 + $0x20] sm:$0xf]
      %v1550 = vld [vmem:[%s165 + $0x24] sm:$0xf]
      %v1551 = vld [vmem:[%s165 + $0x28] sm:$0xf]
      %v1552 = vld [vmem:[%s165 + $0x2c] sm:$0xf]
      %v1553 = vld [vmem:[%s165 + $0x30] sm:$0xf]
      %v1554 = vld [vmem:[%s165 + $0x34] sm:$0x7]
      %s1555 = scalar_lea.vmem %s1, 672
      %v1556 = vld [vmem:[%s1555] sm:$0xff]
      %v1557 = vld [vmem:[%s1555 + $0x8] sm:$0xff]
      %v1558 = vld [vmem:[%s1555 + $0x10] sm:$0xff]
      %v1559 = vld [vmem:[%s1555 + $0x18] sm:$0xff]
      %v1560 = vld [vmem:[%s1555 + $0x20] sm:$0xff]
      %v1561 = vld [vmem:[%s1555 + $0x28] sm:$0xff]
      %v1562 = vld [vmem:[%s1555 + $0x30] sm:$0xff]
      %v1563 = vld [vmem:[%s1555 + $0x38] sm:$0xff]
      %v1564 = vld [vmem:[%s1555 + $0x40] sm:$0xff]
      %v1565 = vld [vmem:[%s1555 + $0x48] sm:$0xff]
      %v1566 = vld [vmem:[%s1555 + $0x50] sm:$0xff]
      %v1567 = vld [vmem:[%s1555 + $0x58] sm:$0xff]
      %v1568 = vld [vmem:[%s1555 + $0x60] sm:$0xff]
      %v1569 = vld [vmem:[%s1555 + $0x68] sm:$0xff]
      %v1581 = vunpack.c.l.b16 %v1544
      %v1582 = vunpack.c.l.b16 %v1545
      %v1583 = vunpack.c.l.b16 %v1546
      %v1584 = vunpack.c.l.b16 %v1547
      %v1585 = vunpack.c.l.b16 %v1548
      %v1586 = vunpack.c.l.b16 %v1549
      %v1587 = vunpack.c.l.b16 %v1550
      %v1588 = vunpack.c.l.b16 %v1551
      %v1589 = vunpack.c.l.b16 %v1552
      %v1590 = vunpack.c.l.b16 %v1553
      %v1591 = vunpack.c.l.b16 %v1554
      %v1592 = vpack.c.b16 %v1582, %v1581
      %v1593 = vpack.c.b16 %v1584, %v1583
      %v1594 = vpack.c.b16 %v1586, %v1585
      %v1595 = vpack.c.b16 %v1588, %v1587
      %v1596 = vpack.c.b16 %v1590, %v1589
      %v1597 = vpack.c.b16 %v1591, %v1591
      %v1599 = vshrl.u32 %v1592, 16
      %v1601 = vrot.slane %v1599, 2
      %v1602 = vshll.u32 %v1592, 16
      %v1604 = vrot.slane %v1602, 3
      %v1605 = vor.u32 %v1601, %v1604
      %v1607 = vshrl.u32 %v1593, 16
      %v1609 = vrot.slane %v1607, 2
      %v1610 = vshll.u32 %v1593, 16
      %v1612 = vrot.slane %v1610, 3
      %v1613 = vor.u32 %v1609, %v1612
      %v1614 = vsel %vm1337, %v1605, %v1613
      %v1616 = vshrl.u32 %v1594, 16
      %v1618 = vrot.slane %v1616, 2
      %v1619 = vshll.u32 %v1594, 16
      %v1621 = vrot.slane %v1619, 3
      %v1622 = vor.u32 %v1618, %v1621
      %v1623 = vsel %vm1337, %v1613, %v1622
      %v1625 = vshrl.u32 %v1595, 16
      %v1627 = vrot.slane %v1625, 2
      %v1628 = vshll.u32 %v1595, 16
      %v1630 = vrot.slane %v1628, 3
      %v1631 = vor.u32 %v1627, %v1630
      %v1632 = vsel %vm1337, %v1622, %v1631
      %v1634 = vshrl.u32 %v1596, 16
      %v1636 = vrot.slane %v1634, 2
      %v1637 = vshll.u32 %v1596, 16
      %v1639 = vrot.slane %v1637, 3
      %v1640 = vor.u32 %v1636, %v1639
      %v1641 = vsel %vm1337, %v1631, %v1640
      %v1643 = vshrl.u32 %v1597, 16
      %v1645 = vrot.slane %v1643, 2
      %v1646 = vshll.u32 %v1597, 16
      %v1648 = vrot.slane %v1646, 3
      %v1649 = vor.u32 %v1645, %v1648
      %v1650 = vsel %vm1337, %v1640, %v1649
      %v1665 = vunpack.c.l.b16 %v1556
      %v1666 = vunpack.c.h.b16 %v1556
      %v1667 = vunpack.c.l.b16 %v1557
      %v1668 = vunpack.c.h.b16 %v1557
      %v1669 = vunpack.c.l.b16 %v1558
      %v1670 = vunpack.c.h.b16 %v1558
      %v1671 = vunpack.c.l.b16 %v1559
      %v1672 = vunpack.c.h.b16 %v1559
      %v1673 = vunpack.c.l.b16 %v1560
      %v1674 = vunpack.c.h.b16 %v1560
      %v1675 = vunpack.c.l.b16 %v1561
      %v1676 = vunpack.c.h.b16 %v1561
      %v1677 = vunpack.c.l.b16 %v1562
      %v1678 = vunpack.c.h.b16 %v1562
      %v1679 = vunpack.c.l.b16 %v1563
      %v1680 = vunpack.c.h.b16 %v1563
      %v1681 = vunpack.c.l.b16 %v1564
      %v1682 = vunpack.c.h.b16 %v1564
      %v1683 = vunpack.c.l.b16 %v1565
      %v1684 = vunpack.c.h.b16 %v1565
      %v1685 = vunpack.c.l.b16 %v1566
      %v1686 = vunpack.c.h.b16 %v1566
      %v1687 = vunpack.c.l.b16 %v1567
      %v1688 = vunpack.c.h.b16 %v1567
      %v1689 = vunpack.c.l.b16 %v1568
      %v1690 = vunpack.c.h.b16 %v1568
      %v1691 = vunpack.c.l.b16 %v1569
      %v1692 = vunpack.c.h.b16 %v1569
      %v1693 = vpack.c.b16 %v1667, %v1665
      %v1694 = vpack.c.b16 %v1668, %v1666
      %v1695 = vpack.c.b16 %v1671, %v1669
      %v1696 = vpack.c.b16 %v1672, %v1670
      %v1697 = vpack.c.b16 %v1675, %v1673
      %v1698 = vpack.c.b16 %v1676, %v1674
      %v1699 = vpack.c.b16 %v1679, %v1677
      %v1700 = vpack.c.b16 %v1680, %v1678
      %v1701 = vpack.c.b16 %v1683, %v1681
      %v1702 = vpack.c.b16 %v1684, %v1682
      %v1703 = vpack.c.b16 %v1687, %v1685
      %v1704 = vpack.c.b16 %v1688, %v1686
      %v1705 = vpack.c.b16 %v1691, %v1689
      %v1706 = vpack.c.b16 %v1692, %v1690
      %v1722 = vsel %vm323, %v1614, 0
      %v1725 = vsel %vm323, %v1623, 0
      %v1728 = vsel %vm323, %v1632, 0
      %v1731 = vsel %vm323, %v1641, 0
      %v1734 = vsel %vm323, %v1650, 0
      %1736 = vmatpush.bf16.msra.mxu0 0
      %1737 = vmatpush.bf16.msra.mxu0 %v1705
      %1738 = vmatpush.bf16.msra.mxu0 %v1703
      %1739 = vmatpush.bf16.msra.mxu0 %v1701
      %1740 = vmatpush.bf16.msra.mxu0 %v1699
      %1741 = vmatpush.bf16.msra.mxu0 %v1697
      %1742 = vmatpush.bf16.msra.mxu0 %v1695
      %1743 = vmatpush.bf16.msra.mxu0 %v1693
      %1744 = vmatmul.bf16.gmra.mxu0 %v1722
      %v1745 = vpop.f32.mrf.mxu0
      %v1746 = vadd.f32 0.0, %v1745
      %v1747 = vpop.f32.mrf.mxu0
      %v1748 = vadd.f32 0.0, %v1747
      %1749 = vmatmul.bf16.gmra.mxu0 %v1725
      %v1750 = vpop.f32.mrf.mxu0
      %v1751 = vadd.f32 0.0, %v1750
      %v1752 = vpop.f32.mrf.mxu0
      %v1753 = vadd.f32 0.0, %v1752
      %1754 = vmatmul.bf16.gmra.mxu0 %v1728
      %v1755 = vpop.f32.mrf.mxu0
      %v1756 = vadd.f32 0.0, %v1755
      %v1757 = vpop.f32.mrf.mxu0
      %v1758 = vadd.f32 0.0, %v1757
      %1759 = vmatmul.bf16.gmra.mxu0 %v1731
      %v1760 = vpop.f32.mrf.mxu0
      %v1761 = vadd.f32 0.0, %v1760
      %v1762 = vpop.f32.mrf.mxu0
      %v1763 = vadd.f32 0.0, %v1762
      %1764 = vmatmul.bf16.gmra.mxu0 %v1734
      %v1765 = vpop.f32.mrf.mxu0
      %v1766 = vadd.f32 0.0, %v1765
      %v1767 = vpop.f32.mrf.mxu0
      %v1768 = vadd.f32 0.0, %v1767
      %1769 = vdwg.mxu0
      %1770 = vmatpush.bf16.msra.mxu0 0
      %1771 = vmatpush.bf16.msra.mxu0 %v1706
      %1772 = vmatpush.bf16.msra.mxu0 %v1704
      %1773 = vmatpush.bf16.msra.mxu0 %v1702
      %1774 = vmatpush.bf16.msra.mxu0 %v1700
      %1775 = vmatpush.bf16.msra.mxu0 %v1698
      %1776 = vmatpush.bf16.msra.mxu0 %v1696
      %1777 = vmatpush.bf16.msra.mxu0 %v1694
      %1778 = vmatmul.bf16.gmra.mxu0 %v1722
      %v1779 = vpop.f32.mrf.mxu0
      %v1780 = vadd.f32 0.0, %v1779
      %v1781 = vpop.f32.mrf.mxu0
      %v1782 = vadd.f32 0.0, %v1781
      %1783 = vmatmul.bf16.gmra.mxu0 %v1725
      %v1784 = vpop.f32.mrf.mxu0
      %v1785 = vadd.f32 0.0, %v1784
      %v1786 = vpop.f32.mrf.mxu0
      %v1787 = vadd.f32 0.0, %v1786
      %1788 = vmatmul.bf16.gmra.mxu0 %v1728
      %v1789 = vpop.f32.mrf.mxu0
      %v1790 = vadd.f32 0.0, %v1789
      %v1791 = vpop.f32.mrf.mxu0
      %v1792 = vadd.f32 0.0, %v1791
      %1793 = vmatmul.bf16.gmra.mxu0 %v1731
      %v1794 = vpop.f32.mrf.mxu0
      %v1795 = vadd.f32 0.0, %v1794
      %v1796 = vpop.f32.mrf.mxu0
      %v1797 = vadd.f32 0.0, %v1796
      %1798 = vmatmul.bf16.gmra.mxu0 %v1734
      %v1799 = vpop.f32.mrf.mxu0
      %v1800 = vadd.f32 0.0, %v1799
      %v1801 = vpop.f32.mrf.mxu0
      %v1802 = vadd.f32 0.0, %v1801
      %1803 = vdwg.mxu0
      %v1804 = vadd.f32 %v1524, %v1746
      %v1805 = vadd.f32 %v1525, %v1780
      %v1806 = vadd.f32 %v1526, %v1748
      %v1807 = vadd.f32 %v1527, %v1782
      %v1808 = vadd.f32 %v1528, %v1751
      %v1809 = vadd.f32 %v1529, %v1785
      %v1810 = vadd.f32 %v1530, %v1753
      %v1811 = vadd.f32 %v1531, %v1787
      %v1812 = vadd.f32 %v1532, %v1756
      %v1813 = vadd.f32 %v1533, %v1790
      %v1814 = vadd.f32 %v1534, %v1758
      %v1815 = vadd.f32 %v1535, %v1792
      %v1816 = vadd.f32 %v1536, %v1761
      %v1817 = vadd.f32 %v1537, %v1795
      %v1818 = vadd.f32 %v1538, %v1763
      %v1819 = vadd.f32 %v1539, %v1797
      %v1820 = vadd.f32 %v1540, %v1766
      %v1821 = vadd.f32 %v1541, %v1800
      %v1822 = vadd.f32 %v1542, %v1768
      %v1823 = vadd.f32 %v1543, %v1802
      %v1824 = vld [vmem:[%s165 + $0xc] sm:$0x8]
      %s1825 = scalar_lea.vmem %s1, 784
      %v1826 = vld [vmem:[%s1825] sm:$0xff]
      %v1827 = vld [vmem:[%s1825 + $0x8] sm:$0xff]
      %v1828 = vld [vmem:[%s1825 + $0x10] sm:$0xff]
      %v1829 = vld [vmem:[%s1825 + $0x18] sm:$0xff]
      %v1830 = vld [vmem:[%s1825 + $0x20] sm:$0xff]
      %v1831 = vld [vmem:[%s1825 + $0x28] sm:$0xff]
      %v1832 = vld [vmem:[%s1825 + $0x30] sm:$0xff]
      %v1833 = vld [vmem:[%s1825 + $0x38] sm:$0xff]
      %v1834 = vld [vmem:[%s1825 + $0x40] sm:$0xff]
      %v1835 = vld [vmem:[%s1825 + $0x48] sm:$0xff]
      %v1836 = vld [vmem:[%s1825 + $0x50] sm:$0xff]
      %v1837 = vld [vmem:[%s1825 + $0x58] sm:$0xff]
      %v1838 = vld [vmem:[%s1825 + $0x60] sm:$0xff]
      %v1839 = vld [vmem:[%s1825 + $0x68] sm:$0xff]
      %v1841 = vunpack.c.l.b16 %v1824
      %v1842 = vpack.c.b16 %v1582, %v1841
      %vm1843 = vcmask 1044480
      %v1844 = vrot.slane %v1842, 3
      %v1845 = vrot.slane %v1593, 3
      %v1846 = vsel %vm1843, %v1844, %v1845
      %v1847 = vrot.slane %v1594, 3
      %v1848 = vsel %vm1843, %v1845, %v1847
      %v1849 = vrot.slane %v1595, 3
      %v1850 = vsel %vm1843, %v1847, %v1849
      %v1851 = vrot.slane %v1596, 3
      %v1852 = vsel %vm1843, %v1849, %v1851
      %v1853 = vrot.slane %v1597, 3
      %v1854 = vsel %vm1843, %v1851, %v1853
      %v1869 = vunpack.c.l.b16 %v1826
      %v1870 = vunpack.c.h.b16 %v1826
      %v1871 = vunpack.c.l.b16 %v1827
      %v1872 = vunpack.c.h.b16 %v1827
      %v1873 = vunpack.c.l.b16 %v1828
      %v1874 = vunpack.c.h.b16 %v1828
      %v1875 = vunpack.c.l.b16 %v1829
      %v1876 = vunpack.c.h.b16 %v1829
      %v1877 = vunpack.c.l.b16 %v1830
      %v1878 = vunpack.c.h.b16 %v1830
      %v1879 = vunpack.c.l.b16 %v1831
      %v1880 = vunpack.c.h.b16 %v1831
      %v1881 = vunpack.c.l.b16 %v1832
      %v1882 = vunpack.c.h.b16 %v1832
      %v1883 = vunpack.c.l.b16 %v1833
      %v1884 = vunpack.c.h.b16 %v1833
      %v1885 = vunpack.c.l.b16 %v1834
      %v1886 = vunpack.c.h.b16 %v1834
      %v1887 = vunpack.c.l.b16 %v1835
      %v1888 = vunpack.c.h.b16 %v1835
      %v1889 = vunpack.c.l.b16 %v1836
      %v1890 = vunpack.c.h.b16 %v1836
      %v1891 = vunpack.c.l.b16 %v1837
      %v1892 = vunpack.c.h.b16 %v1837
      %v1893 = vunpack.c.l.b16 %v1838
      %v1894 = vunpack.c.h.b16 %v1838
      %v1895 = vunpack.c.l.b16 %v1839
      %v1896 = vunpack.c.h.b16 %v1839
      %v1897 = vpack.c.b16 %v1871, %v1869
      %v1898 = vpack.c.b16 %v1872, %v1870
      %v1899 = vpack.c.b16 %v1875, %v1873
      %v1900 = vpack.c.b16 %v1876, %v1874
      %v1901 = vpack.c.b16 %v1879, %v1877
      %v1902 = vpack.c.b16 %v1880, %v1878
      %v1903 = vpack.c.b16 %v1883, %v1881
      %v1904 = vpack.c.b16 %v1884, %v1882
      %v1905 = vpack.c.b16 %v1887, %v1885
      %v1906 = vpack.c.b16 %v1888, %v1886
      %v1907 = vpack.c.b16 %v1891, %v1889
      %v1908 = vpack.c.b16 %v1892, %v1890
      %v1909 = vpack.c.b16 %v1895, %v1893
      %v1910 = vpack.c.b16 %v1896, %v1894
      %v1926 = vsel %vm323, %v1846, 0
      %v1929 = vsel %vm323, %v1848, 0
      %v1932 = vsel %vm323, %v1850, 0
      %v1935 = vsel %vm323, %v1852, 0
      %v1938 = vsel %vm323, %v1854, 0
      %1940 = vmatpush.bf16.msra.mxu0 0
      %1941 = vmatpush.bf16.msra.mxu0 %v1909
      %1942 = vmatpush.bf16.msra.mxu0 %v1907
      %1943 = vmatpush.bf16.msra.mxu0 %v1905
      %1944 = vmatpush.bf16.msra.mxu0 %v1903
      %1945 = vmatpush.bf16.msra.mxu0 %v1901
      %1946 = vmatpush.bf16.msra.mxu0 %v1899
      %1947 = vmatpush.bf16.msra.mxu0 %v1897
      %1948 = vmatmul.bf16.gmra.mxu0 %v1926
      %v1949 = vpop.f32.mrf.mxu0
      %v1950 = vadd.f32 0.0, %v1949
      %v1951 = vpop.f32.mrf.mxu0
      %v1952 = vadd.f32 0.0, %v1951
      %1953 = vmatmul.bf16.gmra.mxu0 %v1929
      %v1954 = vpop.f32.mrf.mxu0
      %v1955 = vadd.f32 0.0, %v1954
      %v1956 = vpop.f32.mrf.mxu0
      %v1957 = vadd.f32 0.0, %v1956
      %1958 = vmatmul.bf16.gmra.mxu0 %v1932
      %v1959 = vpop.f32.mrf.mxu0
      %v1960 = vadd.f32 0.0, %v1959
      %v1961 = vpop.f32.mrf.mxu0
      %v1962 = vadd.f32 0.0, %v1961
      %1963 = vmatmul.bf16.gmra.mxu0 %v1935
      %v1964 = vpop.f32.mrf.mxu0
      %v1965 = vadd.f32 0.0, %v1964
      %v1966 = vpop.f32.mrf.mxu0
      %v1967 = vadd.f32 0.0, %v1966
      %1968 = vmatmul.bf16.gmra.mxu0 %v1938
      %v1969 = vpop.f32.mrf.mxu0
      %v1970 = vadd.f32 0.0, %v1969
      %v1971 = vpop.f32.mrf.mxu0
      %v1972 = vadd.f32 0.0, %v1971
      %1973 = vdwg.mxu0
      %1974 = vmatpush.bf16.msra.mxu0 0
      %1975 = vmatpush.bf16.msra.mxu0 %v1910
      %1976 = vmatpush.bf16.msra.mxu0 %v1908
      %1977 = vmatpush.bf16.msra.mxu0 %v1906
      %1978 = vmatpush.bf16.msra.mxu0 %v1904
      %1979 = vmatpush.bf16.msra.mxu0 %v1902
      %1980 = vmatpush.bf16.msra.mxu0 %v1900
      %1981 = vmatpush.bf16.msra.mxu0 %v1898
      %1982 = vmatmul.bf16.gmra.mxu0 %v1926
      %v1983 = vpop.f32.mrf.mxu0
      %v1984 = vadd.f32 0.0, %v1983
      %v1985 = vpop.f32.mrf.mxu0
      %v1986 = vadd.f32 0.0, %v1985
      %1987 = vmatmul.bf16.gmra.mxu0 %v1929
      %v1988 = vpop.f32.mrf.mxu0
      %v1989 = vadd.f32 0.0, %v1988
      %v1990 = vpop.f32.mrf.mxu0
      %v1991 = vadd.f32 0.0, %v1990
      %1992 = vmatmul.bf16.gmra.mxu0 %v1932
      %v1993 = vpop.f32.mrf.mxu0
      %v1994 = vadd.f32 0.0, %v1993
      %v1995 = vpop.f32.mrf.mxu0
      %v1996 = vadd.f32 0.0, %v1995
      %1997 = vmatmul.bf16.gmra.mxu0 %v1935
      %v1998 = vpop.f32.mrf.mxu0
      %v1999 = vadd.f32 0.0, %v1998
      %v2000 = vpop.f32.mrf.mxu0
      %v2001 = vadd.f32 0.0, %v2000
      %2002 = vmatmul.bf16.gmra.mxu0 %v1938
      %v2003 = vpop.f32.mrf.mxu0
      %v2004 = vadd.f32 0.0, %v2003
      %v2005 = vpop.f32.mrf.mxu0
      %v2006 = vadd.f32 0.0, %v2005
      %2007 = vdwg.mxu0
      %v2008 = vadd.f32 %v1804, %v1950
      %v2009 = vadd.f32 %v1805, %v1984
      %v2010 = vadd.f32 %v1806, %v1952
      %v2011 = vadd.f32 %v1807, %v1986
      %v2012 = vadd.f32 %v1808, %v1955
      %v2013 = vadd.f32 %v1809, %v1989
      %v2014 = vadd.f32 %v1810, %v1957
      %v2015 = vadd.f32 %v1811, %v1991
      %v2016 = vadd.f32 %v1812, %v1960
      %v2017 = vadd.f32 %v1813, %v1994
      %v2018 = vadd.f32 %v1814, %v1962
      %v2019 = vadd.f32 %v1815, %v1996
      %v2020 = vadd.f32 %v1816, %v1965
      %v2021 = vadd.f32 %v1817, %v1999
      %v2022 = vadd.f32 %v1818, %v1967
      %v2023 = vadd.f32 %v1819, %v2001
      %v2024 = vadd.f32 %v1820, %v1970
      %v2025 = vadd.f32 %v1821, %v2004
      %v2026 = vadd.f32 %v1822, %v1972
      %v2027 = vadd.f32 %v1823, %v2006
      %v2028 = vld [vmem:[%s165 + $0x34] sm:$0xf]
      %s2029 = scalar_lea.vmem %s1, 896
      %v2030 = vld [vmem:[%s2029] sm:$0xff]
      %v2031 = vld [vmem:[%s2029 + $0x8] sm:$0xff]
      %v2032 = vld [vmem:[%s2029 + $0x10] sm:$0xff]
      %v2033 = vld [vmem:[%s2029 + $0x18] sm:$0xff]
      %v2034 = vld [vmem:[%s2029 + $0x20] sm:$0xff]
      %v2035 = vld [vmem:[%s2029 + $0x28] sm:$0xff]
      %v2036 = vld [vmem:[%s2029 + $0x30] sm:$0xff]
      %v2037 = vld [vmem:[%s2029 + $0x38] sm:$0xff]
      %v2038 = vld [vmem:[%s2029 + $0x40] sm:$0xff]
      %v2039 = vld [vmem:[%s2029 + $0x48] sm:$0xff]
      %v2040 = vld [vmem:[%s2029 + $0x50] sm:$0xff]
      %v2041 = vld [vmem:[%s2029 + $0x58] sm:$0xff]
      %v2042 = vld [vmem:[%s2029 + $0x60] sm:$0xff]
      %v2043 = vld [vmem:[%s2029 + $0x68] sm:$0xff]
      %v2045 = vunpack.c.l.b16 %v2028
      %v2046 = vpack.c.b16 %v2045, %v2045
      %vm2047 = vsmask.f32 4352
      %v2049 = vshrl.u32 %v1842, 16
      %v2051 = vrot.slane %v2049, 3
      %v2052 = vshll.u32 %v1842, 16
      %v2054 = vrot.slane %v2052, 4
      %v2055 = vor.u32 %v2051, %v2054
      %v2056 = vrot.slane %v1607, 3
      %v2057 = vrot.slane %v1610, 4
      %v2058 = vor.u32 %v2056, %v2057
      %v2059 = vsel %vm2047, %v2055, %v2058
      %v2060 = vrot.slane %v1616, 3
      %v2061 = vrot.slane %v1619, 4
      %v2062 = vor.u32 %v2060, %v2061
      %v2063 = vsel %vm2047, %v2058, %v2062
      %v2064 = vrot.slane %v1625, 3
      %v2065 = vrot.slane %v1628, 4
      %v2066 = vor.u32 %v2064, %v2065
      %v2067 = vsel %vm2047, %v2062, %v2066
      %v2068 = vrot.slane %v1634, 3
      %v2069 = vrot.slane %v1637, 4
      %v2070 = vor.u32 %v2068, %v2069
      %v2071 = vsel %vm2047, %v2066, %v2070
      %v2073 = vshrl.u32 %v2046, 16
      %v2075 = vrot.slane %v2073, 3
      %v2076 = vshll.u32 %v2046, 16
      %v2078 = vrot.slane %v2076, 4
      %v2079 = vor.u32 %v2075, %v2078
      %v2080 = vsel %vm2047, %v2070, %v2079
      %v2095 = vunpack.c.l.b16 %v2030
      %v2096 = vunpack.c.h.b16 %v2030
      %v2097 = vunpack.c.l.b16 %v2031
      %v2098 = vunpack.c.h.b16 %v2031
      %v2099 = vunpack.c.l.b16 %v2032
      %v2100 = vunpack.c.h.b16 %v2032
      %v2101 = vunpack.c.l.b16 %v2033
      %v2102 = vunpack.c.h.b16 %v2033
      %v2103 = vunpack.c.l.b16 %v2034
      %v2104 = vunpack.c.h.b16 %v2034
      %v2105 = vunpack.c.l.b16 %v2035
      %v2106 = vunpack.c.h.b16 %v2035
      %v2107 = vunpack.c.l.b16 %v2036
      %v2108 = vunpack.c.h.b16 %v2036
      %v2109 = vunpack.c.l.b16 %v2037
      %v2110 = vunpack.c.h.b16 %v2037
      %v2111 = vunpack.c.l.b16 %v2038
      %v2112 = vunpack.c.h.b16 %v2038
      %v2113 = vunpack.c.l.b16 %v2039
      %v2114 = vunpack.c.h.b16 %v2039
      %v2115 = vunpack.c.l.b16 %v2040
      %v2116 = vunpack.c.h.b16 %v2040
      %v2117 = vunpack.c.l.b16 %v2041
      %v2118 = vunpack.c.h.b16 %v2041
      %v2119 = vunpack.c.l.b16 %v2042
      %v2120 = vunpack.c.h.b16 %v2042
      %v2121 = vunpack.c.l.b16 %v2043
      %v2122 = vunpack.c.h.b16 %v2043
      %v2123 = vpack.c.b16 %v2097, %v2095
      %v2124 = vpack.c.b16 %v2098, %v2096
      %v2125 = vpack.c.b16 %v2101, %v2099
      %v2126 = vpack.c.b16 %v2102, %v2100
      %v2127 = vpack.c.b16 %v2105, %v2103
      %v2128 = vpack.c.b16 %v2106, %v2104
      %v2129 = vpack.c.b16 %v2109, %v2107
      %v2130 = vpack.c.b16 %v2110, %v2108
      %v2131 = vpack.c.b16 %v2113, %v2111
      %v2132 = vpack.c.b16 %v2114, %v2112
      %v2133 = vpack.c.b16 %v2117, %v2115
      %v2134 = vpack.c.b16 %v2118, %v2116
      %v2135 = vpack.c.b16 %v2121, %v2119
      %v2136 = vpack.c.b16 %v2122, %v2120
      %v2152 = vsel %vm323, %v2059, 0
      %v2155 = vsel %vm323, %v2063, 0
      %v2158 = vsel %vm323, %v2067, 0
      %v2161 = vsel %vm323, %v2071, 0
      %v2164 = vsel %vm323, %v2080, 0
      %2166 = vmatpush.bf16.msra.mxu0 0
      %2167 = vmatpush.bf16.msra.mxu0 %v2135
      %2168 = vmatpush.bf16.msra.mxu0 %v2133
      %2169 = vmatpush.bf16.msra.mxu0 %v2131
      %2170 = vmatpush.bf16.msra.mxu0 %v2129
      %2171 = vmatpush.bf16.msra.mxu0 %v2127
      %2172 = vmatpush.bf16.msra.mxu0 %v2125
      %2173 = vmatpush.bf16.msra.mxu0 %v2123
      %2174 = vmatmul.bf16.gmra.mxu0 %v2152
      %v2175 = vpop.f32.mrf.mxu0
      %v2176 = vadd.f32 0.0, %v2175
      %v2177 = vpop.f32.mrf.mxu0
      %v2178 = vadd.f32 0.0, %v2177
      %2179 = vmatmul.bf16.gmra.mxu0 %v2155
      %v2180 = vpop.f32.mrf.mxu0
      %v2181 = vadd.f32 0.0, %v2180
      %v2182 = vpop.f32.mrf.mxu0
      %v2183 = vadd.f32 0.0, %v2182
      %2184 = vmatmul.bf16.gmra.mxu0 %v2158
      %v2185 = vpop.f32.mrf.mxu0
      %v2186 = vadd.f32 0.0, %v2185
      %v2187 = vpop.f32.mrf.mxu0
      %v2188 = vadd.f32 0.0, %v2187
      %2189 = vmatmul.bf16.gmra.mxu0 %v2161
      %v2190 = vpop.f32.mrf.mxu0
      %v2191 = vadd.f32 0.0, %v2190
      %v2192 = vpop.f32.mrf.mxu0
      %v2193 = vadd.f32 0.0, %v2192
      %2194 = vmatmul.bf16.gmra.mxu0 %v2164
      %v2195 = vpop.f32.mrf.mxu0
      %v2196 = vadd.f32 0.0, %v2195
      %v2197 = vpop.f32.mrf.mxu0
      %v2198 = vadd.f32 0.0, %v2197
      %2199 = vdwg.mxu0
      %2200 = vmatpush.bf16.msra.mxu0 0
      %2201 = vmatpush.bf16.msra.mxu0 %v2136
      %2202 = vmatpush.bf16.msra.mxu0 %v2134
      %2203 = vmatpush.bf16.msra.mxu0 %v2132
      %2204 = vmatpush.bf16.msra.mxu0 %v2130
      %2205 = vmatpush.bf16.msra.mxu0 %v2128
      %2206 = vmatpush.bf16.msra.mxu0 %v2126
      %2207 = vmatpush.bf16.msra.mxu0 %v2124
      %2208 = vmatmul.bf16.gmra.mxu0 %v2152
      %v2209 = vpop.f32.mrf.mxu0
      %v2210 = vadd.f32 0.0, %v2209
      %v2211 = vpop.f32.mrf.mxu0
      %v2212 = vadd.f32 0.0, %v2211
      %2213 = vmatmul.bf16.gmra.mxu0 %v2155
      %v2214 = vpop.f32.mrf.mxu0
      %v2215 = vadd.f32 0.0, %v2214
      %v2216 = vpop.f32.mrf.mxu0
      %v2217 = vadd.f32 0.0, %v2216
      %2218 = vmatmul.bf16.gmra.mxu0 %v2158
      %v2219 = vpop.f32.mrf.mxu0
      %v2220 = vadd.f32 0.0, %v2219
      %v2221 = vpop.f32.mrf.mxu0
      %v2222 = vadd.f32 0.0, %v2221
      %2223 = vmatmul.bf16.gmra.mxu0 %v2161
      %v2224 = vpop.f32.mrf.mxu0
      %v2225 = vadd.f32 0.0, %v2224
      %v2226 = vpop.f32.mrf.mxu0
      %v2227 = vadd.f32 0.0, %v2226
      %2228 = vmatmul.bf16.gmra.mxu0 %v2164
      %v2229 = vpop.f32.mrf.mxu0
      %v2230 = vadd.f32 0.0, %v2229
      %v2231 = vpop.f32.mrf.mxu0
      %v2232 = vadd.f32 0.0, %v2231
      %2233 = vdwg.mxu0
      %v2234 = vadd.f32 %v2008, %v2176
      %v2235 = vadd.f32 %v2009, %v2210
      %v2236 = vadd.f32 %v2010, %v2178
      %v2237 = vadd.f32 %v2011, %v2212
      %v2238 = vadd.f32 %v2012, %v2181
      %v2239 = vadd.f32 %v2013, %v2215
      %v2240 = vadd.f32 %v2014, %v2183
      %v2241 = vadd.f32 %v2015, %v2217
      %v2242 = vadd.f32 %v2016, %v2186
      %v2243 = vadd.f32 %v2017, %v2220
      %v2244 = vadd.f32 %v2018, %v2188
      %v2245 = vadd.f32 %v2019, %v2222
      %v2246 = vadd.f32 %v2020, %v2191
      %v2247 = vadd.f32 %v2021, %v2225
      %v2248 = vadd.f32 %v2022, %v2193
      %v2249 = vadd.f32 %v2023, %v2227
      %v2250 = vadd.f32 %v2024, %v2196
      %v2251 = vadd.f32 %v2025, %v2230
      %v2252 = vadd.f32 %v2026, %v2198
      %v2253 = vadd.f32 %v2027, %v2232
      %v2254 = vld [vmem:[%s2] sm:$0x3]
      %v2256 = vperm.slane %v2254, 0
      %v2257 = vperm.slane %v2254, 1
      %v2260 = vadd.f32 %v2234, %v2256
      %v2261 = vadd.f32 %v2235, %v2257
      %v2262 = vadd.f32 %v2236, %v2256
      %v2263 = vadd.f32 %v2237, %v2257
      %v2264 = vadd.f32 %v2238, %v2256
      %v2265 = vadd.f32 %v2239, %v2257
      %v2266 = vadd.f32 %v2240, %v2256
      %v2267 = vadd.f32 %v2241, %v2257
      %v2268 = vadd.f32 %v2242, %v2256
      %v2269 = vadd.f32 %v2243, %v2257
      %v2270 = vadd.f32 %v2244, %v2256
      %v2271 = vadd.f32 %v2245, %v2257
      %v2272 = vadd.f32 %v2246, %v2256
      %v2273 = vadd.f32 %v2247, %v2257
      %v2274 = vadd.f32 %v2248, %v2256
      %v2275 = vadd.f32 %v2249, %v2257
      %v2276 = vadd.f32 %v2250, %v2256
      %v2277 = vadd.f32 %v2251, %v2257
      %v2278 = vadd.f32 %v2252, %v2256
      %v2279 = vadd.f32 %v2253, %v2257
      %v2280 = vmax.f32 %v2260, 0.0
      %v2281 = vmax.f32 %v2261, 0.0
      %v2282 = vmax.f32 %v2262, 0.0
      %v2283 = vmax.f32 %v2263, 0.0
      %v2284 = vmax.f32 %v2264, 0.0
      %v2285 = vmax.f32 %v2265, 0.0
      %v2286 = vmax.f32 %v2266, 0.0
      %v2287 = vmax.f32 %v2267, 0.0
      %v2288 = vmax.f32 %v2268, 0.0
      %v2289 = vmax.f32 %v2269, 0.0
      %v2290 = vmax.f32 %v2270, 0.0
      %v2291 = vmax.f32 %v2271, 0.0
      %v2292 = vmax.f32 %v2272, 0.0
      %v2293 = vmax.f32 %v2273, 0.0
      %v2294 = vmax.f32 %v2274, 0.0
      %v2295 = vmax.f32 %v2275, 0.0
      %v2296 = vmax.f32 %v2276, 0.0
      %v2297 = vmax.f32 %v2277, 0.0
      %v2298 = vmax.f32 %v2278, 0.0
      %v2299 = vmax.f32 %v2279, 0.0
      %v2300 = vpack.c.bf16 %v2281, %v2280
      %v2301 = vpack.c.bf16 %v2283, %v2282
      %v2302 = vpack.c.bf16 %v2285, %v2284
      %v2303 = vpack.c.bf16 %v2287, %v2286
      %v2304 = vpack.c.bf16 %v2289, %v2288
      %v2305 = vpack.c.bf16 %v2291, %v2290
      %v2306 = vpack.c.bf16 %v2293, %v2292
      %v2307 = vpack.c.bf16 %v2295, %v2294
      %v2308 = vpack.c.bf16 %v2297, %v2296
      %v2309 = vpack.c.bf16 %v2299, %v2298
      %vm2310 = vcmask 1043456
      %vm2311 = vcmask 261124
      %vm2312 = vmor %vm2311, %vm2310
      %2313 = vst.msk [vmem:[%s170] sm:$0xff] %vm2312, %v2300
      %2314 = vst.msk [vmem:[%s170 + $0x8] sm:$0xff] %vm2312, %v2301
      %2315 = vst.msk [vmem:[%s170 + $0x10] sm:$0xff] %vm2312, %v2302
      %2316 = vst.msk [vmem:[%s170 + $0x18] sm:$0xff] %vm2312, %v2303
      %2317 = vst.msk [vmem:[%s170 + $0x20] sm:$0xff] %vm2312, %v2304
      %2318 = vst.msk [vmem:[%s170 + $0x28] sm:$0xff] %vm2312, %v2305
      %2319 = vst.msk [vmem:[%s170 + $0x30] sm:$0xff] %vm2312, %v2306
      %2320 = vst.msk [vmem:[%s170 + $0x38] sm:$0xff] %vm2312, %v2307
      %2321 = vst.msk [vmem:[%s170 + $0x40] sm:$0xff] %vm2312, %v2308
      %2322 = vst.msk [vmem:[%s170 + $0x48] sm:$0xff] %vm2312, %v2309
      %p2323 = scmp.lt.s32.totalorder %s14, 7
      %s2324 = scalar_select %p2323, %s14, 7
      %s2325 = smul.addr %s2324, 20
      %s2326 = smul.addr %s2325, 4
      %s2327 = scalar_lea.vmem %s3, %s2326
      // Predicated region
      $region33: #{mixed_3b_forward.5} parent=31 // pred_check
        %p2328 = pneg %p100
      $region34: #{mixed_3b_forward.5} parent=31 // pred_check_branch
        %2330 = sbr.rel (%p2328) target = $region36
      $region35: #{mixed_3b_forward.5} parent=31 // pred_region
        _
      $region36: #{mixed_3b_forward.5} parent=31 // pred_fallthru
        _
    $region32: #{mixed_3b_forward.5} parent=5 // pred_fallthru
      _
    %p2331 = scmp.le.s32.totalorder 2, %s9
    // Predicated region
    $region37: #{mixed_3b_forward.5} parent=5 // pred_check
      %p2332 = pneg %p2331
    $region38: #{mixed_3b_forward.5} parent=5 // pred_check_branch
      %2334 = sbr.rel (%p2332) target = $region40
    $region39: #{mixed_3b_forward.5} parent=5 // pred_region
      %s2335 = ssub.s32 %s9, 2
      // Predicated region
      $region41: #{mixed_3b_forward.5} parent=39 // pred_check
        %p2336 = pneg %p106
      $region42: #{mixed_3b_forward.5} parent=39 // pred_check_branch
        %2338 = sbr.rel (%p2336) target = $region44
      $region43: #{mixed_3b_forward.5} parent=39 // pred_region
        %p2339 = scmp.lt.s32.totalorder %s15, 7
        %s2340 = scalar_select %p2339, %s15, 7
        %s2341 = smul.addr %s2340, 20
        %s2342 = smul.addr %s2341, 4
        %s2343 = scalar_lea.vmem %s3, %s2342
      $region44: #{mixed_3b_forward.5} parent=39 // pred_fallthru
        _
    $region40: #{mixed_3b_forward.5} parent=5 // pred_fallthru
      _
  $region6: #{mixed_3b_forward.5} parent=0 // loop_footer
    %s13 = sadd.s32 1, %s9
  $region7: #{mixed_3b_forward.5} parent=0 // loop_footer_branch
    %8 = sbr.rel target = $region3
  $region8: #{mixed_3b_forward.5} parent=0 // loop_exit
    _

// kernel: mixed_3b_forward.7
$region0: #{mixed_3b_forward.7}
  #allocation0 [shape = 'u32[]', space=smem, size = 0x4, offset = 0x4, fixed_abs, tag = 'smem constant byte address 0x4 - core index']
  #allocation1 [shape = 'u32[72,128]{1,0:T(1,128)}', space=vmem, size = 0x9000, scoped, tag = 'internal scratch']
  #allocation2 [shape = 'bf16[80,192]{1,0:T(8,128)(2,1)}', space=vmem, size = 0xa000, scoped, tag = 'scratch operand']
  %s0 = inlined_call_operand.vmem [shape: bf16[2,4,120,192], index: 0, kind: input, shape index: {}, may-alias: {0,1,2}]
  %s1 = inlined_call_operand.vmem [shape: bf16[2,4,120,192], index: 1, kind: input, shape index: {}, may-alias: {0,1,2}]
  %s2 = inlined_call_operand.vmem [shape: bf16[2,4,120,192], index: 2, kind: input, shape index: {}, may-alias: {0,1,2}]
  %s3 = inlined_call_operand.vmem [shape: bf16[192,32], index: 3, kind: input, shape index: {}]
  %s4 = inlined_call_operand.vmem [shape: f32[1,32], index: 4, kind: input, shape index: {}]
  %s5 = inlined_call_operand.vmem [shape: f32[2,4,80,32], index: 5, kind: output, shape index: {}]
  %s6 = sld [smem:[#allocation0]]
  $region61: #{mixed_3b_forward.7} parent=0
    _
  %s8 = ssub.s32 1, %s6
  %s9 = scalar_select 0, %s8, %s6
  loop: start=0, step=1, limit=10
  $region2: #{mixed_3b_forward.7} parent=0 // loop_pre_header
    _
  $region3: #{mixed_3b_forward.7} parent=0 // loop_header
    %s11 = sphi 0, %s15
    %p12 = scmp.ge.s32.totalorder %s11, 10
    %s18 = sphi 0, %s30
    %s19 = sphi 0, %s26
    %s20 = sphi 0, %s18
    %s21 = sphi 0, %s19
    %s22 = sphi 0, %s20
    %s23 = sphi 0, %s21
    %s41 = sphi 0, %s43
    %s44 = sphi 0, %s41
    %s45 = sphi 0, %s44
    %s61 = sphi 0, %s45
    %s69 = sphi 0, %s71
    %s72 = sphi 0, %s69
    %s73 = sphi 0, %s72
    %s89 = sphi 0, %s73
    %s103 = sphi 0, %s105
    %s106 = sphi 0, %s103
    %s107 = sphi 0, %s106
    %s123 = sphi 0, %s107
    %s127 = sphi 0, %s127
    %s129 = sphi 0, %s127
    %s130 = sphi 0, %s129
    %s144 = sphi 0, %s130
    %s148 = sphi 0, %s148
    %s150 = sphi 0, %s148
    %s151 = sphi 0, %s150
    %s165 = sphi 0, %s151
    %s173 = sphi 0, %s175
    %s176 = sphi 0, %s173
    %s177 = sphi 0, %s176
    %s193 = sphi 0, %s177
  $region4: #{mixed_3b_forward.7} parent=0 // loop_header_branch
    %14 = sbr.rel (%p12) target = $region8
  $region5: #{mixed_3b_forward.7} parent=0 // loop_body
    %s16 = ssub.s32 %s11, 1
    %s17 = ssub.s32 %s11, 2
    %s24 = sadd.s32 1, %s19
    %p25 = scmp.ge.s32.totalorder %s24, 4
    %s26 = scalar_select %p25, 0, %s24
    %s27 = sadd.s32 1, %s18
    %s28 = scalar_select %p25, %s27, %s18
    %p29 = scmp.ge.s32.totalorder %s28, 2
    %s30 = scalar_select %p29, 0, %s28
    %s31 = ssub.s32 %s19, 1
    %p32 = scmp.gt.s32.totalorder %s31, 0
    %s33 = scalar_select %p32, %s31, 0
    %s34 = ssub.s32 %s26, 1
    %p35 = scmp.gt.s32.totalorder %s34, 0
    %s36 = scalar_select %p35, %s34, 0
    %s37 = ssub.s32 %s18, %s30
    %s38 = ssub.s32 %s33, %s36
    %s39 = sor.u32 %s37, %s38
    %p40 = scmp.eq.s32.totalorder %s39, 0
    %s42 = sadd.s32 %s41, 1
    %s43 = scalar_select %p40, %s41, %s42
    %p46 = pneg %p40
    %p47 = scmp.eq.s32.totalorder %s11, 7
    %p48 = por %p46, %p47
    %p49 = scmp.ne.s32.totalorder %s41, %s44
    %p50 = scmp.eq.s32.totalorder %s11, 0
    %p51 = por %p49, %p50
    %p52 = scmp.ne.s32.totalorder %s41, %s44
    %p53 = scmp.eq.s32.totalorder %s16, 7
    %p54 = por %p52, %p53
    %p55 = scmp.ne.s32.totalorder %s44, %s45
    %p56 = scmp.eq.s32.totalorder %s16, 0
    %p57 = por %p55, %p56
    %p58 = scmp.ne.s32.totalorder %s44, %s45
    %p59 = scmp.eq.s32.totalorder %s17, 7
    %p60 = por %p58, %p59
    %p62 = scmp.ne.s32.totalorder %s45, %s61
    %p63 = scmp.eq.s32.totalorder %s17, 0
    %p64 = por %p62, %p63
    %s65 = ssub.s32 %s18, %s30
    %s66 = ssub.s32 %s19, %s26
    %s67 = sor.u32 %s65, %s66
    %p68 = scmp.eq.s32.totalorder %s67, 0
    %s70 = sadd.s32 %s69, 1
    %s71 = scalar_select %p68, %s69, %s70
    %p74 = pneg %p68
    %p75 = scmp.eq.s32.totalorder %s11, 7
    %p76 = por %p74, %p75
    %p77 = scmp.ne.s32.totalorder %s69, %s72
    %p78 = scmp.eq.s32.totalorder %s11, 0
    %p79 = por %p77, %p78
    %p80 = scmp.ne.s32.totalorder %s69, %s72
    %p81 = scmp.eq.s32.totalorder %s16, 7
    %p82 = por %p80, %p81
    %p83 = scmp.ne.s32.totalorder %s72, %s73
    %p84 = scmp.eq.s32.totalorder %s16, 0
    %p85 = por %p83, %p84
    %p86 = scmp.ne.s32.totalorder %s72, %s73
    %p87 = scmp.eq.s32.totalorder %s17, 7
    %p88 = por %p86, %p87
    %p90 = scmp.ne.s32.totalorder %s73, %s89
    %p91 = scmp.eq.s32.totalorder %s17, 0
    %p92 = por %p90, %p91
    %s93 = sadd.s32 %s19, 1
    %p94 = scmp.lt.s32.totalorder %s93, 3
    %s95 = scalar_select %p94, %s93, 3
    %s96 = sadd.s32 %s26, 1
    %p97 = scmp.lt.s32.totalorder %s96, 3
    %s98 = scalar_select %p97, %s96, 3
    %s99 = ssub.s32 %s18, %s30
    %s100 = ssub.s32 %s95, %s98
    %s101 = sor.u32 %s99, %s100
    %p102 = scmp.eq.s32.totalorder %s101, 0
    %s104 = sadd.s32 %s103, 1
    %s105 = scalar_select %p102, %s103, %s104
    %p108 = pneg %p102
    %p109 = scmp.eq.s32.totalorder %s11, 7
    %p110 = por %p108, %p109
    %p111 = scmp.ne.s32.totalorder %s103, %s106
    %p112 = scmp.eq.s32.totalorder %s11, 0
    %p113 = por %p111, %p112
    %p114 = scmp.ne.s32.totalorder %s103, %s106
    %p115 = scmp.eq.s32.totalorder %s16, 7
    %p116 = por %p114, %p115
    %p117 = scmp.ne.s32.totalorder %s106, %s107
    %p118 = scmp.eq.s32.totalorder %s16, 0
    %p119 = por %p117, %p118
    %p120 = scmp.ne.s32.totalorder %s106, %s107
    %p121 = scmp.eq.s32.totalorder %s17, 7
    %p122 = por %p120, %p121
    %p124 = scmp.ne.s32.totalorder %s107, %s123
    %p125 = scmp.eq.s32.totalorder %s17, 0
    %p126 = por %p124, %p125
    %s128 = sadd.s32 %s127, 1
    %p131 = scmp.eq.s32.totalorder %s11, 7
    %p132 = scmp.ne.s32.totalorder %s127, %s129
    %p133 = scmp.eq.s32.totalorder %s11, 0
    %p134 = por %p132, %p133
    %p135 = scmp.ne.s32.totalorder %s127, %s129
    %p136 = scmp.eq.s32.totalorder %s16, 7
    %p137 = por %p135, %p136
    %p138 = scmp.ne.s32.totalorder %s129, %s130
    %p139 = scmp.eq.s32.totalorder %s16, 0
    %p140 = por %p138, %p139
    %p141 = scmp.ne.s32.totalorder %s129, %s130
    %p142 = scmp.eq.s32.totalorder %s17, 7
    %p143 = por %p141, %p142
    %p145 = scmp.ne.s32.totalorder %s130, %s144
    %p146 = scmp.eq.s32.totalorder %s17, 0
    %p147 = por %p145, %p146
    %s149 = sadd.s32 %s148, 1
    %p152 = scmp.eq.s32.totalorder %s11, 7
    %p153 = scmp.ne.s32.totalorder %s148, %s150
    %p154 = scmp.eq.s32.totalorder %s11, 0
    %p155 = por %p153, %p154
    %p156 = scmp.ne.s32.totalorder %s148, %s150
    %p157 = scmp.eq.s32.totalorder %s16, 7
    %p158 = por %p156, %p157
    %p159 = scmp.ne.s32.totalorder %s150, %s151
    %p160 = scmp.eq.s32.totalorder %s16, 0
    %p161 = por %p159, %p160
    %p162 = scmp.ne.s32.totalorder %s150, %s151
    %p163 = scmp.eq.s32.totalorder %s17, 7
    %p164 = por %p162, %p163
    %p166 = scmp.ne.s32.totalorder %s151, %s165
    %p167 = scmp.eq.s32.totalorder %s17, 0
    %p168 = por %p166, %p167
    %s169 = ssub.s32 %s18, %s30
    %s170 = ssub.s32 %s19, %s26
    %s171 = sor.u32 %s169, %s170
    %p172 = scmp.eq.s32.totalorder %s171, 0
    %s174 = sadd.s32 %s173, 1
    %s175 = scalar_select %p172, %s173, %s174
    %p178 = pneg %p172
    %p179 = scmp.eq.s32.totalorder %s11, 7
    %p180 = por %p178, %p179
    %p181 = scmp.ne.s32.totalorder %s173, %s176
    %p182 = scmp.eq.s32.totalorder %s11, 0
    %p183 = por %p181, %p182
    %p184 = scmp.ne.s32.totalorder %s173, %s176
    %p185 = scmp.eq.s32.totalorder %s16, 7
    %p186 = por %p184, %p185
    %p187 = scmp.ne.s32.totalorder %s176, %s177
    %p188 = scmp.eq.s32.totalorder %s16, 0
    %p189 = por %p187, %p188
    %p190 = scmp.ne.s32.totalorder %s176, %s177
    %p191 = scmp.eq.s32.totalorder %s17, 7
    %p192 = por %p190, %p191
    %p194 = scmp.ne.s32.totalorder %s177, %s193
    %p195 = scmp.eq.s32.totalorder %s17, 0
    %p196 = por %p194, %p195
    %p197 = scmp.le.s32.totalorder 1, %s11
    %p198 = scmp.lt.s32.totalorder %s11, 9
    %p199 = pnand %p197, %p198
    %p200 = pneg %p199
    // Predicated region
    $region9: #{mixed_3b_forward.7} parent=5 // pred_check
      _
    $region10: #{mixed_3b_forward.7} parent=5 // pred_check_branch
      %202 = sbr.rel (%p199) target = $region12
    $region11: #{mixed_3b_forward.7} parent=5 // pred_region
      %s203 = ssub.s32 %s11, 1
      // Predicated region
      $region13: #{mixed_3b_forward.7} parent=11 // pred_check
        %p204 = pneg %p140
      $region14: #{mixed_3b_forward.7} parent=11 // pred_check_branch
        %206 = sbr.rel (%p204) target = $region16
      $region15: #{mixed_3b_forward.7} parent=11 // pred_region
        _
      $region16: #{mixed_3b_forward.7} parent=11 // pred_fallthru
        _
      // Predicated region
      $region17: #{mixed_3b_forward.7} parent=11 // pred_check
        %p207 = pneg %p161
      $region18: #{mixed_3b_forward.7} parent=11 // pred_check_branch
        %209 = sbr.rel (%p207) target = $region20
      $region19: #{mixed_3b_forward.7} parent=11 // pred_region
        _
      $region20: #{mixed_3b_forward.7} parent=11 // pred_fallthru
        _
    $region12: #{mixed_3b_forward.7} parent=5 // pred_fallthru
      _
    %p210 = scmp.lt.s32.totalorder %s11, 8
    // Predicated region
    $region21: #{mixed_3b_forward.7} parent=5 // pred_check
      %p211 = pneg %p210
    $region22: #{mixed_3b_forward.7} parent=5 // pred_check_branch
      %213 = sbr.rel (%p211) target = $region24
    $region23: #{mixed_3b_forward.7} parent=5 // pred_region
      // Predicated region
      $region25: #{mixed_3b_forward.7} parent=23 // pred_check
        %p214 = pneg %p51
      $region26: #{mixed_3b_forward.7} parent=23 // pred_check_branch
        %216 = sbr.rel (%p214) target = $region28
      $region27: #{mixed_3b_forward.7} parent=23 // pred_region
        %s217 = ssub.s32 %s19, 1
        %p218 = scmp.gt.s32.totalorder %s217, 0
        %s219 = scalar_select %p218, %s217, 0
        %p220 = scmp.lt.s32.totalorder %s18, 1
        %s221 = scalar_select %p220, %s18, 1
        %p222 = scmp.lt.s32.totalorder %s219, 3
        %s223 = scalar_select %p222, %s219, 3
        %s224 = smul.addr %s223, 30
        %s225 = smul.addr %s221, 120
        %s226 = sadd.s32 %s224, %s225
        %s227 = smul.addr %s226, 4
        %s228 = scalar_lea.vmem %s0, %s227
        %s229 = ssub.s32 %s19, 1
        %p230 = scmp.gt.s32.totalorder %s229, 0
        %s231 = scalar_select %p230, %s229, 0
      $region28: #{mixed_3b_forward.7} parent=23 // pred_fallthru
        _
      // Predicated region
      $region29: #{mixed_3b_forward.7} parent=23 // pred_check
        %p232 = pneg %p79
      $region30: #{mixed_3b_forward.7} parent=23 // pred_check_branch
        %234 = sbr.rel (%p232) target = $region32
      $region31: #{mixed_3b_forward.7} parent=23 // pred_region
        %p235 = scmp.lt.s32.totalorder %s18, 1
        %s236 = scalar_select %p235, %s18, 1
        %p237 = scmp.lt.s32.totalorder %s19, 3
        %s238 = scalar_select %p237, %s19, 3
        %s239 = smul.addr %s238, 30
        %s240 = smul.addr %s236, 120
        %s241 = sadd.s32 %s239, %s240
        %s242 = smul.addr %s241, 4
        %s243 = scalar_lea.vmem %s1, %s242
      $region32: #{mixed_3b_forward.7} parent=23 // pred_fallthru
        _
      // Predicated region
      $region33: #{mixed_3b_forward.7} parent=23 // pred_check
        %p244 = pneg %p113
      $region34: #{mixed_3b_forward.7} parent=23 // pred_check_branch
        %246 = sbr.rel (%p244) target = $region36
      $region35: #{mixed_3b_forward.7} parent=23 // pred_region
        %s247 = sadd.s32 %s19, 1
        %p248 = scmp.lt.s32.totalorder %s247, 3
        %s249 = scalar_select %p248, %s247, 3
        %p250 = scmp.lt.s32.totalorder %s18, 1
        %s251 = scalar_select %p250, %s18, 1
        %p252 = scmp.lt.s32.totalorder %s249, 3
        %s253 = scalar_select %p252, %s249, 3
        %s254 = smul.addr %s253, 30
        %s255 = smul.addr %s251, 120
        %s256 = sadd.s32 %s254, %s255
        %s257 = smul.addr %s256, 4
        %s258 = scalar_lea.vmem %s2, %s257
        %s259 = sadd.s32 %s19, 1
        %p260 = scmp.lt.s32.totalorder %s259, 3
        %s261 = scalar_select %p260, %s259, 3
      $region36: #{mixed_3b_forward.7} parent=23 // pred_fallthru
        _
    $region24: #{mixed_3b_forward.7} parent=5 // pred_fallthru
      _
    %p262 = scmp.le.s32.totalorder 1, %s11
    %p263 = scmp.lt.s32.totalorder %s11, 9
    %p264 = pnand %p262, %p263
    %p265 = pneg %p264
    // Predicated region
    $region37: #{mixed_3b_forward.7} parent=5 // pred_check
      _
    $region38: #{mixed_3b_forward.7} parent=5 // pred_check_branch
      %267 = sbr.rel (%p264) target = $region40
    $region39: #{mixed_3b_forward.7} parent=5 // pred_region
      %s268 = ssub.s32 %s11, 1
      %s269 = ssub.s32 %s21, 1
      %p270 = scmp.gt.s32.totalorder %s269, 0
      %s271 = scalar_select %p270, %s269, 0
      %p272 = scmp.lt.s32.totalorder %s20, 1
      %s273 = scalar_select %p272, %s20, 1
      %p274 = scmp.lt.s32.totalorder %s271, 3
      %s275 = scalar_select %p274, %s271, 3
      %s276 = smul.addr %s275, 30
      %s277 = smul.addr %s273, 120
      %s278 = sadd.s32 %s276, %s277
      %s279 = smul.addr %s278, 4
      %s280 = scalar_lea.vmem %s0, %s279
      %p281 = pneg %p57
      %p282 = pneg %p54
      %p283 = scmp.lt.s32.totalorder %s20, 1
      %s284 = scalar_select %p283, %s20, 1
      %p285 = scmp.lt.s32.totalorder %s21, 3
      %s286 = scalar_select %p285, %s21, 3
      %s287 = smul.addr %s286, 30
      %s288 = smul.addr %s284, 120
      %s289 = sadd.s32 %s287, %s288
      %s290 = smul.addr %s289, 4
      %s291 = scalar_lea.vmem %s1, %s290
      %p292 = pneg %p85
      %p293 = pneg %p82
      %s294 = sadd.s32 %s21, 1
      %p295 = scmp.lt.s32.totalorder %s294, 3
      %s296 = scalar_select %p295, %s294, 3
      %p297 = scmp.lt.s32.totalorder %s20, 1
      %s298 = scalar_select %p297, %s20, 1
      %p299 = scmp.lt.s32.totalorder %s296, 3
      %s300 = scalar_select %p299, %s296, 3
      %s301 = smul.addr %s300, 30
      %s302 = smul.addr %s298, 120
      %s303 = sadd.s32 %s301, %s302
      %s304 = smul.addr %s303, 4
      %s305 = scalar_lea.vmem %s2, %s304
      %p306 = pneg %p119
      %p307 = pneg %p116
      %p308 = pneg %p140
      %p309 = pneg %p137
      %p310 = pneg %p161
      %p311 = pneg %p158
      %p312 = pneg %p189
      %p313 = pneg %p186
      %p314 = scmp.lt.s32.totalorder %s20, 1
      %s315 = scalar_select %p314, %s20, 1
      %p316 = scmp.lt.s32.totalorder %s21, 3
      %s317 = scalar_select %p316, %s21, 3
      %s318 = smul.addr %s317, 10
      %s319 = smul.addr %s315, 40
      %s320 = sadd.s32 %s318, %s319
      %s321 = smul.addr %s320, 8
      %s322 = scalar_lea.vmem %s5, %s321
      %s323 = ssub.s32 %s21, 1
      %p324 = scmp.gt.s32.totalorder %s323, 0
      %s325 = scalar_select %p324, %s323, 0
      %p326 = scmp.lt.s32.totalorder %s20, 1
      %s327 = scalar_select %p326, %s20, 1
      %p328 = scmp.lt.s32.totalorder %s325, 3
      %s329 = scalar_select %p328, %s325, 3
      %s330 = smul.addr %s329, 30
      %s331 = smul.addr %s327, 120
      %s332 = sadd.s32 %s330, %s331
      %s333 = smul.addr %s332, 4
      %s334 = scalar_lea.vmem %s0, %s333
      %s335 = ssub.s32 %s21, 1
      %p336 = scmp.gt.s32.totalorder %s335, 0
      %s337 = scalar_select %p336, %s335, 0
      %p338 = scmp.lt.s32.totalorder %s20, 1
      %s339 = scalar_select %p338, %s20, 1
      %p340 = scmp.lt.s32.totalorder %s21, 3
      %s341 = scalar_select %p340, %s21, 3
      %s342 = smul.addr %s341, 30
      %s343 = smul.addr %s339, 120
      %s344 = sadd.s32 %s342, %s343
      %s345 = smul.addr %s344, 4
      %s346 = scalar_lea.vmem %s1, %s345
      %s347 = sadd.s32 %s21, 1
      %p348 = scmp.lt.s32.totalorder %s347, 3
      %s349 = scalar_select %p348, %s347, 3
      %p350 = scmp.lt.s32.totalorder %s20, 1
      %s351 = scalar_select %p350, %s20, 1
      %p352 = scmp.lt.s32.totalorder %s349, 3
      %s353 = scalar_select %p352, %s349, 3
      %s354 = smul.addr %s353, 30
      %s355 = smul.addr %s351, 120
      %s356 = sadd.s32 %s354, %s355
      %s357 = smul.addr %s356, 4
      %s358 = scalar_lea.vmem %s2, %s357
      %s359 = sadd.s32 %s21, 1
      %p360 = scmp.lt.s32.totalorder %s359, 3
      %s361 = scalar_select %p360, %s359, 3
      %p362 = scmp.lt.s32.totalorder %s20, 1
      %s363 = scalar_select %p362, %s20, 1
      %p364 = scmp.lt.s32.totalorder %s21, 3
      %s365 = scalar_select %p364, %s21, 3
      %s366 = smul.addr %s365, 10
      %s367 = smul.addr %s363, 40
      %s368 = sadd.s32 %s366, %s367
      %s369 = smul.addr %s368, 8
      %s370 = scalar_lea.vmem %s5, %s369
      %v372 = vld [vmem:[%s346 + $0x8] sm:$0xff]
      %v373 = vld [vmem:[%s346 + $0x10] sm:$0xff]
      %v374 = vld [vmem:[%s346 + $0x18] sm:$0xff]
      %v375 = vld [vmem:[%s346 + $0x20] sm:$0xff]
      %v376 = vld [vmem:[%s346 + $0x28] sm:$0xff]
      %v377 = vld [vmem:[%s346 + $0x30] sm:$0xff]
      %v378 = vld [vmem:[%s346 + $0x38] sm:$0xff]
      %v379 = vld [vmem:[%s346 + $0x40] sm:$0xff]
      %v380 = vld [vmem:[%s346 + $0x48] sm:$0xff]
      %v381 = vld [vmem:[%s346 + $0x50] sm:$0xff]
      %v382 = vld [vmem:[%s346 + $0x58] sm:$0x11]
      %v383 = vld [vmem:[%s346 + $0x8] sm:$0xee]
      %v384 = vunpack.c.l.bf16 %v372
      %v385 = vunpack.c.h.bf16 %v372
      %v386 = vunpack.c.l.bf16 %v373
      %v387 = vunpack.c.h.bf16 %v373
      %v388 = vunpack.c.l.bf16 %v374
      %v389 = vunpack.c.h.bf16 %v374
      %v390 = vunpack.c.l.bf16 %v375
      %v391 = vunpack.c.h.bf16 %v375
      %v392 = vunpack.c.l.bf16 %v376
      %v393 = vunpack.c.h.bf16 %v376
      %v394 = vunpack.c.l.bf16 %v377
      %v395 = vunpack.c.h.bf16 %v377
      %v396 = vunpack.c.l.bf16 %v378
      %v397 = vunpack.c.h.bf16 %v378
      %v398 = vunpack.c.l.bf16 %v379
      %v399 = vunpack.c.h.bf16 %v379
      %v400 = vunpack.c.l.bf16 %v380
      %v401 = vunpack.c.h.bf16 %v380
      %v402 = vunpack.c.l.bf16 %v381
      %v403 = vunpack.c.h.bf16 %v381
      %v404 = vunpack.c.l.bf16 %v382
      %v405 = vunpack.c.h.bf16 %v382
      %v406 = vunpack.c.l.bf16 %v383
      %v407 = vunpack.c.h.bf16 %v383
      %vm430 = vcmask 1046528
      %v431 = vrot.slane %v406, 1
      %v432 = vrot.slane %v386, 1
      %v433 = vsel %vm430, %v431, %v432
      %v434 = vrot.slane %v407, 1
      %v435 = vrot.slane %v387, 1
      %v436 = vsel %vm430, %v434, %v435
      %v437 = vrot.slane %v388, 1
      %v438 = vsel %vm430, %v432, %v437
      %v439 = vrot.slane %v389, 1
      %v440 = vsel %vm430, %v435, %v439
      %v441 = vrot.slane %v390, 1
      %v442 = vsel %vm430, %v437, %v441
      %v443 = vrot.slane %v391, 1
      %v444 = vsel %vm430, %v439, %v443
      %v445 = vrot.slane %v392, 1
      %v446 = vsel %vm430, %v441, %v445
      %v447 = vrot.slane %v393, 1
      %v448 = vsel %vm430, %v443, %v447
      %v449 = vrot.slane %v394, 1
      %v450 = vsel %vm430, %v445, %v449
      %v451 = vrot.slane %v395, 1
      %v452 = vsel %vm430, %v447, %v451
      %v453 = vrot.slane %v396, 1
      %v454 = vsel %vm430, %v449, %v453
      %v455 = vrot.slane %v397, 1
      %v456 = vsel %vm430, %v451, %v455
      %v457 = vrot.slane %v398, 1
      %v458 = vsel %vm430, %v453, %v457
      %v459 = vrot.slane %v399, 1
      %v460 = vsel %vm430, %v455, %v459
      %v461 = vrot.slane %v400, 1
      %v462 = vsel %vm430, %v457, %v461
      %v463 = vrot.slane %v401, 1
      %v464 = vsel %vm430, %v459, %v463
      %v465 = vrot.slane %v402, 1
      %v466 = vsel %vm430, %v461, %v465
      %v467 = vrot.slane %v403, 1
      %v468 = vsel %vm430, %v463, %v467
      %v469 = vrot.slane %v404, 1
      %v470 = vsel %vm430, %v465, %v469
      %v471 = vrot.slane %v405, 1
      %v472 = vsel %vm430, %v467, %v471
      %v495 = vmax.f32 %v384, %v433
      %v496 = vmax.f32 %v385, %v436
      %v497 = vmax.f32 %v386, %v438
      %v498 = vmax.f32 %v387, %v440
      %v499 = vmax.f32 %v388, %v442
      %v500 = vmax.f32 %v389, %v444
      %v501 = vmax.f32 %v390, %v446
      %v502 = vmax.f32 %v391, %v448
      %v503 = vmax.f32 %v392, %v450
      %v504 = vmax.f32 %v393, %v452
      %v505 = vmax.f32 %v394, %v454
      %v506 = vmax.f32 %v395, %v456
      %v507 = vmax.f32 %v396, %v458
      %v508 = vmax.f32 %v397, %v460
      %v509 = vmax.f32 %v398, %v462
      %v510 = vmax.f32 %v399, %v464
      %v511 = vmax.f32 %v400, %v466
      %v512 = vmax.f32 %v401, %v468
      %v513 = vmax.f32 %v402, %v470
      %v514 = vmax.f32 %v403, %v472
      %v515 = vmax.f32 %v404, %v469
      %v516 = vmax.f32 %v405, %v471
      %v517 = vpack.c.bf16 %v496, %v495
      %v518 = vpack.c.bf16 %v498, %v497
      %v519 = vpack.c.bf16 %v500, %v499
      %v520 = vpack.c.bf16 %v502, %v501
      %v521 = vpack.c.bf16 %v504, %v503
      %v522 = vpack.c.bf16 %v506, %v505
      %v523 = vpack.c.bf16 %v508, %v507
      %v524 = vpack.c.bf16 %v510, %v509
      %v525 = vpack.c.bf16 %v512, %v511
      %v526 = vpack.c.bf16 %v514, %v513
      %v527 = vpack.c.bf16 %v516, %v515
      %v528 = vld [vmem:[%s346 + $0x58] sm:$0x33]
      %v529 = vunpack.c.l.bf16 %v517
      %v530 = vunpack.c.h.bf16 %v517
      %v531 = vunpack.c.l.bf16 %v518
      %v532 = vunpack.c.h.bf16 %v518
      %v533 = vunpack.c.l.bf16 %v519
      %v534 = vunpack.c.h.bf16 %v519
      %v535 = vunpack.c.l.bf16 %v520
      %v536 = vunpack.c.h.bf16 %v520
      %v537 = vunpack.c.l.bf16 %v521
      %v538 = vunpack.c.h.bf16 %v521
      %v539 = vunpack.c.l.bf16 %v522
      %v540 = vunpack.c.h.bf16 %v522
      %v541 = vunpack.c.l.bf16 %v523
      %v542 = vunpack.c.h.bf16 %v523
      %v543 = vunpack.c.l.bf16 %v524
      %v544 = vunpack.c.h.bf16 %v524
      %v545 = vunpack.c.l.bf16 %v525
      %v546 = vunpack.c.h.bf16 %v525
      %v547 = vunpack.c.l.bf16 %v526
      %v548 = vunpack.c.h.bf16 %v526
      %v549 = vunpack.c.l.bf16 %v527
      %v550 = vunpack.c.h.bf16 %v527
      %v551 = vunpack.c.l.bf16 %v528
      %v552 = vunpack.c.h.bf16 %v528
      %vm555 = vcmask 1045504
      %v556 = vrot.slane %v406, 2
      %v557 = vrot.slane %v386, 2
      %v558 = vsel %vm555, %v556, %v557
      %v559 = vrot.slane %v407, 2
      %v560 = vrot.slane %v387, 2
      %v561 = vsel %vm555, %v559, %v560
      %v562 = vrot.slane %v388, 2
      %v563 = vsel %vm555, %v557, %v562
      %v564 = vrot.slane %v389, 2
      %v565 = vsel %vm555, %v560, %v564
      %v566 = vrot.slane %v390, 2
      %v567 = vsel %vm555, %v562, %v566
      %v568 = vrot.slane %v391, 2
      %v569 = vsel %vm555, %v564, %v568
      %v570 = vrot.slane %v392, 2
      %v571 = vsel %vm555, %v566, %v570
      %v572 = vrot.slane %v393, 2
      %v573 = vsel %vm555, %v568, %v572
      %v574 = vrot.slane %v394, 2
      %v575 = vsel %vm555, %v570, %v574
      %v576 = vrot.slane %v395, 2
      %v577 = vsel %vm555, %v572, %v576
      %v578 = vrot.slane %v396, 2
      %v579 = vsel %vm555, %v574, %v578
      %v580 = vrot.slane %v397, 2
      %v581 = vsel %vm555, %v576, %v580
      %v582 = vrot.slane %v398, 2
      %v583 = vsel %vm555, %v578, %v582
      %v584 = vrot.slane %v399, 2
      %v585 = vsel %vm555, %v580, %v584
      %v586 = vrot.slane %v400, 2
      %v587 = vsel %vm555, %v582, %v586
      %v588 = vrot.slane %v401, 2
      %v589 = vsel %vm555, %v584, %v588
      %v590 = vrot.slane %v402, 2
      %v591 = vsel %vm555, %v586, %v590
      %v592 = vrot.slane %v403, 2
      %v593 = vsel %vm555, %v588, %v592
      %v594 = vrot.slane %v551, 2
      %v595 = vsel %vm555, %v590, %v594
      %v596 = vrot.slane %v552, 2
      %v597 = vsel %vm555, %v592, %v596
      %v620 = vmax.f32 %v529, %v558
      %v621 = vmax.f32 %v530, %v561
      %v622 = vmax.f32 %v531, %v563
      %v623 = vmax.f32 %v532, %v565
      %v624 = vmax.f32 %v533, %v567
      %v625 = vmax.f32 %v534, %v569
      %v626 = vmax.f32 %v535, %v571
      %v627 = vmax.f32 %v536, %v573
      %v628 = vmax.f32 %v537, %v575
      %v629 = vmax.f32 %v538, %v577
      %v630 = vmax.f32 %v539, %v579
      %v631 = vmax.f32 %v540, %v581
      %v632 = vmax.f32 %v541, %v583
      %v633 = vmax.f32 %v542, %v585
      %v634 = vmax.f32 %v543, %v587
      %v635 = vmax.f32 %v544, %v589
      %v636 = vmax.f32 %v545, %v591
      %v637 = vmax.f32 %v546, %v593
      %v638 = vmax.f32 %v547, %v595
      %v639 = vmax.f32 %v548, %v597
      %v640 = vmax.f32 %v549, %v594
      %v641 = vmax.f32 %v550, %v596
      %v642 = vpack.c.bf16 %v621, %v620
      %v643 = vpack.c.bf16 %v623, %v622
      %v644 = vpack.c.bf16 %v625, %v624
      %v645 = vpack.c.bf16 %v627, %v626
      %v646 = vpack.c.bf16 %v629, %v628
      %v647 = vpack.c.bf16 %v631, %v630
      %v648 = vpack.c.bf16 %v633, %v632
      %v649 = vpack.c.bf16 %v635, %v634
      %v650 = vpack.c.bf16 %v637, %v636
      %v651 = vpack.c.bf16 %v639, %v638
      %v652 = vpack.c.bf16 %v641, %v640
      %v653 = vld [vmem:[%s346 + $0x10] sm:$0xee]
      %v654 = vld [vmem:[%s346 + $0x58] sm:$0xff]
      %v655 = vld [vmem:[%s346 + $0x60] sm:$0x33]
      %v656 = vunpack.c.l.bf16 %v642
      %v657 = vunpack.c.h.bf16 %v642
      %v658 = vunpack.c.l.bf16 %v643
      %v659 = vunpack.c.h.bf16 %v643
      %v660 = vunpack.c.l.bf16 %v644
      %v661 = vunpack.c.h.bf16 %v644
      %v662 = vunpack.c.l.bf16 %v645
      %v663 = vunpack.c.h.bf16 %v645
      %v664 = vunpack.c.l.bf16 %v646
      %v665 = vunpack.c.h.bf16 %v646
      %v666 = vunpack.c.l.bf16 %v647
      %v667 = vunpack.c.h.bf16 %v647
      %v668 = vunpack.c.l.bf16 %v648
      %v669 = vunpack.c.h.bf16 %v648
      %v670 = vunpack.c.l.bf16 %v649
      %v671 = vunpack.c.h.bf16 %v649
      %v672 = vunpack.c.l.bf16 %v650
      %v673 = vunpack.c.h.bf16 %v650
      %v674 = vunpack.c.l.bf16 %v651
      %v675 = vunpack.c.h.bf16 %v651
      %v676 = vunpack.c.l.bf16 %v652
      %v677 = vunpack.c.h.bf16 %v652
      %v678 = vunpack.c.l.bf16 %v653
      %v679 = vunpack.c.h.bf16 %v653
      %v680 = vunpack.c.l.bf16 %v654
      %v681 = vunpack.c.h.bf16 %v654
      %v682 = vunpack.c.l.bf16 %v655
      %v683 = vunpack.c.h.bf16 %v655
      %v690 = vrot.slane %v678, 2
      %v691 = vsel %vm555, %v690, %v562
      %v692 = vrot.slane %v679, 2
      %v693 = vsel %vm555, %v692, %v564
      %v694 = vrot.slane %v680, 2
      %v695 = vsel %vm555, %v590, %v694
      %v696 = vrot.slane %v681, 2
      %v697 = vsel %vm555, %v592, %v696
      %v698 = vrot.slane %v682, 2
      %v699 = vsel %vm555, %v694, %v698
      %v700 = vrot.slane %v683, 2
      %v701 = vsel %vm555, %v696, %v700
      %v710 = vmax.f32 %v656, %v691
      %v711 = vmax.f32 %v657, %v693
      %v712 = vmax.f32 %v658, %v567
      %v713 = vmax.f32 %v659, %v569
      %v714 = vmax.f32 %v660, %v571
      %v715 = vmax.f32 %v661, %v573
      %v716 = vmax.f32 %v662, %v575
      %v717 = vmax.f32 %v663, %v577
      %v718 = vmax.f32 %v664, %v579
      %v719 = vmax.f32 %v665, %v581
      %v720 = vmax.f32 %v666, %v583
      %v721 = vmax.f32 %v667, %v585
      %v722 = vmax.f32 %v668, %v587
      %v723 = vmax.f32 %v669, %v589
      %v724 = vmax.f32 %v670, %v591
      %v725 = vmax.f32 %v671, %v593
      %v726 = vmax.f32 %v672, %v695
      %v727 = vmax.f32 %v673, %v697
      %v728 = vmax.f32 %v674, %v699
      %v729 = vmax.f32 %v675, %v701
      %v730 = vmax.f32 %v676, %v698
      %v731 = vmax.f32 %v677, %v700
      %v732 = vpack.c.bf16 %v711, %v710
      %v733 = vpack.c.bf16 %v713, %v712
      %v734 = vpack.c.bf16 %v715, %v714
      %v735 = vpack.c.bf16 %v717, %v716
      %v736 = vpack.c.bf16 %v719, %v718
      %v737 = vpack.c.bf16 %v721, %v720
      %v738 = vpack.c.bf16 %v723, %v722
      %v739 = vpack.c.bf16 %v725, %v724
      %v740 = vpack.c.bf16 %v727, %v726
      %v741 = vpack.c.bf16 %v729, %v728
      %v742 = vpack.c.bf16 %v731, %v730
      %v743 = vld [vmem:[%s346 + $0x10] sm:$0xcc]
      %v744 = vunpack.c.l.bf16 %v732
      %v745 = vunpack.c.h.bf16 %v732
      %v746 = vunpack.c.l.bf16 %v733
      %v747 = vunpack.c.h.bf16 %v733
      %v748 = vunpack.c.l.bf16 %v734
      %v749 = vunpack.c.h.bf16 %v734
      %v750 = vunpack.c.l.bf16 %v735
      %v751 = vunpack.c.h.bf16 %v735
      %v752 = vunpack.c.l.bf16 %v736
      %v753 = vunpack.c.h.bf16 %v736
      %v754 = vunpack.c.l.bf16 %v737
      %v755 = vunpack.c.h.bf16 %v737
      %v756 = vunpack.c.l.bf16 %v738
      %v757 = vunpack.c.h.bf16 %v738
      %v758 = vunpack.c.l.bf16 %v739
      %v759 = vunpack.c.h.bf16 %v739
      %v760 = vunpack.c.l.bf16 %v740
      %v761 = vunpack.c.h.bf16 %v740
      %v762 = vunpack.c.l.bf16 %v741
      %v763 = vunpack.c.h.bf16 %v741
      %v764 = vunpack.c.l.bf16 %v742
      %v765 = vunpack.c.h.bf16 %v742
      %v766 = vunpack.c.l.bf16 %v743
      %v767 = vunpack.c.h.bf16 %v743
      %vm770 = vcmask 1044480
      %v771 = vrot.slane %v766, 3
      %v772 = vrot.slane %v388, 3
      %v773 = vsel %vm770, %v771, %v772
      %v774 = vrot.slane %v767, 3
      %v775 = vrot.slane %v389, 3
      %v776 = vsel %vm770, %v774, %v775
      %v777 = vrot.slane %v390, 3
      %v778 = vsel %vm770, %v772, %v777
      %v779 = vrot.slane %v391, 3
      %v780 = vsel %vm770, %v775, %v779
      %v781 = vrot.slane %v392, 3
      %v782 = vsel %vm770, %v777, %v781
      %v783 = vrot.slane %v393, 3
      %v784 = vsel %vm770, %v779, %v783
      %v785 = vrot.slane %v394, 3
      %v786 = vsel %vm770, %v781, %v785
      %v787 = vrot.slane %v395, 3
      %v788 = vsel %vm770, %v783, %v787
      %v789 = vrot.slane %v396, 3
      %v790 = vsel %vm770, %v785, %v789
      %v791 = vrot.slane %v397, 3
      %v792 = vsel %vm770, %v787, %v791
      %v793 = vrot.slane %v398, 3
      %v794 = vsel %vm770, %v789, %v793
      %v795 = vrot.slane %v399, 3
      %v796 = vsel %vm770, %v791, %v795
      %v797 = vrot.slane %v400, 3
      %v798 = vsel %vm770, %v793, %v797
      %v799 = vrot.slane %v401, 3
      %v800 = vsel %vm770, %v795, %v799
      %v801 = vrot.slane %v402, 3
      %v802 = vsel %vm770, %v797, %v801
      %v803 = vrot.slane %v403, 3
      %v804 = vsel %vm770, %v799, %v803
      %v805 = vrot.slane %v680, 3
      %v806 = vsel %vm770, %v801, %v805
      %v807 = vrot.slane %v681, 3
      %v808 = vsel %vm770, %v803, %v807
      %v809 = vrot.slane %v682, 3
      %v810 = vsel %vm770, %v805, %v809
      %v811 = vrot.slane %v683, 3
      %v812 = vsel %vm770, %v807, %v811
      %v835 = vmax.f32 %v744, %v773
      %v836 = vmax.f32 %v745, %v776
      %v837 = vmax.f32 %v746, %v778
      %v838 = vmax.f32 %v747, %v780
      %v839 = vmax.f32 %v748, %v782
      %v840 = vmax.f32 %v749, %v784
      %v841 = vmax.f32 %v750, %v786
      %v842 = vmax.f32 %v751, %v788
      %v843 = vmax.f32 %v752, %v790
      %v844 = vmax.f32 %v753, %v792
      %v845 = vmax.f32 %v754, %v794
      %v846 = vmax.f32 %v755, %v796
      %v847 = vmax.f32 %v756, %v798
      %v848 = vmax.f32 %v757, %v800
      %v849 = vmax.f32 %v758, %v802
      %v850 = vmax.f32 %v759, %v804
      %v851 = vmax.f32 %v760, %v806
      %v852 = vmax.f32 %v761, %v808
      %v853 = vmax.f32 %v762, %v810
      %v854 = vmax.f32 %v763, %v812
      %v855 = vmax.f32 %v764, %v809
      %v856 = vmax.f32 %v765, %v811
      %v857 = vpack.c.bf16 %v836, %v835
      %v858 = vpack.c.bf16 %v838, %v837
      %v859 = vpack.c.bf16 %v840, %v839
      %v860 = vpack.c.bf16 %v842, %v841
      %v861 = vpack.c.bf16 %v844, %v843
      %v862 = vpack.c.bf16 %v846, %v845
      %v863 = vpack.c.bf16 %v848, %v847
      %v864 = vpack.c.bf16 %v850, %v849
      %v865 = vpack.c.bf16 %v852, %v851
      %v866 = vpack.c.bf16 %v854, %v853
      %v867 = vpack.c.bf16 %v856, %v855
      %v868 = vld [vmem:[%s346 + $0x60] sm:$0x77]
      %v869 = vunpack.c.l.bf16 %v857
      %v870 = vunpack.c.h.bf16 %v857
      %v871 = vunpack.c.l.bf16 %v858
      %v872 = vunpack.c.h.bf16 %v858
      %v873 = vunpack.c.l.bf16 %v859
      %v874 = vunpack.c.h.bf16 %v859
      %v875 = vunpack.c.l.bf16 %v860
      %v876 = vunpack.c.h.bf16 %v860
      %v877 = vunpack.c.l.bf16 %v861
      %v878 = vunpack.c.h.bf16 %v861
      %v879 = vunpack.c.l.bf16 %v862
      %v880 = vunpack.c.h.bf16 %v862
      %v881 = vunpack.c.l.bf16 %v863
      %v882 = vunpack.c.h.bf16 %v863
      %v883 = vunpack.c.l.bf16 %v864
      %v884 = vunpack.c.h.bf16 %v864
      %v885 = vunpack.c.l.bf16 %v865
      %v886 = vunpack.c.h.bf16 %v865
      %v887 = vunpack.c.l.bf16 %v866
      %v888 = vunpack.c.h.bf16 %v866
      %v889 = vunpack.c.l.bf16 %v867
      %v890 = vunpack.c.h.bf16 %v867
      %v891 = vunpack.c.l.bf16 %v868
      %v892 = vunpack.c.h.bf16 %v868
      %vm895 = vcmask 1043456
      %v896 = vrot.slane %v766, 4
      %v897 = vrot.slane %v388, 4
      %v898 = vsel %vm895, %v896, %v897
      %v899 = vrot.slane %v767, 4
      %v900 = vrot.slane %v389, 4
      %v901 = vsel %vm895, %v899, %v900
      %v902 = vrot.slane %v390, 4
      %v903 = vsel %vm895, %v897, %v902
      %v904 = vrot.slane %v391, 4
      %v905 = vsel %vm895, %v900, %v904
      %v906 = vrot.slane %v392, 4
      %v907 = vsel %vm895, %v902, %v906
      %v908 = vrot.slane %v393, 4
      %v909 = vsel %vm895, %v904, %v908
      %v910 = vrot.slane %v394, 4
      %v911 = vsel %vm895, %v906, %v910
      %v912 = vrot.slane %v395, 4
      %v913 = vsel %vm895, %v908, %v912
      %v914 = vrot.slane %v396, 4
      %v915 = vsel %vm895, %v910, %v914
      %v916 = vrot.slane %v397, 4
      %v917 = vsel %vm895, %v912, %v916
      %v918 = vrot.slane %v398, 4
      %v919 = vsel %vm895, %v914, %v918
      %v920 = vrot.slane %v399, 4
      %v921 = vsel %vm895, %v916, %v920
      %v922 = vrot.slane %v400, 4
      %v923 = vsel %vm895, %v918, %v922
      %v924 = vrot.slane %v401, 4
      %v925 = vsel %vm895, %v920, %v924
      %v926 = vrot.slane %v402, 4
      %v927 = vsel %vm895, %v922, %v926
      %v928 = vrot.slane %v403, 4
      %v929 = vsel %vm895, %v924, %v928
      %v930 = vrot.slane %v680, 4
      %v931 = vsel %vm895, %v926, %v930
      %v932 = vrot.slane %v681, 4
      %v933 = vsel %vm895, %v928, %v932
      %v934 = vrot.slane %v891, 4
      %v935 = vsel %vm895, %v930, %v934
      %v936 = vrot.slane %v892, 4
      %v937 = vsel %vm895, %v932, %v936
      %v960 = vmax.f32 %v869, %v898
      %v961 = vmax.f32 %v870, %v901
      %v962 = vmax.f32 %v871, %v903
      %v963 = vmax.f32 %v872, %v905
      %v964 = vmax.f32 %v873, %v907
      %v965 = vmax.f32 %v874, %v909
      %v966 = vmax.f32 %v875, %v911
      %v967 = vmax.f32 %v876, %v913
      %v968 = vmax.f32 %v877, %v915
      %v969 = vmax.f32 %v878, %v917
      %v970 = vmax.f32 %v879, %v919
      %v971 = vmax.f32 %v880, %v921
      %v972 = vmax.f32 %v881, %v923
      %v973 = vmax.f32 %v882, %v925
      %v974 = vmax.f32 %v883, %v927
      %v975 = vmax.f32 %v884, %v929
      %v976 = vmax.f32 %v885, %v931
      %v977 = vmax.f32 %v886, %v933
      %v978 = vmax.f32 %v887, %v935
      %v979 = vmax.f32 %v888, %v937
      %v980 = vmax.f32 %v889, %v934
      %v981 = vmax.f32 %v890, %v936
      %v982 = vpack.c.bf16 %v961, %v960
      %v983 = vpack.c.bf16 %v963, %v962
      %v984 = vpack.c.bf16 %v965, %v964
      %v985 = vpack.c.bf16 %v967, %v966
      %v986 = vpack.c.bf16 %v969, %v968
      %v987 = vpack.c.bf16 %v971, %v970
      %v988 = vpack.c.bf16 %v973, %v972
      %v989 = vpack.c.bf16 %v975, %v974
      %v990 = vpack.c.bf16 %v977, %v976
      %v991 = vpack.c.bf16 %v979, %v978
      %v992 = vpack.c.bf16 %v981, %v980
      %v993 = vld [vmem:[%s346 + $0x18] sm:$0xcc]
      %v994 = vld [vmem:[%s346 + $0x60] sm:$0xff]
      %v995 = vld [vmem:[%s346 + $0x68] sm:$0x77]
      %v996 = vunpack.c.l.bf16 %v982
      %v997 = vunpack.c.h.bf16 %v982
      %v998 = vunpack.c.l.bf16 %v983
      %v999 = vunpack.c.h.bf16 %v983
      %v1000 = vunpack.c.l.bf16 %v984
      %v1001 = vunpack.c.h.bf16 %v984
      %v1002 = vunpack.c.l.bf16 %v985
      %v1003 = vunpack.c.h.bf16 %v985
      %v1004 = vunpack.c.l.bf16 %v986
      %v1005 = vunpack.c.h.bf16 %v986
      %v1006 = vunpack.c.l.bf16 %v987
      %v1007 = vunpack.c.h.bf16 %v987
      %v1008 = vunpack.c.l.bf16 %v988
      %v1009 = vunpack.c.h.bf16 %v988
      %v1010 = vunpack.c.l.bf16 %v989
      %v1011 = vunpack.c.h.bf16 %v989
      %v1012 = vunpack.c.l.bf16 %v990
      %v1013 = vunpack.c.h.bf16 %v990
      %v1014 = vunpack.c.l.bf16 %v991
      %v1015 = vunpack.c.h.bf16 %v991
      %v1016 = vunpack.c.l.bf16 %v992
      %v1017 = vunpack.c.h.bf16 %v992
      %v1018 = vunpack.c.l.bf16 %v993
      %v1019 = vunpack.c.h.bf16 %v993
      %v1020 = vunpack.c.l.bf16 %v994
      %v1021 = vunpack.c.h.bf16 %v994
      %v1022 = vunpack.c.l.bf16 %v995
      %v1023 = vunpack.c.h.bf16 %v995
      %v1030 = vrot.slane %v1018, 4
      %v1031 = vsel %vm895, %v1030, %v902
      %v1032 = vrot.slane %v1019, 4
      %v1033 = vsel %vm895, %v1032, %v904
      %v1034 = vrot.slane %v1020, 4
      %v1035 = vsel %vm895, %v930, %v1034
      %v1036 = vrot.slane %v1021, 4
      %v1037 = vsel %vm895, %v932, %v1036
      %v1038 = vrot.slane %v1022, 4
      %v1039 = vsel %vm895, %v1034, %v1038
      %v1040 = vrot.slane %v1023, 4
      %v1041 = vsel %vm895, %v1036, %v1040
      %v1050 = vmax.f32 %v996, %v1031
      %v1051 = vmax.f32 %v997, %v1033
      %v1052 = vmax.f32 %v998, %v907
      %v1053 = vmax.f32 %v999, %v909
      %v1054 = vmax.f32 %v1000, %v911
      %v1055 = vmax.f32 %v1001, %v913
      %v1056 = vmax.f32 %v1002, %v915
      %v1057 = vmax.f32 %v1003, %v917
      %v1058 = vmax.f32 %v1004, %v919
      %v1059 = vmax.f32 %v1005, %v921
      %v1060 = vmax.f32 %v1006, %v923
      %v1061 = vmax.f32 %v1007, %v925
      %v1062 = vmax.f32 %v1008, %v927
      %v1063 = vmax.f32 %v1009, %v929
      %v1064 = vmax.f32 %v1010, %v931
      %v1065 = vmax.f32 %v1011, %v933
      %v1066 = vmax.f32 %v1012, %v1035
      %v1067 = vmax.f32 %v1013, %v1037
      %v1068 = vmax.f32 %v1014, %v1039
      %v1069 = vmax.f32 %v1015, %v1041
      %v1070 = vmax.f32 %v1016, %v1038
      %v1071 = vmax.f32 %v1017, %v1040
      %v1072 = vpack.c.bf16 %v1051, %v1050
      %v1073 = vpack.c.bf16 %v1053, %v1052
      %v1074 = vpack.c.bf16 %v1055, %v1054
      %v1075 = vpack.c.bf16 %v1057, %v1056
      %v1076 = vpack.c.bf16 %v1059, %v1058
      %v1077 = vpack.c.bf16 %v1061, %v1060
      %v1078 = vpack.c.bf16 %v1063, %v1062
      %v1079 = vpack.c.bf16 %v1065, %v1064
      %v1080 = vpack.c.bf16 %v1067, %v1066
      %v1081 = vpack.c.bf16 %v1069, %v1068
      %v1082 = vpack.c.bf16 %v1071, %v1070
      %v1083 = vld [vmem:[%s346 + $0x18] sm:$0x88]
      %v1084 = vunpack.c.l.bf16 %v1072
      %v1085 = vunpack.c.h.bf16 %v1072
      %v1086 = vunpack.c.l.bf16 %v1073
      %v1087 = vunpack.c.h.bf16 %v1073
      %v1088 = vunpack.c.l.bf16 %v1074
      %v1089 = vunpack.c.h.bf16 %v1074
      %v1090 = vunpack.c.l.bf16 %v1075
      %v1091 = vunpack.c.h.bf16 %v1075
      %v1092 = vunpack.c.l.bf16 %v1076
      %v1093 = vunpack.c.h.bf16 %v1076
      %v1094 = vunpack.c.l.bf16 %v1077
      %v1095 = vunpack.c.h.bf16 %v1077
      %v1096 = vunpack.c.l.bf16 %v1078
      %v1097 = vunpack.c.h.bf16 %v1078
      %v1098 = vunpack.c.l.bf16 %v1079
      %v1099 = vunpack.c.h.bf16 %v1079
      %v1100 = vunpack.c.l.bf16 %v1080
      %v1101 = vunpack.c.h.bf16 %v1080
      %v1102 = vunpack.c.l.bf16 %v1081
      %v1103 = vunpack.c.h.bf16 %v1081
      %v1104 = vunpack.c.l.bf16 %v1082
      %v1105 = vunpack.c.h.bf16 %v1082
      %v1106 = vunpack.c.l.bf16 %v1083
      %v1107 = vunpack.c.h.bf16 %v1083
      %vm1110 = vcmask 1042432
      %v1111 = vrot.slane %v1106, 5
      %v1112 = vrot.slane %v390, 5
      %v1113 = vsel %vm1110, %v1111, %v1112
      %v1114 = vrot.slane %v1107, 5
      %v1115 = vrot.slane %v391, 5
      %v1116 = vsel %vm1110, %v1114, %v1115
      %v1117 = vrot.slane %v392, 5
      %v1118 = vsel %vm1110, %v1112, %v1117
      %v1119 = vrot.slane %v393, 5
      %v1120 = vsel %vm1110, %v1115, %v1119
      %v1121 = vrot.slane %v394, 5
      %v1122 = vsel %vm1110, %v1117, %v1121
      %v1123 = vrot.slane %v395, 5
      %v1124 = vsel %vm1110, %v1119, %v1123
      %v1125 = vrot.slane %v396, 5
      %v1126 = vsel %vm1110, %v1121, %v1125
      %v1127 = vrot.slane %v397, 5
      %v1128 = vsel %vm1110, %v1123, %v1127
      %v1129 = vrot.slane %v398, 5
      %v1130 = vsel %vm1110, %v1125, %v1129
      %v1131 = vrot.slane %v399, 5
      %v1132 = vsel %vm1110, %v1127, %v1131
      %v1133 = vrot.slane %v400, 5
      %v1134 = vsel %vm1110, %v1129, %v1133
      %v1135 = vrot.slane %v401, 5
      %v1136 = vsel %vm1110, %v1131, %v1135
      %v1137 = vrot.slane %v402, 5
      %v1138 = vsel %vm1110, %v1133, %v1137
      %v1139 = vrot.slane %v403, 5
      %v1140 = vsel %vm1110, %v1135, %v1139
      %v1141 = vrot.slane %v680, 5
      %v1142 = vsel %vm1110, %v1137, %v1141
      %v1143 = vrot.slane %v681, 5
      %v1144 = vsel %vm1110, %v1139, %v1143
      %v1145 = vrot.slane %v1020, 5
      %v1146 = vsel %vm1110, %v1141, %v1145
      %v1147 = vrot.slane %v1021, 5
      %v1148 = vsel %vm1110, %v1143, %v1147
      %v1149 = vrot.slane %v1022, 5
      %v1150 = vsel %vm1110, %v1145, %v1149
      %v1151 = vrot.slane %v1023, 5
      %v1152 = vsel %vm1110, %v1147, %v1151
      %v1175 = vmax.f32 %v1084, %v1113
      %v1176 = vmax.f32 %v1085, %v1116
      %v1177 = vmax.f32 %v1086, %v1118
      %v1178 = vmax.f32 %v1087, %v1120
      %v1179 = vmax.f32 %v1088, %v1122
      %v1180 = vmax.f32 %v1089, %v1124
      %v1181 = vmax.f32 %v1090, %v1126
      %v1182 = vmax.f32 %v1091, %v1128
      %v1183 = vmax.f32 %v1092, %v1130
      %v1184 = vmax.f32 %v1093, %v1132
      %v1185 = vmax.f32 %v1094, %v1134
      %v1186 = vmax.f32 %v1095, %v1136
      %v1187 = vmax.f32 %v1096, %v1138
      %v1188 = vmax.f32 %v1097, %v1140
      %v1189 = vmax.f32 %v1098, %v1142
      %v1190 = vmax.f32 %v1099, %v1144
      %v1191 = vmax.f32 %v1100, %v1146
      %v1192 = vmax.f32 %v1101, %v1148
      %v1193 = vmax.f32 %v1102, %v1150
      %v1194 = vmax.f32 %v1103, %v1152
      %v1195 = vmax.f32 %v1104, %v1149
      %v1196 = vmax.f32 %v1105, %v1151
      %v1197 = vpack.c.bf16 %v1176, %v1175
      %v1198 = vpack.c.bf16 %v1178, %v1177
      %v1199 = vpack.c.bf16 %v1180, %v1179
      %v1200 = vpack.c.bf16 %v1182, %v1181
      %v1201 = vpack.c.bf16 %v1184, %v1183
      %v1202 = vpack.c.bf16 %v1186, %v1185
      %v1203 = vpack.c.bf16 %v1188, %v1187
      %v1204 = vpack.c.bf16 %v1190, %v1189
      %v1205 = vpack.c.bf16 %v1192, %v1191
      %v1206 = vpack.c.bf16 %v1194, %v1193
      %v1207 = vpack.c.bf16 %v1196, %v1195
      %v1208 = vld [vmem:[%s346 + $0x68] sm:$0xff]
      %v1209 = vunpack.c.l.bf16 %v1197
      %v1210 = vunpack.c.h.bf16 %v1197
      %v1211 = vunpack.c.l.bf16 %v1198
      %v1212 = vunpack.c.h.bf16 %v1198
      %v1213 = vunpack.c.l.bf16 %v1199
      %v1214 = vunpack.c.h.bf16 %v1199
      %v1215 = vunpack.c.l.bf16 %v1200
      %v1216 = vunpack.c.h.bf16 %v1200
      %v1217 = vunpack.c.l.bf16 %v1201
      %v1218 = vunpack.c.h.bf16 %v1201
      %v1219 = vunpack.c.l.bf16 %v1202
      %v1220 = vunpack.c.h.bf16 %v1202
      %v1221 = vunpack.c.l.bf16 %v1203
      %v1222 = vunpack.c.h.bf16 %v1203
      %v1223 = vunpack.c.l.bf16 %v1204
      %v1224 = vunpack.c.h.bf16 %v1204
      %v1225 = vunpack.c.l.bf16 %v1205
      %v1226 = vunpack.c.h.bf16 %v1205
      %v1227 = vunpack.c.l.bf16 %v1206
      %v1228 = vunpack.c.h.bf16 %v1206
      %v1229 = vunpack.c.l.bf16 %v1207
      %v1230 = vunpack.c.h.bf16 %v1207
      %v1231 = vunpack.c.l.bf16 %v1208
      %v1232 = vunpack.c.h.bf16 %v1208
      %vm1235 = vcmask 1041408
      %v1236 = vrot.slane %v1106, 6
      %v1237 = vrot.slane %v390, 6
      %v1238 = vsel %vm1235, %v1236, %v1237
      %v1239 = vrot.slane %v1107, 6
      %v1240 = vrot.slane %v391, 6
      %v1241 = vsel %vm1235, %v1239, %v1240
      %v1242 = vrot.slane %v392, 6
      %v1243 = vsel %vm1235, %v1237, %v1242
      %v1244 = vrot.slane %v393, 6
      %v1245 = vsel %vm1235, %v1240, %v1244
      %v1246 = vrot.slane %v394, 6
      %v1247 = vsel %vm1235, %v1242, %v1246
      %v1248 = vrot.slane %v395, 6
      %v1249 = vsel %vm1235, %v1244, %v1248
      %v1250 = vrot.slane %v396, 6
      %v1251 = vsel %vm1235, %v1246, %v1250
      %v1252 = vrot.slane %v397, 6
      %v1253 = vsel %vm1235, %v1248, %v1252
      %v1254 = vrot.slane %v398, 6
      %v1255 = vsel %vm1235, %v1250, %v1254
      %v1256 = vrot.slane %v399, 6
      %v1257 = vsel %vm1235, %v1252, %v1256
      %v1258 = vrot.slane %v400, 6
      %v1259 = vsel %vm1235, %v1254, %v1258
      %v1260 = vrot.slane %v401, 6
      %v1261 = vsel %vm1235, %v1256, %v1260
      %v1262 = vrot.slane %v402, 6
      %v1263 = vsel %vm1235, %v1258, %v1262
      %v1264 = vrot.slane %v403, 6
      %v1265 = vsel %vm1235, %v1260, %v1264
      %v1266 = vrot.slane %v680, 6
      %v1267 = vsel %vm1235, %v1262, %v1266
      %v1268 = vrot.slane %v681, 6
      %v1269 = vsel %vm1235, %v1264, %v1268
      %v1270 = vrot.slane %v1020, 6
      %v1271 = vsel %vm1235, %v1266, %v1270
      %v1272 = vrot.slane %v1021, 6
      %v1273 = vsel %vm1235, %v1268, %v1272
      %v1274 = vrot.slane %v1231, 6
      %v1275 = vsel %vm1235, %v1270, %v1274
      %v1276 = vrot.slane %v1232, 6
      %v1277 = vsel %vm1235, %v1272, %v1276
      %v1300 = vmax.f32 %v1209, %v1238
      %v1301 = vmax.f32 %v1210, %v1241
      %v1302 = vmax.f32 %v1211, %v1243
      %v1303 = vmax.f32 %v1212, %v1245
      %v1304 = vmax.f32 %v1213, %v1247
      %v1305 = vmax.f32 %v1214, %v1249
      %v1306 = vmax.f32 %v1215, %v1251
      %v1307 = vmax.f32 %v1216, %v1253
      %v1308 = vmax.f32 %v1217, %v1255
      %v1309 = vmax.f32 %v1218, %v1257
      %v1310 = vmax.f32 %v1219, %v1259
      %v1311 = vmax.f32 %v1220, %v1261
      %v1312 = vmax.f32 %v1221, %v1263
      %v1313 = vmax.f32 %v1222, %v1265
      %v1314 = vmax.f32 %v1223, %v1267
      %v1315 = vmax.f32 %v1224, %v1269
      %v1316 = vmax.f32 %v1225, %v1271
      %v1317 = vmax.f32 %v1226, %v1273
      %v1318 = vmax.f32 %v1227, %v1275
      %v1319 = vmax.f32 %v1228, %v1277
      %v1320 = vmax.f32 %v1229, %v1274
      %v1321 = vmax.f32 %v1230, %v1276
      %v1322 = vpack.c.bf16 %v1301, %v1300
      %v1323 = vpack.c.bf16 %v1303, %v1302
      %v1324 = vpack.c.bf16 %v1305, %v1304
      %v1325 = vpack.c.bf16 %v1307, %v1306
      %v1326 = vpack.c.bf16 %v1309, %v1308
      %v1327 = vpack.c.bf16 %v1311, %v1310
      %v1328 = vpack.c.bf16 %v1313, %v1312
      %v1329 = vpack.c.bf16 %v1315, %v1314
      %v1330 = vpack.c.bf16 %v1317, %v1316
      %v1331 = vpack.c.bf16 %v1319, %v1318
      %v1332 = vpack.c.bf16 %v1321, %v1320
      %vm1333 = vsmask.f32 3328
      %vm1334 = vsmask.f32 7440
      %vm1335 = vmor %vm1333, %vm1334
      %v1337 = vshrl.u32 %v1322, 16
      %v1339 = vrot.slane %v1337, 4
      %v1340 = vshll.u32 %v1322, 16
      %v1342 = vrot.slane %v1340, 5
      %v1343 = vor.u32 %v1339, %v1342
      %v1344 = vrot.slane %v1343, 4
      %v1346 = vshll.u32 %v1323, 16
      %v1348 = vrot.slane %v1346, 5
      %v1349 = vsel %vm1335, %v1344, %v1348
      %v1350 = vshrl.u32 %v1323, 16
      %v1352 = vrot.slane %v1350, 4
      %v1353 = vor.u32 %v1352, %v1348
      %v1354 = vrot.slane %v1353, 4
      %v1356 = vshll.u32 %v1324, 16
      %v1358 = vrot.slane %v1356, 5
      %v1359 = vsel %vm1335, %v1354, %v1358
      %v1360 = vshrl.u32 %v1324, 16
      %v1362 = vrot.slane %v1360, 4
      %v1363 = vor.u32 %v1362, %v1358
      %v1364 = vrot.slane %v1363, 4
      %v1366 = vshll.u32 %v1325, 16
      %v1368 = vrot.slane %v1366, 5
      %v1369 = vsel %vm1335, %v1364, %v1368
      %v1370 = vshrl.u32 %v1325, 16
      %v1372 = vrot.slane %v1370, 4
      %v1373 = vor.u32 %v1372, %v1368
      %v1374 = vrot.slane %v1373, 4
      %v1376 = vshll.u32 %v1326, 16
      %v1378 = vrot.slane %v1376, 5
      %v1379 = vsel %vm1335, %v1374, %v1378
      %v1380 = vshrl.u32 %v1326, 16
      %v1382 = vrot.slane %v1380, 4
      %v1383 = vor.u32 %v1382, %v1378
      %v1384 = vrot.slane %v1383, 4
      %v1386 = vshll.u32 %v1327, 16
      %v1388 = vrot.slane %v1386, 5
      %v1389 = vsel %vm1335, %v1384, %v1388
      %v1390 = vshrl.u32 %v1327, 16
      %v1392 = vrot.slane %v1390, 4
      %v1393 = vor.u32 %v1392, %v1388
      %v1394 = vrot.slane %v1393, 4
      %v1396 = vshll.u32 %v1328, 16
      %v1398 = vrot.slane %v1396, 5
      %v1399 = vsel %vm1335, %v1394, %v1398
      %v1400 = vshrl.u32 %v1328, 16
      %v1402 = vrot.slane %v1400, 4
      %v1403 = vor.u32 %v1402, %v1398
      %v1404 = vrot.slane %v1403, 4
      %v1406 = vshll.u32 %v1329, 16
      %v1408 = vrot.slane %v1406, 5
      %v1409 = vsel %vm1335, %v1404, %v1408
      %v1410 = vshrl.u32 %v1329, 16
      %v1412 = vrot.slane %v1410, 4
      %v1413 = vor.u32 %v1412, %v1408
      %v1414 = vrot.slane %v1413, 4
      %v1416 = vshll.u32 %v1330, 16
      %v1418 = vrot.slane %v1416, 5
      %v1419 = vsel %vm1335, %v1414, %v1418
      %v1420 = vshrl.u32 %v1330, 16
      %v1422 = vrot.slane %v1420, 4
      %v1423 = vor.u32 %v1422, %v1418
      %v1424 = vrot.slane %v1423, 4
      %v1426 = vshll.u32 %v1331, 16
      %v1428 = vrot.slane %v1426, 5
      %v1429 = vsel %vm1335, %v1424, %v1428
      %v1430 = vshrl.u32 %v1331, 16
      %v1432 = vrot.slane %v1430, 4
      %v1433 = vor.u32 %v1432, %v1428
      %v1434 = vrot.slane %v1433, 4
      %v1436 = vshll.u32 %v1332, 16
      %v1438 = vrot.slane %v1436, 5
      %v1439 = vsel %vm1335, %v1434, %v1438
      %vm1450 = vcmask 523268
      %vm1451 = vmor %vm1450, %vm895
      %1452 = vst.msk [vmem:[#allocation2] sm:$0xff] %vm1451, %v1349
      %1453 = vst.msk [vmem:[#allocation2 + $0x8] sm:$0xff] %vm1451, %v1359
      %1454 = vst.msk [vmem:[#allocation2 + $0x10] sm:$0xff] %vm1451, %v1369
      %1455 = vst.msk [vmem:[#allocation2 + $0x18] sm:$0xff] %vm1451, %v1379
      %1456 = vst.msk [vmem:[#allocation2 + $0x20] sm:$0xff] %vm1451, %v1389
      %1457 = vst.msk [vmem:[#allocation2 + $0x28] sm:$0xff] %vm1451, %v1399
      %1458 = vst.msk [vmem:[#allocation2 + $0x30] sm:$0xff] %vm1451, %v1409
      %1459 = vst.msk [vmem:[#allocation2 + $0x38] sm:$0xff] %vm1451, %v1419
      %1460 = vst.msk [vmem:[#allocation2 + $0x40] sm:$0xff] %vm1451, %v1429
      %1461 = vst.msk [vmem:[#allocation2 + $0x48] sm:$0xff] %vm1451, %v1439
      %p1462 = scmp.gt.s32.totalorder %s21, 0
      // Predicated region
      $region41: #{mixed_3b_forward.7} parent=39 // pred_check
        %p1463 = pneg %p1462
      $region42: #{mixed_3b_forward.7} parent=39 // pred_check_branch
        %1465 = sbr.rel (%p1463) target = $region44
      $region43: #{mixed_3b_forward.7} parent=39 // pred_region
        %v1466 = vld [vmem:[#allocation2] sm:$0xff]
        %v1467 = vld [vmem:[#allocation2 + $0x8] sm:$0xff]
        %v1468 = vld [vmem:[#allocation2 + $0x10] sm:$0xff]
        %v1469 = vld [vmem:[#allocation2 + $0x18] sm:$0xff]
        %v1470 = vld [vmem:[#allocation2 + $0x20] sm:$0xff]
        %v1471 = vld [vmem:[#allocation2 + $0x28] sm:$0xff]
        %v1472 = vld [vmem:[#allocation2 + $0x30] sm:$0xff]
        %v1473 = vld [vmem:[#allocation2 + $0x38] sm:$0xff]
        %v1474 = vld [vmem:[#allocation2 + $0x40] sm:$0xff]
        %v1475 = vld [vmem:[#allocation2 + $0x48] sm:$0xff]
        %v1476 = vld [vmem:[%s334 + $0x8] sm:$0xff]
        %v1477 = vld [vmem:[%s334 + $0x10] sm:$0xff]
        %v1478 = vld [vmem:[%s334 + $0x18] sm:$0xff]
        %v1479 = vld [vmem:[%s334 + $0x20] sm:$0xff]
        %v1480 = vld [vmem:[%s334 + $0x28] sm:$0xff]
        %v1481 = vld [vmem:[%s334 + $0x30] sm:$0xff]
        %v1482 = vld [vmem:[%s334 + $0x38] sm:$0xff]
        %v1483 = vld [vmem:[%s334 + $0x40] sm:$0xff]
        %v1484 = vld [vmem:[%s334 + $0x48] sm:$0xff]
        %v1485 = vld [vmem:[%s334 + $0x50] sm:$0xff]
        %v1486 = vld [vmem:[%s334 + $0x58] sm:$0x11]
        %v1487 = vld [vmem:[%s334 + $0x8] sm:$0xee]
        %v1488 = vunpack.c.l.bf16 %v1476
        %v1489 = vunpack.c.h.bf16 %v1476
        %v1490 = vunpack.c.l.bf16 %v1477
        %v1491 = vunpack.c.h.bf16 %v1477
        %v1492 = vunpack.c.l.bf16 %v1478
        %v1493 = vunpack.c.h.bf16 %v1478
        %v1494 = vunpack.c.l.bf16 %v1479
        %v1495 = vunpack.c.h.bf16 %v1479
        %v1496 = vunpack.c.l.bf16 %v1480
        %v1497 = vunpack.c.h.bf16 %v1480
        %v1498 = vunpack.c.l.bf16 %v1481
        %v1499 = vunpack.c.h.bf16 %v1481
        %v1500 = vunpack.c.l.bf16 %v1482
        %v1501 = vunpack.c.h.bf16 %v1482
        %v1502 = vunpack.c.l.bf16 %v1483
        %v1503 = vunpack.c.h.bf16 %v1483
        %v1504 = vunpack.c.l.bf16 %v1484
        %v1505 = vunpack.c.h.bf16 %v1484
        %v1506 = vunpack.c.l.bf16 %v1485
        %v1507 = vunpack.c.h.bf16 %v1485
        %v1508 = vunpack.c.l.bf16 %v1486
        %v1509 = vunpack.c.h.bf16 %v1486
        %v1510 = vunpack.c.l.bf16 %v1487
        %v1511 = vunpack.c.h.bf16 %v1487
        %v1534 = vrot.slane %v1510, 1
        %v1535 = vrot.slane %v1490, 1
        %v1536 = vsel %vm430, %v1534, %v1535
        %v1537 = vrot.slane %v1511, 1
        %v1538 = vrot.slane %v1491, 1
        %v1539 = vsel %vm430, %v1537, %v1538
        %v1540 = vrot.slane %v1492, 1
        %v1541 = vsel %vm430, %v1535, %v1540
        %v1542 = vrot.slane %v1493, 1
        %v1543 = vsel %vm430, %v1538, %v1542
        %v1544 = vrot.slane %v1494, 1
        %v1545 = vsel %vm430, %v1540, %v1544
        %v1546 = vrot.slane %v1495, 1
        %v1547 = vsel %vm430, %v1542, %v1546
        %v1548 = vrot.slane %v1496, 1
        %v1549 = vsel %vm430, %v1544, %v1548
        %v1550 = vrot.slane %v1497, 1
        %v1551 = vsel %vm430, %v1546, %v1550
        %v1552 = vrot.slane %v1498, 1
        %v1553 = vsel %vm430, %v1548, %v1552
        %v1554 = vrot.slane %v1499, 1
        %v1555 = vsel %vm430, %v1550, %v1554
        %v1556 = vrot.slane %v1500, 1
        %v1557 = vsel %vm430, %v1552, %v1556
        %v1558 = vrot.slane %v1501, 1
        %v1559 = vsel %vm430, %v1554, %v1558
        %v1560 = vrot.slane %v1502, 1
        %v1561 = vsel %vm430, %v1556, %v1560
        %v1562 = vrot.slane %v1503, 1
        %v1563 = vsel %vm430, %v1558, %v1562
        %v1564 = vrot.slane %v1504, 1
        %v1565 = vsel %vm430, %v1560, %v1564
        %v1566 = vrot.slane %v1505, 1
        %v1567 = vsel %vm430, %v1562, %v1566
        %v1568 = vrot.slane %v1506, 1
        %v1569 = vsel %vm430, %v1564, %v1568
        %v1570 = vrot.slane %v1507, 1
        %v1571 = vsel %vm430, %v1566, %v1570
        %v1572 = vrot.slane %v1508, 1
        %v1573 = vsel %vm430, %v1568, %v1572
        %v1574 = vrot.slane %v1509, 1
        %v1575 = vsel %vm430, %v1570, %v1574
        %v1598 = vmax.f32 %v1488, %v1536
        %v1599 = vmax.f32 %v1489, %v1539
        %v1600 = vmax.f32 %v1490, %v1541
        %v1601 = vmax.f32 %v1491, %v1543
        %v1602 = vmax.f32 %v1492, %v1545
        %v1603 = vmax.f32 %v1493, %v1547
        %v1604 = vmax.f32 %v1494, %v1549
        %v1605 = vmax.f32 %v1495, %v1551
        %v1606 = vmax.f32 %v1496, %v1553
        %v1607 = vmax.f32 %v1497, %v1555
        %v1608 = vmax.f32 %v1498, %v1557
        %v1609 = vmax.f32 %v1499, %v1559
        %v1610 = vmax.f32 %v1500, %v1561
        %v1611 = vmax.f32 %v1501, %v1563
        %v1612 = vmax.f32 %v1502, %v1565
        %v1613 = vmax.f32 %v1503, %v1567
        %v1614 = vmax.f32 %v1504, %v1569
        %v1615 = vmax.f32 %v1505, %v1571
        %v1616 = vmax.f32 %v1506, %v1573
        %v1617 = vmax.f32 %v1507, %v1575
        %v1618 = vmax.f32 %v1508, %v1572
        %v1619 = vmax.f32 %v1509, %v1574
        %v1620 = vpack.c.bf16 %v1599, %v1598
        %v1621 = vpack.c.bf16 %v1601, %v1600
        %v1622 = vpack.c.bf16 %v1603, %v1602
        %v1623 = vpack.c.bf16 %v1605, %v1604
        %v1624 = vpack.c.bf16 %v1607, %v1606
        %v1625 = vpack.c.bf16 %v1609, %v1608
        %v1626 = vpack.c.bf16 %v1611, %v1610
        %v1627 = vpack.c.bf16 %v1613, %v1612
        %v1628 = vpack.c.bf16 %v1615, %v1614
        %v1629 = vpack.c.bf16 %v1617, %v1616
        %v1630 = vpack.c.bf16 %v1619, %v1618
        %v1631 = vld [vmem:[%s334 + $0x58] sm:$0x33]
        %v1632 = vunpack.c.l.bf16 %v1620
        %v1633 = vunpack.c.h.bf16 %v1620
        %v1634 = vunpack.c.l.bf16 %v1621
        %v1635 = vunpack.c.h.bf16 %v1621
        %v1636 = vunpack.c.l.bf16 %v1622
        %v1637 = vunpack.c.h.bf16 %v1622
        %v1638 = vunpack.c.l.bf16 %v1623
        %v1639 = vunpack.c.h.bf16 %v1623
        %v1640 = vunpack.c.l.bf16 %v1624
        %v1641 = vunpack.c.h.bf16 %v1624
        %v1642 = vunpack.c.l.bf16 %v1625
        %v1643 = vunpack.c.h.bf16 %v1625
        %v1644 = vunpack.c.l.bf16 %v1626
        %v1645 = vunpack.c.h.bf16 %v1626
        %v1646 = vunpack.c.l.bf16 %v1627
        %v1647 = vunpack.c.h.bf16 %v1627
        %v1648 = vunpack.c.l.bf16 %v1628
        %v1649 = vunpack.c.h.bf16 %v1628
        %v1650 = vunpack.c.l.bf16 %v1629
        %v1651 = vunpack.c.h.bf16 %v1629
        %v1652 = vunpack.c.l.bf16 %v1630
        %v1653 = vunpack.c.h.bf16 %v1630
        %v1654 = vunpack.c.l.bf16 %v1631
        %v1655 = vunpack.c.h.bf16 %v1631
        %v1658 = vrot.slane %v1510, 2
        %v1659 = vrot.slane %v1490, 2
        %v1660 = vsel %vm555, %v1658, %v1659
        %v1661 = vrot.slane %v1511, 2
        %v1662 = vrot.slane %v1491, 2
        %v1663 = vsel %vm555, %v1661, %v1662
        %v1664 = vrot.slane %v1492, 2
        %v1665 = vsel %vm555, %v1659, %v1664
        %v1666 = vrot.slane %v1493, 2
        %v1667 = vsel %vm555, %v1662, %v1666
        %v1668 = vrot.slane %v1494, 2
        %v1669 = vsel %vm555, %v1664, %v1668
        %v1670 = vrot.slane %v1495, 2
        %v1671 = vsel %vm555, %v1666, %v1670
        %v1672 = vrot.slane %v1496, 2
        %v1673 = vsel %vm555, %v1668, %v1672
        %v1674 = vrot.slane %v1497, 2
        %v1675 = vsel %vm555, %v1670, %v1674
        %v1676 = vrot.slane %v1498, 2
        %v1677 = vsel %vm555, %v1672, %v1676
        %v1678 = vrot.slane %v1499, 2
        %v1679 = vsel %vm555, %v1674, %v1678
        %v1680 = vrot.slane %v1500, 2
        %v1681 = vsel %vm555, %v1676, %v1680
        %v1682 = vrot.slane %v1501, 2
        %v1683 = vsel %vm555, %v1678, %v1682
        %v1684 = vrot.slane %v1502, 2
        %v1685 = vsel %vm555, %v1680, %v1684
        %v1686 = vrot.slane %v1503, 2
        %v1687 = vsel %vm555, %v1682, %v1686
        %v1688 = vrot.slane %v1504, 2
        %v1689 = vsel %vm555, %v1684, %v1688
        %v1690 = vrot.slane %v1505, 2
        %v1691 = vsel %vm555, %v1686, %v1690
        %v1692 = vrot.slane %v1506, 2
        %v1693 = vsel %vm555, %v1688, %v1692
        %v1694 = vrot.slane %v1507, 2
        %v1695 = vsel %vm555, %v1690, %v1694
        %v1696 = vrot.slane %v1654, 2
        %v1697 = vsel %vm555, %v1692, %v1696
        %v1698 = vrot.slane %v1655, 2
        %v1699 = vsel %vm555, %v1694, %v1698
        %v1722 = vmax.f32 %v1632, %v1660
        %v1723 = vmax.f32 %v1633, %v1663
        %v1724 = vmax.f32 %v1634, %v1665
        %v1725 = vmax.f32 %v1635, %v1667
        %v1726 = vmax.f32 %v1636, %v1669
        %v1727 = vmax.f32 %v1637, %v1671
        %v1728 = vmax.f32 %v1638, %v1673
        %v1729 = vmax.f32 %v1639, %v1675
        %v1730 = vmax.f32 %v1640, %v1677
        %v1731 = vmax.f32 %v1641, %v1679
        %v1732 = vmax.f32 %v1642, %v1681
        %v1733 = vmax.f32 %v1643, %v1683
        %v1734 = vmax.f32 %v1644, %v1685
        %v1735 = vmax.f32 %v1645, %v1687
        %v1736 = vmax.f32 %v1646, %v1689
        %v1737 = vmax.f32 %v1647, %v1691
        %v1738 = vmax.f32 %v1648, %v1693
        %v1739 = vmax.f32 %v1649, %v1695
        %v1740 = vmax.f32 %v1650, %v1697
        %v1741 = vmax.f32 %v1651, %v1699
        %v1742 = vmax.f32 %v1652, %v1696
        %v1743 = vmax.f32 %v1653, %v1698
        %v1744 = vpack.c.bf16 %v1723, %v1722
        %v1745 = vpack.c.bf16 %v1725, %v1724
        %v1746 = vpack.c.bf16 %v1727, %v1726
        %v1747 = vpack.c.bf16 %v1729, %v1728
        %v1748 = vpack.c.bf16 %v1731, %v1730
        %v1749 = vpack.c.bf16 %v1733, %v1732
        %v1750 = vpack.c.bf16 %v1735, %v1734
        %v1751 = vpack.c.bf16 %v1737, %v1736
        %v1752 = vpack.c.bf16 %v1739, %v1738
        %v1753 = vpack.c.bf16 %v1741, %v1740
        %v1754 = vpack.c.bf16 %v1743, %v1742
        %v1755 = vld [vmem:[%s334 + $0x10] sm:$0xee]
        %v1756 = vld [vmem:[%s334 + $0x58] sm:$0xff]
        %v1757 = vld [vmem:[%s334 + $0x60] sm:$0x33]
        %v1758 = vunpack.c.l.bf16 %v1744
        %v1759 = vunpack.c.h.bf16 %v1744
        %v1760 = vunpack.c.l.bf16 %v1745
        %v1761 = vunpack.c.h.bf16 %v1745
        %v1762 = vunpack.c.l.bf16 %v1746
        %v1763 = vunpack.c.h.bf16 %v1746
        %v1764 = vunpack.c.l.bf16 %v1747
        %v1765 = vunpack.c.h.bf16 %v1747
        %v1766 = vunpack.c.l.bf16 %v1748
        %v1767 = vunpack.c.h.bf16 %v1748
        %v1768 = vunpack.c.l.bf16 %v1749
        %v1769 = vunpack.c.h.bf16 %v1749
        %v1770 = vunpack.c.l.bf16 %v1750
        %v1771 = vunpack.c.h.bf16 %v1750
        %v1772 = vunpack.c.l.bf16 %v1751
        %v1773 = vunpack.c.h.bf16 %v1751
        %v1774 = vunpack.c.l.bf16 %v1752
        %v1775 = vunpack.c.h.bf16 %v1752
        %v1776 = vunpack.c.l.bf16 %v1753
        %v1777 = vunpack.c.h.bf16 %v1753
        %v1778 = vunpack.c.l.bf16 %v1754
        %v1779 = vunpack.c.h.bf16 %v1754
        %v1780 = vunpack.c.l.bf16 %v1755
        %v1781 = vunpack.c.h.bf16 %v1755
        %v1782 = vunpack.c.l.bf16 %v1756
        %v1783 = vunpack.c.h.bf16 %v1756
        %v1784 = vunpack.c.l.bf16 %v1757
        %v1785 = vunpack.c.h.bf16 %v1757
        %v1792 = vrot.slane %v1780, 2
        %v1793 = vsel %vm555, %v1792, %v1664
        %v1794 = vrot.slane %v1781, 2
        %v1795 = vsel %vm555, %v1794, %v1666
        %v1796 = vrot.slane %v1782, 2
        %v1797 = vsel %vm555, %v1692, %v1796
        %v1798 = vrot.slane %v1783, 2
        %v1799 = vsel %vm555, %v1694, %v1798
        %v1800 = vrot.slane %v1784, 2
        %v1801 = vsel %vm555, %v1796, %v1800
        %v1802 = vrot.slane %v1785, 2
        %v1803 = vsel %vm555, %v1798, %v1802
        %v1812 = vmax.f32 %v1758, %v1793
        %v1813 = vmax.f32 %v1759, %v1795
        %v1814 = vmax.f32 %v1760, %v1669
        %v1815 = vmax.f32 %v1761, %v1671
        %v1816 = vmax.f32 %v1762, %v1673
        %v1817 = vmax.f32 %v1763, %v1675
        %v1818 = vmax.f32 %v1764, %v1677
        %v1819 = vmax.f32 %v1765, %v1679
        %v1820 = vmax.f32 %v1766, %v1681
        %v1821 = vmax.f32 %v1767, %v1683
        %v1822 = vmax.f32 %v1768, %v1685
        %v1823 = vmax.f32 %v1769, %v1687
        %v1824 = vmax.f32 %v1770, %v1689
        %v1825 = vmax.f32 %v1771, %v1691
        %v1826 = vmax.f32 %v1772, %v1693
        %v1827 = vmax.f32 %v1773, %v1695
        %v1828 = vmax.f32 %v1774, %v1797
        %v1829 = vmax.f32 %v1775, %v1799
        %v1830 = vmax.f32 %v1776, %v1801
        %v1831 = vmax.f32 %v1777, %v1803
        %v1832 = vmax.f32 %v1778, %v1800
        %v1833 = vmax.f32 %v1779, %v1802
        %v1834 = vpack.c.bf16 %v1813, %v1812
        %v1835 = vpack.c.bf16 %v1815, %v1814
        %v1836 = vpack.c.bf16 %v1817, %v1816
        %v1837 = vpack.c.bf16 %v1819, %v1818
        %v1838 = vpack.c.bf16 %v1821, %v1820
        %v1839 = vpack.c.bf16 %v1823, %v1822
        %v1840 = vpack.c.bf16 %v1825, %v1824
        %v1841 = vpack.c.bf16 %v1827, %v1826
        %v1842 = vpack.c.bf16 %v1829, %v1828
        %v1843 = vpack.c.bf16 %v1831, %v1830
        %v1844 = vpack.c.bf16 %v1833, %v1832
        %v1845 = vld [vmem:[%s334 + $0x10] sm:$0xcc]
        %v1846 = vunpack.c.l.bf16 %v1834
        %v1847 = vunpack.c.h.bf16 %v1834
        %v1848 = vunpack.c.l.bf16 %v1835
        %v1849 = vunpack.c.h.bf16 %v1835
        %v1850 = vunpack.c.l.bf16 %v1836
        %v1851 = vunpack.c.h.bf16 %v1836
        %v1852 = vunpack.c.l.bf16 %v1837
        %v1853 = vunpack.c.h.bf16 %v1837
        %v1854 = vunpack.c.l.bf16 %v1838
        %v1855 = vunpack.c.h.bf16 %v1838
        %v1856 = vunpack.c.l.bf16 %v1839
        %v1857 = vunpack.c.h.bf16 %v1839
        %v1858 = vunpack.c.l.bf16 %v1840
        %v1859 = vunpack.c.h.bf16 %v1840
        %v1860 = vunpack.c.l.bf16 %v1841
        %v1861 = vunpack.c.h.bf16 %v1841
        %v1862 = vunpack.c.l.bf16 %v1842
        %v1863 = vunpack.c.h.bf16 %v1842
        %v1864 = vunpack.c.l.bf16 %v1843
        %v1865 = vunpack.c.h.bf16 %v1843
        %v1866 = vunpack.c.l.bf16 %v1844
        %v1867 = vunpack.c.h.bf16 %v1844
        %v1868 = vunpack.c.l.bf16 %v1845
        %v1869 = vunpack.c.h.bf16 %v1845
        %v1872 = vrot.slane %v1868, 3
        %v1873 = vrot.slane %v1492, 3
        %v1874 = vsel %vm770, %v1872, %v1873
        %v1875 = vrot.slane %v1869, 3
        %v1876 = vrot.slane %v1493, 3
        %v1877 = vsel %vm770, %v1875, %v1876
        %v1878 = vrot.slane %v1494, 3
        %v1879 = vsel %vm770, %v1873, %v1878
        %v1880 = vrot.slane %v1495, 3
        %v1881 = vsel %vm770, %v1876, %v1880
        %v1882 = vrot.slane %v1496, 3
        %v1883 = vsel %vm770, %v1878, %v1882
        %v1884 = vrot.slane %v1497, 3
        %v1885 = vsel %vm770, %v1880, %v1884
        %v1886 = vrot.slane %v1498, 3
        %v1887 = vsel %vm770, %v1882, %v1886
        %v1888 = vrot.slane %v1499, 3
        %v1889 = vsel %vm770, %v1884, %v1888
        %v1890 = vrot.slane %v1500, 3
        %v1891 = vsel %vm770, %v1886, %v1890
        %v1892 = vrot.slane %v1501, 3
        %v1893 = vsel %vm770, %v1888, %v1892
        %v1894 = vrot.slane %v1502, 3
        %v1895 = vsel %vm770, %v1890, %v1894
        %v1896 = vrot.slane %v1503, 3
        %v1897 = vsel %vm770, %v1892, %v1896
        %v1898 = vrot.slane %v1504, 3
        %v1899 = vsel %vm770, %v1894, %v1898
        %v1900 = vrot.slane %v1505, 3
        %v1901 = vsel %vm770, %v1896, %v1900
        %v1902 = vrot.slane %v1506, 3
        %v1903 = vsel %vm770, %v1898, %v1902
        %v1904 = vrot.slane %v1507, 3
        %v1905 = vsel %vm770, %v1900, %v1904
        %v1906 = vrot.slane %v1782, 3
        %v1907 = vsel %vm770, %v1902, %v1906
        %v1908 = vrot.slane %v1783, 3
        %v1909 = vsel %vm770, %v1904, %v1908
        %v1910 = vrot.slane %v1784, 3
        %v1911 = vsel %vm770, %v1906, %v1910
        %v1912 = vrot.slane %v1785, 3
        %v1913 = vsel %vm770, %v1908, %v1912
        %v1936 = vmax.f32 %v1846, %v1874
        %v1937 = vmax.f32 %v1847, %v1877
        %v1938 = vmax.f32 %v1848, %v1879
        %v1939 = vmax.f32 %v1849, %v1881
        %v1940 = vmax.f32 %v1850, %v1883
        %v1941 = vmax.f32 %v1851, %v1885
        %v1942 = vmax.f32 %v1852, %v1887
        %v1943 = vmax.f32 %v1853, %v1889
        %v1944 = vmax.f32 %v1854, %v1891
        %v1945 = vmax.f32 %v1855, %v1893
        %v1946 = vmax.f32 %v1856, %v1895
        %v1947 = vmax.f32 %v1857, %v1897
        %v1948 = vmax.f32 %v1858, %v1899
        %v1949 = vmax.f32 %v1859, %v1901
        %v1950 = vmax.f32 %v1860, %v1903
        %v1951 = vmax.f32 %v1861, %v1905
        %v1952 = vmax.f32 %v1862, %v1907
        %v1953 = vmax.f32 %v1863, %v1909
        %v1954 = vmax.f32 %v1864, %v1911
        %v1955 = vmax.f32 %v1865, %v1913
        %v1956 = vmax.f32 %v1866, %v1910
        %v1957 = vmax.f32 %v1867, %v1912
        %v1958 = vpack.c.bf16 %v1937, %v1936
        %v1959 = vpack.c.bf16 %v1939, %v1938
        %v1960 = vpack.c.bf16 %v1941, %v1940
        %v1961 = vpack.c.bf16 %v1943, %v1942
        %v1962 = vpack.c.bf16 %v1945, %v1944
        %v1963 = vpack.c.bf16 %v1947, %v1946
        %v1964 = vpack.c.bf16 %v1949, %v1948
        %v1965 = vpack.c.bf16 %v1951, %v1950
        %v1966 = vpack.c.bf16 %v1953, %v1952
        %v1967 = vpack.c.bf16 %v1955, %v1954
        %v1968 = vpack.c.bf16 %v1957, %v1956
        %v1969 = vld [vmem:[%s334 + $0x60] sm:$0x77]
        %v1970 = vunpack.c.l.bf16 %v1958
        %v1971 = vunpack.c.h.bf16 %v1958
        %v1972 = vunpack.c.l.bf16 %v1959
        %v1973 = vunpack.c.h.bf16 %v1959
        %v1974 = vunpack.c.l.bf16 %v1960
        %v1975 = vunpack.c.h.bf16 %v1960
        %v1976 = vunpack.c.l.bf16 %v1961
        %v1977 = vunpack.c.h.bf16 %v1961
        %v1978 = vunpack.c.l.bf16 %v1962
        %v1979 = vunpack.c.h.bf16 %v1962
        %v1980 = vunpack.c.l.bf16 %v1963
        %v1981 = vunpack.c.h.bf16 %v1963
        %v1982 = vunpack.c.l.bf16 %v1964
        %v1983 = vunpack.c.h.bf16 %v1964
        %v1984 = vunpack.c.l.bf16 %v1965
        %v1985 = vunpack.c.h.bf16 %v1965
        %v1986 = vunpack.c.l.bf16 %v1966
        %v1987 = vunpack.c.h.bf16 %v1966
        %v1988 = vunpack.c.l.bf16 %v1967
        %v1989 = vunpack.c.h.bf16 %v1967
        %v1990 = vunpack.c.l.bf16 %v1968
        %v1991 = vunpack.c.h.bf16 %v1968
        %v1992 = vunpack.c.l.bf16 %v1969
        %v1993 = vunpack.c.h.bf16 %v1969
        %v1996 = vrot.slane %v1868, 4
        %v1997 = vrot.slane %v1492, 4
        %v1998 = vsel %vm895, %v1996, %v1997
        %v1999 = vrot.slane %v1869, 4
        %v2000 = vrot.slane %v1493, 4
        %v2001 = vsel %vm895, %v1999, %v2000
        %v2002 = vrot.slane %v1494, 4
        %v2003 = vsel %vm895, %v1997, %v2002
        %v2004 = vrot.slane %v1495, 4
        %v2005 = vsel %vm895, %v2000, %v2004
        %v2006 = vrot.slane %v1496, 4
        %v2007 = vsel %vm895, %v2002, %v2006
        %v2008 = vrot.slane %v1497, 4
        %v2009 = vsel %vm895, %v2004, %v2008
        %v2010 = vrot.slane %v1498, 4
        %v2011 = vsel %vm895, %v2006, %v2010
        %v2012 = vrot.slane %v1499, 4
        %v2013 = vsel %vm895, %v2008, %v2012
        %v2014 = vrot.slane %v1500, 4
        %v2015 = vsel %vm895, %v2010, %v2014
        %v2016 = vrot.slane %v1501, 4
        %v2017 = vsel %vm895, %v2012, %v2016
        %v2018 = vrot.slane %v1502, 4
        %v2019 = vsel %vm895, %v2014, %v2018
        %v2020 = vrot.slane %v1503, 4
        %v2021 = vsel %vm895, %v2016, %v2020
        %v2022 = vrot.slane %v1504, 4
        %v2023 = vsel %vm895, %v2018, %v2022
        %v2024 = vrot.slane %v1505, 4
        %v2025 = vsel %vm895, %v2020, %v2024
        %v2026 = vrot.slane %v1506, 4
        %v2027 = vsel %vm895, %v2022, %v2026
        %v2028 = vrot.slane %v1507, 4
        %v2029 = vsel %vm895, %v2024, %v2028
        %v2030 = vrot.slane %v1782, 4
        %v2031 = vsel %vm895, %v2026, %v2030
        %v2032 = vrot.slane %v1783, 4
        %v2033 = vsel %vm895, %v2028, %v2032
        %v2034 = vrot.slane %v1992, 4
        %v2035 = vsel %vm895, %v2030, %v2034
        %v2036 = vrot.slane %v1993, 4
        %v2037 = vsel %vm895, %v2032, %v2036
        %v2060 = vmax.f32 %v1970, %v1998
        %v2061 = vmax.f32 %v1971, %v2001
        %v2062 = vmax.f32 %v1972, %v2003
        %v2063 = vmax.f32 %v1973, %v2005
        %v2064 = vmax.f32 %v1974, %v2007
        %v2065 = vmax.f32 %v1975, %v2009
        %v2066 = vmax.f32 %v1976, %v2011
        %v2067 = vmax.f32 %v1977, %v2013
        %v2068 = vmax.f32 %v1978, %v2015
        %v2069 = vmax.f32 %v1979, %v2017
        %v2070 = vmax.f32 %v1980, %v2019
        %v2071 = vmax.f32 %v1981, %v2021
        %v2072 = vmax.f32 %v1982, %v2023
        %v2073 = vmax.f32 %v1983, %v2025
        %v2074 = vmax.f32 %v1984, %v2027
        %v2075 = vmax.f32 %v1985, %v2029
        %v2076 = vmax.f32 %v1986, %v2031
        %v2077 = vmax.f32 %v1987, %v2033
        %v2078 = vmax.f32 %v1988, %v2035
        %v2079 = vmax.f32 %v1989, %v2037
        %v2080 = vmax.f32 %v1990, %v2034
        %v2081 = vmax.f32 %v1991, %v2036
        %v2082 = vpack.c.bf16 %v2061, %v2060
        %v2083 = vpack.c.bf16 %v2063, %v2062
        %v2084 = vpack.c.bf16 %v2065, %v2064
        %v2085 = vpack.c.bf16 %v2067, %v2066
        %v2086 = vpack.c.bf16 %v2069, %v2068
        %v2087 = vpack.c.bf16 %v2071, %v2070
        %v2088 = vpack.c.bf16 %v2073, %v2072
        %v2089 = vpack.c.bf16 %v2075, %v2074
        %v2090 = vpack.c.bf16 %v2077, %v2076
        %v2091 = vpack.c.bf16 %v2079, %v2078
        %v2092 = vpack.c.bf16 %v2081, %v2080
        %v2093 = vld [vmem:[%s334 + $0x18] sm:$0xcc]
        %v2094 = vld [vmem:[%s334 + $0x60] sm:$0xff]
        %v2095 = vld [vmem:[%s334 + $0x68] sm:$0x77]
        %v2096 = vunpack.c.l.bf16 %v2082
        %v2097 = vunpack.c.h.bf16 %v2082
        %v2098 = vunpack.c.l.bf16 %v2083
        %v2099 = vunpack.c.h.bf16 %v2083
        %v2100 = vunpack.c.l.bf16 %v2084
        %v2101 = vunpack.c.h.bf16 %v2084
        %v2102 = vunpack.c.l.bf16 %v2085
        %v2103 = vunpack.c.h.bf16 %v2085
        %v2104 = vunpack.c.l.bf16 %v2086
        %v2105 = vunpack.c.h.bf16 %v2086
        %v2106 = vunpack.c.l.bf16 %v2087
        %v2107 = vunpack.c.h.bf16 %v2087
        %v2108 = vunpack.c.l.bf16 %v2088
        %v2109 = vunpack.c.h.bf16 %v2088
        %v2110 = vunpack.c.l.bf16 %v2089
        %v2111 = vunpack.c.h.bf16 %v2089
        %v2112 = vunpack.c.l.bf16 %v2090
        %v2113 = vunpack.c.h.bf16 %v2090
        %v2114 = vunpack.c.l.bf16 %v2091
        %v2115 = vunpack.c.h.bf16 %v2091
        %v2116 = vunpack.c.l.bf16 %v2092
        %v2117 = vunpack.c.h.bf16 %v2092
        %v2118 = vunpack.c.l.bf16 %v2093
        %v2119 = vunpack.c.h.bf16 %v2093
        %v2120 = vunpack.c.l.bf16 %v2094
        %v2121 = vunpack.c.h.bf16 %v2094
        %v2122 = vunpack.c.l.bf16 %v2095
        %v2123 = vunpack.c.h.bf16 %v2095
        %v2130 = vrot.slane %v2118, 4
        %v2131 = vsel %vm895, %v2130, %v2002
        %v2132 = vrot.slane %v2119, 4
        %v2133 = vsel %vm895, %v2132, %v2004
        %v2134 = vrot.slane %v2120, 4
        %v2135 = vsel %vm895, %v2030, %v2134
        %v2136 = vrot.slane %v2121, 4
        %v2137 = vsel %vm895, %v2032, %v2136
        %v2138 = vrot.slane %v2122, 4
        %v2139 = vsel %vm895, %v2134, %v2138
        %v2140 = vrot.slane %v2123, 4
        %v2141 = vsel %vm895, %v2136, %v2140
        %v2150 = vmax.f32 %v2096, %v2131
        %v2151 = vmax.f32 %v2097, %v2133
        %v2152 = vmax.f32 %v2098, %v2007
        %v2153 = vmax.f32 %v2099, %v2009
        %v2154 = vmax.f32 %v2100, %v2011
        %v2155 = vmax.f32 %v2101, %v2013
        %v2156 = vmax.f32 %v2102, %v2015
        %v2157 = vmax.f32 %v2103, %v2017
        %v2158 = vmax.f32 %v2104, %v2019
        %v2159 = vmax.f32 %v2105, %v2021
        %v2160 = vmax.f32 %v2106, %v2023
        %v2161 = vmax.f32 %v2107, %v2025
        %v2162 = vmax.f32 %v2108, %v2027
        %v2163 = vmax.f32 %v2109, %v2029
        %v2164 = vmax.f32 %v2110, %v2031
        %v2165 = vmax.f32 %v2111, %v2033
        %v2166 = vmax.f32 %v2112, %v2135
        %v2167 = vmax.f32 %v2113, %v2137
        %v2168 = vmax.f32 %v2114, %v2139
        %v2169 = vmax.f32 %v2115, %v2141
        %v2170 = vmax.f32 %v2116, %v2138
        %v2171 = vmax.f32 %v2117, %v2140
        %v2172 = vpack.c.bf16 %v2151, %v2150
        %v2173 = vpack.c.bf16 %v2153, %v2152
        %v2174 = vpack.c.bf16 %v2155, %v2154
        %v2175 = vpack.c.bf16 %v2157, %v2156
        %v2176 = vpack.c.bf16 %v2159, %v2158
        %v2177 = vpack.c.bf16 %v2161, %v2160
        %v2178 = vpack.c.bf16 %v2163, %v2162
        %v2179 = vpack.c.bf16 %v2165, %v2164
        %v2180 = vpack.c.bf16 %v2167, %v2166
        %v2181 = vpack.c.bf16 %v2169, %v2168
        %v2182 = vpack.c.bf16 %v2171, %v2170
        %v2183 = vld [vmem:[%s334 + $0x18] sm:$0x88]
        %v2184 = vunpack.c.l.bf16 %v2172
        %v2185 = vunpack.c.h.bf16 %v2172
        %v2186 = vunpack.c.l.bf16 %v2173
        %v2187 = vunpack.c.h.bf16 %v2173
        %v2188 = vunpack.c.l.bf16 %v2174
        %v2189 = vunpack.c.h.bf16 %v2174
        %v2190 = vunpack.c.l.bf16 %v2175
        %v2191 = vunpack.c.h.bf16 %v2175
        %v2192 = vunpack.c.l.bf16 %v2176
        %v2193 = vunpack.c.h.bf16 %v2176
        %v2194 = vunpack.c.l.bf16 %v2177
        %v2195 = vunpack.c.h.bf16 %v2177
        %v2196 = vunpack.c.l.bf16 %v2178
        %v2197 = vunpack.c.h.bf16 %v2178
        %v2198 = vunpack.c.l.bf16 %v2179
        %v2199 = vunpack.c.h.bf16 %v2179
        %v2200 = vunpack.c.l.bf16 %v2180
        %v2201 = vunpack.c.h.bf16 %v2180
        %v2202 = vunpack.c.l.bf16 %v2181
        %v2203 = vunpack.c.h.bf16 %v2181
        %v2204 = vunpack.c.l.bf16 %v2182
        %v2205 = vunpack.c.h.bf16 %v2182
        %v2206 = vunpack.c.l.bf16 %v2183
        %v2207 = vunpack.c.h.bf16 %v2183
        %v2210 = vrot.slane %v2206, 5
        %v2211 = vrot.slane %v1494, 5
        %v2212 = vsel %vm1110, %v2210, %v2211
        %v2213 = vrot.slane %v2207, 5
        %v2214 = vrot.slane %v1495, 5
        %v2215 = vsel %vm1110, %v2213, %v2214
        %v2216 = vrot.slane %v1496, 5
        %v2217 = vsel %vm1110, %v2211, %v2216
        %v2218 = vrot.slane %v1497, 5
        %v2219 = vsel %vm1110, %v2214, %v2218
        %v2220 = vrot.slane %v1498, 5
        %v2221 = vsel %vm1110, %v2216, %v2220
        %v2222 = vrot.slane %v1499, 5
        %v2223 = vsel %vm1110, %v2218, %v2222
        %v2224 = vrot.slane %v1500, 5
        %v2225 = vsel %vm1110, %v2220, %v2224
        %v2226 = vrot.slane %v1501, 5
        %v2227 = vsel %vm1110, %v2222, %v2226
        %v2228 = vrot.slane %v1502, 5
        %v2229 = vsel %vm1110, %v2224, %v2228
        %v2230 = vrot.slane %v1503, 5
        %v2231 = vsel %vm1110, %v2226, %v2230
        %v2232 = vrot.slane %v1504, 5
        %v2233 = vsel %vm1110, %v2228, %v2232
        %v2234 = vrot.slane %v1505, 5
        %v2235 = vsel %vm1110, %v2230, %v2234
        %v2236 = vrot.slane %v1506, 5
        %v2237 = vsel %vm1110, %v2232, %v2236
        %v2238 = vrot.slane %v1507, 5
        %v2239 = vsel %vm1110, %v2234, %v2238
        %v2240 = vrot.slane %v1782, 5
        %v2241 = vsel %vm1110, %v2236, %v2240
        %v2242 = vrot.slane %v1783, 5
        %v2243 = vsel %vm1110, %v2238, %v2242
        %v2244 = vrot.slane %v2120, 5
        %v2245 = vsel %vm1110, %v2240, %v2244
        %v2246 = vrot.slane %v2121, 5
        %v2247 = vsel %vm1110, %v2242, %v2246
        %v2248 = vrot.slane %v2122, 5
        %v2249 = vsel %vm1110, %v2244, %v2248
        %v2250 = vrot.slane %v2123, 5
        %v2251 = vsel %vm1110, %v2246, %v2250
        %v2274 = vmax.f32 %v2184, %v2212
        %v2275 = vmax.f32 %v2185, %v2215
        %v2276 = vmax.f32 %v2186, %v2217
        %v2277 = vmax.f32 %v2187, %v2219
        %v2278 = vmax.f32 %v2188, %v2221
        %v2279 = vmax.f32 %v2189, %v2223
        %v2280 = vmax.f32 %v2190, %v2225
        %v2281 = vmax.f32 %v2191, %v2227
        %v2282 = vmax.f32 %v2192, %v2229
        %v2283 = vmax.f32 %v2193, %v2231
        %v2284 = vmax.f32 %v2194, %v2233
        %v2285 = vmax.f32 %v2195, %v2235
        %v2286 = vmax.f32 %v2196, %v2237
        %v2287 = vmax.f32 %v2197, %v2239
        %v2288 = vmax.f32 %v2198, %v2241
        %v2289 = vmax.f32 %v2199, %v2243
        %v2290 = vmax.f32 %v2200, %v2245
        %v2291 = vmax.f32 %v2201, %v2247
        %v2292 = vmax.f32 %v2202, %v2249
        %v2293 = vmax.f32 %v2203, %v2251
        %v2294 = vmax.f32 %v2204, %v2248
        %v2295 = vmax.f32 %v2205, %v2250
        %v2296 = vpack.c.bf16 %v2275, %v2274
        %v2297 = vpack.c.bf16 %v2277, %v2276
        %v2298 = vpack.c.bf16 %v2279, %v2278
        %v2299 = vpack.c.bf16 %v2281, %v2280
        %v2300 = vpack.c.bf16 %v2283, %v2282
        %v2301 = vpack.c.bf16 %v2285, %v2284
        %v2302 = vpack.c.bf16 %v2287, %v2286
        %v2303 = vpack.c.bf16 %v2289, %v2288
        %v2304 = vpack.c.bf16 %v2291, %v2290
        %v2305 = vpack.c.bf16 %v2293, %v2292
        %v2306 = vpack.c.bf16 %v2295, %v2294
        %v2307 = vld [vmem:[%s334 + $0x68] sm:$0xff]
        %v2308 = vunpack.c.l.bf16 %v2296
        %v2309 = vunpack.c.h.bf16 %v2296
        %v2310 = vunpack.c.l.bf16 %v2297
        %v2311 = vunpack.c.h.bf16 %v2297
        %v2312 = vunpack.c.l.bf16 %v2298
        %v2313 = vunpack.c.h.bf16 %v2298
        %v2314 = vunpack.c.l.bf16 %v2299
        %v2315 = vunpack.c.h.bf16 %v2299
        %v2316 = vunpack.c.l.bf16 %v2300
        %v2317 = vunpack.c.h.bf16 %v2300
        %v2318 = vunpack.c.l.bf16 %v2301
        %v2319 = vunpack.c.h.bf16 %v2301
        %v2320 = vunpack.c.l.bf16 %v2302
        %v2321 = vunpack.c.h.bf16 %v2302
        %v2322 = vunpack.c.l.bf16 %v2303
        %v2323 = vunpack.c.h.bf16 %v2303
        %v2324 = vunpack.c.l.bf16 %v2304
        %v2325 = vunpack.c.h.bf16 %v2304
        %v2326 = vunpack.c.l.bf16 %v2305
        %v2327 = vunpack.c.h.bf16 %v2305
        %v2328 = vunpack.c.l.bf16 %v2306
        %v2329 = vunpack.c.h.bf16 %v2306
        %v2330 = vunpack.c.l.bf16 %v2307
        %v2331 = vunpack.c.h.bf16 %v2307
        %v2334 = vrot.slane %v2206, 6
        %v2335 = vrot.slane %v1494, 6
        %v2336 = vsel %vm1235, %v2334, %v2335
        %v2337 = vrot.slane %v2207, 6
        %v2338 = vrot.slane %v1495, 6
        %v2339 = vsel %vm1235, %v2337, %v2338
        %v2340 = vrot.slane %v1496, 6
        %v2341 = vsel %vm1235, %v2335, %v2340
        %v2342 = vrot.slane %v1497, 6
        %v2343 = vsel %vm1235, %v2338, %v2342
        %v2344 = vrot.slane %v1498, 6
        %v2345 = vsel %vm1235, %v2340, %v2344
        %v2346 = vrot.slane %v1499, 6
        %v2347 = vsel %vm1235, %v2342, %v2346
        %v2348 = vrot.slane %v1500, 6
        %v2349 = vsel %vm1235, %v2344, %v2348
        %v2350 = vrot.slane %v1501, 6
        %v2351 = vsel %vm1235, %v2346, %v2350
        %v2352 = vrot.slane %v1502, 6
        %v2353 = vsel %vm1235, %v2348, %v2352
        %v2354 = vrot.slane %v1503, 6
        %v2355 = vsel %vm1235, %v2350, %v2354
        %v2356 = vrot.slane %v1504, 6
        %v2357 = vsel %vm1235, %v2352, %v2356
        %v2358 = vrot.slane %v1505, 6
        %v2359 = vsel %vm1235, %v2354, %v2358
        %v2360 = vrot.slane %v1506, 6
        %v2361 = vsel %vm1235, %v2356, %v2360
        %v2362 = vrot.slane %v1507, 6
        %v2363 = vsel %vm1235, %v2358, %v2362
        %v2364 = vrot.slane %v1782, 6
        %v2365 = vsel %vm1235, %v2360, %v2364
        %v2366 = vrot.slane %v1783, 6
        %v2367 = vsel %vm1235, %v2362, %v2366
        %v2368 = vrot.slane %v2120, 6
        %v2369 = vsel %vm1235, %v2364, %v2368
        %v2370 = vrot.slane %v2121, 6
        %v2371 = vsel %vm1235, %v2366, %v2370
        %v2372 = vrot.slane %v2330, 6
        %v2373 = vsel %vm1235, %v2368, %v2372
        %v2374 = vrot.slane %v2331, 6
        %v2375 = vsel %vm1235, %v2370, %v2374
        %v2398 = vmax.f32 %v2308, %v2336
        %v2399 = vmax.f32 %v2309, %v2339
        %v2400 = vmax.f32 %v2310, %v2341
        %v2401 = vmax.f32 %v2311, %v2343
        %v2402 = vmax.f32 %v2312, %v2345
        %v2403 = vmax.f32 %v2313, %v2347
        %v2404 = vmax.f32 %v2314, %v2349
        %v2405 = vmax.f32 %v2315, %v2351
        %v2406 = vmax.f32 %v2316, %v2353
        %v2407 = vmax.f32 %v2317, %v2355
        %v2408 = vmax.f32 %v2318, %v2357
        %v2409 = vmax.f32 %v2319, %v2359
        %v2410 = vmax.f32 %v2320, %v2361
        %v2411 = vmax.f32 %v2321, %v2363
        %v2412 = vmax.f32 %v2322, %v2365
        %v2413 = vmax.f32 %v2323, %v2367
        %v2414 = vmax.f32 %v2324, %v2369
        %v2415 = vmax.f32 %v2325, %v2371
        %v2416 = vmax.f32 %v2326, %v2373
        %v2417 = vmax.f32 %v2327, %v2375
        %v2418 = vmax.f32 %v2328, %v2372
        %v2419 = vmax.f32 %v2329, %v2374
        %v2420 = vpack.c.bf16 %v2399, %v2398
        %v2421 = vpack.c.bf16 %v2401, %v2400
        %v2422 = vpack.c.bf16 %v2403, %v2402
        %v2423 = vpack.c.bf16 %v2405, %v2404
        %v2424 = vpack.c.bf16 %v2407, %v2406
        %v2425 = vpack.c.bf16 %v2409, %v2408
        %v2426 = vpack.c.bf16 %v2411, %v2410
        %v2427 = vpack.c.bf16 %v2413, %v2412
        %v2428 = vpack.c.bf16 %v2415, %v2414
        %v2429 = vpack.c.bf16 %v2417, %v2416
        %v2430 = vpack.c.bf16 %v2419, %v2418
        %v2431 = vunpack.c.l.bf16 %v1466
        %v2432 = vunpack.c.h.bf16 %v1466
        %v2433 = vunpack.c.l.bf16 %v1467
        %v2434 = vunpack.c.h.bf16 %v1467
        %v2435 = vunpack.c.l.bf16 %v1468
        %v2436 = vunpack.c.h.bf16 %v1468
        %v2437 = vunpack.c.l.bf16 %v1469
        %v2438 = vunpack.c.h.bf16 %v1469
        %v2439 = vunpack.c.l.bf16 %v1470
        %v2440 = vunpack.c.h.bf16 %v1470
        %v2441 = vunpack.c.l.bf16 %v1471
        %v2442 = vunpack.c.h.bf16 %v1471
        %v2443 = vunpack.c.l.bf16 %v1472
        %v2444 = vunpack.c.h.bf16 %v1472
        %v2445 = vunpack.c.l.bf16 %v1473
        %v2446 = vunpack.c.h.bf16 %v1473
        %v2447 = vunpack.c.l.bf16 %v1474
        %v2448 = vunpack.c.h.bf16 %v1474
        %v2449 = vunpack.c.l.bf16 %v1475
        %v2450 = vunpack.c.h.bf16 %v1475
        %v2451 = vunpack.c.l.bf16 %v2420
        %v2452 = vunpack.c.h.bf16 %v2420
        %v2453 = vunpack.c.l.bf16 %v2421
        %v2454 = vunpack.c.h.bf16 %v2421
        %v2455 = vunpack.c.l.bf16 %v2422
        %v2456 = vunpack.c.h.bf16 %v2422
        %v2457 = vunpack.c.l.bf16 %v2423
        %v2458 = vunpack.c.h.bf16 %v2423
        %v2459 = vunpack.c.l.bf16 %v2424
        %v2460 = vunpack.c.h.bf16 %v2424
        %v2461 = vunpack.c.l.bf16 %v2425
        %v2462 = vunpack.c.h.bf16 %v2425
        %v2463 = vunpack.c.l.bf16 %v2426
        %v2464 = vunpack.c.h.bf16 %v2426
        %v2465 = vunpack.c.l.bf16 %v2427
        %v2466 = vunpack.c.h.bf16 %v2427
        %v2467 = vunpack.c.l.bf16 %v2428
        %v2468 = vunpack.c.h.bf16 %v2428
        %v2469 = vunpack.c.l.bf16 %v2429
        %v2470 = vunpack.c.h.bf16 %v2429
        %v2471 = vunpack.c.l.bf16 %v2430
        %v2472 = vunpack.c.h.bf16 %v2430
        %v2495 = vrot.slane %v2451, 1
        %v2496 = vrot.slane %v2453, 1
        %v2497 = vsel %vm430, %v2495, %v2496
        %v2498 = vrot.slane %v2452, 1
        %v2499 = vrot.slane %v2454, 1
        %v2500 = vsel %vm430, %v2498, %v2499
        %v2501 = vrot.slane %v2455, 1
        %v2502 = vsel %vm430, %v2496, %v2501
        %v2503 = vrot.slane %v2456, 1
        %v2504 = vsel %vm430, %v2499, %v2503
        %v2505 = vrot.slane %v2457, 1
        %v2506 = vsel %vm430, %v2501, %v2505
        %v2507 = vrot.slane %v2458, 1
        %v2508 = vsel %vm430, %v2503, %v2507
        %v2509 = vrot.slane %v2459, 1
        %v2510 = vsel %vm430, %v2505, %v2509
        %v2511 = vrot.slane %v2460, 1
        %v2512 = vsel %vm430, %v2507, %v2511
        %v2513 = vrot.slane %v2461, 1
        %v2514 = vsel %vm430, %v2509, %v2513
        %v2515 = vrot.slane %v2462, 1
        %v2516 = vsel %vm430, %v2511, %v2515
        %v2517 = vrot.slane %v2463, 1
        %v2518 = vsel %vm430, %v2513, %v2517
        %v2519 = vrot.slane %v2464, 1
        %v2520 = vsel %vm430, %v2515, %v2519
        %v2521 = vrot.slane %v2465, 1
        %v2522 = vsel %vm430, %v2517, %v2521
        %v2523 = vrot.slane %v2466, 1
        %v2524 = vsel %vm430, %v2519, %v2523
        %v2525 = vrot.slane %v2467, 1
        %v2526 = vsel %vm430, %v2521, %v2525
        %v2527 = vrot.slane %v2468, 1
        %v2528 = vsel %vm430, %v2523, %v2527
        %v2529 = vrot.slane %v2469, 1
        %v2530 = vsel %vm430, %v2525, %v2529
        %v2531 = vrot.slane %v2470, 1
        %v2532 = vsel %vm430, %v2527, %v2531
        %v2533 = vrot.slane %v2471, 1
        %v2534 = vsel %vm430, %v2529, %v2533
        %v2535 = vrot.slane %v2472, 1
        %v2536 = vsel %vm430, %v2531, %v2535
        %v2557 = vmax.f32 %v2431, %v2497
        %v2558 = vmax.f32 %v2432, %v2500
        %v2559 = vmax.f32 %v2433, %v2502
        %v2560 = vmax.f32 %v2434, %v2504
        %v2561 = vmax.f32 %v2435, %v2506
        %v2562 = vmax.f32 %v2436, %v2508
        %v2563 = vmax.f32 %v2437, %v2510
        %v2564 = vmax.f32 %v2438, %v2512
        %v2565 = vmax.f32 %v2439, %v2514
        %v2566 = vmax.f32 %v2440, %v2516
        %v2567 = vmax.f32 %v2441, %v2518
        %v2568 = vmax.f32 %v2442, %v2520
        %v2569 = vmax.f32 %v2443, %v2522
        %v2570 = vmax.f32 %v2444, %v2524
        %v2571 = vmax.f32 %v2445, %v2526
        %v2572 = vmax.f32 %v2446, %v2528
        %v2573 = vmax.f32 %v2447, %v2530
        %v2574 = vmax.f32 %v2448, %v2532
        %v2575 = vmax.f32 %v2449, %v2534
        %v2576 = vmax.f32 %v2450, %v2536
        %v2577 = vpack.c.bf16 %v2558, %v2557
        %v2578 = vpack.c.bf16 %v2560, %v2559
        %v2579 = vpack.c.bf16 %v2562, %v2561
        %v2580 = vpack.c.bf16 %v2564, %v2563
        %v2581 = vpack.c.bf16 %v2566, %v2565
        %v2582 = vpack.c.bf16 %v2568, %v2567
        %v2583 = vpack.c.bf16 %v2570, %v2569
        %v2584 = vpack.c.bf16 %v2572, %v2571
        %v2585 = vpack.c.bf16 %v2574, %v2573
        %v2586 = vpack.c.bf16 %v2576, %v2575
        %2587 = vst.msk [vmem:[#allocation2] sm:$0xff] %vm1451, %v2577
        %2588 = vst.msk [vmem:[#allocation2 + $0x8] sm:$0xff] %vm1451, %v2578
        %2589 = vst.msk [vmem:[#allocation2 + $0x10] sm:$0xff] %vm1451, %v2579
        %2590 = vst.msk [vmem:[#allocation2 + $0x18] sm:$0xff] %vm1451, %v2580
        %2591 = vst.msk [vmem:[#allocation2 + $0x20] sm:$0xff] %vm1451, %v2581
        %2592 = vst.msk [vmem:[#allocation2 + $0x28] sm:$0xff] %vm1451, %v2582
        %2593 = vst.msk [vmem:[#allocation2 + $0x30] sm:$0xff] %vm1451, %v2583
        %2594 = vst.msk [vmem:[#allocation2 + $0x38] sm:$0xff] %vm1451, %v2584
        %2595 = vst.msk [vmem:[#allocation2 + $0x40] sm:$0xff] %vm1451, %v2585
        %2596 = vst.msk [vmem:[#allocation2 + $0x48] sm:$0xff] %vm1451, %v2586
      $region44: #{mixed_3b_forward.7} parent=39 // pred_fallthru
        _
      %p2597 = scmp.lt.s32.totalorder %s21, 3
      // Predicated region
      $region45: #{mixed_3b_forward.7} parent=39 // pred_check
        %p2598 = pneg %p2597
      $region46: #{mixed_3b_forward.7} parent=39 // pred_check_branch
        %2600 = sbr.rel (%p2598) target = $region48
      $region47: #{mixed_3b_forward.7} parent=39 // pred_region
        %v2601 = vld [vmem:[#allocation2] sm:$0xff]
        %v2602 = vld [vmem:[#allocation2 + $0x8] sm:$0xff]
        %v2603 = vld [vmem:[#allocation2 + $0x10] sm:$0xff]
        %v2604 = vld [vmem:[#allocation2 + $0x18] sm:$0xff]
        %v2605 = vld [vmem:[#allocation2 + $0x20] sm:$0xff]
        %v2606 = vld [vmem:[#allocation2 + $0x28] sm:$0xff]
        %v2607 = vld [vmem:[#allocation2 + $0x30] sm:$0xff]
        %v2608 = vld [vmem:[#allocation2 + $0x38] sm:$0xff]
        %v2609 = vld [vmem:[#allocation2 + $0x40] sm:$0xff]
        %v2610 = vld [vmem:[#allocation2 + $0x48] sm:$0xff]
        %v2611 = vld [vmem:[%s358 + $0x8] sm:$0xff]
        %v2612 = vld [vmem:[%s358 + $0x10] sm:$0xff]
        %v2613 = vld [vmem:[%s358 + $0x18] sm:$0xff]
        %v2614 = vld [vmem:[%s358 + $0x20] sm:$0xff]
        %v2615 = vld [vmem:[%s358 + $0x28] sm:$0xff]
        %v2616 = vld [vmem:[%s358 + $0x30] sm:$0xff]
        %v2617 = vld [vmem:[%s358 + $0x38] sm:$0xff]
        %v2618 = vld [vmem:[%s358 + $0x40] sm:$0xff]
        %v2619 = vld [vmem:[%s358 + $0x48] sm:$0xff]
        %v2620 = vld [vmem:[%s358 + $0x50] sm:$0xff]
        %v2621 = vld [vmem:[%s358 + $0x58] sm:$0x11]
        %v2622 = vld [vmem:[%s358 + $0x8] sm:$0xee]
        %v2623 = vunpack.c.l.bf16 %v2611
        %v2624 = vunpack.c.h.bf16 %v2611
        %v2625 = vunpack.c.l.bf16 %v2612
        %v2626 = vunpack.c.h.bf16 %v2612
        %v2627 = vunpack.c.l.bf16 %v2613
        %v2628 = vunpack.c.h.bf16 %v2613
        %v2629 = vunpack.c.l.bf16 %v2614
        %v2630 = vunpack.c.h.bf16 %v2614
        %v2631 = vunpack.c.l.bf16 %v2615
        %v2632 = vunpack.c.h.bf16 %v2615
        %v2633 = vunpack.c.l.bf16 %v2616
        %v2634 = vunpack.c.h.bf16 %v2616
        %v2635 = vunpack.c.l.bf16 %v2617
        %v2636 = vunpack.c.h.bf16 %v2617
        %v2637 = vunpack.c.l.bf16 %v2618
        %v2638 = vunpack.c.h.bf16 %v2618
        %v2639 = vunpack.c.l.bf16 %v2619
        %v2640 = vunpack.c.h.bf16 %v2619
        %v2641 = vunpack.c.l.bf16 %v2620
        %v2642 = vunpack.c.h.bf16 %v2620
        %v2643 = vunpack.c.l.bf16 %v2621
        %v2644 = vunpack.c.h.bf16 %v2621
        %v2645 = vunpack.c.l.bf16 %v2622
        %v2646 = vunpack.c.h.bf16 %v2622
        %v2669 = vrot.slane %v2645, 1
        %v2670 = vrot.slane %v2625, 1
        %v2671 = vsel %vm430, %v2669, %v2670
        %v2672 = vrot.slane %v2646, 1
        %v2673 = vrot.slane %v2626, 1
        %v2674 = vsel %vm430, %v2672, %v2673
        %v2675 = vrot.slane %v2627, 1
        %v2676 = vsel %vm430, %v2670, %v2675
        %v2677 = vrot.slane %v2628, 1
        %v2678 = vsel %vm430, %v2673, %v2677
        %v2679 = vrot.slane %v2629, 1
        %v2680 = vsel %vm430, %v2675, %v2679
        %v2681 = vrot.slane %v2630, 1
        %v2682 = vsel %vm430, %v2677, %v2681
        %v2683 = vrot.slane %v2631, 1
        %v2684 = vsel %vm430, %v2679, %v2683
        %v2685 = vrot.slane %v2632, 1
        %v2686 = vsel %vm430, %v2681, %v2685
        %v2687 = vrot.slane %v2633, 1
        %v2688 = vsel %vm430, %v2683, %v2687
        %v2689 = vrot.slane %v2634, 1
        %v2690 = vsel %vm430, %v2685, %v2689
        %v2691 = vrot.slane %v2635, 1
        %v2692 = vsel %vm430, %v2687, %v2691
        %v2693 = vrot.slane %v2636, 1
        %v2694 = vsel %vm430, %v2689, %v2693
        %v2695 = vrot.slane %v2637, 1
        %v2696 = vsel %vm430, %v2691, %v2695
        %v2697 = vrot.slane %v2638, 1
        %v2698 = vsel %vm430, %v2693, %v2697
        %v2699 = vrot.slane %v2639, 1
        %v2700 = vsel %vm430, %v2695, %v2699
        %v2701 = vrot.slane %v2640, 1
        %v2702 = vsel %vm430, %v2697, %v2701
        %v2703 = vrot.slane %v2641, 1
        %v2704 = vsel %vm430, %v2699, %v2703
        %v2705 = vrot.slane %v2642, 1
        %v2706 = vsel %vm430, %v2701, %v2705
        %v2707 = vrot.slane %v2643, 1
        %v2708 = vsel %vm430, %v2703, %v2707
        %v2709 = vrot.slane %v2644, 1
        %v2710 = vsel %vm430, %v2705, %v2709
        %v2733 = vmax.f32 %v2623, %v2671
        %v2734 = vmax.f32 %v2624, %v2674
        %v2735 = vmax.f32 %v2625, %v2676
        %v2736 = vmax.f32 %v2626, %v2678
        %v2737 = vmax.f32 %v2627, %v2680
        %v2738 = vmax.f32 %v2628, %v2682
        %v2739 = vmax.f32 %v2629, %v2684
        %v2740 = vmax.f32 %v2630, %v2686
        %v2741 = vmax.f32 %v2631, %v2688
        %v2742 = vmax.f32 %v2632, %v2690
        %v2743 = vmax.f32 %v2633, %v2692
        %v2744 = vmax.f32 %v2634, %v2694
        %v2745 = vmax.f32 %v2635, %v2696
        %v2746 = vmax.f32 %v2636, %v2698
        %v2747 = vmax.f32 %v2637, %v2700
        %v2748 = vmax.f32 %v2638, %v2702
        %v2749 = vmax.f32 %v2639, %v2704
        %v2750 = vmax.f32 %v2640, %v2706
        %v2751 = vmax.f32 %v2641, %v2708
        %v2752 = vmax.f32 %v2642, %v2710
        %v2753 = vmax.f32 %v2643, %v2707
        %v2754 = vmax.f32 %v2644, %v2709
        %v2755 = vpack.c.bf16 %v2734, %v2733
        %v2756 = vpack.c.bf16 %v2736, %v2735
        %v2757 = vpack.c.bf16 %v2738, %v2737
        %v2758 = vpack.c.bf16 %v2740, %v2739
        %v2759 = vpack.c.bf16 %v2742, %v2741
        %v2760 = vpack.c.bf16 %v2744, %v2743
        %v2761 = vpack.c.bf16 %v2746, %v2745
        %v2762 = vpack.c.bf16 %v2748, %v2747
        %v2763 = vpack.c.bf16 %v2750, %v2749
        %v2764 = vpack.c.bf16 %v2752, %v2751
        %v2765 = vpack.c.bf16 %v2754, %v2753
        %v2766 = vld [vmem:[%s358 + $0x58] sm:$0x33]
        %v2767 = vunpack.c.l.bf16 %v2755
        %v2768 = vunpack.c.h.bf16 %v2755
        %v2769 = vunpack.c.l.bf16 %v2756
        %v2770 = vunpack.c.h.bf16 %v2756
        %v2771 = vunpack.c.l.bf16 %v2757
        %v2772 = vunpack.c.h.bf16 %v2757
        %v2773 = vunpack.c.l.bf16 %v2758
        %v2774 = vunpack.c.h.bf16 %v2758
        %v2775 = vunpack.c.l.bf16 %v2759
        %v2776 = vunpack.c.h.bf16 %v2759
        %v2777 = vunpack.c.l.bf16 %v2760
        %v2778 = vunpack.c.h.bf16 %v2760
        %v2779 = vunpack.c.l.bf16 %v2761
        %v2780 = vunpack.c.h.bf16 %v2761
        %v2781 = vunpack.c.l.bf16 %v2762
        %v2782 = vunpack.c.h.bf16 %v2762
        %v2783 = vunpack.c.l.bf16 %v2763
        %v2784 = vunpack.c.h.bf16 %v2763
        %v2785 = vunpack.c.l.bf16 %v2764
        %v2786 = vunpack.c.h.bf16 %v2764
        %v2787 = vunpack.c.l.bf16 %v2765
        %v2788 = vunpack.c.h.bf16 %v2765
        %v2789 = vunpack.c.l.bf16 %v2766
        %v2790 = vunpack.c.h.bf16 %v2766
        %v2793 = vrot.slane %v2645, 2
        %v2794 = vrot.slane %v2625, 2
        %v2795 = vsel %vm555, %v2793, %v2794
        %v2796 = vrot.slane %v2646, 2
        %v2797 = vrot.slane %v2626, 2
        %v2798 = vsel %vm555, %v2796, %v2797
        %v2799 = vrot.slane %v2627, 2
        %v2800 = vsel %vm555, %v2794, %v2799
        %v2801 = vrot.slane %v2628, 2
        %v2802 = vsel %vm555, %v2797, %v2801
        %v2803 = vrot.slane %v2629, 2
        %v2804 = vsel %vm555, %v2799, %v2803
        %v2805 = vrot.slane %v2630, 2
        %v2806 = vsel %vm555, %v2801, %v2805
        %v2807 = vrot.slane %v2631, 2
        %v2808 = vsel %vm555, %v2803, %v2807
        %v2809 = vrot.slane %v2632, 2
        %v2810 = vsel %vm555, %v2805, %v2809
        %v2811 = vrot.slane %v2633, 2
        %v2812 = vsel %vm555, %v2807, %v2811
        %v2813 = vrot.slane %v2634, 2
        %v2814 = vsel %vm555, %v2809, %v2813
        %v2815 = vrot.slane %v2635, 2
        %v2816 = vsel %vm555, %v2811, %v2815
        %v2817 = vrot.slane %v2636, 2
        %v2818 = vsel %vm555, %v2813, %v2817
        %v2819 = vrot.slane %v2637, 2
        %v2820 = vsel %vm555, %v2815, %v2819
        %v2821 = vrot.slane %v2638, 2
        %v2822 = vsel %vm555, %v2817, %v2821
        %v2823 = vrot.slane %v2639, 2
        %v2824 = vsel %vm555, %v2819, %v2823
        %v2825 = vrot.slane %v2640, 2
        %v2826 = vsel %vm555, %v2821, %v2825
        %v2827 = vrot.slane %v2641, 2
        %v2828 = vsel %vm555, %v2823, %v2827
        %v2829 = vrot.slane %v2642, 2
        %v2830 = vsel %vm555, %v2825, %v2829
        %v2831 = vrot.slane %v2789, 2
        %v2832 = vsel %vm555, %v2827, %v2831
        %v2833 = vrot.slane %v2790, 2
        %v2834 = vsel %vm555, %v2829, %v2833
        %v2857 = vmax.f32 %v2767, %v2795
        %v2858 = vmax.f32 %v2768, %v2798
        %v2859 = vmax.f32 %v2769, %v2800
        %v2860 = vmax.f32 %v2770, %v2802
        %v2861 = vmax.f32 %v2771, %v2804
        %v2862 = vmax.f32 %v2772, %v2806
        %v2863 = vmax.f32 %v2773, %v2808
        %v2864 = vmax.f32 %v2774, %v2810
        %v2865 = vmax.f32 %v2775, %v2812
        %v2866 = vmax.f32 %v2776, %v2814
        %v2867 = vmax.f32 %v2777, %v2816
        %v2868 = vmax.f32 %v2778, %v2818
        %v2869 = vmax.f32 %v2779, %v2820
        %v2870 = vmax.f32 %v2780, %v2822
        %v2871 = vmax.f32 %v2781, %v2824
        %v2872 = vmax.f32 %v2782, %v2826
        %v2873 = vmax.f32 %v2783, %v2828
        %v2874 = vmax.f32 %v2784, %v2830
        %v2875 = vmax.f32 %v2785, %v2832
        %v2876 = vmax.f32 %v2786, %v2834
        %v2877 = vmax.f32 %v2787, %v2831
        %v2878 = vmax.f32 %v2788, %v2833
        %v2879 = vpack.c.bf16 %v2858, %v2857
        %v2880 = vpack.c.bf16 %v2860, %v2859
        %v2881 = vpack.c.bf16 %v2862, %v2861
        %v2882 = vpack.c.bf16 %v2864, %v2863
        %v2883 = vpack.c.bf16 %v2866, %v2865
        %v2884 = vpack.c.bf16 %v2868, %v2867
        %v2885 = vpack.c.bf16 %v2870, %v2869
        %v2886 = vpack.c.bf16 %v2872, %v2871
        %v2887 = vpack.c.bf16 %v2874, %v2873
        %v2888 = vpack.c.bf16 %v2876, %v2875
        %v2889 = vpack.c.bf16 %v2878, %v2877
        %v2890 = vld [vmem:[%s358 + $0x10] sm:$0xee]
        %v2891 = vld [vmem:[%s358 + $0x58] sm:$0xff]
        %v2892 = vld [vmem:[%s358 + $0x60] sm:$0x33]
        %v2893 = vunpack.c.l.bf16 %v2879
        %v2894 = vunpack.c.h.bf16 %v2879
        %v2895 = vunpack.c.l.bf16 %v2880
        %v2896 = vunpack.c.h.bf16 %v2880
        %v2897 = vunpack.c.l.bf16 %v2881
        %v2898 = vunpack.c.h.bf16 %v2881
        %v2899 = vunpack.c.l.bf16 %v2882
        %v2900 = vunpack.c.h.bf16 %v2882
        %v2901 = vunpack.c.l.bf16 %v2883
        %v2902 = vunpack.c.h.bf16 %v2883
        %v2903 = vunpack.c.l.bf16 %v2884
        %v2904 = vunpack.c.h.bf16 %v2884
        %v2905 = vunpack.c.l.bf16 %v2885
        %v2906 = vunpack.c.h.bf16 %v2885
        %v2907 = vunpack.c.l.bf16 %v2886
        %v2908 = vunpack.c.h.bf16 %v2886
        %v2909 = vunpack.c.l.bf16 %v2887
        %v2910 = vunpack.c.h.bf16 %v2887
        %v2911 = vunpack.c.l.bf16 %v2888
        %v2912 = vunpack.c.h.bf16 %v2888
        %v2913 = vunpack.c.l.bf16 %v2889
        %v2914 = vunpack.c.h.bf16 %v2889
        %v2915 = vunpack.c.l.bf16 %v2890
        %v2916 = vunpack.c.h.bf16 %v2890
        %v2917 = vunpack.c.l.bf16 %v2891
        %v2918 = vunpack.c.h.bf16 %v2891
        %v2919 = vunpack.c.l.bf16 %v2892
        %v2920 = vunpack.c.h.bf16 %v2892
        %v2927 = vrot.slane %v2915, 2
        %v2928 = vsel %vm555, %v2927, %v2799
        %v2929 = vrot.slane %v2916, 2
        %v2930 = vsel %vm555, %v2929, %v2801
        %v2931 = vrot.slane %v2917, 2
        %v2932 = vsel %vm555, %v2827, %v2931
        %v2933 = vrot.slane %v2918, 2
        %v2934 = vsel %vm555, %v2829, %v2933
        %v2935 = vrot.slane %v2919, 2
        %v2936 = vsel %vm555, %v2931, %v2935
        %v2937 = vrot.slane %v2920, 2
        %v2938 = vsel %vm555, %v2933, %v2937
        %v2947 = vmax.f32 %v2893, %v2928
        %v2948 = vmax.f32 %v2894, %v2930
        %v2949 = vmax.f32 %v2895, %v2804
        %v2950 = vmax.f32 %v2896, %v2806
        %v2951 = vmax.f32 %v2897, %v2808
        %v2952 = vmax.f32 %v2898, %v2810
        %v2953 = vmax.f32 %v2899, %v2812
        %v2954 = vmax.f32 %v2900, %v2814
        %v2955 = vmax.f32 %v2901, %v2816
        %v2956 = vmax.f32 %v2902, %v2818
        %v2957 = vmax.f32 %v2903, %v2820
        %v2958 = vmax.f32 %v2904, %v2822
        %v2959 = vmax.f32 %v2905, %v2824
        %v2960 = vmax.f32 %v2906, %v2826
        %v2961 = vmax.f32 %v2907, %v2828
        %v2962 = vmax.f32 %v2908, %v2830
        %v2963 = vmax.f32 %v2909, %v2932
        %v2964 = vmax.f32 %v2910, %v2934
        %v2965 = vmax.f32 %v2911, %v2936
        %v2966 = vmax.f32 %v2912, %v2938
        %v2967 = vmax.f32 %v2913, %v2935
        %v2968 = vmax.f32 %v2914, %v2937
        %v2969 = vpack.c.bf16 %v2948, %v2947
        %v2970 = vpack.c.bf16 %v2950, %v2949
        %v2971 = vpack.c.bf16 %v2952, %v2951
        %v2972 = vpack.c.bf16 %v2954, %v2953
        %v2973 = vpack.c.bf16 %v2956, %v2955
        %v2974 = vpack.c.bf16 %v2958, %v2957
        %v2975 = vpack.c.bf16 %v2960, %v2959
        %v2976 = vpack.c.bf16 %v2962, %v2961
        %v2977 = vpack.c.bf16 %v2964, %v2963
        %v2978 = vpack.c.bf16 %v2966, %v2965
        %v2979 = vpack.c.bf16 %v2968, %v2967
        %v2980 = vld [vmem:[%s358 + $0x10] sm:$0xcc]
        %v2981 = vunpack.c.l.bf16 %v2969
        %v2982 = vunpack.c.h.bf16 %v2969
        %v2983 = vunpack.c.l.bf16 %v2970
        %v2984 = vunpack.c.h.bf16 %v2970
        %v2985 = vunpack.c.l.bf16 %v2971
        %v2986 = vunpack.c.h.bf16 %v2971
        %v2987 = vunpack.c.l.bf16 %v2972
        %v2988 = vunpack.c.h.bf16 %v2972
        %v2989 = vunpack.c.l.bf16 %v2973
        %v2990 = vunpack.c.h.bf16 %v2973
        %v2991 = vunpack.c.l.bf16 %v2974
        %v2992 = vunpack.c.h.bf16 %v2974
        %v2993 = vunpack.c.l.bf16 %v2975
        %v2994 = vunpack.c.h.bf16 %v2975
        %v2995 = vunpack.c.l.bf16 %v2976
        %v2996 = vunpack.c.h.bf16 %v2976
        %v2997 = vunpack.c.l.bf16 %v2977
        %v2998 = vunpack.c.h.bf16 %v2977
        %v2999 = vunpack.c.l.bf16 %v2978
        %v3000 = vunpack.c.h.bf16 %v2978
        %v3001 = vunpack.c.l.bf16 %v2979
        %v3002 = vunpack.c.h.bf16 %v2979
        %v3003 = vunpack.c.l.bf16 %v2980
        %v3004 = vunpack.c.h.bf16 %v2980
        %v3007 = vrot.slane %v3003, 3
        %v3008 = vrot.slane %v2627, 3
        %v3009 = vsel %vm770, %v3007, %v3008
        %v3010 = vrot.slane %v3004, 3
        %v3011 = vrot.slane %v2628, 3
        %v3012 = vsel %vm770, %v3010, %v3011
        %v3013 = vrot.slane %v2629, 3
        %v3014 = vsel %vm770, %v3008, %v3013
        %v3015 = vrot.slane %v2630, 3
        %v3016 = vsel %vm770, %v3011, %v3015
        %v3017 = vrot.slane %v2631, 3
        %v3018 = vsel %vm770, %v3013, %v3017
        %v3019 = vrot.slane %v2632, 3
        %v3020 = vsel %vm770, %v3015, %v3019
        %v3021 = vrot.slane %v2633, 3
        %v3022 = vsel %vm770, %v3017, %v3021
        %v3023 = vrot.slane %v2634, 3
        %v3024 = vsel %vm770, %v3019, %v3023
        %v3025 = vrot.slane %v2635, 3
        %v3026 = vsel %vm770, %v3021, %v3025
        %v3027 = vrot.slane %v2636, 3
        %v3028 = vsel %vm770, %v3023, %v3027
        %v3029 = vrot.slane %v2637, 3
        %v3030 = vsel %vm770, %v3025, %v3029
        %v3031 = vrot.slane %v2638, 3
        %v3032 = vsel %vm770, %v3027, %v3031
        %v3033 = vrot.slane %v2639, 3
        %v3034 = vsel %vm770, %v3029, %v3033
        %v3035 = vrot.slane %v2640, 3
        %v3036 = vsel %vm770, %v3031, %v3035
        %v3037 = vrot.slane %v2641, 3
        %v3038 = vsel %vm770, %v3033, %v3037
        %v3039 = vrot.slane %v2642, 3
        %v3040 = vsel %vm770, %v3035, %v3039
        %v3041 = vrot.slane %v2917, 3
        %v3042 = vsel %vm770, %v3037, %v3041
        %v3043 = vrot.slane %v2918, 3
        %v3044 = vsel %vm770, %v3039, %v3043
        %v3045 = vrot.slane %v2919, 3
        %v3046 = vsel %vm770, %v3041, %v3045
        %v3047 = vrot.slane %v2920, 3
        %v3048 = vsel %vm770, %v3043, %v3047
        %v3071 = vmax.f32 %v2981, %v3009
        %v3072 = vmax.f32 %v2982, %v3012
        %v3073 = vmax.f32 %v2983, %v3014
        %v3074 = vmax.f32 %v2984, %v3016
        %v3075 = vmax.f32 %v2985, %v3018
        %v3076 = vmax.f32 %v2986, %v3020
        %v3077 = vmax.f32 %v2987, %v3022
        %v3078 = vmax.f32 %v2988, %v3024
        %v3079 = vmax.f32 %v2989, %v3026
        %v3080 = vmax.f32 %v2990, %v3028
        %v3081 = vmax.f32 %v2991, %v3030
        %v3082 = vmax.f32 %v2992, %v3032
        %v3083 = vmax.f32 %v2993, %v3034
        %v3084 = vmax.f32 %v2994, %v3036
        %v3085 = vmax.f32 %v2995, %v3038
        %v3086 = vmax.f32 %v2996, %v3040
        %v3087 = vmax.f32 %v2997, %v3042
        %v3088 = vmax.f32 %v2998, %v3044
        %v3089 = vmax.f32 %v2999, %v3046
        %v3090 = vmax.f32 %v3000, %v3048
        %v3091 = vmax.f32 %v3001, %v3045
        %v3092 = vmax.f32 %v3002, %v3047
        %v3093 = vpack.c.bf16 %v3072, %v3071
        %v3094 = vpack.c.bf16 %v3074, %v3073
        %v3095 = vpack.c.bf16 %v3076, %v3075
        %v3096 = vpack.c.bf16 %v3078, %v3077
        %v3097 = vpack.c.bf16 %v3080, %v3079
        %v3098 = vpack.c.bf16 %v3082, %v3081
        %v3099 = vpack.c.bf16 %v3084, %v3083
        %v3100 = vpack.c.bf16 %v3086, %v3085
        %v3101 = vpack.c.bf16 %v3088, %v3087
        %v3102 = vpack.c.bf16 %v3090, %v3089
        %v3103 = vpack.c.bf16 %v3092, %v3091
        %v3104 = vld [vmem:[%s358 + $0x60] sm:$0x77]
        %v3105 = vunpack.c.l.bf16 %v3093
        %v3106 = vunpack.c.h.bf16 %v3093
        %v3107 = vunpack.c.l.bf16 %v3094
        %v3108 = vunpack.c.h.bf16 %v3094
        %v3109 = vunpack.c.l.bf16 %v3095
        %v3110 = vunpack.c.h.bf16 %v3095
        %v3111 = vunpack.c.l.bf16 %v3096
        %v3112 = vunpack.c.h.bf16 %v3096
        %v3113 = vunpack.c.l.bf16 %v3097
        %v3114 = vunpack.c.h.bf16 %v3097
        %v3115 = vunpack.c.l.bf16 %v3098
        %v3116 = vunpack.c.h.bf16 %v3098
        %v3117 = vunpack.c.l.bf16 %v3099
        %v3118 = vunpack.c.h.bf16 %v3099
        %v3119 = vunpack.c.l.bf16 %v3100
        %v3120 = vunpack.c.h.bf16 %v3100
        %v3121 = vunpack.c.l.bf16 %v3101
        %v3122 = vunpack.c.h.bf16 %v3101
        %v3123 = vunpack.c.l.bf16 %v3102
        %v3124 = vunpack.c.h.bf16 %v3102
        %v3125 = vunpack.c.l.bf16 %v3103
        %v3126 = vunpack.c.h.bf16 %v3103
        %v3127 = vunpack.c.l.bf16 %v3104
        %v3128 = vunpack.c.h.bf16 %v3104
        %v3131 = vrot.slane %v3003, 4
        %v3132 = vrot.slane %v2627, 4
        %v3133 = vsel %vm895, %v3131, %v3132
        %v3134 = vrot.slane %v3004, 4
        %v3135 = vrot.slane %v2628, 4
        %v3136 = vsel %vm895, %v3134, %v3135
        %v3137 = vrot.slane %v2629, 4
        %v3138 = vsel %vm895, %v3132, %v3137
        %v3139 = vrot.slane %v2630, 4
        %v3140 = vsel %vm895, %v3135, %v3139
        %v3141 = vrot.slane %v2631, 4
        %v3142 = vsel %vm895, %v3137, %v3141
        %v3143 = vrot.slane %v2632, 4
        %v3144 = vsel %vm895, %v3139, %v3143
        %v3145 = vrot.slane %v2633, 4
        %v3146 = vsel %vm895, %v3141, %v3145
        %v3147 = vrot.slane %v2634, 4
        %v3148 = vsel %vm895, %v3143, %v3147
        %v3149 = vrot.slane %v2635, 4
        %v3150 = vsel %vm895, %v3145, %v3149
        %v3151 = vrot.slane %v2636, 4
        %v3152 = vsel %vm895, %v3147, %v3151
        %v3153 = vrot.slane %v2637, 4
        %v3154 = vsel %vm895, %v3149, %v3153
        %v3155 = vrot.slane %v2638, 4
        %v3156 = vsel %vm895, %v3151, %v3155
        %v3157 = vrot.slane %v2639, 4
        %v3158 = vsel %vm895, %v3153, %v3157
        %v3159 = vrot.slane %v2640, 4
        %v3160 = vsel %vm895, %v3155, %v3159
        %v3161 = vrot.slane %v2641, 4
        %v3162 = vsel %vm895, %v3157, %v3161
        %v3163 = vrot.slane %v2642, 4
        %v3164 = vsel %vm895, %v3159, %v3163
        %v3165 = vrot.slane %v2917, 4
        %v3166 = vsel %vm895, %v3161, %v3165
        %v3167 = vrot.slane %v2918, 4
        %v3168 = vsel %vm895, %v3163, %v3167
        %v3169 = vrot.slane %v3127, 4
        %v3170 = vsel %vm895, %v3165, %v3169
        %v3171 = vrot.slane %v3128, 4
        %v3172 = vsel %vm895, %v3167, %v3171
        %v3195 = vmax.f32 %v3105, %v3133
        %v3196 = vmax.f32 %v3106, %v3136
        %v3197 = vmax.f32 %v3107, %v3138
        %v3198 = vmax.f32 %v3108, %v3140
        %v3199 = vmax.f32 %v3109, %v3142
        %v3200 = vmax.f32 %v3110, %v3144
        %v3201 = vmax.f32 %v3111, %v3146
        %v3202 = vmax.f32 %v3112, %v3148
        %v3203 = vmax.f32 %v3113, %v3150
        %v3204 = vmax.f32 %v3114, %v3152
        %v3205 = vmax.f32 %v3115, %v3154
        %v3206 = vmax.f32 %v3116, %v3156
        %v3207 = vmax.f32 %v3117, %v3158
        %v3208 = vmax.f32 %v3118, %v3160
        %v3209 = vmax.f32 %v3119, %v3162
        %v3210 = vmax.f32 %v3120, %v3164
        %v3211 = vmax.f32 %v3121, %v3166
        %v3212 = vmax.f32 %v3122, %v3168
        %v3213 = vmax.f32 %v3123, %v3170
        %v3214 = vmax.f32 %v3124, %v3172
        %v3215 = vmax.f32 %v3125, %v3169
        %v3216 = vmax.f32 %v3126, %v3171
        %v3217 = vpack.c.bf16 %v3196, %v3195
        %v3218 = vpack.c.bf16 %v3198, %v3197
        %v3219 = vpack.c.bf16 %v3200, %v3199
        %v3220 = vpack.c.bf16 %v3202, %v3201
        %v3221 = vpack.c.bf16 %v3204, %v3203
        %v3222 = vpack.c.bf16 %v3206, %v3205
        %v3223 = vpack.c.bf16 %v3208, %v3207
        %v3224 = vpack.c.bf16 %v3210, %v3209
        %v3225 = vpack.c.bf16 %v3212, %v3211
        %v3226 = vpack.c.bf16 %v3214, %v3213
        %v3227 = vpack.c.bf16 %v3216, %v3215
        %v3228 = vld [vmem:[%s358 + $0x18] sm:$0xcc]
        %v3229 = vld [vmem:[%s358 + $0x60] sm:$0xff]
        %v3230 = vld [vmem:[%s358 + $0x68] sm:$0x77]
        %v3231 = vunpack.c.l.bf16 %v3217
        %v3232 = vunpack.c.h.bf16 %v3217
        %v3233 = vunpack.c.l.bf16 %v3218
        %v3234 = vunpack.c.h.bf16 %v3218
        %v3235 = vunpack.c.l.bf16 %v3219
        %v3236 = vunpack.c.h.bf16 %v3219
        %v3237 = vunpack.c.l.bf16 %v3220
        %v3238 = vunpack.c.h.bf16 %v3220
        %v3239 = vunpack.c.l.bf16 %v3221
        %v3240 = vunpack.c.h.bf16 %v3221
        %v3241 = vunpack.c.l.bf16 %v3222
        %v3242 = vunpack.c.h.bf16 %v3222
        %v3243 = vunpack.c.l.bf16 %v3223
        %v3244 = vunpack.c.h.bf16 %v3223
        %v3245 = vunpack.c.l.bf16 %v3224
        %v3246 = vunpack.c.h.bf16 %v3224
        %v3247 = vunpack.c.l.bf16 %v3225
        %v3248 = vunpack.c.h.bf16 %v3225
        %v3249 = vunpack.c.l.bf16 %v3226
        %v3250 = vunpack.c.h.bf16 %v3226
        %v3251 = vunpack.c.l.bf16 %v3227
        %v3252 = vunpack.c.h.bf16 %v3227
        %v3253 = vunpack.c.l.bf16 %v3228
        %v3254 = vunpack.c.h.bf16 %v3228
        %v3255 = vunpack.c.l.bf16 %v3229
        %v3256 = vunpack.c.h.bf16 %v3229
        %v3257 = vunpack.c.l.bf16 %v3230
        %v3258 = vunpack.c.h.bf16 %v3230
        %v3265 = vrot.slane %v3253, 4
        %v3266 = vsel %vm895, %v3265, %v3137
        %v3267 = vrot.slane %v3254, 4
        %v3268 = vsel %vm895, %v3267, %v3139
        %v3269 = vrot.slane %v3255, 4
        %v3270 = vsel %vm895, %v3165, %v3269
        %v3271 = vrot.slane %v3256, 4
        %v3272 = vsel %vm895, %v3167, %v3271
        %v3273 = vrot.slane %v3257, 4
        %v3274 = vsel %vm895, %v3269, %v3273
        %v3275 = vrot.slane %v3258, 4
        %v3276 = vsel %vm895, %v3271, %v3275
        %v3285 = vmax.f32 %v3231, %v3266
        %v3286 = vmax.f32 %v3232, %v3268
        %v3287 = vmax.f32 %v3233, %v3142
        %v3288 = vmax.f32 %v3234, %v3144
        %v3289 = vmax.f32 %v3235, %v3146
        %v3290 = vmax.f32 %v3236, %v3148
        %v3291 = vmax.f32 %v3237, %v3150
        %v3292 = vmax.f32 %v3238, %v3152
        %v3293 = vmax.f32 %v3239, %v3154
        %v3294 = vmax.f32 %v3240, %v3156
        %v3295 = vmax.f32 %v3241, %v3158
        %v3296 = vmax.f32 %v3242, %v3160
        %v3297 = vmax.f32 %v3243, %v3162
        %v3298 = vmax.f32 %v3244, %v3164
        %v3299 = vmax.f32 %v3245, %v3166
        %v3300 = vmax.f32 %v3246, %v3168
        %v3301 = vmax.f32 %v3247, %v3270
        %v3302 = vmax.f32 %v3248, %v3272
        %v3303 = vmax.f32 %v3249, %v3274
        %v3304 = vmax.f32 %v3250, %v3276
        %v3305 = vmax.f32 %v3251, %v3273
        %v3306 = vmax.f32 %v3252, %v3275
        %v3307 = vpack.c.bf16 %v3286, %v3285
        %v3308 = vpack.c.bf16 %v3288, %v3287
        %v3309 = vpack.c.bf16 %v3290, %v3289
        %v3310 = vpack.c.bf16 %v3292, %v3291
        %v3311 = vpack.c.bf16 %v3294, %v3293
        %v3312 = vpack.c.bf16 %v3296, %v3295
        %v3313 = vpack.c.bf16 %v3298, %v3297
        %v3314 = vpack.c.bf16 %v3300, %v3299
        %v3315 = vpack.c.bf16 %v3302, %v3301
        %v3316 = vpack.c.bf16 %v3304, %v3303
        %v3317 = vpack.c.bf16 %v3306, %v3305
        %v3318 = vld [vmem:[%s358 + $0x18] sm:$0x88]
        %v3319 = vunpack.c.l.bf16 %v3307
        %v3320 = vunpack.c.h.bf16 %v3307
        %v3321 = vunpack.c.l.bf16 %v3308
        %v3322 = vunpack.c.h.bf16 %v3308
        %v3323 = vunpack.c.l.bf16 %v3309
        %v3324 = vunpack.c.h.bf16 %v3309
        %v3325 = vunpack.c.l.bf16 %v3310
        %v3326 = vunpack.c.h.bf16 %v3310
        %v3327 = vunpack.c.l.bf16 %v3311
        %v3328 = vunpack.c.h.bf16 %v3311
        %v3329 = vunpack.c.l.bf16 %v3312
        %v3330 = vunpack.c.h.bf16 %v3312
        %v3331 = vunpack.c.l.bf16 %v3313
        %v3332 = vunpack.c.h.bf16 %v3313
        %v3333 = vunpack.c.l.bf16 %v3314
        %v3334 = vunpack.c.h.bf16 %v3314
        %v3335 = vunpack.c.l.bf16 %v3315
        %v3336 = vunpack.c.h.bf16 %v3315
        %v3337 = vunpack.c.l.bf16 %v3316
        %v3338 = vunpack.c.h.bf16 %v3316
        %v3339 = vunpack.c.l.bf16 %v3317
        %v3340 = vunpack.c.h.bf16 %v3317
        %v3341 = vunpack.c.l.bf16 %v3318
        %v3342 = vunpack.c.h.bf16 %v3318
        %v3345 = vrot.slane %v3341, 5
        %v3346 = vrot.slane %v2629, 5
        %v3347 = vsel %vm1110, %v3345, %v3346
        %v3348 = vrot.slane %v3342, 5
        %v3349 = vrot.slane %v2630, 5
        %v3350 = vsel %vm1110, %v3348, %v3349
        %v3351 = vrot.slane %v2631, 5
        %v3352 = vsel %vm1110, %v3346, %v3351
        %v3353 = vrot.slane %v2632, 5
        %v3354 = vsel %vm1110, %v3349, %v3353
        %v3355 = vrot.slane %v2633, 5
        %v3356 = vsel %vm1110, %v3351, %v3355
        %v3357 = vrot.slane %v2634, 5
        %v3358 = vsel %vm1110, %v3353, %v3357
        %v3359 = vrot.slane %v2635, 5
        %v3360 = vsel %vm1110, %v3355, %v3359
        %v3361 = vrot.slane %v2636, 5
        %v3362 = vsel %vm1110, %v3357, %v3361
        %v3363 = vrot.slane %v2637, 5
        %v3364 = vsel %vm1110, %v3359, %v3363
        %v3365 = vrot.slane %v2638, 5
        %v3366 = vsel %vm1110, %v3361, %v3365
        %v3367 = vrot.slane %v2639, 5
        %v3368 = vsel %vm1110, %v3363, %v3367
        %v3369 = vrot.slane %v2640, 5
        %v3370 = vsel %vm1110, %v3365, %v3369
        %v3371 = vrot.slane %v2641, 5
        %v3372 = vsel %vm1110, %v3367, %v3371
        %v3373 = vrot.slane %v2642, 5
        %v3374 = vsel %vm1110, %v3369, %v3373
        %v3375 = vrot.slane %v2917, 5
        %v3376 = vsel %vm1110, %v3371, %v3375
        %v3377 = vrot.slane %v2918, 5
        %v3378 = vsel %vm1110, %v3373, %v3377
        %v3379 = vrot.slane %v3255, 5
        %v3380 = vsel %vm1110, %v3375, %v3379
        %v3381 = vrot.slane %v3256, 5
        %v3382 = vsel %vm1110, %v3377, %v3381
        %v3383 = vrot.slane %v3257, 5
        %v3384 = vsel %vm1110, %v3379, %v3383
        %v3385 = vrot.slane %v3258, 5
        %v3386 = vsel %vm1110, %v3381, %v3385
        %v3409 = vmax.f32 %v3319, %v3347
        %v3410 = vmax.f32 %v3320, %v3350
        %v3411 = vmax.f32 %v3321, %v3352
        %v3412 = vmax.f32 %v3322, %v3354
        %v3413 = vmax.f32 %v3323, %v3356
        %v3414 = vmax.f32 %v3324, %v3358
        %v3415 = vmax.f32 %v3325, %v3360
        %v3416 = vmax.f32 %v3326, %v3362
        %v3417 = vmax.f32 %v3327, %v3364
        %v3418 = vmax.f32 %v3328, %v3366
        %v3419 = vmax.f32 %v3329, %v3368
        %v3420 = vmax.f32 %v3330, %v3370
        %v3421 = vmax.f32 %v3331, %v3372
        %v3422 = vmax.f32 %v3332, %v3374
        %v3423 = vmax.f32 %v3333, %v3376
        %v3424 = vmax.f32 %v3334, %v3378
        %v3425 = vmax.f32 %v3335, %v3380
        %v3426 = vmax.f32 %v3336, %v3382
        %v3427 = vmax.f32 %v3337, %v3384
        %v3428 = vmax.f32 %v3338, %v3386
        %v3429 = vmax.f32 %v3339, %v3383
        %v3430 = vmax.f32 %v3340, %v3385
        %v3431 = vpack.c.bf16 %v3410, %v3409
        %v3432 = vpack.c.bf16 %v3412, %v3411
        %v3433 = vpack.c.bf16 %v3414, %v3413
        %v3434 = vpack.c.bf16 %v3416, %v3415
        %v3435 = vpack.c.bf16 %v3418, %v3417
        %v3436 = vpack.c.bf16 %v3420, %v3419
        %v3437 = vpack.c.bf16 %v3422, %v3421
        %v3438 = vpack.c.bf16 %v3424, %v3423
        %v3439 = vpack.c.bf16 %v3426, %v3425
        %v3440 = vpack.c.bf16 %v3428, %v3427
        %v3441 = vpack.c.bf16 %v3430, %v3429
        %v3442 = vld [vmem:[%s358 + $0x68] sm:$0xff]
        %v3443 = vunpack.c.l.bf16 %v3431
        %v3444 = vunpack.c.h.bf16 %v3431
        %v3445 = vunpack.c.l.bf16 %v3432
        %v3446 = vunpack.c.h.bf16 %v3432
        %v3447 = vunpack.c.l.bf16 %v3433
        %v3448 = vunpack.c.h.bf16 %v3433
        %v3449 = vunpack.c.l.bf16 %v3434
        %v3450 = vunpack.c.h.bf16 %v3434
        %v3451 = vunpack.c.l.bf16 %v3435
        %v3452 = vunpack.c.h.bf16 %v3435
        %v3453 = vunpack.c.l.bf16 %v3436
        %v3454 = vunpack.c.h.bf16 %v3436
        %v3455 = vunpack.c.l.bf16 %v3437
        %v3456 = vunpack.c.h.bf16 %v3437
        %v3457 = vunpack.c.l.bf16 %v3438
        %v3458 = vunpack.c.h.bf16 %v3438
        %v3459 = vunpack.c.l.bf16 %v3439
        %v3460 = vunpack.c.h.bf16 %v3439
        %v3461 = vunpack.c.l.bf16 %v3440
        %v3462 = vunpack.c.h.bf16 %v3440
        %v3463 = vunpack.c.l.bf16 %v3441
        %v3464 = vunpack.c.h.bf16 %v3441
        %v3465 = vunpack.c.l.bf16 %v3442
        %v3466 = vunpack.c.h.bf16 %v3442
        %v3469 = vrot.slane %v3341, 6
        %v3470 = vrot.slane %v2629, 6
        %v3471 = vsel %vm1235, %v3469, %v3470
        %v3472 = vrot.slane %v3342, 6
        %v3473 = vrot.slane %v2630, 6
        %v3474 = vsel %vm1235, %v3472, %v3473
        %v3475 = vrot.slane %v2631, 6
        %v3476 = vsel %vm1235, %v3470, %v3475
        %v3477 = vrot.slane %v2632, 6
        %v3478 = vsel %vm1235, %v3473, %v3477
        %v3479 = vrot.slane %v2633, 6
        %v3480 = vsel %vm1235, %v3475, %v3479
        %v3481 = vrot.slane %v2634, 6
        %v3482 = vsel %vm1235, %v3477, %v3481
        %v3483 = vrot.slane %v2635, 6
        %v3484 = vsel %vm1235, %v3479, %v3483
        %v3485 = vrot.slane %v2636, 6
        %v3486 = vsel %vm1235, %v3481, %v3485
        %v3487 = vrot.slane %v2637, 6
        %v3488 = vsel %vm1235, %v3483, %v3487
        %v3489 = vrot.slane %v2638, 6
        %v3490 = vsel %vm1235, %v3485, %v3489
        %v3491 = vrot.slane %v2639, 6
        %v3492 = vsel %vm1235, %v3487, %v3491
        %v3493 = vrot.slane %v2640, 6
        %v3494 = vsel %vm1235, %v3489, %v3493
        %v3495 = vrot.slane %v2641, 6
        %v3496 = vsel %vm1235, %v3491, %v3495
        %v3497 = vrot.slane %v2642, 6
        %v3498 = vsel %vm1235, %v3493, %v3497
        %v3499 = vrot.slane %v2917, 6
        %v3500 = vsel %vm1235, %v3495, %v3499
        %v3501 = vrot.slane %v2918, 6
        %v3502 = vsel %vm1235, %v3497, %v3501
        %v3503 = vrot.slane %v3255, 6
        %v3504 = vsel %vm1235, %v3499, %v3503
        %v3505 = vrot.slane %v3256, 6
        %v3506 = vsel %vm1235, %v3501, %v3505
        %v3507 = vrot.slane %v3465, 6
        %v3508 = vsel %vm1235, %v3503, %v3507
        %v3509 = vrot.slane %v3466, 6
        %v3510 = vsel %vm1235, %v3505, %v3509
        %v3533 = vmax.f32 %v3443, %v3471
        %v3534 = vmax.f32 %v3444, %v3474
        %v3535 = vmax.f32 %v3445, %v3476
        %v3536 = vmax.f32 %v3446, %v3478
        %v3537 = vmax.f32 %v3447, %v3480
        %v3538 = vmax.f32 %v3448, %v3482
        %v3539 = vmax.f32 %v3449, %v3484
        %v3540 = vmax.f32 %v3450, %v3486
        %v3541 = vmax.f32 %v3451, %v3488
        %v3542 = vmax.f32 %v3452, %v3490
        %v3543 = vmax.f32 %v3453, %v3492
        %v3544 = vmax.f32 %v3454, %v3494
        %v3545 = vmax.f32 %v3455, %v3496
        %v3546 = vmax.f32 %v3456, %v3498
        %v3547 = vmax.f32 %v3457, %v3500
        %v3548 = vmax.f32 %v3458, %v3502
        %v3549 = vmax.f32 %v3459, %v3504
        %v3550 = vmax.f32 %v3460, %v3506
        %v3551 = vmax.f32 %v3461, %v3508
        %v3552 = vmax.f32 %v3462, %v3510
        %v3553 = vmax.f32 %v3463, %v3507
        %v3554 = vmax.f32 %v3464, %v3509
        %v3555 = vpack.c.bf16 %v3534, %v3533
        %v3556 = vpack.c.bf16 %v3536, %v3535
        %v3557 = vpack.c.bf16 %v3538, %v3537
        %v3558 = vpack.c.bf16 %v3540, %v3539
        %v3559 = vpack.c.bf16 %v3542, %v3541
        %v3560 = vpack.c.bf16 %v3544, %v3543
        %v3561 = vpack.c.bf16 %v3546, %v3545
        %v3562 = vpack.c.bf16 %v3548, %v3547
        %v3563 = vpack.c.bf16 %v3550, %v3549
        %v3564 = vpack.c.bf16 %v3552, %v3551
        %v3565 = vpack.c.bf16 %v3554, %v3553
        %v3566 = vunpack.c.l.bf16 %v2601
        %v3567 = vunpack.c.h.bf16 %v2601
        %v3568 = vunpack.c.l.bf16 %v2602
        %v3569 = vunpack.c.h.bf16 %v2602
        %v3570 = vunpack.c.l.bf16 %v2603
        %v3571 = vunpack.c.h.bf16 %v2603
        %v3572 = vunpack.c.l.bf16 %v2604
        %v3573 = vunpack.c.h.bf16 %v2604
        %v3574 = vunpack.c.l.bf16 %v2605
        %v3575 = vunpack.c.h.bf16 %v2605
        %v3576 = vunpack.c.l.bf16 %v2606
        %v3577 = vunpack.c.h.bf16 %v2606
        %v3578 = vunpack.c.l.bf16 %v2607
        %v3579 = vunpack.c.h.bf16 %v2607
        %v3580 = vunpack.c.l.bf16 %v2608
        %v3581 = vunpack.c.h.bf16 %v2608
        %v3582 = vunpack.c.l.bf16 %v2609
        %v3583 = vunpack.c.h.bf16 %v2609
        %v3584 = vunpack.c.l.bf16 %v2610
        %v3585 = vunpack.c.h.bf16 %v2610
        %v3586 = vunpack.c.l.bf16 %v3555
        %v3587 = vunpack.c.h.bf16 %v3555
        %v3588 = vunpack.c.l.bf16 %v3556
        %v3589 = vunpack.c.h.bf16 %v3556
        %v3590 = vunpack.c.l.bf16 %v3557
        %v3591 = vunpack.c.h.bf16 %v3557
        %v3592 = vunpack.c.l.bf16 %v3558
        %v3593 = vunpack.c.h.bf16 %v3558
        %v3594 = vunpack.c.l.bf16 %v3559
        %v3595 = vunpack.c.h.bf16 %v3559
        %v3596 = vunpack.c.l.bf16 %v3560
        %v3597 = vunpack.c.h.bf16 %v3560
        %v3598 = vunpack.c.l.bf16 %v3561
        %v3599 = vunpack.c.h.bf16 %v3561
        %v3600 = vunpack.c.l.bf16 %v3562
        %v3601 = vunpack.c.h.bf16 %v3562
        %v3602 = vunpack.c.l.bf16 %v3563
        %v3603 = vunpack.c.h.bf16 %v3563
        %v3604 = vunpack.c.l.bf16 %v3564
        %v3605 = vunpack.c.h.bf16 %v3564
        %v3606 = vunpack.c.l.bf16 %v3565
        %v3607 = vunpack.c.h.bf16 %v3565
        %v3630 = vrot.slane %v3586, 1
        %v3631 = vrot.slane %v3588, 1
        %v3632 = vsel %vm430, %v3630, %v3631
        %v3633 = vrot.slane %v3587, 1
        %v3634 = vrot.slane %v3589, 1
        %v3635 = vsel %vm430, %v3633, %v3634
        %v3636 = vrot.slane %v3590, 1
        %v3637 = vsel %vm430, %v3631, %v3636
        %v3638 = vrot.slane %v3591, 1
        %v3639 = vsel %vm430, %v3634, %v3638
        %v3640 = vrot.slane %v3592, 1
        %v3641 = vsel %vm430, %v3636, %v3640
        %v3642 = vrot.slane %v3593, 1
        %v3643 = vsel %vm430, %v3638, %v3642
        %v3644 = vrot.slane %v3594, 1
        %v3645 = vsel %vm430, %v3640, %v3644
        %v3646 = vrot.slane %v3595, 1
        %v3647 = vsel %vm430, %v3642, %v3646
        %v3648 = vrot.slane %v3596, 1
        %v3649 = vsel %vm430, %v3644, %v3648
        %v3650 = vrot.slane %v3597, 1
        %v3651 = vsel %vm430, %v3646, %v3650
        %v3652 = vrot.slane %v3598, 1
        %v3653 = vsel %vm430, %v3648, %v3652
        %v3654 = vrot.slane %v3599, 1
        %v3655 = vsel %vm430, %v3650, %v3654
        %v3656 = vrot.slane %v3600, 1
        %v3657 = vsel %vm430, %v3652, %v3656
        %v3658 = vrot.slane %v3601, 1
        %v3659 = vsel %vm430, %v3654, %v3658
        %v3660 = vrot.slane %v3602, 1
        %v3661 = vsel %vm430, %v3656, %v3660
        %v3662 = vrot.slane %v3603, 1
        %v3663 = vsel %vm430, %v3658, %v3662
        %v3664 = vrot.slane %v3604, 1
        %v3665 = vsel %vm430, %v3660, %v3664
        %v3666 = vrot.slane %v3605, 1
        %v3667 = vsel %vm430, %v3662, %v3666
        %v3668 = vrot.slane %v3606, 1
        %v3669 = vsel %vm430, %v3664, %v3668
        %v3670 = vrot.slane %v3607, 1
        %v3671 = vsel %vm430, %v3666, %v3670
        %v3692 = vmax.f32 %v3566, %v3632
        %v3693 = vmax.f32 %v3567, %v3635
        %v3694 = vmax.f32 %v3568, %v3637
        %v3695 = vmax.f32 %v3569, %v3639
        %v3696 = vmax.f32 %v3570, %v3641
        %v3697 = vmax.f32 %v3571, %v3643
        %v3698 = vmax.f32 %v3572, %v3645
        %v3699 = vmax.f32 %v3573, %v3647
        %v3700 = vmax.f32 %v3574, %v3649
        %v3701 = vmax.f32 %v3575, %v3651
        %v3702 = vmax.f32 %v3576, %v3653
        %v3703 = vmax.f32 %v3577, %v3655
        %v3704 = vmax.f32 %v3578, %v3657
        %v3705 = vmax.f32 %v3579, %v3659
        %v3706 = vmax.f32 %v3580, %v3661
        %v3707 = vmax.f32 %v3581, %v3663
        %v3708 = vmax.f32 %v3582, %v3665
        %v3709 = vmax.f32 %v3583, %v3667
        %v3710 = vmax.f32 %v3584, %v3669
        %v3711 = vmax.f32 %v3585, %v3671
        %v3712 = vpack.c.bf16 %v3693, %v3692
        %v3713 = vpack.c.bf16 %v3695, %v3694
        %v3714 = vpack.c.bf16 %v3697, %v3696
        %v3715 = vpack.c.bf16 %v3699, %v3698
        %v3716 = vpack.c.bf16 %v3701, %v3700
        %v3717 = vpack.c.bf16 %v3703, %v3702
        %v3718 = vpack.c.bf16 %v3705, %v3704
        %v3719 = vpack.c.bf16 %v3707, %v3706
        %v3720 = vpack.c.bf16 %v3709, %v3708
        %v3721 = vpack.c.bf16 %v3711, %v3710
        %3722 = vst.msk [vmem:[#allocation2] sm:$0xff] %vm1451, %v3712
        %3723 = vst.msk [vmem:[#allocation2 + $0x8] sm:$0xff] %vm1451, %v3713
        %3724 = vst.msk [vmem:[#allocation2 + $0x10] sm:$0xff] %vm1451, %v3714
        %3725 = vst.msk [vmem:[#allocation2 + $0x18] sm:$0xff] %vm1451, %v3715
        %3726 = vst.msk [vmem:[#allocation2 + $0x20] sm:$0xff] %vm1451, %v3716
        %3727 = vst.msk [vmem:[#allocation2 + $0x28] sm:$0xff] %vm1451, %v3717
        %3728 = vst.msk [vmem:[#allocation2 + $0x30] sm:$0xff] %vm1451, %v3718
        %3729 = vst.msk [vmem:[#allocation2 + $0x38] sm:$0xff] %vm1451, %v3719
        %3730 = vst.msk [vmem:[#allocation2 + $0x40] sm:$0xff] %vm1451, %v3720
        %3731 = vst.msk [vmem:[#allocation2 + $0x48] sm:$0xff] %vm1451, %v3721
      $region48: #{mixed_3b_forward.7} parent=39 // pred_fallthru
        _
      %v3732 = vld [vmem:[#allocation2] sm:$0xff]
      %v3733 = vld [vmem:[#allocation2 + $0x8] sm:$0xff]
      %v3734 = vld [vmem:[#allocation2 + $0x10] sm:$0xff]
      %v3735 = vld [vmem:[#allocation2 + $0x18] sm:$0xff]
      %v3736 = vld [vmem:[#allocation2 + $0x20] sm:$0xff]
      %v3737 = vld [vmem:[#allocation2 + $0x28] sm:$0xff]
      %v3738 = vld [vmem:[#allocation2 + $0x30] sm:$0xff]
      %v3739 = vld [vmem:[#allocation2 + $0x38] sm:$0xff]
      %v3740 = vld [vmem:[#allocation2 + $0x40] sm:$0xff]
      %v3741 = vld [vmem:[#allocation2 + $0x48] sm:$0xff]
      %v3742 = vld [vmem:[%s3] sm:$0xf]
      %v3743 = vld [vmem:[%s3 + $0x4] sm:$0xf]
      %v3744 = vld [vmem:[%s3 + $0x8] sm:$0xf]
      %v3745 = vld [vmem:[%s3 + $0xc] sm:$0xf]
      %v3746 = vld [vmem:[%s3 + $0x10] sm:$0xf]
      %v3747 = vld [vmem:[%s3 + $0x14] sm:$0xf]
      %v3748 = vld [vmem:[%s3 + $0x18] sm:$0xf]
      %v3749 = vld [vmem:[%s3 + $0x1c] sm:$0xf]
      %v3750 = vld [vmem:[%s3 + $0x20] sm:$0xf]
      %v3751 = vld [vmem:[%s3 + $0x24] sm:$0xf]
      %v3752 = vld [vmem:[%s3 + $0x28] sm:$0xf]
      %v3753 = vld [vmem:[%s3 + $0x2c] sm:$0xf]
      %v3754 = vld [vmem:[%s3 + $0x30] sm:$0xf]
      %v3755 = vld [vmem:[%s3 + $0x34] sm:$0xf]
      %v3756 = vld [vmem:[%s3 + $0x38] sm:$0xf]
      %v3757 = vld [vmem:[%s3 + $0x3c] sm:$0xf]
      %v3758 = vld [vmem:[%s3 + $0x40] sm:$0xf]
      %v3759 = vld [vmem:[%s3 + $0x44] sm:$0xf]
      %v3760 = vld [vmem:[%s3 + $0x48] sm:$0xf]
      %v3761 = vld [vmem:[%s3 + $0x4c] sm:$0xf]
      %v3762 = vld [vmem:[%s3 + $0x50] sm:$0xf]
      %v3763 = vld [vmem:[%s3 + $0x54] sm:$0xf]
      %v3764 = vld [vmem:[%s3 + $0x58] sm:$0xf]
      %v3765 = vld [vmem:[%s3 + $0x5c] sm:$0xf]
      %v3766 = vld [vmem:[%s4] sm:$0x1]
      %v3768 = vperm.slane %v3766, 0
      %v3780 = vunpack.c.l.b16 %v3732
      %v3781 = vunpack.c.h.b16 %v3732
      %v3782 = vunpack.c.l.b16 %v3733
      %v3783 = vunpack.c.h.b16 %v3733
      %v3784 = vunpack.c.l.b16 %v3734
      %v3785 = vunpack.c.h.b16 %v3734
      %v3786 = vunpack.c.l.b16 %v3735
      %v3787 = vunpack.c.h.b16 %v3735
      %v3788 = vunpack.c.l.b16 %v3736
      %v3789 = vunpack.c.h.b16 %v3736
      %v3790 = vunpack.c.l.b16 %v3737
      %v3791 = vunpack.c.h.b16 %v3737
      %v3792 = vunpack.c.l.b16 %v3738
      %v3793 = vunpack.c.h.b16 %v3738
      %v3794 = vunpack.c.l.b16 %v3739
      %v3795 = vunpack.c.h.b16 %v3739
      %v3796 = vunpack.c.l.b16 %v3740
      %v3797 = vunpack.c.h.b16 %v3740
      %v3798 = vunpack.c.l.b16 %v3741
      %v3799 = vunpack.c.h.b16 %v3741
      %v3800 = vpack.c.b16 %v3782, %v3780
      %v3801 = vpack.c.b16 %v3783, %v3781
      %v3802 = vpack.c.b16 %v3786, %v3784
      %v3803 = vpack.c.b16 %v3787, %v3785
      %v3804 = vpack.c.b16 %v3790, %v3788
      %v3805 = vpack.c.b16 %v3791, %v3789
      %v3806 = vpack.c.b16 %v3794, %v3792
      %v3807 = vpack.c.b16 %v3795, %v3793
      %v3808 = vpack.c.b16 %v3798, %v3796
      %v3809 = vpack.c.b16 %v3799, %v3797
      %v3839 = vunpack.c.l.b16 %v3742
      %v3840 = vunpack.c.l.b16 %v3743
      %v3841 = vunpack.c.l.b16 %v3744
      %v3842 = vunpack.c.l.b16 %v3745
      %v3843 = vunpack.c.l.b16 %v3746
      %v3844 = vunpack.c.l.b16 %v3747
      %v3845 = vunpack.c.l.b16 %v3748
      %v3846 = vunpack.c.l.b16 %v3749
      %v3847 = vunpack.c.l.b16 %v3750
      %v3848 = vunpack.c.l.b16 %v3751
      %v3849 = vunpack.c.l.b16 %v3752
      %v3850 = vunpack.c.l.b16 %v3753
      %v3851 = vunpack.c.l.b16 %v3754
      %v3852 = vunpack.c.l.b16 %v3755
      %v3853 = vunpack.c.l.b16 %v3756
      %v3854 = vunpack.c.l.b16 %v3757
      %v3855 = vunpack.c.l.b16 %v3758
      %v3856 = vunpack.c.l.b16 %v3759
      %v3857 = vunpack.c.l.b16 %v3760
      %v3858 = vunpack.c.l.b16 %v3761
      %v3859 = vunpack.c.l.b16 %v3762
      %v3860 = vunpack.c.l.b16 %v3763
      %v3861 = vunpack.c.l.b16 %v3764
      %v3862 = vunpack.c.l.b16 %v3765
      %v3863 = vpack.c.b16 %v3840, %v3839
      %v3864 = vpack.c.b16 %v3842, %v3841
      %v3865 = vpack.c.b16 %v3844, %v3843
      %v3866 = vpack.c.b16 %v3846, %v3845
      %v3867 = vpack.c.b16 %v3848, %v3847
      %v3868 = vpack.c.b16 %v3850, %v3849
      %v3869 = vpack.c.b16 %v3852, %v3851
      %v3870 = vpack.c.b16 %v3854, %v3853
      %v3871 = vpack.c.b16 %v3856, %v3855
      %v3872 = vpack.c.b16 %v3858, %v3857
      %v3873 = vpack.c.b16 %v3860, %v3859
      %v3874 = vpack.c.b16 %v3862, %v3861
      %vm3887 = vcmask 523264
      %v3889 = vsel %vm3887, %v3801, 0
      %v3892 = vsel %vm3887, %v3803, 0
      %v3895 = vsel %vm3887, %v3805, 0
      %v3898 = vsel %vm3887, %v3807, 0
      %v3901 = vsel %vm3887, %v3809, 0
      %3903 = vmatpush.bf16.msra.mxu0 %v3870
      %3904 = vmatpush.bf16.msra.mxu0 %v3869
      %3905 = vmatpush.bf16.msra.mxu0 %v3868
      %3906 = vmatpush.bf16.msra.mxu0 %v3867
      %3907 = vmatpush.bf16.msra.mxu0 %v3866
      %3908 = vmatpush.bf16.msra.mxu0 %v3865
      %3909 = vmatpush.bf16.msra.mxu0 %v3864
      %3910 = vmatpush.bf16.msra.mxu0 %v3863
      %3911 = vmatmul.bf16.gmra.mxu0 %v3800
      %v3912 = vpop.f32.mrf.mxu0
      %v3913 = vadd.f32 %v3768, %v3912
      %v3914 = vpop.f32.mrf.mxu0
      %v3915 = vadd.f32 %v3768, %v3914
      %3916 = vmatmul.bf16.gmra.mxu0 %v3802
      %v3917 = vpop.f32.mrf.mxu0
      %v3918 = vadd.f32 %v3768, %v3917
      %v3919 = vpop.f32.mrf.mxu0
      %v3920 = vadd.f32 %v3768, %v3919
      %3921 = vmatmul.bf16.gmra.mxu0 %v3804
      %v3922 = vpop.f32.mrf.mxu0
      %v3923 = vadd.f32 %v3768, %v3922
      %v3924 = vpop.f32.mrf.mxu0
      %v3925 = vadd.f32 %v3768, %v3924
      %3926 = vmatmul.bf16.gmra.mxu0 %v3806
      %v3927 = vpop.f32.mrf.mxu0
      %v3928 = vadd.f32 %v3768, %v3927
      %v3929 = vpop.f32.mrf.mxu0
      %v3930 = vadd.f32 %v3768, %v3929
      %3931 = vmatmul.bf16.gmra.mxu0 %v3808
      %v3932 = vpop.f32.mrf.mxu0
      %v3933 = vadd.f32 %v3768, %v3932
      %v3934 = vpop.f32.mrf.mxu0
      %v3935 = vadd.f32 %v3768, %v3934
      %3936 = vdwg.mxu0
      %3937 = vmatpush.bf16.msra.mxu0 0
      %3938 = vmatpush.bf16.msra.mxu0 0
      %3939 = vmatpush.bf16.msra.mxu0 0
      %3940 = vmatpush.bf16.msra.mxu0 0
      %3941 = vmatpush.bf16.msra.mxu0 %v3874
      %3942 = vmatpush.bf16.msra.mxu0 %v3873
      %3943 = vmatpush.bf16.msra.mxu0 %v3872
      %3944 = vmatpush.bf16.msra.mxu0 %v3871
      %3945 = vmatmul.bf16.gmra.mxu0 %v3889
      %v3946 = vpop.f32.mrf.mxu0
      %v3947 = vadd.f32 %v3913, %v3946
      %v3948 = vpop.f32.mrf.mxu0
      %v3949 = vadd.f32 %v3915, %v3948
      %3950 = vmatmul.bf16.gmra.mxu0 %v3892
      %v3951 = vpop.f32.mrf.mxu0
      %v3952 = vadd.f32 %v3918, %v3951
      %v3953 = vpop.f32.mrf.mxu0
      %v3954 = vadd.f32 %v3920, %v3953
      %3955 = vmatmul.bf16.gmra.mxu0 %v3895
      %v3956 = vpop.f32.mrf.mxu0
      %v3957 = vadd.f32 %v3923, %v3956
      %v3958 = vpop.f32.mrf.mxu0
      %v3959 = vadd.f32 %v3925, %v3958
      %3960 = vmatmul.bf16.gmra.mxu0 %v3898
      %v3961 = vpop.f32.mrf.mxu0
      %v3962 = vadd.f32 %v3928, %v3961
      %v3963 = vpop.f32.mrf.mxu0
      %v3964 = vadd.f32 %v3930, %v3963
      %3965 = vmatmul.bf16.gmra.mxu0 %v3901
      %v3966 = vpop.f32.mrf.mxu0
      %v3967 = vadd.f32 %v3933, %v3966
      %v3968 = vpop.f32.mrf.mxu0
      %v3969 = vadd.f32 %v3935, %v3968
      %3970 = vdwg.mxu0
      %v3971 = vmax.f32 %v3947, 0.0
      %v3972 = vmax.f32 %v3949, 0.0
      %v3973 = vmax.f32 %v3952, 0.0
      %v3974 = vmax.f32 %v3954, 0.0
      %v3975 = vmax.f32 %v3957, 0.0
      %v3976 = vmax.f32 %v3959, 0.0
      %v3977 = vmax.f32 %v3962, 0.0
      %v3978 = vmax.f32 %v3964, 0.0
      %v3979 = vmax.f32 %v3967, 0.0
      %v3980 = vmax.f32 %v3969, 0.0
      %vm3981 = vcmask 261120
      %3982 = vst.msk [vmem:[%s370] sm:$0xff] %vm3981, %v3971
      %3983 = vst.msk [vmem:[%s370 + $0x8] sm:$0xff] %vm3981, %v3972
      %3984 = vst.msk [vmem:[%s370 + $0x10] sm:$0xff] %vm3981, %v3973
      %3985 = vst.msk [vmem:[%s370 + $0x18] sm:$0xff] %vm3981, %v3974
      %3986 = vst.msk [vmem:[%s370 + $0x20] sm:$0xff] %vm3981, %v3975
      %3987 = vst.msk [vmem:[%s370 + $0x28] sm:$0xff] %vm3981, %v3976
      %3988 = vst.msk [vmem:[%s370 + $0x30] sm:$0xff] %vm3981, %v3977
      %3989 = vst.msk [vmem:[%s370 + $0x38] sm:$0xff] %vm3981, %v3978
      %3990 = vst.msk [vmem:[%s370 + $0x40] sm:$0xff] %vm3981, %v3979
      %3991 = vst.msk [vmem:[%s370 + $0x48] sm:$0xff] %vm3981, %v3980
      %p3992 = scmp.lt.s32.totalorder %s20, 1
      %s3993 = scalar_select %p3992, %s20, 1
      %p3994 = scmp.lt.s32.totalorder %s21, 3
      %s3995 = scalar_select %p3994, %s21, 3
      %s3996 = smul.addr %s3995, 10
      %s3997 = smul.addr %s3993, 40
      %s3998 = sadd.s32 %s3996, %s3997
      %s3999 = smul.addr %s3998, 8
      %s4000 = scalar_lea.vmem %s5, %s3999
      // Predicated region
      $region49: #{mixed_3b_forward.7} parent=39 // pred_check
        %p4001 = pneg %p186
      $region50: #{mixed_3b_forward.7} parent=39 // pred_check_branch
        %4003 = sbr.rel (%p4001) target = $region52
      $region51: #{mixed_3b_forward.7} parent=39 // pred_region
        _
      $region52: #{mixed_3b_forward.7} parent=39 // pred_fallthru
        _
    $region40: #{mixed_3b_forward.7} parent=5 // pred_fallthru
      _
    %p4004 = scmp.le.s32.totalorder 2, %s11
    // Predicated region
    $region53: #{mixed_3b_forward.7} parent=5 // pred_check
      %p4005 = pneg %p4004
    $region54: #{mixed_3b_forward.7} parent=5 // pred_check_branch
      %4007 = sbr.rel (%p4005) target = $region56
    $region55: #{mixed_3b_forward.7} parent=5 // pred_region
      %s4008 = ssub.s32 %s11, 2
      // Predicated region
      $region57: #{mixed_3b_forward.7} parent=55 // pred_check
        %p4009 = pneg %p192
      $region58: #{mixed_3b_forward.7} parent=55 // pred_check_branch
        %4011 = sbr.rel (%p4009) target = $region60
      $region59: #{mixed_3b_forward.7} parent=55 // pred_region
        %p4012 = scmp.lt.s32.totalorder %s22, 1
        %s4013 = scalar_select %p4012, %s22, 1
        %p4014 = scmp.lt.s32.totalorder %s23, 3
        %s4015 = scalar_select %p4014, %s23, 3
        %s4016 = smul.addr %s4015, 10
        %s4017 = smul.addr %s4013, 40
        %s4018 = sadd.s32 %s4016, %s4017
        %s4019 = smul.addr %s4018, 8
        %s4020 = scalar_lea.vmem %s5, %s4019
      $region60: #{mixed_3b_forward.7} parent=55 // pred_fallthru
        _
    $region56: #{mixed_3b_forward.7} parent=5 // pred_fallthru
      _
  $region6: #{mixed_3b_forward.7} parent=0 // loop_footer
    %s15 = sadd.s32 1, %s11
  $region7: #{mixed_3b_forward.7} parent=0 // loop_footer_branch
    %10 = sbr.rel target = $region3
  $region8: #{mixed_3b_forward.7} parent=0 // loop_exit
    _

</llo_original>
